<compile_context>
chip_gen: v7x
topology: tpu7x:2x2x1
jax: 0.10.0
libtpu: 0.0.40
codegen_flags: <defaults>
</compile_context>

<pallas_src>
import jax
import jax.numpy as jnp
import numpy as np
from jax.experimental import pallas as pl
from jax.experimental.pallas import tpu as pltpu


_LANE = 128   # channel (lane) padding multiple
_ROW = 16     # row (sublane) padding multiple -- bf16-safe slice alignment


def _round_up(x, m):
    return ((x + m - 1) // m) * m


# ---------------------------------------------------------------------------
# Static architecture description of YOLOv5Backbone.
# ---------------------------------------------------------------------------
def make_layer_table(num_classes=5):
    nout = 3 * (5 + num_classes)
    return (
        # name  src    cout  k  s  p  relu   bn      head
        ("c1", "x",    32,   3, 2, 1, True,  "bn1",  None),
        ("c2", "c1",   64,   3, 2, 1, True,  "bn2",  None),
        ("c3", "c2",   128,  3, 2, 1, True,  "bn3",  None),
        ("h1", "c3",   128,  3, 1, 1, True,  None,   None),
        ("h2", "h1",   nout, 1, 1, 0, False, None,   "high"),
        ("d1", "c3",   256,  3, 2, 1, True,  "bnd",  None),
        ("l1", "d1",   256,  3, 1, 1, True,  None,   None),
        ("l2", "l1",   nout, 1, 1, 0, False, None,   "low"),
    )


# ---------------------------------------------------------------------------
# Parameter construction (deterministic, PyTorch-default-style init)
# ---------------------------------------------------------------------------
def _make_conv(key, cout, cin, k):
    kw_, kb_ = jax.random.split(key)
    bound = 1.0 / np.sqrt(cin * k * k)
    w = jax.random.uniform(kw_, (cout, cin, k, k), jnp.float32, -bound, bound)
    b = jax.random.uniform(kb_, (cout,), jnp.float32, -bound, bound)
    return w, b


def _make_bn(c):
    return (jnp.ones((c,), jnp.float32), jnp.zeros((c,), jnp.float32),
            jnp.zeros((c,), jnp.float32), jnp.ones((c,), jnp.float32))


def make_params(key, num_classes=5):
    keys = jax.random.split(key, 8)
    nout = 3 * (5 + num_classes)
    p = {}
    p["c1"] = _make_conv(keys[0], 32, 3, 3);    p["bn1"] = _make_bn(32)
    p["c2"] = _make_conv(keys[1], 64, 32, 3);   p["bn2"] = _make_bn(64)
    p["c3"] = _make_conv(keys[2], 128, 64, 3);  p["bn3"] = _make_bn(128)
    p["h1"] = _make_conv(keys[3], 128, 128, 3)
    p["h2"] = _make_conv(keys[4], nout, 128, 1)
    p["d1"] = _make_conv(keys[5], 256, 128, 3); p["bnd"] = _make_bn(256)
    p["l1"] = _make_conv(keys[6], 256, 256, 3)
    p["l2"] = _make_conv(keys[7], nout, 256, 1)
    return p


# ---------------------------------------------------------------------------
# One-time prep: fold BN into per-tap GEMM weights, build the static 0/1
# spatial-gather matrices (in-kernel im2col), pad rows to multiples of 16 and
# channels to multiples of 128, cast to bf16.  Done once, NOT per forward.
# ---------------------------------------------------------------------------
def prepare_fused_params(params, layer_table, input_shape):
    n, cin0, H, W = input_shape
    spatial = {"x": (H, W)}
    channels = {"x": cin0}
    plan, flat = [], []
    flops = 0

    for (name, src, cout, k, stride, pad, relu, bn, head) in layer_table:
        w, b = params[name]
        cout_w, cin, kh, kw = w.shape
        assert cout_w == cout and kh == k and kw == k
        assert channels[src] == cin
        h, wd = spatial[src]
        oh = (h + 2 * pad - k) // stride + 1
        ow = (wd + 2 * pad - k) // stride + 1
        spatial[name] = (oh, ow)
        channels[name] = cout

        m_in = _round_up(n * h * wd, _ROW)
        m_out = _round_up(n * oh * ow, _ROW)
        cin_p = _round_up(cin, _LANE)
        cout_p = _round_up(cout, _LANE)

        # Fold BatchNorm (inference mode, eps=1e-5) into scale / shift.
        if bn is not None:
            gamma, beta, mean, var = params[bn]
            s = gamma / jnp.sqrt(var + 1e-5)
            shift = s * (b - mean) + beta
        else:
            s = jnp.ones((cout,), jnp.float32)
            shift = b
        shift = jnp.pad(shift.reshape(1, cout), ((0, 0), (0, cout_p - cout)))

        pointwise = (k == 1 and stride == 1 and pad == 0)
        w_np = np.asarray(w)
        s_np = np.asarray(s)

        if pointwise:
            wmat = w_np[:, :, 0, 0].T * s_np[None, :]            # (cin, cout)
            wmat = np.pad(wmat, ((0, cin_p - cin), (0, cout_p - cout)))
            flat.append(jnp.asarray(wmat, jnp.bfloat16))
            flat.append(jnp.asarray(shift, jnp.float32))
            n_taps = 1
            flops += 2 * m_out * cin_p * cout_p
        else:
            g_blocks, w_blocks = [], []
            for di in range(k):
                for dj in range(k):
                    g = np.zeros((m_out, m_in), np.float32)
                    active = False
                    for bi in range(n):
                        for i in range(oh):
                            hi = stride * i + di - pad
                            if hi < 0 or hi >= h:
                                continue
                            for j in range(ow):
                                wi = stride * j + dj - pad
                                if wi < 0 or wi >= wd:
                                    continue
                                g[bi * oh * ow + i * ow + j,
                                  bi * h * wd + hi * wd + wi] = 1.0
                                active = True
                    if not active:            # tap lies fully in the zero pad
                        continue
                    wt = w_np[:, :, di, dj].T * s_np[None, :]    # (cin, cout)
                    wt = np.pad(wt, ((0, cin_p - cin), (0, cout_p - cout)))
                    g_blocks.append(g)
                    w_blocks.append(wt)
            n_taps = len(g_blocks)
            gstack = np.concatenate(g_blocks, axis=0)            # (T*m_out, m_in)
            wstack = np.concatenate(w_blocks, axis=0)            # (T*cin_p, cout_p)
            flat.append(jnp.asarray(gstack, jnp.bfloat16))
            flat.append(jnp.asarray(wstack, jnp.bfloat16))
            flat.append(jnp.asarray(shift, jnp.float32))
            flops += 2 * n_taps * (m_out * m_in * cin_p + m_out * cin_p * cout_p)

        plan.append(dict(name=name, src=src, head=head, relu=relu,
                         pointwise=pointwise, n_taps=n_taps,
                         m_in=m_in, m_out=m_out, cin_p=cin_p, cout_p=cout_p,
                         n=n, oh=oh, ow=ow, cout=cout))

    in_bytes = sum(int(a.size) * a.dtype.itemsize for a in flat)
    in_bytes += plan[0]["m_in"] * plan[0]["cin_p"] * 2          # bf16 input
    out_bytes = sum(p["m_out"] * p["cout_p"] * 4 for p in plan if p["head"])
    cost = pl.CostEstimate(flops=int(flops), transcendentals=0,
                           bytes_accessed=int(in_bytes + out_bytes))
    return plan, flat, cost


# ---------------------------------------------------------------------------
# Fused whole-backbone kernel.  refs = (x, *layer_params, out_high, out_low).
# Intermediate activations are plain values (VMEM-resident) between layers.
# ---------------------------------------------------------------------------
def _make_fused_kernel(plan):
    def kernel(*refs):
        x_ref = refs[0]
        out_high_ref, out_low_ref = refs[-2], refs[-1]
        param_refs = refs[1:-2]
        pi = 0
        vals = {"x": x_ref[...]}            # bf16 (rows x channels) matrices

        for meta in plan:
            act = vals[meta["src"]]
            if meta["pointwise"]:
                w_ref, s_ref = param_refs[pi], param_refs[pi + 1]
                pi += 2
                acc = jnp.dot(act, w_ref[...],
                              preferred_element_type=jnp.float32)
            else:
                g_ref = param_refs[pi]
                w_ref = param_refs[pi + 1]
                s_ref = param_refs[pi + 2]
                pi += 3
                m_out, cin_p = meta["m_out"], meta["cin_p"]
                acc = jnp.zeros((m_out, meta["cout_p"]), jnp.float32)
                for t in range(meta["n_taps"]):     # static unroll, small T
                    # Spatial gather for this tap: 0/1 matrix on the MXU
                    # (exact pass-through of the bf16 activation values).
                    xt = jnp.dot(g_ref[t * m_out:(t + 1) * m_out, :], act,
                                 preferred_element_type=jnp.float32)
                    acc += jnp.dot(xt.astype(jnp.bfloat16),
                                   w_ref[t * cin_p:(t + 1) * cin_p, :],
                                   preferred_element_type=jnp.float32)

            y = acc + s_ref[...]                    # f32 bias / BN-shift
            if meta["relu"]:
                y = jnp.maximum(y, 0.0)

            if meta["head"] == "high":
                out_high_ref[...] = y               # f32 detection output
            elif meta["head"] == "low":
                out_low_ref[...] = y
            else:
                vals[meta["name"]] = y.astype(jnp.bfloat16)

    return kernel


def make_forward(plan, cost):
    kernel = _make_fused_kernel(plan)
    heads = {p["head"]: p for p in plan if p["head"]}
    hi, lo = heads["high"], heads["low"]
    m0, c0 = plan[0]["m_in"], plan[0]["cin_p"]

    fused = pl.pallas_call(
        kernel,
        out_shape=(
            jax.ShapeDtypeStruct((hi["m_out"], hi["cout_p"]), jnp.float32),
            jax.ShapeDtypeStruct((lo["m_out"], lo["cout_p"]), jnp.float32),
        ),
        # No grid: whole-array VMEM blocks (total ~3 MB).  Explicit scoped
        # VMEM limit per the review; equal to the default so it is safe on
        # every generation (v5e/v6e 128 MiB, v7x 64 MiB physical).
        compiler_params=pltpu.CompilerParams(vmem_limit_bytes=32 * 1024 * 1024),
        cost_estimate=cost,
    )

    def _to_nchw(mat, meta):
        n, oh, ow, cout = meta["n"], meta["oh"], meta["ow"], meta["cout"]
        y = mat[:n * oh * ow, :cout].reshape(n, oh, ow, cout)
        return jnp.transpose(y, (0, 3, 1, 2))

    @jax.jit
    def fwd(flat_params, x_nchw):
        n, c, H, W = x_nchw.shape
        x = jnp.transpose(x_nchw, (0, 2, 3, 1)).reshape(n * H * W, c)
        x = jnp.pad(x, ((0, m0 - n * H * W), (0, c0 - c))).astype(jnp.bfloat16)
        out_high, out_low = fused(x, *flat_params)
        return [_to_nchw(out_high, hi), _to_nchw(out_low, lo)]

    return fwd


# ---------------------------------------------------------------------------
# Pure-JAX reference (lax.conv) for correctness checking
# ---------------------------------------------------------------------------
def _ref_conv(x, w, b, stride, pad):
    y = jax.lax.conv_general_dilated(
        x, w, (stride, stride), ((pad, pad), (pad, pad)),
        dimension_numbers=("NCHW", "OIHW", "NCHW"))
    return y + b[None, :, None, None]


def _ref_bn(x, gamma, beta, mean, var, eps=1e-5):
    return ((x - mean[None, :, None, None])
            / jnp.sqrt(var[None, :, None, None] + eps)
            * gamma[None, :, None, None] + beta[None, :, None, None])


def yolov5_backbone_ref(p, x):
    def cbr(h, conv, bn, stride):
        return jax.nn.relu(_ref_bn(_ref_conv(h, *conv, stride, 1), *bn))

    feat = cbr(cbr(cbr(x, p["c1"], p["bn1"], 2), p["c2"], p["bn2"], 2),
               p["c3"], p["bn3"], 2)
    out_high = _ref_conv(jax.nn.relu(_ref_conv(feat, *p["h1"], 1, 1)),
                         *p["h2"], 1, 0)
    fl = cbr(feat, p["d1"], p["bnd"], 2)
    out_low = _ref_conv(jax.nn.relu(_ref_conv(fl, *p["l1"], 1, 1)),
                        *p["l2"], 1, 0)
    return [out_high, out_low]


if __name__ == "__main__":
    key = jax.random.PRNGKey(0)
    kx, kp = jax.random.split(key)

    # Small NCHW input consistent with the module (3 input channels).
    x = jax.random.normal(kx, (2, 3, 16, 16), jnp.float32)
    params = make_params(kp, num_classes=5)
    layer_table = make_layer_table(num_classes=5)

    # One-time weight / gather-matrix prep (hoisted out of the forward pass).
    plan, flat_params, cost = prepare_fused_params(params, layer_table, x.shape)
    forward = make_forward(plan, cost)

    out_high, out_low = forward(flat_params, x)
    jax.block_until_ready(out_high)
    jax.block_until_ready(out_low)

    assert out_high.shape == (2, 30, 2, 2), out_high.shape
    assert out_low.shape == (2, 30, 1, 1), out_low.shape

    ref_high, ref_low = yolov5_backbone_ref(params, x)
    # bf16 weights / intermediate activations with f32 accumulation ->
    # tolerance reflects bf16 rounding; reference is full f32.
    err_h = float(jnp.max(jnp.abs(out_high - ref_high)))
    err_l = float(jnp.max(jnp.abs(out_low - ref_low)))
    assert jnp.allclose(out_high, ref_high, atol=2e-2, rtol=2e-2), err_h
    assert jnp.allclose(out_low, ref_low, atol=2e-2, rtol=2e-2), err_l

    print("KERNEL_OK")
</pallas_src>

<mosaic_0001>
module attributes {stable_mosaic.version = 11 : i64} {
  func.func @kernel(%arg0: memref<512x128xbf16, #tpu.memory_space<vmem>>, %arg1: memref<1152x512xbf16, #tpu.memory_space<vmem>>, %arg2: memref<1152x128xbf16, #tpu.memory_space<vmem>>, %arg3: memref<1x128xf32, #tpu.memory_space<vmem>>, %arg4: memref<288x128xbf16, #tpu.memory_space<vmem>>, %arg5: memref<1152x128xbf16, #tpu.memory_space<vmem>>, %arg6: memref<1x128xf32, #tpu.memory_space<vmem>>, %arg7: memref<144x32xbf16, #tpu.memory_space<vmem>>, %arg8: memref<1152x128xbf16, #tpu.memory_space<vmem>>, %arg9: memref<1x128xf32, #tpu.memory_space<vmem>>, %arg10: memref<144x16xbf16, #tpu.memory_space<vmem>>, %arg11: memref<1152x128xbf16, #tpu.memory_space<vmem>>, %arg12: memref<1x128xf32, #tpu.memory_space<vmem>>, %arg13: memref<128x128xbf16, #tpu.memory_space<vmem>>, %arg14: memref<1x128xf32, #tpu.memory_space<vmem>>, %arg15: memref<64x16xbf16, #tpu.memory_space<vmem>>, %arg16: memref<512x256xbf16, #tpu.memory_space<vmem>>, %arg17: memref<1x256xf32, #tpu.memory_space<vmem>>, %arg18: memref<16x16xbf16, #tpu.memory_space<vmem>>, %arg19: memref<256x256xbf16, #tpu.memory_space<vmem>>, %arg20: memref<1x256xf32, #tpu.memory_space<vmem>>, %arg21: memref<256x128xbf16, #tpu.memory_space<vmem>>, %arg22: memref<1x128xf32, #tpu.memory_space<vmem>>, %arg23: memref<16x128xf32, #tpu.memory_space<vmem>>, %arg24: memref<16x128xf32, #tpu.memory_space<vmem>>) attributes {dimension_semantics = [], scalar_prefetch = 0 : i64, scratch_operands = 0 : i64, tpu.core_type = #tpu.core_type<tc>} {
    %c0 = arith.constant 0 : index
    %c0_0 = arith.constant 0 : index
    %0 = vector.load %arg0[%c0, %c0_0] : memref<512x128xbf16, #tpu.memory_space<vmem>>, vector<512x128xbf16>
    %cst = arith.constant 0.000000e+00 : f32
    %1 = vector.broadcast %cst : f32 to vector<128x128xf32>
    %c0_1 = arith.constant 0 : index
    %c0_2 = arith.constant 0 : index
    %2 = vector.load %arg1[%c0_1, %c0_2] : memref<1152x512xbf16, #tpu.memory_space<vmem>>, vector<128x512xbf16>
    %cst_3 = arith.constant dense<0.000000e+00> : vector<128x128xf32>
    %3 = tpu.matmul %2, %0, %cst_3 {dimension_numbers = #tpu.dot_dimension_numbers<[1], [0], [0], [1], [0, 0, 1, 1], [], []>} : vector<128x512xbf16>, vector<512x128xbf16>, vector<128x128xf32> -> vector<128x128xf32>
    %4 = arith.truncf %3 : vector<128x128xf32> to vector<128x128xbf16>
    %c0_4 = arith.constant 0 : index
    %c0_5 = arith.constant 0 : index
    %5 = vector.load %arg2[%c0_4, %c0_5] : memref<1152x128xbf16, #tpu.memory_space<vmem>>, vector<128x128xbf16>
    %cst_6 = arith.constant dense<0.000000e+00> : vector<128x128xf32>
    %6 = tpu.matmul %4, %5, %cst_6 {dimension_numbers = #tpu.dot_dimension_numbers<[1], [0], [0], [1], [0, 0, 1, 1], [], []>} : vector<128x128xbf16>, vector<128x128xbf16>, vector<128x128xf32> -> vector<128x128xf32>
    %7 = arith.addf %1, %6 : vector<128x128xf32>
    %c128 = arith.constant 128 : index
    %c0_7 = arith.constant 0 : index
    %8 = vector.load %arg1[%c128, %c0_7] : memref<1152x512xbf16, #tpu.memory_space<vmem>>, vector<128x512xbf16>
    %cst_8 = arith.constant dense<0.000000e+00> : vector<128x128xf32>
    %9 = tpu.matmul %8, %0, %cst_8 {dimension_numbers = #tpu.dot_dimension_numbers<[1], [0], [0], [1], [0, 0, 1, 1], [], []>} : vector<128x512xbf16>, vector<512x128xbf16>, vector<128x128xf32> -> vector<128x128xf32>
    %10 = arith.truncf %9 : vector<128x128xf32> to vector<128x128xbf16>
    %c128_9 = arith.constant 128 : index
    %c0_10 = arith.constant 0 : index
    %11 = vector.load %arg2[%c128_9, %c0_10] : memref<1152x128xbf16, #tpu.memory_space<vmem>>, vector<128x128xbf16>
    %cst_11 = arith.constant dense<0.000000e+00> : vector<128x128xf32>
    %12 = tpu.matmul %10, %11, %cst_11 {dimension_numbers = #tpu.dot_dimension_numbers<[1], [0], [0], [1], [0, 0, 1, 1], [], []>} : vector<128x128xbf16>, vector<128x128xbf16>, vector<128x128xf32> -> vector<128x128xf32>
    %13 = arith.addf %7, %12 : vector<128x128xf32>
    %c256 = arith.constant 256 : index
    %c0_12 = arith.constant 0 : index
    %14 = vector.load %arg1[%c256, %c0_12] : memref<1152x512xbf16, #tpu.memory_space<vmem>>, vector<128x512xbf16>
    %cst_13 = arith.constant dense<0.000000e+00> : vector<128x128xf32>
    %15 = tpu.matmul %14, %0, %cst_13 {dimension_numbers = #tpu.dot_dimension_numbers<[1], [0], [0], [1], [0, 0, 1, 1], [], []>} : vector<128x512xbf16>, vector<512x128xbf16>, vector<128x128xf32> -> vector<128x128xf32>
    %16 = arith.truncf %15 : vector<128x128xf32> to vector<128x128xbf16>
    %c256_14 = arith.constant 256 : index
    %c0_15 = arith.constant 0 : index
    %17 = vector.load %arg2[%c256_14, %c0_15] : memref<1152x128xbf16, #tpu.memory_space<vmem>>, vector<128x128xbf16>
    %cst_16 = arith.constant dense<0.000000e+00> : vector<128x128xf32>
    %18 = tpu.matmul %16, %17, %cst_16 {dimension_numbers = #tpu.dot_dimension_numbers<[1], [0], [0], [1], [0, 0, 1, 1], [], []>} : vector<128x128xbf16>, vector<128x128xbf16>, vector<128x128xf32> -> vector<128x128xf32>
    %19 = arith.addf %13, %18 : vector<128x128xf32>
    %c384 = arith.constant 384 : index
    %c0_17 = arith.constant 0 : index
    %20 = vector.load %arg1[%c384, %c0_17] : memref<1152x512xbf16, #tpu.memory_space<vmem>>, vector<128x512xbf16>
    %cst_18 = arith.constant dense<0.000000e+00> : vector<128x128xf32>
    %21 = tpu.matmul %20, %0, %cst_18 {dimension_numbers = #tpu.dot_dimension_numbers<[1], [0], [0], [1], [0, 0, 1, 1], [], []>} : vector<128x512xbf16>, vector<512x128xbf16>, vector<128x128xf32> -> vector<128x128xf32>
    %22 = arith.truncf %21 : vector<128x128xf32> to vector<128x128xbf16>
    %c384_19 = arith.constant 384 : index
    %c0_20 = arith.constant 0 : index
    %23 = vector.load %arg2[%c384_19, %c0_20] : memref<1152x128xbf16, #tpu.memory_space<vmem>>, vector<128x128xbf16>
    %cst_21 = arith.constant dense<0.000000e+00> : vector<128x128xf32>
    %24 = tpu.matmul %22, %23, %cst_21 {dimension_numbers = #tpu.dot_dimension_numbers<[1], [0], [0], [1], [0, 0, 1, 1], [], []>} : vector<128x128xbf16>, vector<128x128xbf16>, vector<128x128xf32> -> vector<128x128xf32>
    %25 = arith.addf %19, %24 : vector<128x128xf32>
    %c512 = arith.constant 512 : index
    %c0_22 = arith.constant 0 : index
    %26 = vector.load %arg1[%c512, %c0_22] : memref<1152x512xbf16, #tpu.memory_space<vmem>>, vector<128x512xbf16>
    %cst_23 = arith.constant dense<0.000000e+00> : vector<128x128xf32>
    %27 = tpu.matmul %26, %0, %cst_23 {dimension_numbers = #tpu.dot_dimension_numbers<[1], [0], [0], [1], [0, 0, 1, 1], [], []>} : vector<128x512xbf16>, vector<512x128xbf16>, vector<128x128xf32> -> vector<128x128xf32>
    %28 = arith.truncf %27 : vector<128x128xf32> to vector<128x128xbf16>
    %c512_24 = arith.constant 512 : index
    %c0_25 = arith.constant 0 : index
    %29 = vector.load %arg2[%c512_24, %c0_25] : memref<1152x128xbf16, #tpu.memory_space<vmem>>, vector<128x128xbf16>
    %cst_26 = arith.constant dense<0.000000e+00> : vector<128x128xf32>
    %30 = tpu.matmul %28, %29, %cst_26 {dimension_numbers = #tpu.dot_dimension_numbers<[1], [0], [0], [1], [0, 0, 1, 1], [], []>} : vector<128x128xbf16>, vector<128x128xbf16>, vector<128x128xf32> -> vector<128x128xf32>
    %31 = arith.addf %25, %30 : vector<128x128xf32>
    %c640 = arith.constant 640 : index
    %c0_27 = arith.constant 0 : index
    %32 = vector.load %arg1[%c640, %c0_27] : memref<1152x512xbf16, #tpu.memory_space<vmem>>, vector<128x512xbf16>
    %cst_28 = arith.constant dense<0.000000e+00> : vector<128x128xf32>
    %33 = tpu.matmul %32, %0, %cst_28 {dimension_numbers = #tpu.dot_dimension_numbers<[1], [0], [0], [1], [0, 0, 1, 1], [], []>} : vector<128x512xbf16>, vector<512x128xbf16>, vector<128x128xf32> -> vector<128x128xf32>
    %34 = arith.truncf %33 : vector<128x128xf32> to vector<128x128xbf16>
    %c640_29 = arith.constant 640 : index
    %c0_30 = arith.constant 0 : index
    %35 = vector.load %arg2[%c640_29, %c0_30] : memref<1152x128xbf16, #tpu.memory_space<vmem>>, vector<128x128xbf16>
    %cst_31 = arith.constant dense<0.000000e+00> : vector<128x128xf32>
    %36 = tpu.matmul %34, %35, %cst_31 {dimension_numbers = #tpu.dot_dimension_numbers<[1], [0], [0], [1], [0, 0, 1, 1], [], []>} : vector<128x128xbf16>, vector<128x128xbf16>, vector<128x128xf32> -> vector<128x128xf32>
    %37 = arith.addf %31, %36 : vector<128x128xf32>
    %c768 = arith.constant 768 : index
    %c0_32 = arith.constant 0 : index
    %38 = vector.load %arg1[%c768, %c0_32] : memref<1152x512xbf16, #tpu.memory_space<vmem>>, vector<128x512xbf16>
    %cst_33 = arith.constant dense<0.000000e+00> : vector<128x128xf32>
    %39 = tpu.matmul %38, %0, %cst_33 {dimension_numbers = #tpu.dot_dimension_numbers<[1], [0], [0], [1], [0, 0, 1, 1], [], []>} : vector<128x512xbf16>, vector<512x128xbf16>, vector<128x128xf32> -> vector<128x128xf32>
    %40 = arith.truncf %39 : vector<128x128xf32> to vector<128x128xbf16>
    %c768_34 = arith.constant 768 : index
    %c0_35 = arith.constant 0 : index
    %41 = vector.load %arg2[%c768_34, %c0_35] : memref<1152x128xbf16, #tpu.memory_space<vmem>>, vector<128x128xbf16>
    %cst_36 = arith.constant dense<0.000000e+00> : vector<128x128xf32>
    %42 = tpu.matmul %40, %41, %cst_36 {dimension_numbers = #tpu.dot_dimension_numbers<[1], [0], [0], [1], [0, 0, 1, 1], [], []>} : vector<128x128xbf16>, vector<128x128xbf16>, vector<128x128xf32> -> vector<128x128xf32>
    %43 = arith.addf %37, %42 : vector<128x128xf32>
    %c896 = arith.constant 896 : index
    %c0_37 = arith.constant 0 : index
    %44 = vector.load %arg1[%c896, %c0_37] : memref<1152x512xbf16, #tpu.memory_space<vmem>>, vector<128x512xbf16>
    %cst_38 = arith.constant dense<0.000000e+00> : vector<128x128xf32>
    %45 = tpu.matmul %44, %0, %cst_38 {dimension_numbers = #tpu.dot_dimension_numbers<[1], [0], [0], [1], [0, 0, 1, 1], [], []>} : vector<128x512xbf16>, vector<512x128xbf16>, vector<128x128xf32> -> vector<128x128xf32>
    %46 = arith.truncf %45 : vector<128x128xf32> to vector<128x128xbf16>
    %c896_39 = arith.constant 896 : index
    %c0_40 = arith.constant 0 : index
    %47 = vector.load %arg2[%c896_39, %c0_40] : memref<1152x128xbf16, #tpu.memory_space<vmem>>, vector<128x128xbf16>
    %cst_41 = arith.constant dense<0.000000e+00> : vector<128x128xf32>
    %48 = tpu.matmul %46, %47, %cst_41 {dimension_numbers = #tpu.dot_dimension_numbers<[1], [0], [0], [1], [0, 0, 1, 1], [], []>} : vector<128x128xbf16>, vector<128x128xbf16>, vector<128x128xf32> -> vector<128x128xf32>
    %49 = arith.addf %43, %48 : vector<128x128xf32>
    %c1024 = arith.constant 1024 : index
    %c0_42 = arith.constant 0 : index
    %50 = vector.load %arg1[%c1024, %c0_42] : memref<1152x512xbf16, #tpu.memory_space<vmem>>, vector<128x512xbf16>
    %cst_43 = arith.constant dense<0.000000e+00> : vector<128x128xf32>
    %51 = tpu.matmul %50, %0, %cst_43 {dimension_numbers = #tpu.dot_dimension_numbers<[1], [0], [0], [1], [0, 0, 1, 1], [], []>} : vector<128x512xbf16>, vector<512x128xbf16>, vector<128x128xf32> -> vector<128x128xf32>
    %52 = arith.truncf %51 : vector<128x128xf32> to vector<128x128xbf16>
    %c1024_44 = arith.constant 1024 : index
    %c0_45 = arith.constant 0 : index
    %53 = vector.load %arg2[%c1024_44, %c0_45] : memref<1152x128xbf16, #tpu.memory_space<vmem>>, vector<128x128xbf16>
    %cst_46 = arith.constant dense<0.000000e+00> : vector<128x128xf32>
    %54 = tpu.matmul %52, %53, %cst_46 {dimension_numbers = #tpu.dot_dimension_numbers<[1], [0], [0], [1], [0, 0, 1, 1], [], []>} : vector<128x128xbf16>, vector<128x128xbf16>, vector<128x128xf32> -> vector<128x128xf32>
    %55 = arith.addf %49, %54 : vector<128x128xf32>
    %c0_47 = arith.constant 0 : index
    %c0_48 = arith.constant 0 : index
    %56 = vector.load %arg3[%c0_47, %c0_48] : memref<1x128xf32, #tpu.memory_space<vmem>>, vector<1x128xf32>
    %57 = vector.broadcast %56 : vector<1x128xf32> to vector<128x128xf32>
    %58 = arith.addf %55, %57 : vector<128x128xf32>
    %cst_49 = arith.constant 0.000000e+00 : f32
    %59 = vector.broadcast %cst_49 : f32 to vector<128x128xf32>
    %60 = arith.maximumf %58, %59 : vector<128x128xf32>
    %61 = arith.truncf %60 : vector<128x128xf32> to vector<128x128xbf16>
    %cst_50 = arith.constant 0.000000e+00 : f32
    %62 = vector.broadcast %cst_50 : f32 to vector<32x128xf32>
    %c0_51 = arith.constant 0 : index
    %c0_52 = arith.constant 0 : index
    %63 = vector.load %arg4[%c0_51, %c0_52] : memref<288x128xbf16, #tpu.memory_space<vmem>>, vector<32x128xbf16>
    %cst_53 = arith.constant dense<0.000000e+00> : vector<32x128xf32>
    %64 = tpu.matmul %63, %61, %cst_53 {dimension_numbers = #tpu.dot_dimension_numbers<[1], [0], [0], [1], [0, 0, 1, 1], [], []>} : vector<32x128xbf16>, vector<128x128xbf16>, vector<32x128xf32> -> vector<32x128xf32>
    %65 = arith.truncf %64 : vector<32x128xf32> to vector<32x128xbf16>
    %c0_54 = arith.constant 0 : index
    %c0_55 = arith.constant 0 : index
    %66 = vector.load %arg5[%c0_54, %c0_55] : memref<1152x128xbf16, #tpu.memory_space<vmem>>, vector<128x128xbf16>
    %cst_56 = arith.constant dense<0.000000e+00> : vector<32x128xf32>
    %67 = tpu.matmul %65, %66, %cst_56 {dimension_numbers = #tpu.dot_dimension_numbers<[1], [0], [0], [1], [0, 0, 1, 1], [], []>} : vector<32x128xbf16>, vector<128x128xbf16>, vector<32x128xf32> -> vector<32x128xf32>
    %68 = arith.addf %62, %67 : vector<32x128xf32>
    %c32 = arith.constant 32 : index
    %c0_57 = arith.constant 0 : index
    %69 = vector.load %arg4[%c32, %c0_57] : memref<288x128xbf16, #tpu.memory_space<vmem>>, vector<32x128xbf16>
    %cst_58 = arith.constant dense<0.000000e+00> : vector<32x128xf32>
    %70 = tpu.matmul %69, %61, %cst_58 {dimension_numbers = #tpu.dot_dimension_numbers<[1], [0], [0], [1], [0, 0, 1, 1], [], []>} : vector<32x128xbf16>, vector<128x128xbf16>, vector<32x128xf32> -> vector<32x128xf32>
    %71 = arith.truncf %70 : vector<32x128xf32> to vector<32x128xbf16>
    %c128_59 = arith.constant 128 : index
    %c0_60 = arith.constant 0 : index
    %72 = vector.load %arg5[%c128_59, %c0_60] : memref<1152x128xbf16, #tpu.memory_space<vmem>>, vector<128x128xbf16>
    %cst_61 = arith.constant dense<0.000000e+00> : vector<32x128xf32>
    %73 = tpu.matmul %71, %72, %cst_61 {dimension_numbers = #tpu.dot_dimension_numbers<[1], [0], [0], [1], [0, 0, 1, 1], [], []>} : vector<32x128xbf16>, vector<128x128xbf16>, vector<32x128xf32> -> vector<32x128xf32>
    %74 = arith.addf %68, %73 : vector<32x128xf32>
    %c64 = arith.constant 64 : index
    %c0_62 = arith.constant 0 : index
    %75 = vector.load %arg4[%c64, %c0_62] : memref<288x128xbf16, #tpu.memory_space<vmem>>, vector<32x128xbf16>
    %cst_63 = arith.constant dense<0.000000e+00> : vector<32x128xf32>
    %76 = tpu.matmul %75, %61, %cst_63 {dimension_numbers = #tpu.dot_dimension_numbers<[1], [0], [0], [1], [0, 0, 1, 1], [], []>} : vector<32x128xbf16>, vector<128x128xbf16>, vector<32x128xf32> -> vector<32x128xf32>
    %77 = arith.truncf %76 : vector<32x128xf32> to vector<32x128xbf16>
    %c256_64 = arith.constant 256 : index
    %c0_65 = arith.constant 0 : index
    %78 = vector.load %arg5[%c256_64, %c0_65] : memref<1152x128xbf16, #tpu.memory_space<vmem>>, vector<128x128xbf16>
    %cst_66 = arith.constant dense<0.000000e+00> : vector<32x128xf32>
    %79 = tpu.matmul %77, %78, %cst_66 {dimension_numbers = #tpu.dot_dimension_numbers<[1], [0], [0], [1], [0, 0, 1, 1], [], []>} : vector<32x128xbf16>, vector<128x128xbf16>, vector<32x128xf32> -> vector<32x128xf32>
    %80 = arith.addf %74, %79 : vector<32x128xf32>
    %c96 = arith.constant 96 : index
    %c0_67 = arith.constant 0 : index
    %81 = vector.load %arg4[%c96, %c0_67] : memref<288x128xbf16, #tpu.memory_space<vmem>>, vector<32x128xbf16>
    %cst_68 = arith.constant dense<0.000000e+00> : vector<32x128xf32>
    %82 = tpu.matmul %81, %61, %cst_68 {dimension_numbers = #tpu.dot_dimension_numbers<[1], [0], [0], [1], [0, 0, 1, 1], [], []>} : vector<32x128xbf16>, vector<128x128xbf16>, vector<32x128xf32> -> vector<32x128xf32>
    %83 = arith.truncf %82 : vector<32x128xf32> to vector<32x128xbf16>
    %c384_69 = arith.constant 384 : index
    %c0_70 = arith.constant 0 : index
    %84 = vector.load %arg5[%c384_69, %c0_70] : memref<1152x128xbf16, #tpu.memory_space<vmem>>, vector<128x128xbf16>
    %cst_71 = arith.constant dense<0.000000e+00> : vector<32x128xf32>
    %85 = tpu.matmul %83, %84, %cst_71 {dimension_numbers = #tpu.dot_dimension_numbers<[1], [0], [0], [1], [0, 0, 1, 1], [], []>} : vector<32x128xbf16>, vector<128x128xbf16>, vector<32x128xf32> -> vector<32x128xf32>
    %86 = arith.addf %80, %85 : vector<32x128xf32>
    %c128_72 = arith.constant 128 : index
    %c0_73 = arith.constant 0 : index
    %87 = vector.load %arg4[%c128_72, %c0_73] : memref<288x128xbf16, #tpu.memory_space<vmem>>, vector<32x128xbf16>
    %cst_74 = arith.constant dense<0.000000e+00> : vector<32x128xf32>
    %88 = tpu.matmul %87, %61, %cst_74 {dimension_numbers = #tpu.dot_dimension_numbers<[1], [0], [0], [1], [0, 0, 1, 1], [], []>} : vector<32x128xbf16>, vector<128x128xbf16>, vector<32x128xf32> -> vector<32x128xf32>
    %89 = arith.truncf %88 : vector<32x128xf32> to vector<32x128xbf16>
    %c512_75 = arith.constant 512 : index
    %c0_76 = arith.constant 0 : index
    %90 = vector.load %arg5[%c512_75, %c0_76] : memref<1152x128xbf16, #tpu.memory_space<vmem>>, vector<128x128xbf16>
    %cst_77 = arith.constant dense<0.000000e+00> : vector<32x128xf32>
    %91 = tpu.matmul %89, %90, %cst_77 {dimension_numbers = #tpu.dot_dimension_numbers<[1], [0], [0], [1], [0, 0, 1, 1], [], []>} : vector<32x128xbf16>, vector<128x128xbf16>, vector<32x128xf32> -> vector<32x128xf32>
    %92 = arith.addf %86, %91 : vector<32x128xf32>
    %c160 = arith.constant 160 : index
    %c0_78 = arith.constant 0 : index
    %93 = vector.load %arg4[%c160, %c0_78] : memref<288x128xbf16, #tpu.memory_space<vmem>>, vector<32x128xbf16>
    %cst_79 = arith.constant dense<0.000000e+00> : vector<32x128xf32>
    %94 = tpu.matmul %93, %61, %cst_79 {dimension_numbers = #tpu.dot_dimension_numbers<[1], [0], [0], [1], [0, 0, 1, 1], [], []>} : vector<32x128xbf16>, vector<128x128xbf16>, vector<32x128xf32> -> vector<32x128xf32>
    %95 = arith.truncf %94 : vector<32x128xf32> to vector<32x128xbf16>
    %c640_80 = arith.constant 640 : index
    %c0_81 = arith.constant 0 : index
    %96 = vector.load %arg5[%c640_80, %c0_81] : memref<1152x128xbf16, #tpu.memory_space<vmem>>, vector<128x128xbf16>
    %cst_82 = arith.constant dense<0.000000e+00> : vector<32x128xf32>
    %97 = tpu.matmul %95, %96, %cst_82 {dimension_numbers = #tpu.dot_dimension_numbers<[1], [0], [0], [1], [0, 0, 1, 1], [], []>} : vector<32x128xbf16>, vector<128x128xbf16>, vector<32x128xf32> -> vector<32x128xf32>
    %98 = arith.addf %92, %97 : vector<32x128xf32>
    %c192 = arith.constant 192 : index
    %c0_83 = arith.constant 0 : index
    %99 = vector.load %arg4[%c192, %c0_83] : memref<288x128xbf16, #tpu.memory_space<vmem>>, vector<32x128xbf16>
    %cst_84 = arith.constant dense<0.000000e+00> : vector<32x128xf32>
    %100 = tpu.matmul %99, %61, %cst_84 {dimension_numbers = #tpu.dot_dimension_numbers<[1], [0], [0], [1], [0, 0, 1, 1], [], []>} : vector<32x128xbf16>, vector<128x128xbf16>, vector<32x128xf32> -> vector<32x128xf32>
    %101 = arith.truncf %100 : vector<32x128xf32> to vector<32x128xbf16>
    %c768_85 = arith.constant 768 : index
    %c0_86 = arith.constant 0 : index
    %102 = vector.load %arg5[%c768_85, %c0_86] : memref<1152x128xbf16, #tpu.memory_space<vmem>>, vector<128x128xbf16>
    %cst_87 = arith.constant dense<0.000000e+00> : vector<32x128xf32>
    %103 = tpu.matmul %101, %102, %cst_87 {dimension_numbers = #tpu.dot_dimension_numbers<[1], [0], [0], [1], [0, 0, 1, 1], [], []>} : vector<32x128xbf16>, vector<128x128xbf16>, vector<32x128xf32> -> vector<32x128xf32>
    %104 = arith.addf %98, %103 : vector<32x128xf32>
    %c224 = arith.constant 224 : index
    %c0_88 = arith.constant 0 : index
    %105 = vector.load %arg4[%c224, %c0_88] : memref<288x128xbf16, #tpu.memory_space<vmem>>, vector<32x128xbf16>
    %cst_89 = arith.constant dense<0.000000e+00> : vector<32x128xf32>
    %106 = tpu.matmul %105, %61, %cst_89 {dimension_numbers = #tpu.dot_dimension_numbers<[1], [0], [0], [1], [0, 0, 1, 1], [], []>} : vector<32x128xbf16>, vector<128x128xbf16>, vector<32x128xf32> -> vector<32x128xf32>
    %107 = arith.truncf %106 : vector<32x128xf32> to vector<32x128xbf16>
    %c896_90 = arith.constant 896 : index
    %c0_91 = arith.constant 0 : index
    %108 = vector.load %arg5[%c896_90, %c0_91] : memref<1152x128xbf16, #tpu.memory_space<vmem>>, vector<128x128xbf16>
    %cst_92 = arith.constant dense<0.000000e+00> : vector<32x128xf32>
    %109 = tpu.matmul %107, %108, %cst_92 {dimension_numbers = #tpu.dot_dimension_numbers<[1], [0], [0], [1], [0, 0, 1, 1], [], []>} : vector<32x128xbf16>, vector<128x128xbf16>, vector<32x128xf32> -> vector<32x128xf32>
    %110 = arith.addf %104, %109 : vector<32x128xf32>
    %c256_93 = arith.constant 256 : index
    %c0_94 = arith.constant 0 : index
    %111 = vector.load %arg4[%c256_93, %c0_94] : memref<288x128xbf16, #tpu.memory_space<vmem>>, vector<32x128xbf16>
    %cst_95 = arith.constant dense<0.000000e+00> : vector<32x128xf32>
    %112 = tpu.matmul %111, %61, %cst_95 {dimension_numbers = #tpu.dot_dimension_numbers<[1], [0], [0], [1], [0, 0, 1, 1], [], []>} : vector<32x128xbf16>, vector<128x128xbf16>, vector<32x128xf32> -> vector<32x128xf32>
    %113 = arith.truncf %112 : vector<32x128xf32> to vector<32x128xbf16>
    %c1024_96 = arith.constant 1024 : index
    %c0_97 = arith.constant 0 : index
    %114 = vector.load %arg5[%c1024_96, %c0_97] : memref<1152x128xbf16, #tpu.memory_space<vmem>>, vector<128x128xbf16>
    %cst_98 = arith.constant dense<0.000000e+00> : vector<32x128xf32>
    %115 = tpu.matmul %113, %114, %cst_98 {dimension_numbers = #tpu.dot_dimension_numbers<[1], [0], [0], [1], [0, 0, 1, 1], [], []>} : vector<32x128xbf16>, vector<128x128xbf16>, vector<32x128xf32> -> vector<32x128xf32>
    %116 = arith.addf %110, %115 : vector<32x128xf32>
    %c0_99 = arith.constant 0 : index
    %c0_100 = arith.constant 0 : index
    %117 = vector.load %arg6[%c0_99, %c0_100] : memref<1x128xf32, #tpu.memory_space<vmem>>, vector<1x128xf32>
    %118 = vector.broadcast %117 : vector<1x128xf32> to vector<32x128xf32>
    %119 = arith.addf %116, %118 : vector<32x128xf32>
    %cst_101 = arith.constant 0.000000e+00 : f32
    %120 = vector.broadcast %cst_101 : f32 to vector<32x128xf32>
    %121 = arith.maximumf %119, %120 : vector<32x128xf32>
    %122 = arith.truncf %121 : vector<32x128xf32> to vector<32x128xbf16>
    %cst_102 = arith.constant 0.000000e+00 : f32
    %123 = vector.broadcast %cst_102 : f32 to vector<16x128xf32>
    %c0_103 = arith.constant 0 : index
    %c0_104 = arith.constant 0 : index
    %124 = vector.load %arg7[%c0_103, %c0_104] : memref<144x32xbf16, #tpu.memory_space<vmem>>, vector<16x32xbf16>
    %cst_105 = arith.constant dense<0.000000e+00> : vector<16x128xf32>
    %125 = tpu.matmul %124, %122, %cst_105 {dimension_numbers = #tpu.dot_dimension_numbers<[1], [0], [0], [1], [0, 0, 1, 1], [], []>} : vector<16x32xbf16>, vector<32x128xbf16>, vector<16x128xf32> -> vector<16x128xf32>
    %126 = arith.truncf %125 : vector<16x128xf32> to vector<16x128xbf16>
    %c0_106 = arith.constant 0 : index
    %c0_107 = arith.constant 0 : index
    %127 = vector.load %arg8[%c0_106, %c0_107] : memref<1152x128xbf16, #tpu.memory_space<vmem>>, vector<128x128xbf16>
    %cst_108 = arith.constant dense<0.000000e+00> : vector<16x128xf32>
    %128 = tpu.matmul %126, %127, %cst_108 {dimension_numbers = #tpu.dot_dimension_numbers<[1], [0], [0], [1], [0, 0, 1, 1], [], []>} : vector<16x128xbf16>, vector<128x128xbf16>, vector<16x128xf32> -> vector<16x128xf32>
    %129 = arith.addf %123, %128 : vector<16x128xf32>
    %c16 = arith.constant 16 : index
    %c0_109 = arith.constant 0 : index
    %130 = vector.load %arg7[%c16, %c0_109] : memref<144x32xbf16, #tpu.memory_space<vmem>>, vector<16x32xbf16>
    %cst_110 = arith.constant dense<0.000000e+00> : vector<16x128xf32>
    %131 = tpu.matmul %130, %122, %cst_110 {dimension_numbers = #tpu.dot_dimension_numbers<[1], [0], [0], [1], [0, 0, 1, 1], [], []>} : vector<16x32xbf16>, vector<32x128xbf16>, vector<16x128xf32> -> vector<16x128xf32>
    %132 = arith.truncf %131 : vector<16x128xf32> to vector<16x128xbf16>
    %c128_111 = arith.constant 128 : index
    %c0_112 = arith.constant 0 : index
    %133 = vector.load %arg8[%c128_111, %c0_112] : memref<1152x128xbf16, #tpu.memory_space<vmem>>, vector<128x128xbf16>
    %cst_113 = arith.constant dense<0.000000e+00> : vector<16x128xf32>
    %134 = tpu.matmul %132, %133, %cst_113 {dimension_numbers = #tpu.dot_dimension_numbers<[1], [0], [0], [1], [0, 0, 1, 1], [], []>} : vector<16x128xbf16>, vector<128x128xbf16>, vector<16x128xf32> -> vector<16x128xf32>
    %135 = arith.addf %129, %134 : vector<16x128xf32>
    %c32_114 = arith.constant 32 : index
    %c0_115 = arith.constant 0 : index
    %136 = vector.load %arg7[%c32_114, %c0_115] : memref<144x32xbf16, #tpu.memory_space<vmem>>, vector<16x32xbf16>
    %cst_116 = arith.constant dense<0.000000e+00> : vector<16x128xf32>
    %137 = tpu.matmul %136, %122, %cst_116 {dimension_numbers = #tpu.dot_dimension_numbers<[1], [0], [0], [1], [0, 0, 1, 1], [], []>} : vector<16x32xbf16>, vector<32x128xbf16>, vector<16x128xf32> -> vector<16x128xf32>
    %138 = arith.truncf %137 : vector<16x128xf32> to vector<16x128xbf16>
    %c256_117 = arith.constant 256 : index
    %c0_118 = arith.constant 0 : index
    %139 = vector.load %arg8[%c256_117, %c0_118] : memref<1152x128xbf16, #tpu.memory_space<vmem>>, vector<128x128xbf16>
    %cst_119 = arith.constant dense<0.000000e+00> : vector<16x128xf32>
    %140 = tpu.matmul %138, %139, %cst_119 {dimension_numbers = #tpu.dot_dimension_numbers<[1], [0], [0], [1], [0, 0, 1, 1], [], []>} : vector<16x128xbf16>, vector<128x128xbf16>, vector<16x128xf32> -> vector<16x128xf32>
    %141 = arith.addf %135, %140 : vector<16x128xf32>
    %c48 = arith.constant 48 : index
    %c0_120 = arith.constant 0 : index
    %142 = vector.load %arg7[%c48, %c0_120] : memref<144x32xbf16, #tpu.memory_space<vmem>>, vector<16x32xbf16>
    %cst_121 = arith.constant dense<0.000000e+00> : vector<16x128xf32>
    %143 = tpu.matmul %142, %122, %cst_121 {dimension_numbers = #tpu.dot_dimension_numbers<[1], [0], [0], [1], [0, 0, 1, 1], [], []>} : vector<16x32xbf16>, vector<32x128xbf16>, vector<16x128xf32> -> vector<16x128xf32>
    %144 = arith.truncf %143 : vector<16x128xf32> to vector<16x128xbf16>
    %c384_122 = arith.constant 384 : index
    %c0_123 = arith.constant 0 : index
    %145 = vector.load %arg8[%c384_122, %c0_123] : memref<1152x128xbf16, #tpu.memory_space<vmem>>, vector<128x128xbf16>
    %cst_124 = arith.constant dense<0.000000e+00> : vector<16x128xf32>
    %146 = tpu.matmul %144, %145, %cst_124 {dimension_numbers = #tpu.dot_dimension_numbers<[1], [0], [0], [1], [0, 0, 1, 1], [], []>} : vector<16x128xbf16>, vector<128x128xbf16>, vector<16x128xf32> -> vector<16x128xf32>
    %147 = arith.addf %141, %146 : vector<16x128xf32>
    %c64_125 = arith.constant 64 : index
    %c0_126 = arith.constant 0 : index
    %148 = vector.load %arg7[%c64_125, %c0_126] : memref<144x32xbf16, #tpu.memory_space<vmem>>, vector<16x32xbf16>
    %cst_127 = arith.constant dense<0.000000e+00> : vector<16x128xf32>
    %149 = tpu.matmul %148, %122, %cst_127 {dimension_numbers = #tpu.dot_dimension_numbers<[1], [0], [0], [1], [0, 0, 1, 1], [], []>} : vector<16x32xbf16>, vector<32x128xbf16>, vector<16x128xf32> -> vector<16x128xf32>
    %150 = arith.truncf %149 : vector<16x128xf32> to vector<16x128xbf16>
    %c512_128 = arith.constant 512 : index
    %c0_129 = arith.constant 0 : index
    %151 = vector.load %arg8[%c512_128, %c0_129] : memref<1152x128xbf16, #tpu.memory_space<vmem>>, vector<128x128xbf16>
    %cst_130 = arith.constant dense<0.000000e+00> : vector<16x128xf32>
    %152 = tpu.matmul %150, %151, %cst_130 {dimension_numbers = #tpu.dot_dimension_numbers<[1], [0], [0], [1], [0, 0, 1, 1], [], []>} : vector<16x128xbf16>, vector<128x128xbf16>, vector<16x128xf32> -> vector<16x128xf32>
    %153 = arith.addf %147, %152 : vector<16x128xf32>
    %c80 = arith.constant 80 : index
    %c0_131 = arith.constant 0 : index
    %154 = vector.load %arg7[%c80, %c0_131] : memref<144x32xbf16, #tpu.memory_space<vmem>>, vector<16x32xbf16>
    %cst_132 = arith.constant dense<0.000000e+00> : vector<16x128xf32>
    %155 = tpu.matmul %154, %122, %cst_132 {dimension_numbers = #tpu.dot_dimension_numbers<[1], [0], [0], [1], [0, 0, 1, 1], [], []>} : vector<16x32xbf16>, vector<32x128xbf16>, vector<16x128xf32> -> vector<16x128xf32>
    %156 = arith.truncf %155 : vector<16x128xf32> to vector<16x128xbf16>
    %c640_133 = arith.constant 640 : index
    %c0_134 = arith.constant 0 : index
    %157 = vector.load %arg8[%c640_133, %c0_134] : memref<1152x128xbf16, #tpu.memory_space<vmem>>, vector<128x128xbf16>
    %cst_135 = arith.constant dense<0.000000e+00> : vector<16x128xf32>
    %158 = tpu.matmul %156, %157, %cst_135 {dimension_numbers = #tpu.dot_dimension_numbers<[1], [0], [0], [1], [0, 0, 1, 1], [], []>} : vector<16x128xbf16>, vector<128x128xbf16>, vector<16x128xf32> -> vector<16x128xf32>
    %159 = arith.addf %153, %158 : vector<16x128xf32>
    %c96_136 = arith.constant 96 : index
    %c0_137 = arith.constant 0 : index
    %160 = vector.load %arg7[%c96_136, %c0_137] : memref<144x32xbf16, #tpu.memory_space<vmem>>, vector<16x32xbf16>
    %cst_138 = arith.constant dense<0.000000e+00> : vector<16x128xf32>
    %161 = tpu.matmul %160, %122, %cst_138 {dimension_numbers = #tpu.dot_dimension_numbers<[1], [0], [0], [1], [0, 0, 1, 1], [], []>} : vector<16x32xbf16>, vector<32x128xbf16>, vector<16x128xf32> -> vector<16x128xf32>
    %162 = arith.truncf %161 : vector<16x128xf32> to vector<16x128xbf16>
    %c768_139 = arith.constant 768 : index
    %c0_140 = arith.constant 0 : index
    %163 = vector.load %arg8[%c768_139, %c0_140] : memref<1152x128xbf16, #tpu.memory_space<vmem>>, vector<128x128xbf16>
    %cst_141 = arith.constant dense<0.000000e+00> : vector<16x128xf32>
    %164 = tpu.matmul %162, %163, %cst_141 {dimension_numbers = #tpu.dot_dimension_numbers<[1], [0], [0], [1], [0, 0, 1, 1], [], []>} : vector<16x128xbf16>, vector<128x128xbf16>, vector<16x128xf32> -> vector<16x128xf32>
    %165 = arith.addf %159, %164 : vector<16x128xf32>
    %c112 = arith.constant 112 : index
    %c0_142 = arith.constant 0 : index
    %166 = vector.load %arg7[%c112, %c0_142] : memref<144x32xbf16, #tpu.memory_space<vmem>>, vector<16x32xbf16>
    %cst_143 = arith.constant dense<0.000000e+00> : vector<16x128xf32>
    %167 = tpu.matmul %166, %122, %cst_143 {dimension_numbers = #tpu.dot_dimension_numbers<[1], [0], [0], [1], [0, 0, 1, 1], [], []>} : vector<16x32xbf16>, vector<32x128xbf16>, vector<16x128xf32> -> vector<16x128xf32>
    %168 = arith.truncf %167 : vector<16x128xf32> to vector<16x128xbf16>
    %c896_144 = arith.constant 896 : index
    %c0_145 = arith.constant 0 : index
    %169 = vector.load %arg8[%c896_144, %c0_145] : memref<1152x128xbf16, #tpu.memory_space<vmem>>, vector<128x128xbf16>
    %cst_146 = arith.constant dense<0.000000e+00> : vector<16x128xf32>
    %170 = tpu.matmul %168, %169, %cst_146 {dimension_numbers = #tpu.dot_dimension_numbers<[1], [0], [0], [1], [0, 0, 1, 1], [], []>} : vector<16x128xbf16>, vector<128x128xbf16>, vector<16x128xf32> -> vector<16x128xf32>
    %171 = arith.addf %165, %170 : vector<16x128xf32>
    %c128_147 = arith.constant 128 : index
    %c0_148 = arith.constant 0 : index
    %172 = vector.load %arg7[%c128_147, %c0_148] : memref<144x32xbf16, #tpu.memory_space<vmem>>, vector<16x32xbf16>
    %cst_149 = arith.constant dense<0.000000e+00> : vector<16x128xf32>
    %173 = tpu.matmul %172, %122, %cst_149 {dimension_numbers = #tpu.dot_dimension_numbers<[1], [0], [0], [1], [0, 0, 1, 1], [], []>} : vector<16x32xbf16>, vector<32x128xbf16>, vector<16x128xf32> -> vector<16x128xf32>
    %174 = arith.truncf %173 : vector<16x128xf32> to vector<16x128xbf16>
    %c1024_150 = arith.constant 1024 : index
    %c0_151 = arith.constant 0 : index
    %175 = vector.load %arg8[%c1024_150, %c0_151] : memref<1152x128xbf16, #tpu.memory_space<vmem>>, vector<128x128xbf16>
    %cst_152 = arith.constant dense<0.000000e+00> : vector<16x128xf32>
    %176 = tpu.matmul %174, %175, %cst_152 {dimension_numbers = #tpu.dot_dimension_numbers<[1], [0], [0], [1], [0, 0, 1, 1], [], []>} : vector<16x128xbf16>, vector<128x128xbf16>, vector<16x128xf32> -> vector<16x128xf32>
    %177 = arith.addf %171, %176 : vector<16x128xf32>
    %c0_153 = arith.constant 0 : index
    %c0_154 = arith.constant 0 : index
    %178 = vector.load %arg9[%c0_153, %c0_154] : memref<1x128xf32, #tpu.memory_space<vmem>>, vector<1x128xf32>
    %179 = vector.broadcast %178 : vector<1x128xf32> to vector<16x128xf32>
    %180 = arith.addf %177, %179 : vector<16x128xf32>
    %cst_155 = arith.constant 0.000000e+00 : f32
    %181 = vector.broadcast %cst_155 : f32 to vector<16x128xf32>
    %182 = arith.maximumf %180, %181 : vector<16x128xf32>
    %183 = arith.truncf %182 : vector<16x128xf32> to vector<16x128xbf16>
    %cst_156 = arith.constant 0.000000e+00 : f32
    %184 = vector.broadcast %cst_156 : f32 to vector<16x128xf32>
    %c0_157 = arith.constant 0 : index
    %c0_158 = arith.constant 0 : index
    %185 = vector.load %arg10[%c0_157, %c0_158] : memref<144x16xbf16, #tpu.memory_space<vmem>>, vector<16x16xbf16>
    %cst_159 = arith.constant dense<0.000000e+00> : vector<16x128xf32>
    %186 = tpu.matmul %185, %183, %cst_159 {dimension_numbers = #tpu.dot_dimension_numbers<[1], [0], [0], [1], [0, 0, 1, 1], [], []>} : vector<16x16xbf16>, vector<16x128xbf16>, vector<16x128xf32> -> vector<16x128xf32>
    %187 = arith.truncf %186 : vector<16x128xf32> to vector<16x128xbf16>
    %c0_160 = arith.constant 0 : index
    %c0_161 = arith.constant 0 : index
    %188 = vector.load %arg11[%c0_160, %c0_161] : memref<1152x128xbf16, #tpu.memory_space<vmem>>, vector<128x128xbf16>
    %cst_162 = arith.constant dense<0.000000e+00> : vector<16x128xf32>
    %189 = tpu.matmul %187, %188, %cst_162 {dimension_numbers = #tpu.dot_dimension_numbers<[1], [0], [0], [1], [0, 0, 1, 1], [], []>} : vector<16x128xbf16>, vector<128x128xbf16>, vector<16x128xf32> -> vector<16x128xf32>
    %190 = arith.addf %184, %189 : vector<16x128xf32>
    %c16_163 = arith.constant 16 : index
    %c0_164 = arith.constant 0 : index
    %191 = vector.load %arg10[%c16_163, %c0_164] : memref<144x16xbf16, #tpu.memory_space<vmem>>, vector<16x16xbf16>
    %cst_165 = arith.constant dense<0.000000e+00> : vector<16x128xf32>
    %192 = tpu.matmul %191, %183, %cst_165 {dimension_numbers = #tpu.dot_dimension_numbers<[1], [0], [0], [1], [0, 0, 1, 1], [], []>} : vector<16x16xbf16>, vector<16x128xbf16>, vector<16x128xf32> -> vector<16x128xf32>
    %193 = arith.truncf %192 : vector<16x128xf32> to vector<16x128xbf16>
    %c128_166 = arith.constant 128 : index
    %c0_167 = arith.constant 0 : index
    %194 = vector.load %arg11[%c128_166, %c0_167] : memref<1152x128xbf16, #tpu.memory_space<vmem>>, vector<128x128xbf16>
    %cst_168 = arith.constant dense<0.000000e+00> : vector<16x128xf32>
    %195 = tpu.matmul %193, %194, %cst_168 {dimension_numbers = #tpu.dot_dimension_numbers<[1], [0], [0], [1], [0, 0, 1, 1], [], []>} : vector<16x128xbf16>, vector<128x128xbf16>, vector<16x128xf32> -> vector<16x128xf32>
    %196 = arith.addf %190, %195 : vector<16x128xf32>
    %c32_169 = arith.constant 32 : index
    %c0_170 = arith.constant 0 : index
    %197 = vector.load %arg10[%c32_169, %c0_170] : memref<144x16xbf16, #tpu.memory_space<vmem>>, vector<16x16xbf16>
    %cst_171 = arith.constant dense<0.000000e+00> : vector<16x128xf32>
    %198 = tpu.matmul %197, %183, %cst_171 {dimension_numbers = #tpu.dot_dimension_numbers<[1], [0], [0], [1], [0, 0, 1, 1], [], []>} : vector<16x16xbf16>, vector<16x128xbf16>, vector<16x128xf32> -> vector<16x128xf32>
    %199 = arith.truncf %198 : vector<16x128xf32> to vector<16x128xbf16>
    %c256_172 = arith.constant 256 : index
    %c0_173 = arith.constant 0 : index
    %200 = vector.load %arg11[%c256_172, %c0_173] : memref<1152x128xbf16, #tpu.memory_space<vmem>>, vector<128x128xbf16>
    %cst_174 = arith.constant dense<0.000000e+00> : vector<16x128xf32>
    %201 = tpu.matmul %199, %200, %cst_174 {dimension_numbers = #tpu.dot_dimension_numbers<[1], [0], [0], [1], [0, 0, 1, 1], [], []>} : vector<16x128xbf16>, vector<128x128xbf16>, vector<16x128xf32> -> vector<16x128xf32>
    %202 = arith.addf %196, %201 : vector<16x128xf32>
    %c48_175 = arith.constant 48 : index
    %c0_176 = arith.constant 0 : index
    %203 = vector.load %arg10[%c48_175, %c0_176] : memref<144x16xbf16, #tpu.memory_space<vmem>>, vector<16x16xbf16>
    %cst_177 = arith.constant dense<0.000000e+00> : vector<16x128xf32>
    %204 = tpu.matmul %203, %183, %cst_177 {dimension_numbers = #tpu.dot_dimension_numbers<[1], [0], [0], [1], [0, 0, 1, 1], [], []>} : vector<16x16xbf16>, vector<16x128xbf16>, vector<16x128xf32> -> vector<16x128xf32>
    %205 = arith.truncf %204 : vector<16x128xf32> to vector<16x128xbf16>
    %c384_178 = arith.constant 384 : index
    %c0_179 = arith.constant 0 : index
    %206 = vector.load %arg11[%c384_178, %c0_179] : memref<1152x128xbf16, #tpu.memory_space<vmem>>, vector<128x128xbf16>
    %cst_180 = arith.constant dense<0.000000e+00> : vector<16x128xf32>
    %207 = tpu.matmul %205, %206, %cst_180 {dimension_numbers = #tpu.dot_dimension_numbers<[1], [0], [0], [1], [0, 0, 1, 1], [], []>} : vector<16x128xbf16>, vector<128x128xbf16>, vector<16x128xf32> -> vector<16x128xf32>
    %208 = arith.addf %202, %207 : vector<16x128xf32>
    %c64_181 = arith.constant 64 : index
    %c0_182 = arith.constant 0 : index
    %209 = vector.load %arg10[%c64_181, %c0_182] : memref<144x16xbf16, #tpu.memory_space<vmem>>, vector<16x16xbf16>
    %cst_183 = arith.constant dense<0.000000e+00> : vector<16x128xf32>
    %210 = tpu.matmul %209, %183, %cst_183 {dimension_numbers = #tpu.dot_dimension_numbers<[1], [0], [0], [1], [0, 0, 1, 1], [], []>} : vector<16x16xbf16>, vector<16x128xbf16>, vector<16x128xf32> -> vector<16x128xf32>
    %211 = arith.truncf %210 : vector<16x128xf32> to vector<16x128xbf16>
    %c512_184 = arith.constant 512 : index
    %c0_185 = arith.constant 0 : index
    %212 = vector.load %arg11[%c512_184, %c0_185] : memref<1152x128xbf16, #tpu.memory_space<vmem>>, vector<128x128xbf16>
    %cst_186 = arith.constant dense<0.000000e+00> : vector<16x128xf32>
    %213 = tpu.matmul %211, %212, %cst_186 {dimension_numbers = #tpu.dot_dimension_numbers<[1], [0], [0], [1], [0, 0, 1, 1], [], []>} : vector<16x128xbf16>, vector<128x128xbf16>, vector<16x128xf32> -> vector<16x128xf32>
    %214 = arith.addf %208, %213 : vector<16x128xf32>
    %c80_187 = arith.constant 80 : index
    %c0_188 = arith.constant 0 : index
    %215 = vector.load %arg10[%c80_187, %c0_188] : memref<144x16xbf16, #tpu.memory_space<vmem>>, vector<16x16xbf16>
    %cst_189 = arith.constant dense<0.000000e+00> : vector<16x128xf32>
    %216 = tpu.matmul %215, %183, %cst_189 {dimension_numbers = #tpu.dot_dimension_numbers<[1], [0], [0], [1], [0, 0, 1, 1], [], []>} : vector<16x16xbf16>, vector<16x128xbf16>, vector<16x128xf32> -> vector<16x128xf32>
    %217 = arith.truncf %216 : vector<16x128xf32> to vector<16x128xbf16>
    %c640_190 = arith.constant 640 : index
    %c0_191 = arith.constant 0 : index
    %218 = vector.load %arg11[%c640_190, %c0_191] : memref<1152x128xbf16, #tpu.memory_space<vmem>>, vector<128x128xbf16>
    %cst_192 = arith.constant dense<0.000000e+00> : vector<16x128xf32>
    %219 = tpu.matmul %217, %218, %cst_192 {dimension_numbers = #tpu.dot_dimension_numbers<[1], [0], [0], [1], [0, 0, 1, 1], [], []>} : vector<16x128xbf16>, vector<128x128xbf16>, vector<16x128xf32> -> vector<16x128xf32>
    %220 = arith.addf %214, %219 : vector<16x128xf32>
    %c96_193 = arith.constant 96 : index
    %c0_194 = arith.constant 0 : index
    %221 = vector.load %arg10[%c96_193, %c0_194] : memref<144x16xbf16, #tpu.memory_space<vmem>>, vector<16x16xbf16>
    %cst_195 = arith.constant dense<0.000000e+00> : vector<16x128xf32>
    %222 = tpu.matmul %221, %183, %cst_195 {dimension_numbers = #tpu.dot_dimension_numbers<[1], [0], [0], [1], [0, 0, 1, 1], [], []>} : vector<16x16xbf16>, vector<16x128xbf16>, vector<16x128xf32> -> vector<16x128xf32>
    %223 = arith.truncf %222 : vector<16x128xf32> to vector<16x128xbf16>
    %c768_196 = arith.constant 768 : index
    %c0_197 = arith.constant 0 : index
    %224 = vector.load %arg11[%c768_196, %c0_197] : memref<1152x128xbf16, #tpu.memory_space<vmem>>, vector<128x128xbf16>
    %cst_198 = arith.constant dense<0.000000e+00> : vector<16x128xf32>
    %225 = tpu.matmul %223, %224, %cst_198 {dimension_numbers = #tpu.dot_dimension_numbers<[1], [0], [0], [1], [0, 0, 1, 1], [], []>} : vector<16x128xbf16>, vector<128x128xbf16>, vector<16x128xf32> -> vector<16x128xf32>
    %226 = arith.addf %220, %225 : vector<16x128xf32>
    %c112_199 = arith.constant 112 : index
    %c0_200 = arith.constant 0 : index
    %227 = vector.load %arg10[%c112_199, %c0_200] : memref<144x16xbf16, #tpu.memory_space<vmem>>, vector<16x16xbf16>
    %cst_201 = arith.constant dense<0.000000e+00> : vector<16x128xf32>
    %228 = tpu.matmul %227, %183, %cst_201 {dimension_numbers = #tpu.dot_dimension_numbers<[1], [0], [0], [1], [0, 0, 1, 1], [], []>} : vector<16x16xbf16>, vector<16x128xbf16>, vector<16x128xf32> -> vector<16x128xf32>
    %229 = arith.truncf %228 : vector<16x128xf32> to vector<16x128xbf16>
    %c896_202 = arith.constant 896 : index
    %c0_203 = arith.constant 0 : index
    %230 = vector.load %arg11[%c896_202, %c0_203] : memref<1152x128xbf16, #tpu.memory_space<vmem>>, vector<128x128xbf16>
    %cst_204 = arith.constant dense<0.000000e+00> : vector<16x128xf32>
    %231 = tpu.matmul %229, %230, %cst_204 {dimension_numbers = #tpu.dot_dimension_numbers<[1], [0], [0], [1], [0, 0, 1, 1], [], []>} : vector<16x128xbf16>, vector<128x128xbf16>, vector<16x128xf32> -> vector<16x128xf32>
    %232 = arith.addf %226, %231 : vector<16x128xf32>
    %c128_205 = arith.constant 128 : index
    %c0_206 = arith.constant 0 : index
    %233 = vector.load %arg10[%c128_205, %c0_206] : memref<144x16xbf16, #tpu.memory_space<vmem>>, vector<16x16xbf16>
    %cst_207 = arith.constant dense<0.000000e+00> : vector<16x128xf32>
    %234 = tpu.matmul %233, %183, %cst_207 {dimension_numbers = #tpu.dot_dimension_numbers<[1], [0], [0], [1], [0, 0, 1, 1], [], []>} : vector<16x16xbf16>, vector<16x128xbf16>, vector<16x128xf32> -> vector<16x128xf32>
    %235 = arith.truncf %234 : vector<16x128xf32> to vector<16x128xbf16>
    %c1024_208 = arith.constant 1024 : index
    %c0_209 = arith.constant 0 : index
    %236 = vector.load %arg11[%c1024_208, %c0_209] : memref<1152x128xbf16, #tpu.memory_space<vmem>>, vector<128x128xbf16>
    %cst_210 = arith.constant dense<0.000000e+00> : vector<16x128xf32>
    %237 = tpu.matmul %235, %236, %cst_210 {dimension_numbers = #tpu.dot_dimension_numbers<[1], [0], [0], [1], [0, 0, 1, 1], [], []>} : vector<16x128xbf16>, vector<128x128xbf16>, vector<16x128xf32> -> vector<16x128xf32>
    %238 = arith.addf %232, %237 : vector<16x128xf32>
    %c0_211 = arith.constant 0 : index
    %c0_212 = arith.constant 0 : index
    %239 = vector.load %arg12[%c0_211, %c0_212] : memref<1x128xf32, #tpu.memory_space<vmem>>, vector<1x128xf32>
    %240 = vector.broadcast %239 : vector<1x128xf32> to vector<16x128xf32>
    %241 = arith.addf %238, %240 : vector<16x128xf32>
    %cst_213 = arith.constant 0.000000e+00 : f32
    %242 = vector.broadcast %cst_213 : f32 to vector<16x128xf32>
    %243 = arith.maximumf %241, %242 : vector<16x128xf32>
    %244 = arith.truncf %243 : vector<16x128xf32> to vector<16x128xbf16>
    %c0_214 = arith.constant 0 : index
    %c0_215 = arith.constant 0 : index
    %245 = vector.load %arg13[%c0_214, %c0_215] : memref<128x128xbf16, #tpu.memory_space<vmem>>, vector<128x128xbf16>
    %cst_216 = arith.constant dense<0.000000e+00> : vector<16x128xf32>
    %246 = tpu.matmul %244, %245, %cst_216 {dimension_numbers = #tpu.dot_dimension_numbers<[1], [0], [0], [1], [0, 0, 1, 1], [], []>} : vector<16x128xbf16>, vector<128x128xbf16>, vector<16x128xf32> -> vector<16x128xf32>
    %c0_217 = arith.constant 0 : index
    %c0_218 = arith.constant 0 : index
    %247 = vector.load %arg14[%c0_217, %c0_218] : memref<1x128xf32, #tpu.memory_space<vmem>>, vector<1x128xf32>
    %248 = vector.broadcast %247 : vector<1x128xf32> to vector<16x128xf32>
    %249 = arith.addf %246, %248 : vector<16x128xf32>
    %c0_219 = arith.constant 0 : index
    %c0_220 = arith.constant 0 : index
    %250 = vector.load %arg23[%c0_219, %c0_220] : memref<16x128xf32, #tpu.memory_space<vmem>>, vector<16x128xf32>
    tpu.vector_store %arg23[%c0_219, %c0_220], %249 {strides = array<i32>} : memref<16x128xf32, #tpu.memory_space<vmem>>, vector<16x128xf32>,
    %cst_221 = arith.constant 0.000000e+00 : f32
    %251 = vector.broadcast %cst_221 : f32 to vector<16x256xf32>
    %c0_222 = arith.constant 0 : index
    %c0_223 = arith.constant 0 : index
    %252 = vector.load %arg15[%c0_222, %c0_223] : memref<64x16xbf16, #tpu.memory_space<vmem>>, vector<16x16xbf16>
    %cst_224 = arith.constant dense<0.000000e+00> : vector<16x128xf32>
    %253 = tpu.matmul %252, %183, %cst_224 {dimension_numbers = #tpu.dot_dimension_numbers<[1], [0], [0], [1], [0, 0, 1, 1], [], []>} : vector<16x16xbf16>, vector<16x128xbf16>, vector<16x128xf32> -> vector<16x128xf32>
    %254 = arith.truncf %253 : vector<16x128xf32> to vector<16x128xbf16>
    %c0_225 = arith.constant 0 : index
    %c0_226 = arith.constant 0 : index
    %255 = vector.load %arg16[%c0_225, %c0_226] : memref<512x256xbf16, #tpu.memory_space<vmem>>, vector<128x256xbf16>
    %cst_227 = arith.constant dense<0.000000e+00> : vector<16x256xf32>
    %256 = tpu.matmul %254, %255, %cst_227 {dimension_numbers = #tpu.dot_dimension_numbers<[1], [0], [0], [1], [0, 0, 1, 1], [], []>} : vector<16x128xbf16>, vector<128x256xbf16>, vector<16x256xf32> -> vector<16x256xf32>
    %257 = arith.addf %251, %256 : vector<16x256xf32>
    %c16_228 = arith.constant 16 : index
    %c0_229 = arith.constant 0 : index
    %258 = vector.load %arg15[%c16_228, %c0_229] : memref<64x16xbf16, #tpu.memory_space<vmem>>, vector<16x16xbf16>
    %cst_230 = arith.constant dense<0.000000e+00> : vector<16x128xf32>
    %259 = tpu.matmul %258, %183, %cst_230 {dimension_numbers = #tpu.dot_dimension_numbers<[1], [0], [0], [1], [0, 0, 1, 1], [], []>} : vector<16x16xbf16>, vector<16x128xbf16>, vector<16x128xf32> -> vector<16x128xf32>
    %260 = arith.truncf %259 : vector<16x128xf32> to vector<16x128xbf16>
    %c128_231 = arith.constant 128 : index
    %c0_232 = arith.constant 0 : index
    %261 = vector.load %arg16[%c128_231, %c0_232] : memref<512x256xbf16, #tpu.memory_space<vmem>>, vector<128x256xbf16>
    %cst_233 = arith.constant dense<0.000000e+00> : vector<16x256xf32>
    %262 = tpu.matmul %260, %261, %cst_233 {dimension_numbers = #tpu.dot_dimension_numbers<[1], [0], [0], [1], [0, 0, 1, 1], [], []>} : vector<16x128xbf16>, vector<128x256xbf16>, vector<16x256xf32> -> vector<16x256xf32>
    %263 = arith.addf %257, %262 : vector<16x256xf32>
    %c32_234 = arith.constant 32 : index
    %c0_235 = arith.constant 0 : index
    %264 = vector.load %arg15[%c32_234, %c0_235] : memref<64x16xbf16, #tpu.memory_space<vmem>>, vector<16x16xbf16>
    %cst_236 = arith.constant dense<0.000000e+00> : vector<16x128xf32>
    %265 = tpu.matmul %264, %183, %cst_236 {dimension_numbers = #tpu.dot_dimension_numbers<[1], [0], [0], [1], [0, 0, 1, 1], [], []>} : vector<16x16xbf16>, vector<16x128xbf16>, vector<16x128xf32> -> vector<16x128xf32>
    %266 = arith.truncf %265 : vector<16x128xf32> to vector<16x128xbf16>
    %c256_237 = arith.constant 256 : index
    %c0_238 = arith.constant 0 : index
    %267 = vector.load %arg16[%c256_237, %c0_238] : memref<512x256xbf16, #tpu.memory_space<vmem>>, vector<128x256xbf16>
    %cst_239 = arith.constant dense<0.000000e+00> : vector<16x256xf32>
    %268 = tpu.matmul %266, %267, %cst_239 {dimension_numbers = #tpu.dot_dimension_numbers<[1], [0], [0], [1], [0, 0, 1, 1], [], []>} : vector<16x128xbf16>, vector<128x256xbf16>, vector<16x256xf32> -> vector<16x256xf32>
    %269 = arith.addf %263, %268 : vector<16x256xf32>
    %c48_240 = arith.constant 48 : index
    %c0_241 = arith.constant 0 : index
    %270 = vector.load %arg15[%c48_240, %c0_241] : memref<64x16xbf16, #tpu.memory_space<vmem>>, vector<16x16xbf16>
    %cst_242 = arith.constant dense<0.000000e+00> : vector<16x128xf32>
    %271 = tpu.matmul %270, %183, %cst_242 {dimension_numbers = #tpu.dot_dimension_numbers<[1], [0], [0], [1], [0, 0, 1, 1], [], []>} : vector<16x16xbf16>, vector<16x128xbf16>, vector<16x128xf32> -> vector<16x128xf32>
    %272 = arith.truncf %271 : vector<16x128xf32> to vector<16x128xbf16>
    %c384_243 = arith.constant 384 : index
    %c0_244 = arith.constant 0 : index
    %273 = vector.load %arg16[%c384_243, %c0_244] : memref<512x256xbf16, #tpu.memory_space<vmem>>, vector<128x256xbf16>
    %cst_245 = arith.constant dense<0.000000e+00> : vector<16x256xf32>
    %274 = tpu.matmul %272, %273, %cst_245 {dimension_numbers = #tpu.dot_dimension_numbers<[1], [0], [0], [1], [0, 0, 1, 1], [], []>} : vector<16x128xbf16>, vector<128x256xbf16>, vector<16x256xf32> -> vector<16x256xf32>
    %275 = arith.addf %269, %274 : vector<16x256xf32>
    %c0_246 = arith.constant 0 : index
    %c0_247 = arith.constant 0 : index
    %276 = vector.load %arg17[%c0_246, %c0_247] : memref<1x256xf32, #tpu.memory_space<vmem>>, vector<1x256xf32>
    %277 = vector.broadcast %276 : vector<1x256xf32> to vector<16x256xf32>
    %278 = arith.addf %275, %277 : vector<16x256xf32>
    %cst_248 = arith.constant 0.000000e+00 : f32
    %279 = vector.broadcast %cst_248 : f32 to vector<16x256xf32>
    %280 = arith.maximumf %278, %279 : vector<16x256xf32>
    %281 = arith.truncf %280 : vector<16x256xf32> to vector<16x256xbf16>
    %cst_249 = arith.constant 0.000000e+00 : f32
    %282 = vector.broadcast %cst_249 : f32 to vector<16x256xf32>
    %c0_250 = arith.constant 0 : index
    %c0_251 = arith.constant 0 : index
    %283 = vector.load %arg18[%c0_250, %c0_251] : memref<16x16xbf16, #tpu.memory_space<vmem>>, vector<16x16xbf16>
    %cst_252 = arith.constant dense<0.000000e+00> : vector<16x256xf32>
    %284 = tpu.matmul %283, %281, %cst_252 {dimension_numbers = #tpu.dot_dimension_numbers<[1], [0], [0], [1], [0, 0, 1, 1], [], []>} : vector<16x16xbf16>, vector<16x256xbf16>, vector<16x256xf32> -> vector<16x256xf32>
    %285 = arith.truncf %284 : vector<16x256xf32> to vector<16x256xbf16>
    %c0_253 = arith.constant 0 : index
    %c0_254 = arith.constant 0 : index
    %286 = vector.load %arg19[%c0_253, %c0_254] : memref<256x256xbf16, #tpu.memory_space<vmem>>, vector<256x256xbf16>
    %cst_255 = arith.constant dense<0.000000e+00> : vector<16x256xf32>
    %287 = tpu.matmul %285, %286, %cst_255 {dimension_numbers = #tpu.dot_dimension_numbers<[1], [0], [0], [1], [0, 0, 1, 1], [], []>} : vector<16x256xbf16>, vector<256x256xbf16>, vector<16x256xf32> -> vector<16x256xf32>
    %288 = arith.addf %282, %287 : vector<16x256xf32>
    %c0_256 = arith.constant 0 : index
    %c0_257 = arith.constant 0 : index
    %289 = vector.load %arg20[%c0_256, %c0_257] : memref<1x256xf32, #tpu.memory_space<vmem>>, vector<1x256xf32>
    %290 = vector.broadcast %289 : vector<1x256xf32> to vector<16x256xf32>
    %291 = arith.addf %288, %290 : vector<16x256xf32>
    %cst_258 = arith.constant 0.000000e+00 : f32
    %292 = vector.broadcast %cst_258 : f32 to vector<16x256xf32>
    %293 = arith.maximumf %291, %292 : vector<16x256xf32>
    %294 = arith.truncf %293 : vector<16x256xf32> to vector<16x256xbf16>
    %c0_259 = arith.constant 0 : index
    %c0_260 = arith.constant 0 : index
    %295 = vector.load %arg21[%c0_259, %c0_260] : memref<256x128xbf16, #tpu.memory_space<vmem>>, vector<256x128xbf16>
    %cst_261 = arith.constant dense<0.000000e+00> : vector<16x128xf32>
    %296 = tpu.matmul %294, %295, %cst_261 {dimension_numbers = #tpu.dot_dimension_numbers<[1], [0], [0], [1], [0, 0, 1, 1], [], []>} : vector<16x256xbf16>, vector<256x128xbf16>, vector<16x128xf32> -> vector<16x128xf32>
    %c0_262 = arith.constant 0 : index
    %c0_263 = arith.constant 0 : index
    %297 = vector.load %arg22[%c0_262, %c0_263] : memref<1x128xf32, #tpu.memory_space<vmem>>, vector<1x128xf32>
    %298 = vector.broadcast %297 : vector<1x128xf32> to vector<16x128xf32>
    %299 = arith.addf %296, %298 : vector<16x128xf32>
    %c0_264 = arith.constant 0 : index
    %c0_265 = arith.constant 0 : index
    %300 = vector.load %arg24[%c0_264, %c0_265] : memref<16x128xf32, #tpu.memory_space<vmem>>, vector<16x128xf32>
    tpu.vector_store %arg24[%c0_264, %c0_265], %299 {strides = array<i32>} : memref<16x128xf32, #tpu.memory_space<vmem>>, vector<16x128xf32>,
    return
  }
}

</mosaic_0001>

<llo_original>
// kernel: fwd.1
$region0: #{fwd.1}
  #allocation0 [shape = 'u32[]', space=smem, size = 0x4, offset = 0x4, fixed_abs, tag = 'smem constant byte address 0x4 - core index']
  #allocation1 [shape = 'u32[144,128]{1,0:T(1,128)}', space=vmem, size = 0x12000, scoped, tag = 'internal scratch']
  %s0 = inlined_call_operand.vmem [shape: bf16[512,128], index: 0, kind: input, shape index: {}]
  %s1 = inlined_call_operand.hbm [shape: bf16[1152,512], index: 1, kind: input, shape index: {}]
  %s2 = inlined_call_operand.hbm [shape: bf16[1152,128], index: 2, kind: input, shape index: {}]
  %s3 = inlined_call_operand.hbm [shape: f32[1,128], index: 3, kind: input, shape index: {}]
  %s4 = inlined_call_operand.hbm [shape: bf16[288,128], index: 4, kind: input, shape index: {}]
  %s5 = inlined_call_operand.hbm [shape: bf16[1152,128], index: 5, kind: input, shape index: {}]
  %s6 = inlined_call_operand.hbm [shape: f32[1,128], index: 6, kind: input, shape index: {}]
  %s7 = inlined_call_operand.vmem [shape: bf16[144,32], index: 7, kind: input, shape index: {}]
  %s8 = inlined_call_operand.hbm [shape: bf16[1152,128], index: 8, kind: input, shape index: {}]
  %s9 = inlined_call_operand.hbm [shape: f32[1,128], index: 9, kind: input, shape index: {}]
  %s10 = inlined_call_operand.vmem [shape: bf16[144,16], index: 10, kind: input, shape index: {}]
  %s11 = inlined_call_operand.hbm [shape: bf16[1152,128], index: 11, kind: input, shape index: {}]
  %s12 = inlined_call_operand.hbm [shape: f32[1,128], index: 12, kind: input, shape index: {}]
  %s13 = inlined_call_operand.hbm [shape: bf16[128,128], index: 13, kind: input, shape index: {}]
  %s14 = inlined_call_operand.hbm [shape: f32[1,128], index: 14, kind: input, shape index: {}]
  %s15 = inlined_call_operand.vmem [shape: bf16[64,16], index: 15, kind: input, shape index: {}]
  %s16 = inlined_call_operand.hbm [shape: bf16[512,256], index: 16, kind: input, shape index: {}]
  %s17 = inlined_call_operand.hbm [shape: f32[1,256], index: 17, kind: input, shape index: {}]
  %s18 = inlined_call_operand.hbm [shape: bf16[16,16], index: 18, kind: input, shape index: {}]
  %s19 = inlined_call_operand.hbm [shape: bf16[256,256], index: 19, kind: input, shape index: {}]
  %s20 = inlined_call_operand.hbm [shape: f32[1,256], index: 20, kind: input, shape index: {}]
  %s21 = inlined_call_operand.hbm [shape: bf16[256,128], index: 21, kind: input, shape index: {}]
  %s22 = inlined_call_operand.hbm [shape: f32[1,128], index: 22, kind: input, shape index: {}]
  %s23 = inlined_call_operand.vmem [shape: f32[16,128], index: 23, kind: output, shape index: {0}]
  %s24 = inlined_call_operand.vmem [shape: f32[16,128], index: 24, kind: output, shape index: {1}]
  %25 = xla_tuple %s23, %s24
  %s26 = sld [smem:[#allocation0]]
  $region186: #{fwd.1} parent=0
    _
  %s28 = ssub.s32 1, %s26
  %s29 = scalar_select 0, %s28, %s26
  $region1: #{fwd.1} parent=0
    #allocation2 [shape = 'u8[1179648]{0}', space=vmem, size = 0x120000, scoped, tag = 'input window, operand 1, single buffered']
    #allocation3 [shape = 's32[1]{0}', space=sflag, size = 0x4, scoped, tag = 'scoped memory for fwd.1']
    #allocation4 [shape = 'u8[294912]{0}', space=vmem, size = 0x48000, scoped, tag = 'input window, operand 2, single buffered']
    #allocation5 [shape = 's32[1]{0}', space=sflag, size = 0x4, scoped, tag = 'scoped memory for fwd.1']
    #allocation6 [shape = 'u8[512]{0}', space=vmem, size = 0x400, scoped, tag = 'input window, operand 3, single buffered']
    #allocation7 [shape = 'u8[73728]{0}', space=vmem, size = 0x12000, scoped, tag = 'input window, operand 4, single buffered']
    #allocation8 [shape = 's32[1]{0}', space=sflag, size = 0x4, scoped, tag = 'scoped memory for fwd.1']
    #allocation9 [shape = 'u8[294912]{0}', space=vmem, size = 0x48000, scoped, tag = 'input window, operand 5, single buffered']
    #allocation10 [shape = 'u8[512]{0}', space=vmem, size = 0x400, scoped, tag = 'input window, operand 6, single buffered']
    #allocation11 [shape = 's32[1]{0}', space=sflag, size = 0x4, scoped, tag = 'scoped memory for fwd.1']
    #allocation12 [shape = 'u8[294912]{0}', space=vmem, size = 0x48000, scoped, tag = 'input window, operand 8, single buffered']
    #allocation13 [shape = 'u8[512]{0}', space=vmem, size = 0x400, scoped, tag = 'input window, operand 9, single buffered']
    #allocation14 [shape = 's32[1]{0}', space=sflag, size = 0x4, scoped, tag = 'scoped memory for fwd.1']
    #allocation15 [shape = 'u8[294912]{0}', space=vmem, size = 0x48000, scoped, tag = 'input window, operand 11, single buffered']
    #allocation16 [shape = 'u8[512]{0}', space=vmem, size = 0x400, scoped, tag = 'input window, operand 12, single buffered']
    #allocation17 [shape = 's32[1]{0}', space=sflag, size = 0x4, scoped, tag = 'scoped memory for fwd.1']
    #allocation18 [shape = 'u8[32768]{0}', space=vmem, size = 0x8000, scoped, tag = 'input window, operand 13, single buffered']
    #allocation19 [shape = 'u8[512]{0}', space=vmem, size = 0x400, scoped, tag = 'input window, operand 14, single buffered']
    #allocation20 [shape = 's32[1]{0}', space=sflag, size = 0x4, scoped, tag = 'scoped memory for fwd.1']
    #allocation21 [shape = 'u8[262144]{0}', space=vmem, size = 0x40000, scoped, tag = 'input window, operand 16, single buffered']
    #allocation22 [shape = 'u8[1024]{0}', space=vmem, size = 0x400, scoped, tag = 'input window, operand 17, single buffered']
    #allocation23 [shape = 's32[1]{0}', space=sflag, size = 0x4, scoped, tag = 'scoped memory for fwd.1']
    #allocation24 [shape = 'u8[4096]{0}', space=vmem, size = 0x1000, scoped, tag = 'input window, operand 18, single buffered']
    #allocation25 [shape = 'u8[131072]{0}', space=vmem, size = 0x20000, scoped, tag = 'input window, operand 19, single buffered']
    #allocation26 [shape = 's32[1]{0}', space=sflag, size = 0x4, scoped, tag = 'scoped memory for fwd.1']
    #allocation27 [shape = 'u8[1024]{0}', space=vmem, size = 0x400, scoped, tag = 'input window, operand 20, single buffered']
    #allocation28 [shape = 'u8[65536]{0}', space=vmem, size = 0x10000, scoped, tag = 'input window, operand 21, single buffered']
    #allocation29 [shape = 's32[1]{0}', space=sflag, size = 0x4, scoped, tag = 'scoped memory for fwd.1']
    #allocation30 [shape = 'u8[512]{0}', space=vmem, size = 0x400, scoped, tag = 'input window, operand 22, single buffered']
    %30 = vsyncpa [#allocation3], 0
    %31 = vsyncpa [#allocation5], 0
    %32 = vsyncpa [#allocation8], 0
    %33 = vsyncpa [#allocation11], 0
    %34 = vsyncpa [#allocation14], 0
    %35 = vsyncpa [#allocation17], 0
    %36 = vsyncpa [#allocation20], 0
    %37 = vsyncpa [#allocation23], 0
    %38 = vsyncpa [#allocation26], 0
    %39 = vsyncpa [#allocation29], 0
    // Predicated region
    $region2: #{fwd.1} parent=1 // pred_check
      _
    $region3: #{fwd.1} parent=1 // pred_check_branch
      %41 = sbr.rel (0) target = $region5
    $region4: #{fwd.1} parent=1 // pred_region
      _
    $region5: #{fwd.1} parent=1 // pred_fallthru
      _
    // Predicated region
    $region6: #{fwd.1} parent=1 // pred_check
      _
    $region7: #{fwd.1} parent=1 // pred_check_branch
      %43 = sbr.rel (0) target = $region9
    $region8: #{fwd.1} parent=1 // pred_region
      %s45 = ssub.s32 36864, 36864
      %46 = vsyncadd [#allocation3], %s45
      %s47 = sshll.u32 [#allocation2], 4
      %s48 = int_to_ptr.vmem [resolvable:$true] %s47
      %53 = dma.hbm_to_vmem [thread:$0]  %s1, 36864, %s48, [#allocation3], 256, 256, 16
    $region9: #{fwd.1} parent=1 // pred_fallthru
      _
    // Predicated region
    $region10: #{fwd.1} parent=1 // pred_check
      _
    $region11: #{fwd.1} parent=1 // pred_check_branch
      %55 = sbr.rel (0) target = $region13
    $region12: #{fwd.1} parent=1 // pred_region
      %s57 = ssub.s32 9216, 9216
      %58 = vsyncadd [#allocation5], %s57
      %s59 = sshll.u32 [#allocation4], 4
      %s60 = int_to_ptr.vmem [resolvable:$true] %s59
      %65 = dma.hbm_to_vmem [thread:$0]  %s2, 9216, %s60, [#allocation5], 64, 64, 4
    $region13: #{fwd.1} parent=1 // pred_fallthru
      _
    // Predicated region
    $region14: #{fwd.1} parent=1 // pred_check
      _
    $region15: #{fwd.1} parent=1 // pred_check_branch
      %67 = sbr.rel (0) target = $region17
    $region16: #{fwd.1} parent=1 // pred_region
      %s69 = ssub.s32 16, 16
      %70 = vsyncadd [#allocation5], %s69
      %s72 = sshll.u32 [#allocation6], 4
      %s73 = int_to_ptr.vmem [resolvable:$true] %s72
      %75 = dma.hbm_to_vmem [thread:$0]  %s3, 16, %s73, [#allocation5]
    $region17: #{fwd.1} parent=1 // pred_fallthru
      _
    // Predicated region
    $region18: #{fwd.1} parent=1 // pred_check
      _
    $region19: #{fwd.1} parent=1 // pred_check_branch
      %77 = sbr.rel (0) target = $region21
    $region20: #{fwd.1} parent=1 // pred_region
      %s79 = ssub.s32 2304, 2304
      %80 = vsyncadd [#allocation8], %s79
      %s81 = sshll.u32 [#allocation7], 4
      %s82 = int_to_ptr.vmem [resolvable:$true] %s81
      %87 = dma.hbm_to_vmem [thread:$0]  %s4, 2304, %s82, [#allocation8], 64, 64, 4
    $region21: #{fwd.1} parent=1 // pred_fallthru
      _
    // Predicated region
    $region22: #{fwd.1} parent=1 // pred_check
      _
    $region23: #{fwd.1} parent=1 // pred_check_branch
      %89 = sbr.rel (0) target = $region25
    $region24: #{fwd.1} parent=1 // pred_region
      %s91 = ssub.s32 9216, 9216
      %92 = vsyncadd [#allocation8], %s91
      %s93 = sshll.u32 [#allocation9], 4
      %s94 = int_to_ptr.vmem [resolvable:$true] %s93
      %99 = dma.hbm_to_vmem [thread:$0]  %s5, 9216, %s94, [#allocation8], 64, 64, 4
    $region25: #{fwd.1} parent=1 // pred_fallthru
      _
    // Predicated region
    $region26: #{fwd.1} parent=1 // pred_check
      _
    $region27: #{fwd.1} parent=1 // pred_check_branch
      %101 = sbr.rel (0) target = $region29
    $region28: #{fwd.1} parent=1 // pred_region
      %s103 = ssub.s32 16, 16
      %104 = vsyncadd [#allocation11], %s103
      %s106 = sshll.u32 [#allocation10], 4
      %s107 = int_to_ptr.vmem [resolvable:$true] %s106
      %109 = dma.hbm_to_vmem [thread:$0]  %s6, 16, %s107, [#allocation11]
    $region29: #{fwd.1} parent=1 // pred_fallthru
      _
    // Predicated region
    $region30: #{fwd.1} parent=1 // pred_check
      _
    $region31: #{fwd.1} parent=1 // pred_check_branch
      %111 = sbr.rel (0) target = $region33
    $region32: #{fwd.1} parent=1 // pred_region
      _
    $region33: #{fwd.1} parent=1 // pred_fallthru
      _
    // Predicated region
    $region34: #{fwd.1} parent=1 // pred_check
      _
    $region35: #{fwd.1} parent=1 // pred_check_branch
      %113 = sbr.rel (0) target = $region37
    $region36: #{fwd.1} parent=1 // pred_region
      %s115 = ssub.s32 9216, 9216
      %116 = vsyncadd [#allocation11], %s115
      %s117 = sshll.u32 [#allocation12], 4
      %s118 = int_to_ptr.vmem [resolvable:$true] %s117
      %123 = dma.hbm_to_vmem [thread:$0]  %s8, 9216, %s118, [#allocation11], 64, 64, 4
    $region37: #{fwd.1} parent=1 // pred_fallthru
      _
    // Predicated region
    $region38: #{fwd.1} parent=1 // pred_check
      _
    $region39: #{fwd.1} parent=1 // pred_check_branch
      %125 = sbr.rel (0) target = $region41
    $region40: #{fwd.1} parent=1 // pred_region
      %s127 = ssub.s32 16, 16
      %128 = vsyncadd [#allocation14], %s127
      %s130 = sshll.u32 [#allocation13], 4
      %s131 = int_to_ptr.vmem [resolvable:$true] %s130
      %133 = dma.hbm_to_vmem [thread:$0]  %s9, 16, %s131, [#allocation14]
    $region41: #{fwd.1} parent=1 // pred_fallthru
      _
    // Predicated region
    $region42: #{fwd.1} parent=1 // pred_check
      _
    $region43: #{fwd.1} parent=1 // pred_check_branch
      %135 = sbr.rel (0) target = $region45
    $region44: #{fwd.1} parent=1 // pred_region
      _
    $region45: #{fwd.1} parent=1 // pred_fallthru
      _
    // Predicated region
    $region46: #{fwd.1} parent=1 // pred_check
      _
    $region47: #{fwd.1} parent=1 // pred_check_branch
      %137 = sbr.rel (0) target = $region49
    $region48: #{fwd.1} parent=1 // pred_region
      %s139 = ssub.s32 9216, 9216
      %140 = vsyncadd [#allocation14], %s139
      %s141 = sshll.u32 [#allocation15], 4
      %s142 = int_to_ptr.vmem [resolvable:$true] %s141
      %147 = dma.hbm_to_vmem [thread:$0]  %s11, 9216, %s142, [#allocation14], 64, 64, 4
    $region49: #{fwd.1} parent=1 // pred_fallthru
      _
    // Predicated region
    $region50: #{fwd.1} parent=1 // pred_check
      _
    $region51: #{fwd.1} parent=1 // pred_check_branch
      %149 = sbr.rel (0) target = $region53
    $region52: #{fwd.1} parent=1 // pred_region
      %s151 = ssub.s32 16, 16
      %152 = vsyncadd [#allocation17], %s151
      %s154 = sshll.u32 [#allocation16], 4
      %s155 = int_to_ptr.vmem [resolvable:$true] %s154
      %157 = dma.hbm_to_vmem [thread:$0]  %s12, 16, %s155, [#allocation17]
    $region53: #{fwd.1} parent=1 // pred_fallthru
      _
    // Predicated region
    $region54: #{fwd.1} parent=1 // pred_check
      _
    $region55: #{fwd.1} parent=1 // pred_check_branch
      %159 = sbr.rel (0) target = $region57
    $region56: #{fwd.1} parent=1 // pred_region
      %s161 = ssub.s32 1024, 1024
      %162 = vsyncadd [#allocation17], %s161
      %s163 = sshll.u32 [#allocation18], 4
      %s164 = int_to_ptr.vmem [resolvable:$true] %s163
      %169 = dma.hbm_to_vmem [thread:$0]  %s13, 1024, %s164, [#allocation17], 64, 64, 4
    $region57: #{fwd.1} parent=1 // pred_fallthru
      _
    // Predicated region
    $region58: #{fwd.1} parent=1 // pred_check
      _
    $region59: #{fwd.1} parent=1 // pred_check_branch
      %171 = sbr.rel (0) target = $region61
    $region60: #{fwd.1} parent=1 // pred_region
      %s173 = ssub.s32 16, 16
      %174 = vsyncadd [#allocation20], %s173
      %s176 = sshll.u32 [#allocation19], 4
      %s177 = int_to_ptr.vmem [resolvable:$true] %s176
      %179 = dma.hbm_to_vmem [thread:$0]  %s14, 16, %s177, [#allocation20]
    $region61: #{fwd.1} parent=1 // pred_fallthru
      _
    // Predicated region
    $region62: #{fwd.1} parent=1 // pred_check
      _
    $region63: #{fwd.1} parent=1 // pred_check_branch
      %181 = sbr.rel (0) target = $region65
    $region64: #{fwd.1} parent=1 // pred_region
      _
    $region65: #{fwd.1} parent=1 // pred_fallthru
      _
    // Predicated region
    $region66: #{fwd.1} parent=1 // pred_check
      _
    $region67: #{fwd.1} parent=1 // pred_check_branch
      %183 = sbr.rel (0) target = $region69
    $region68: #{fwd.1} parent=1 // pred_region
      %s185 = ssub.s32 8192, 8192
      %186 = vsyncadd [#allocation20], %s185
      %s187 = sshll.u32 [#allocation21], 4
      %s188 = int_to_ptr.vmem [resolvable:$true] %s187
      %193 = dma.hbm_to_vmem [thread:$0]  %s16, 8192, %s188, [#allocation20], 128, 128, 8
    $region69: #{fwd.1} parent=1 // pred_fallthru
      _
    // Predicated region
    $region70: #{fwd.1} parent=1 // pred_check
      _
    $region71: #{fwd.1} parent=1 // pred_check_branch
      %195 = sbr.rel (0) target = $region73
    $region72: #{fwd.1} parent=1 // pred_region
      %s197 = ssub.s32 32, 32
      %198 = vsyncadd [#allocation23], %s197
      %s200 = sshll.u32 [#allocation22], 4
      %s201 = int_to_ptr.vmem [resolvable:$true] %s200
      %203 = dma.hbm_to_vmem [thread:$0]  %s17, 32, %s201, [#allocation23]
    $region73: #{fwd.1} parent=1 // pred_fallthru
      _
    // Predicated region
    $region74: #{fwd.1} parent=1 // pred_check
      _
    $region75: #{fwd.1} parent=1 // pred_check_branch
      %205 = sbr.rel (0) target = $region77
    $region76: #{fwd.1} parent=1 // pred_region
      %s207 = ssub.s32 128, 128
      %208 = vsyncadd [#allocation23], %s207
      %s209 = sshll.u32 [#allocation24], 4
      %s210 = int_to_ptr.vmem [resolvable:$true] %s209
      %215 = dma.hbm_to_vmem [thread:$0]  %s18, 128, %s210, [#allocation23], 64, 64, 4
    $region77: #{fwd.1} parent=1 // pred_fallthru
      _
    // Predicated region
    $region78: #{fwd.1} parent=1 // pred_check
      _
    $region79: #{fwd.1} parent=1 // pred_check_branch
      %217 = sbr.rel (0) target = $region81
    $region80: #{fwd.1} parent=1 // pred_region
      %s219 = ssub.s32 4096, 4096
      %220 = vsyncadd [#allocation26], %s219
      %s221 = sshll.u32 [#allocation25], 4
      %s222 = int_to_ptr.vmem [resolvable:$true] %s221
      %227 = dma.hbm_to_vmem [thread:$0]  %s19, 4096, %s222, [#allocation26], 128, 128, 8
    $region81: #{fwd.1} parent=1 // pred_fallthru
      _
    // Predicated region
    $region82: #{fwd.1} parent=1 // pred_check
      _
    $region83: #{fwd.1} parent=1 // pred_check_branch
      %229 = sbr.rel (0) target = $region85
    $region84: #{fwd.1} parent=1 // pred_region
      %s231 = ssub.s32 32, 32
      %232 = vsyncadd [#allocation26], %s231
      %s234 = sshll.u32 [#allocation27], 4
      %s235 = int_to_ptr.vmem [resolvable:$true] %s234
      %237 = dma.hbm_to_vmem [thread:$0]  %s20, 32, %s235, [#allocation26]
    $region85: #{fwd.1} parent=1 // pred_fallthru
      _
    // Predicated region
    $region86: #{fwd.1} parent=1 // pred_check
      _
    $region87: #{fwd.1} parent=1 // pred_check_branch
      %239 = sbr.rel (0) target = $region89
    $region88: #{fwd.1} parent=1 // pred_region
      %s241 = ssub.s32 2048, 2048
      %242 = vsyncadd [#allocation29], %s241
      %s243 = sshll.u32 [#allocation28], 4
      %s244 = int_to_ptr.vmem [resolvable:$true] %s243
      %249 = dma.hbm_to_vmem [thread:$0]  %s21, 2048, %s244, [#allocation29], 64, 64, 4
    $region89: #{fwd.1} parent=1 // pred_fallthru
      _
    // Predicated region
    $region90: #{fwd.1} parent=1 // pred_check
      _
    $region91: #{fwd.1} parent=1 // pred_check_branch
      %251 = sbr.rel (0) target = $region93
    $region92: #{fwd.1} parent=1 // pred_region
      %s253 = ssub.s32 16, 16
      %254 = vsyncadd [#allocation29], %s253
      %s256 = sshll.u32 [#allocation30], 4
      %s257 = int_to_ptr.vmem [resolvable:$true] %s256
      %259 = dma.hbm_to_vmem [thread:$0]  %s22, 16, %s257, [#allocation29]
    $region93: #{fwd.1} parent=1 // pred_fallthru
      _
    // Predicated region
    $region94: #{fwd.1} parent=1 // pred_check
      _
    $region95: #{fwd.1} parent=1 // pred_check_branch
      %261 = sbr.rel (0) target = $region97
    $region96: #{fwd.1} parent=1 // pred_region
      %262 = dma.done [#allocation3], 36864
    $region97: #{fwd.1} parent=1 // pred_fallthru
      _
    // Predicated region
    $region98: #{fwd.1} parent=1 // pred_check
      _
    $region99: #{fwd.1} parent=1 // pred_check_branch
      %264 = sbr.rel (0) target = $region101
    $region100: #{fwd.1} parent=1 // pred_region
      %265 = dma.done [#allocation5], 9216
    $region101: #{fwd.1} parent=1 // pred_fallthru
      _
    // Predicated region
    $region102: #{fwd.1} parent=1 // pred_check
      _
    $region103: #{fwd.1} parent=1 // pred_check_branch
      %267 = sbr.rel (0) target = $region105
    $region104: #{fwd.1} parent=1 // pred_region
      %268 = dma.done [#allocation5], 16
    $region105: #{fwd.1} parent=1 // pred_fallthru
      _
    // Predicated region
    $region106: #{fwd.1} parent=1 // pred_check
      _
    $region107: #{fwd.1} parent=1 // pred_check_branch
      %270 = sbr.rel (0) target = $region109
    $region108: #{fwd.1} parent=1 // pred_region
      %271 = dma.done [#allocation8], 2304
    $region109: #{fwd.1} parent=1 // pred_fallthru
      _
    // Predicated region
    $region110: #{fwd.1} parent=1 // pred_check
      _
    $region111: #{fwd.1} parent=1 // pred_check_branch
      %273 = sbr.rel (0) target = $region113
    $region112: #{fwd.1} parent=1 // pred_region
      %274 = dma.done [#allocation8], 9216
    $region113: #{fwd.1} parent=1 // pred_fallthru
      _
    // Predicated region
    $region114: #{fwd.1} parent=1 // pred_check
      _
    $region115: #{fwd.1} parent=1 // pred_check_branch
      %276 = sbr.rel (0) target = $region117
    $region116: #{fwd.1} parent=1 // pred_region
      %277 = dma.done [#allocation11], 16
    $region117: #{fwd.1} parent=1 // pred_fallthru
      _
    // Predicated region
    $region118: #{fwd.1} parent=1 // pred_check
      _
    $region119: #{fwd.1} parent=1 // pred_check_branch
      %279 = sbr.rel (0) target = $region121
    $region120: #{fwd.1} parent=1 // pred_region
      %280 = dma.done [#allocation11], 9216
    $region121: #{fwd.1} parent=1 // pred_fallthru
      _
    // Predicated region
    $region122: #{fwd.1} parent=1 // pred_check
      _
    $region123: #{fwd.1} parent=1 // pred_check_branch
      %282 = sbr.rel (0) target = $region125
    $region124: #{fwd.1} parent=1 // pred_region
      %283 = dma.done [#allocation14], 16
    $region125: #{fwd.1} parent=1 // pred_fallthru
      _
    // Predicated region
    $region126: #{fwd.1} parent=1 // pred_check
      _
    $region127: #{fwd.1} parent=1 // pred_check_branch
      %285 = sbr.rel (0) target = $region129
    $region128: #{fwd.1} parent=1 // pred_region
      %286 = dma.done [#allocation14], 9216
    $region129: #{fwd.1} parent=1 // pred_fallthru
      _
    // Predicated region
    $region130: #{fwd.1} parent=1 // pred_check
      _
    $region131: #{fwd.1} parent=1 // pred_check_branch
      %288 = sbr.rel (0) target = $region133
    $region132: #{fwd.1} parent=1 // pred_region
      %289 = dma.done [#allocation17], 16
    $region133: #{fwd.1} parent=1 // pred_fallthru
      _
    // Predicated region
    $region134: #{fwd.1} parent=1 // pred_check
      _
    $region135: #{fwd.1} parent=1 // pred_check_branch
      %291 = sbr.rel (0) target = $region137
    $region136: #{fwd.1} parent=1 // pred_region
      %292 = dma.done [#allocation17], 1024
    $region137: #{fwd.1} parent=1 // pred_fallthru
      _
    // Predicated region
    $region138: #{fwd.1} parent=1 // pred_check
      _
    $region139: #{fwd.1} parent=1 // pred_check_branch
      %294 = sbr.rel (0) target = $region141
    $region140: #{fwd.1} parent=1 // pred_region
      %295 = dma.done [#allocation20], 16
    $region141: #{fwd.1} parent=1 // pred_fallthru
      _
    // Predicated region
    $region142: #{fwd.1} parent=1 // pred_check
      _
    $region143: #{fwd.1} parent=1 // pred_check_branch
      %297 = sbr.rel (0) target = $region145
    $region144: #{fwd.1} parent=1 // pred_region
      %298 = dma.done [#allocation20], 8192
    $region145: #{fwd.1} parent=1 // pred_fallthru
      _
    // Predicated region
    $region146: #{fwd.1} parent=1 // pred_check
      _
    $region147: #{fwd.1} parent=1 // pred_check_branch
      %300 = sbr.rel (0) target = $region149
    $region148: #{fwd.1} parent=1 // pred_region
      %301 = dma.done [#allocation23], 32
    $region149: #{fwd.1} parent=1 // pred_fallthru
      _
    // Predicated region
    $region150: #{fwd.1} parent=1 // pred_check
      _
    $region151: #{fwd.1} parent=1 // pred_check_branch
      %303 = sbr.rel (0) target = $region153
    $region152: #{fwd.1} parent=1 // pred_region
      %304 = dma.done [#allocation23], 128
    $region153: #{fwd.1} parent=1 // pred_fallthru
      _
    // Predicated region
    $region154: #{fwd.1} parent=1 // pred_check
      _
    $region155: #{fwd.1} parent=1 // pred_check_branch
      %306 = sbr.rel (0) target = $region157
    $region156: #{fwd.1} parent=1 // pred_region
      %307 = dma.done [#allocation26], 4096
    $region157: #{fwd.1} parent=1 // pred_fallthru
      _
    // Predicated region
    $region158: #{fwd.1} parent=1 // pred_check
      _
    $region159: #{fwd.1} parent=1 // pred_check_branch
      %309 = sbr.rel (0) target = $region161
    $region160: #{fwd.1} parent=1 // pred_region
      %310 = dma.done [#allocation26], 32
    $region161: #{fwd.1} parent=1 // pred_fallthru
      _
    // Predicated region
    $region162: #{fwd.1} parent=1 // pred_check
      _
    $region163: #{fwd.1} parent=1 // pred_check_branch
      %312 = sbr.rel (0) target = $region165
    $region164: #{fwd.1} parent=1 // pred_region
      %313 = dma.done [#allocation29], 2048
    $region165: #{fwd.1} parent=1 // pred_fallthru
      _
    // Predicated region
    $region166: #{fwd.1} parent=1 // pred_check
      _
    $region167: #{fwd.1} parent=1 // pred_check_branch
      %315 = sbr.rel (0) target = $region169
    $region168: #{fwd.1} parent=1 // pred_region
      %316 = dma.done [#allocation29], 16
    $region169: #{fwd.1} parent=1 // pred_fallthru
      _
    %v318 = vld [vmem:[%s0] sm:$0xf]
    %v319 = vld [vmem:[%s0 + $0x4] sm:$0xf]
    %v320 = vld [vmem:[%s0 + $0x8] sm:$0xf]
    %v321 = vld [vmem:[%s0 + $0xc] sm:$0xf]
    %v322 = vld [vmem:[%s0 + $0x10] sm:$0xf]
    %v323 = vld [vmem:[%s0 + $0x14] sm:$0xf]
    %v324 = vld [vmem:[%s0 + $0x18] sm:$0xf]
    %v325 = vld [vmem:[%s0 + $0x1c] sm:$0xf]
    %v326 = vld [vmem:[%s0 + $0x20] sm:$0xf]
    %v327 = vld [vmem:[%s0 + $0x24] sm:$0xf]
    %v328 = vld [vmem:[%s0 + $0x28] sm:$0xf]
    %v329 = vld [vmem:[%s0 + $0x2c] sm:$0xf]
    %v330 = vld [vmem:[%s0 + $0x30] sm:$0xf]
    %v331 = vld [vmem:[%s0 + $0x34] sm:$0xf]
    %v332 = vld [vmem:[%s0 + $0x38] sm:$0xf]
    %v333 = vld [vmem:[%s0 + $0x3c] sm:$0xf]
    %v334 = vld [vmem:[%s0 + $0x40] sm:$0xf]
    %v335 = vld [vmem:[%s0 + $0x44] sm:$0xf]
    %v336 = vld [vmem:[%s0 + $0x48] sm:$0xf]
    %v337 = vld [vmem:[%s0 + $0x4c] sm:$0xf]
    %v338 = vld [vmem:[%s0 + $0x50] sm:$0xf]
    %v339 = vld [vmem:[%s0 + $0x54] sm:$0xf]
    %v340 = vld [vmem:[%s0 + $0x58] sm:$0xf]
    %v341 = vld [vmem:[%s0 + $0x5c] sm:$0xf]
    %v342 = vld [vmem:[%s0 + $0x60] sm:$0xf]
    %v343 = vld [vmem:[%s0 + $0x64] sm:$0xf]
    %v344 = vld [vmem:[%s0 + $0x68] sm:$0xf]
    %v345 = vld [vmem:[%s0 + $0x6c] sm:$0xf]
    %v346 = vld [vmem:[%s0 + $0x70] sm:$0xf]
    %v347 = vld [vmem:[%s0 + $0x74] sm:$0xf]
    %v348 = vld [vmem:[%s0 + $0x78] sm:$0xf]
    %v349 = vld [vmem:[%s0 + $0x7c] sm:$0xf]
    %v350 = vld [vmem:[%s0 + $0x80] sm:$0xf]
    %v351 = vld [vmem:[%s0 + $0x84] sm:$0xf]
    %v352 = vld [vmem:[%s0 + $0x88] sm:$0xf]
    %v353 = vld [vmem:[%s0 + $0x8c] sm:$0xf]
    %v354 = vld [vmem:[%s0 + $0x90] sm:$0xf]
    %v355 = vld [vmem:[%s0 + $0x94] sm:$0xf]
    %v356 = vld [vmem:[%s0 + $0x98] sm:$0xf]
    %v357 = vld [vmem:[%s0 + $0x9c] sm:$0xf]
    %v358 = vld [vmem:[%s0 + $0xa0] sm:$0xf]
    %v359 = vld [vmem:[%s0 + $0xa4] sm:$0xf]
    %v360 = vld [vmem:[%s0 + $0xa8] sm:$0xf]
    %v361 = vld [vmem:[%s0 + $0xac] sm:$0xf]
    %v362 = vld [vmem:[%s0 + $0xb0] sm:$0xf]
    %v363 = vld [vmem:[%s0 + $0xb4] sm:$0xf]
    %v364 = vld [vmem:[%s0 + $0xb8] sm:$0xf]
    %v365 = vld [vmem:[%s0 + $0xbc] sm:$0xf]
    %v366 = vld [vmem:[%s0 + $0xc0] sm:$0xf]
    %v367 = vld [vmem:[%s0 + $0xc4] sm:$0xf]
    %v368 = vld [vmem:[%s0 + $0xc8] sm:$0xf]
    %v369 = vld [vmem:[%s0 + $0xcc] sm:$0xf]
    %v370 = vld [vmem:[%s0 + $0xd0] sm:$0xf]
    %v371 = vld [vmem:[%s0 + $0xd4] sm:$0xf]
    %v372 = vld [vmem:[%s0 + $0xd8] sm:$0xf]
    %v373 = vld [vmem:[%s0 + $0xdc] sm:$0xf]
    %v374 = vld [vmem:[%s0 + $0xe0] sm:$0xf]
    %v375 = vld [vmem:[%s0 + $0xe4] sm:$0xf]
    %v376 = vld [vmem:[%s0 + $0xe8] sm:$0xf]
    %v377 = vld [vmem:[%s0 + $0xec] sm:$0xf]
    %v378 = vld [vmem:[%s0 + $0xf0] sm:$0xf]
    %v379 = vld [vmem:[%s0 + $0xf4] sm:$0xf]
    %v380 = vld [vmem:[%s0 + $0xf8] sm:$0xf]
    %v381 = vld [vmem:[%s0 + $0xfc] sm:$0xf]
    %v382 = vld [vmem:[#allocation2] sm:$0xff]
    %v383 = vld [vmem:[#allocation2 + $0x8] sm:$0xff]
    %v384 = vld [vmem:[#allocation2 + $0x10] sm:$0xff]
    %v385 = vld [vmem:[#allocation2 + $0x18] sm:$0xff]
    %v386 = vld [vmem:[#allocation2 + $0x20] sm:$0xff]
    %v387 = vld [vmem:[#allocation2 + $0x28] sm:$0xff]
    %v388 = vld [vmem:[#allocation2 + $0x30] sm:$0xff]
    %v389 = vld [vmem:[#allocation2 + $0x38] sm:$0xff]
    %v390 = vld [vmem:[#allocation2 + $0x40] sm:$0xff]
    %v391 = vld [vmem:[#allocation2 + $0x48] sm:$0xff]
    %v392 = vld [vmem:[#allocation2 + $0x50] sm:$0xff]
    %v393 = vld [vmem:[#allocation2 + $0x58] sm:$0xff]
    %v394 = vld [vmem:[#allocation2 + $0x60] sm:$0xff]
    %v395 = vld [vmem:[#allocation2 + $0x68] sm:$0xff]
    %v396 = vld [vmem:[#allocation2 + $0x70] sm:$0xff]
    %v397 = vld [vmem:[#allocation2 + $0x78] sm:$0xff]
    %v398 = vld [vmem:[#allocation2 + $0x80] sm:$0xff]
    %v399 = vld [vmem:[#allocation2 + $0x88] sm:$0xff]
    %v400 = vld [vmem:[#allocation2 + $0x90] sm:$0xff]
    %v401 = vld [vmem:[#allocation2 + $0x98] sm:$0xff]
    %v402 = vld [vmem:[#allocation2 + $0xa0] sm:$0xff]
    %v403 = vld [vmem:[#allocation2 + $0xa8] sm:$0xff]
    %v404 = vld [vmem:[#allocation2 + $0xb0] sm:$0xff]
    %v405 = vld [vmem:[#allocation2 + $0xb8] sm:$0xff]
    %v406 = vld [vmem:[#allocation2 + $0xc0] sm:$0xff]
    %v407 = vld [vmem:[#allocation2 + $0xc8] sm:$0xff]
    %v408 = vld [vmem:[#allocation2 + $0xd0] sm:$0xff]
    %v409 = vld [vmem:[#allocation2 + $0xd8] sm:$0xff]
    %v410 = vld [vmem:[#allocation2 + $0xe0] sm:$0xff]
    %v411 = vld [vmem:[#allocation2 + $0xe8] sm:$0xff]
    %v412 = vld [vmem:[#allocation2 + $0xf0] sm:$0xff]
    %v413 = vld [vmem:[#allocation2 + $0xf8] sm:$0xff]
    %v446 = vunpack.c.l.b16 %v382
    %v447 = vunpack.c.h.b16 %v382
    %v448 = vunpack.c.l.b16 %v383
    %v449 = vunpack.c.h.b16 %v383
    %v450 = vunpack.c.l.b16 %v384
    %v451 = vunpack.c.h.b16 %v384
    %v452 = vunpack.c.l.b16 %v385
    %v453 = vunpack.c.h.b16 %v385
    %v454 = vunpack.c.l.b16 %v386
    %v455 = vunpack.c.h.b16 %v386
    %v456 = vunpack.c.l.b16 %v387
    %v457 = vunpack.c.h.b16 %v387
    %v458 = vunpack.c.l.b16 %v388
    %v459 = vunpack.c.h.b16 %v388
    %v460 = vunpack.c.l.b16 %v389
    %v461 = vunpack.c.h.b16 %v389
    %v462 = vunpack.c.l.b16 %v390
    %v463 = vunpack.c.h.b16 %v390
    %v464 = vunpack.c.l.b16 %v391
    %v465 = vunpack.c.h.b16 %v391
    %v466 = vunpack.c.l.b16 %v392
    %v467 = vunpack.c.h.b16 %v392
    %v468 = vunpack.c.l.b16 %v393
    %v469 = vunpack.c.h.b16 %v393
    %v470 = vunpack.c.l.b16 %v394
    %v471 = vunpack.c.h.b16 %v394
    %v472 = vunpack.c.l.b16 %v395
    %v473 = vunpack.c.h.b16 %v395
    %v474 = vunpack.c.l.b16 %v396
    %v475 = vunpack.c.h.b16 %v396
    %v476 = vunpack.c.l.b16 %v397
    %v477 = vunpack.c.h.b16 %v397
    %v478 = vunpack.c.l.b16 %v398
    %v479 = vunpack.c.h.b16 %v398
    %v480 = vunpack.c.l.b16 %v399
    %v481 = vunpack.c.h.b16 %v399
    %v482 = vunpack.c.l.b16 %v400
    %v483 = vunpack.c.h.b16 %v400
    %v484 = vunpack.c.l.b16 %v401
    %v485 = vunpack.c.h.b16 %v401
    %v486 = vunpack.c.l.b16 %v402
    %v487 = vunpack.c.h.b16 %v402
    %v488 = vunpack.c.l.b16 %v403
    %v489 = vunpack.c.h.b16 %v403
    %v490 = vunpack.c.l.b16 %v404
    %v491 = vunpack.c.h.b16 %v404
    %v492 = vunpack.c.l.b16 %v405
    %v493 = vunpack.c.h.b16 %v405
    %v494 = vunpack.c.l.b16 %v406
    %v495 = vunpack.c.h.b16 %v406
    %v496 = vunpack.c.l.b16 %v407
    %v497 = vunpack.c.h.b16 %v407
    %v498 = vunpack.c.l.b16 %v408
    %v499 = vunpack.c.h.b16 %v408
    %v500 = vunpack.c.l.b16 %v409
    %v501 = vunpack.c.h.b16 %v409
    %v502 = vunpack.c.l.b16 %v410
    %v503 = vunpack.c.h.b16 %v410
    %v504 = vunpack.c.l.b16 %v411
    %v505 = vunpack.c.h.b16 %v411
    %v506 = vunpack.c.l.b16 %v412
    %v507 = vunpack.c.h.b16 %v412
    %v508 = vunpack.c.l.b16 %v413
    %v509 = vunpack.c.h.b16 %v413
    %v510 = vpack.c.b16 %v450, %v446
    %v511 = vpack.c.b16 %v451, %v447
    %v512 = vpack.c.b16 %v452, %v448
    %v513 = vpack.c.b16 %v453, %v449
    %v514 = vpack.c.b16 %v458, %v454
    %v515 = vpack.c.b16 %v459, %v455
    %v516 = vpack.c.b16 %v460, %v456
    %v517 = vpack.c.b16 %v461, %v457
    %v518 = vpack.c.b16 %v466, %v462
    %v519 = vpack.c.b16 %v467, %v463
    %v520 = vpack.c.b16 %v468, %v464
    %v521 = vpack.c.b16 %v469, %v465
    %v522 = vpack.c.b16 %v474, %v470
    %v523 = vpack.c.b16 %v475, %v471
    %v524 = vpack.c.b16 %v476, %v472
    %v525 = vpack.c.b16 %v477, %v473
    %v526 = vpack.c.b16 %v482, %v478
    %v527 = vpack.c.b16 %v483, %v479
    %v528 = vpack.c.b16 %v484, %v480
    %v529 = vpack.c.b16 %v485, %v481
    %v530 = vpack.c.b16 %v490, %v486
    %v531 = vpack.c.b16 %v491, %v487
    %v532 = vpack.c.b16 %v492, %v488
    %v533 = vpack.c.b16 %v493, %v489
    %v534 = vpack.c.b16 %v498, %v494
    %v535 = vpack.c.b16 %v499, %v495
    %v536 = vpack.c.b16 %v500, %v496
    %v537 = vpack.c.b16 %v501, %v497
    %v538 = vpack.c.b16 %v506, %v502
    %v539 = vpack.c.b16 %v507, %v503
    %v540 = vpack.c.b16 %v508, %v504
    %v541 = vpack.c.b16 %v509, %v505
    %v638 = vunpack.c.l.b16 %v318
    %v639 = vunpack.c.l.b16 %v319
    %v640 = vunpack.c.l.b16 %v320
    %v641 = vunpack.c.l.b16 %v321
    %v642 = vunpack.c.l.b16 %v322
    %v643 = vunpack.c.l.b16 %v323
    %v644 = vunpack.c.l.b16 %v324
    %v645 = vunpack.c.l.b16 %v325
    %v646 = vunpack.c.l.b16 %v326
    %v647 = vunpack.c.l.b16 %v327
    %v648 = vunpack.c.l.b16 %v328
    %v649 = vunpack.c.l.b16 %v329
    %v650 = vunpack.c.l.b16 %v330
    %v651 = vunpack.c.l.b16 %v331
    %v652 = vunpack.c.l.b16 %v332
    %v653 = vunpack.c.l.b16 %v333
    %v654 = vunpack.c.l.b16 %v334
    %v655 = vunpack.c.l.b16 %v335
    %v656 = vunpack.c.l.b16 %v336
    %v657 = vunpack.c.l.b16 %v337
    %v658 = vunpack.c.l.b16 %v338
    %v659 = vunpack.c.l.b16 %v339
    %v660 = vunpack.c.l.b16 %v340
    %v661 = vunpack.c.l.b16 %v341
    %v662 = vunpack.c.l.b16 %v342
    %v663 = vunpack.c.l.b16 %v343
    %v664 = vunpack.c.l.b16 %v344
    %v665 = vunpack.c.l.b16 %v345
    %v666 = vunpack.c.l.b16 %v346
    %v667 = vunpack.c.l.b16 %v347
    %v668 = vunpack.c.l.b16 %v348
    %v669 = vunpack.c.l.b16 %v349
    %v670 = vunpack.c.l.b16 %v350
    %v671 = vunpack.c.l.b16 %v351
    %v672 = vunpack.c.l.b16 %v352
    %v673 = vunpack.c.l.b16 %v353
    %v674 = vunpack.c.l.b16 %v354
    %v675 = vunpack.c.l.b16 %v355
    %v676 = vunpack.c.l.b16 %v356
    %v677 = vunpack.c.l.b16 %v357
    %v678 = vunpack.c.l.b16 %v358
    %v679 = vunpack.c.l.b16 %v359
    %v680 = vunpack.c.l.b16 %v360
    %v681 = vunpack.c.l.b16 %v361
    %v682 = vunpack.c.l.b16 %v362
    %v683 = vunpack.c.l.b16 %v363
    %v684 = vunpack.c.l.b16 %v364
    %v685 = vunpack.c.l.b16 %v365
    %v686 = vunpack.c.l.b16 %v366
    %v687 = vunpack.c.l.b16 %v367
    %v688 = vunpack.c.l.b16 %v368
    %v689 = vunpack.c.l.b16 %v369
    %v690 = vunpack.c.l.b16 %v370
    %v691 = vunpack.c.l.b16 %v371
    %v692 = vunpack.c.l.b16 %v372
    %v693 = vunpack.c.l.b16 %v373
    %v694 = vunpack.c.l.b16 %v374
    %v695 = vunpack.c.l.b16 %v375
    %v696 = vunpack.c.l.b16 %v376
    %v697 = vunpack.c.l.b16 %v377
    %v698 = vunpack.c.l.b16 %v378
    %v699 = vunpack.c.l.b16 %v379
    %v700 = vunpack.c.l.b16 %v380
    %v701 = vunpack.c.l.b16 %v381
    %v702 = vpack.c.b16 %v639, %v638
    %v703 = vpack.c.b16 %v641, %v640
    %v704 = vpack.c.b16 %v643, %v642
    %v705 = vpack.c.b16 %v645, %v644
    %v706 = vpack.c.b16 %v647, %v646
    %v707 = vpack.c.b16 %v649, %v648
    %v708 = vpack.c.b16 %v651, %v650
    %v709 = vpack.c.b16 %v653, %v652
    %v710 = vpack.c.b16 %v655, %v654
    %v711 = vpack.c.b16 %v657, %v656
    %v712 = vpack.c.b16 %v659, %v658
    %v713 = vpack.c.b16 %v661, %v660
    %v714 = vpack.c.b16 %v663, %v662
    %v715 = vpack.c.b16 %v665, %v664
    %v716 = vpack.c.b16 %v667, %v666
    %v717 = vpack.c.b16 %v669, %v668
    %v718 = vpack.c.b16 %v671, %v670
    %v719 = vpack.c.b16 %v673, %v672
    %v720 = vpack.c.b16 %v675, %v674
    %v721 = vpack.c.b16 %v677, %v676
    %v722 = vpack.c.b16 %v679, %v678
    %v723 = vpack.c.b16 %v681, %v680
    %v724 = vpack.c.b16 %v683, %v682
    %v725 = vpack.c.b16 %v685, %v684
    %v726 = vpack.c.b16 %v687, %v686
    %v727 = vpack.c.b16 %v689, %v688
    %v728 = vpack.c.b16 %v691, %v690
    %v729 = vpack.c.b16 %v693, %v692
    %v730 = vpack.c.b16 %v695, %v694
    %v731 = vpack.c.b16 %v697, %v696
    %v732 = vpack.c.b16 %v699, %v698
    %v733 = vpack.c.b16 %v701, %v700
    %766 = vmatprep.subr.bf16.mxu0 0
    %767 = vmatpush1.bf16.msra.mxu0 %v702
    %768 = vmatprep.subr.bf16.mxu0 0
    %769 = vmatpush1.bf16.msra.mxu0 %v703
    %770 = vmatprep.subr.bf16.mxu0 0
    %771 = vmatpush1.bf16.msra.mxu0 %v704
    %772 = vmatprep.subr.bf16.mxu0 0
    %773 = vmatpush1.bf16.msra.mxu0 %v705
    %774 = vmatprep.subr.bf16.mxu0 0
    %775 = vmatpush1.bf16.msra.mxu0 %v706
    %776 = vmatprep.subr.bf16.mxu0 0
    %777 = vmatpush1.bf16.msra.mxu0 %v707
    %778 = vmatprep.subr.bf16.mxu0 0
    %779 = vmatpush1.bf16.msra.mxu0 %v708
    %780 = vmatprep.subr.bf16.mxu0 0
    %781 = vmatpush1.bf16.msra.mxu0 %v709
    %782 = vmatprep.subr.bf16.mxu0 0
    %783 = vmatpush1.bf16.msra.mxu0 %v710
    %784 = vmatprep.subr.bf16.mxu0 0
    %785 = vmatpush1.bf16.msra.mxu0 %v711
    %786 = vmatprep.subr.bf16.mxu0 0
    %787 = vmatpush1.bf16.msra.mxu0 %v712
    %788 = vmatprep.subr.bf16.mxu0 0
    %789 = vmatpush1.bf16.msra.mxu0 %v713
    %790 = vmatprep.subr.bf16.mxu0 0
    %791 = vmatpush1.bf16.msra.mxu0 %v714
    %792 = vmatprep.subr.bf16.mxu0 0
    %793 = vmatpush1.bf16.msra.mxu0 %v715
    %794 = vmatprep.subr.bf16.mxu0 0
    %795 = vmatpush1.bf16.msra.mxu0 %v716
    %796 = vmatprep.subr.bf16.mxu0 0
    %797 = vmatpush1.bf16.msra.mxu0 %v717
    %798 = vmatprep.mubr.bf16.mxu0 %v511
    %799 = vmatmul.mubr.bf16.gmra.mrb[0].mxu0 %v510
    %v800 = vpop.f32.mrb[0].mxu0
    %v801 = vadd.f32 0.0, %v800
    %v802 = vpop.f32.mrb[0].mxu0
    %v803 = vpop.f32.mrb[0].mxu0
    %v804 = vadd.f32 0.0, %v803
    %v805 = vpop.f32.mrb[0].mxu0
    %806 = vmatprep.mubr.bf16.mxu0 %v515
    %807 = vmatmul.mubr.bf16.gmra.mrb[0].mxu0 %v514
    %v808 = vpop.f32.mrb[0].mxu0
    %v809 = vadd.f32 0.0, %v808
    %v810 = vpop.f32.mrb[0].mxu0
    %v811 = vpop.f32.mrb[0].mxu0
    %v812 = vadd.f32 0.0, %v811
    %v813 = vpop.f32.mrb[0].mxu0
    %814 = vmatprep.mubr.bf16.mxu0 %v519
    %815 = vmatmul.mubr.bf16.gmra.mrb[0].mxu0 %v518
    %v816 = vpop.f32.mrb[0].mxu0
    %v817 = vadd.f32 0.0, %v816
    %v818 = vpop.f32.mrb[0].mxu0
    %v819 = vpop.f32.mrb[0].mxu0
    %v820 = vadd.f32 0.0, %v819
    %v821 = vpop.f32.mrb[0].mxu0
    %822 = vmatprep.mubr.bf16.mxu0 %v523
    %823 = vmatmul.mubr.bf16.gmra.mrb[0].mxu0 %v522
    %v824 = vpop.f32.mrb[0].mxu0
    %v825 = vadd.f32 0.0, %v824
    %v826 = vpop.f32.mrb[0].mxu0
    %v827 = vpop.f32.mrb[0].mxu0
    %v828 = vadd.f32 0.0, %v827
    %v829 = vpop.f32.mrb[0].mxu0
    %830 = vmatprep.mubr.bf16.mxu0 %v527
    %831 = vmatmul.mubr.bf16.gmra.mrb[0].mxu0 %v526
    %v832 = vpop.f32.mrb[0].mxu0
    %v833 = vadd.f32 0.0, %v832
    %v834 = vpop.f32.mrb[0].mxu0
    %v835 = vpop.f32.mrb[0].mxu0
    %v836 = vadd.f32 0.0, %v835
    %v837 = vpop.f32.mrb[0].mxu0
    %838 = vmatprep.mubr.bf16.mxu0 %v531
    %839 = vmatmul.mubr.bf16.gmra.mrb[0].mxu0 %v530
    %v840 = vpop.f32.mrb[0].mxu0
    %v841 = vadd.f32 0.0, %v840
    %v842 = vpop.f32.mrb[0].mxu0
    %v843 = vpop.f32.mrb[0].mxu0
    %v844 = vadd.f32 0.0, %v843
    %v845 = vpop.f32.mrb[0].mxu0
    %846 = vmatprep.mubr.bf16.mxu0 %v535
    %847 = vmatmul.mubr.bf16.gmra.mrb[0].mxu0 %v534
    %v848 = vpop.f32.mrb[0].mxu0
    %v849 = vadd.f32 0.0, %v848
    %v850 = vpop.f32.mrb[0].mxu0
    %v851 = vpop.f32.mrb[0].mxu0
    %v852 = vadd.f32 0.0, %v851
    %v853 = vpop.f32.mrb[0].mxu0
    %854 = vmatprep.mubr.bf16.mxu0 %v539
    %855 = vmatmul.mubr.bf16.gmra.mrb[0].mxu0 %v538
    %v856 = vpop.f32.mrb[0].mxu0
    %v857 = vadd.f32 0.0, %v856
    %v858 = vpop.f32.mrb[0].mxu0
    %v859 = vpop.f32.mrb[0].mxu0
    %v860 = vadd.f32 0.0, %v859
    %v861 = vpop.f32.mrb[0].mxu0
    %862 = vdwg.mxu0
    %863 = vmatprep.subr.bf16.mxu0 0
    %864 = vmatpush1.bf16.msra.mxu0 %v718
    %865 = vmatprep.subr.bf16.mxu0 0
    %866 = vmatpush1.bf16.msra.mxu0 %v719
    %867 = vmatprep.subr.bf16.mxu0 0
    %868 = vmatpush1.bf16.msra.mxu0 %v720
    %869 = vmatprep.subr.bf16.mxu0 0
    %870 = vmatpush1.bf16.msra.mxu0 %v721
    %871 = vmatprep.subr.bf16.mxu0 0
    %872 = vmatpush1.bf16.msra.mxu0 %v722
    %873 = vmatprep.subr.bf16.mxu0 0
    %874 = vmatpush1.bf16.msra.mxu0 %v723
    %875 = vmatprep.subr.bf16.mxu0 0
    %876 = vmatpush1.bf16.msra.mxu0 %v724
    %877 = vmatprep.subr.bf16.mxu0 0
    %878 = vmatpush1.bf16.msra.mxu0 %v725
    %879 = vmatprep.subr.bf16.mxu0 0
    %880 = vmatpush1.bf16.msra.mxu0 %v726
    %881 = vmatprep.subr.bf16.mxu0 0
    %882 = vmatpush1.bf16.msra.mxu0 %v727
    %883 = vmatprep.subr.bf16.mxu0 0
    %884 = vmatpush1.bf16.msra.mxu0 %v728
    %885 = vmatprep.subr.bf16.mxu0 0
    %886 = vmatpush1.bf16.msra.mxu0 %v729
    %887 = vmatprep.subr.bf16.mxu0 0
    %888 = vmatpush1.bf16.msra.mxu0 %v730
    %889 = vmatprep.subr.bf16.mxu0 0
    %890 = vmatpush1.bf16.msra.mxu0 %v731
    %891 = vmatprep.subr.bf16.mxu0 0
    %892 = vmatpush1.bf16.msra.mxu0 %v732
    %893 = vmatprep.subr.bf16.mxu0 0
    %894 = vmatpush1.bf16.msra.mxu0 %v733
    %895 = vmatprep.mubr.bf16.mxu0 %v513
    %896 = vmatmul.mubr.bf16.gmra.mrb[0].mxu0 %v512
    %v897 = vpop.f32.mrb[0].mxu0
    %v898 = vadd.f32 %v801, %v897
    %v899 = vpop.f32.mrb[0].mxu0
    %v900 = vpop.f32.mrb[0].mxu0
    %v901 = vadd.f32 %v804, %v900
    %v902 = vpop.f32.mrb[0].mxu0
    %903 = vmatprep.mubr.bf16.mxu0 %v517
    %904 = vmatmul.mubr.bf16.gmra.mrb[0].mxu0 %v516
    %v905 = vpop.f32.mrb[0].mxu0
    %v906 = vadd.f32 %v809, %v905
    %v907 = vpop.f32.mrb[0].mxu0
    %v908 = vpop.f32.mrb[0].mxu0
    %v909 = vadd.f32 %v812, %v908
    %v910 = vpop.f32.mrb[0].mxu0
    %911 = vmatprep.mubr.bf16.mxu0 %v521
    %912 = vmatmul.mubr.bf16.gmra.mrb[0].mxu0 %v520
    %v913 = vpop.f32.mrb[0].mxu0
    %v914 = vadd.f32 %v817, %v913
    %v915 = vpop.f32.mrb[0].mxu0
    %v916 = vpop.f32.mrb[0].mxu0
    %v917 = vadd.f32 %v820, %v916
    %v918 = vpop.f32.mrb[0].mxu0
    %919 = vmatprep.mubr.bf16.mxu0 %v525
    %920 = vmatmul.mubr.bf16.gmra.mrb[0].mxu0 %v524
    %v921 = vpop.f32.mrb[0].mxu0
    %v922 = vadd.f32 %v825, %v921
    %v923 = vpop.f32.mrb[0].mxu0
    %v924 = vpop.f32.mrb[0].mxu0
    %v925 = vadd.f32 %v828, %v924
    %v926 = vpop.f32.mrb[0].mxu0
    %927 = vmatprep.mubr.bf16.mxu0 %v529
    %928 = vmatmul.mubr.bf16.gmra.mrb[0].mxu0 %v528
    %v929 = vpop.f32.mrb[0].mxu0
    %v930 = vadd.f32 %v833, %v929
    %v931 = vpop.f32.mrb[0].mxu0
    %v932 = vpop.f32.mrb[0].mxu0
    %v933 = vadd.f32 %v836, %v932
    %v934 = vpop.f32.mrb[0].mxu0
    %935 = vmatprep.mubr.bf16.mxu0 %v533
    %936 = vmatmul.mubr.bf16.gmra.mrb[0].mxu0 %v532
    %v937 = vpop.f32.mrb[0].mxu0
    %v938 = vadd.f32 %v841, %v937
    %v939 = vpop.f32.mrb[0].mxu0
    %v940 = vpop.f32.mrb[0].mxu0
    %v941 = vadd.f32 %v844, %v940
    %v942 = vpop.f32.mrb[0].mxu0
    %943 = vmatprep.mubr.bf16.mxu0 %v537
    %944 = vmatmul.mubr.bf16.gmra.mrb[0].mxu0 %v536
    %v945 = vpop.f32.mrb[0].mxu0
    %v946 = vadd.f32 %v849, %v945
    %v947 = vpop.f32.mrb[0].mxu0
    %v948 = vpop.f32.mrb[0].mxu0
    %v949 = vadd.f32 %v852, %v948
    %v950 = vpop.f32.mrb[0].mxu0
    %951 = vmatprep.mubr.bf16.mxu0 %v541
    %952 = vmatmul.mubr.bf16.gmra.mrb[0].mxu0 %v540
    %v953 = vpop.f32.mrb[0].mxu0
    %v954 = vadd.f32 %v857, %v953
    %v955 = vpop.f32.mrb[0].mxu0
    %v956 = vpop.f32.mrb[0].mxu0
    %v957 = vadd.f32 %v860, %v956
    %v958 = vpop.f32.mrb[0].mxu0
    %959 = vdwg.mxu0
    %v960 = vpack.c.bf16 %v901, %v898
    %v961 = vpack.c.bf16 %v909, %v906
    %v962 = vpack.c.bf16 %v917, %v914
    %v963 = vpack.c.bf16 %v925, %v922
    %v964 = vpack.c.bf16 %v933, %v930
    %v965 = vpack.c.bf16 %v941, %v938
    %v966 = vpack.c.bf16 %v949, %v946
    %v967 = vpack.c.bf16 %v957, %v954
    %v968 = vld [vmem:[#allocation4] sm:$0xf]
    %v969 = vld [vmem:[#allocation4 + $0x4] sm:$0xf]
    %v970 = vld [vmem:[#allocation4 + $0x8] sm:$0xf]
    %v971 = vld [vmem:[#allocation4 + $0xc] sm:$0xf]
    %v972 = vld [vmem:[#allocation4 + $0x10] sm:$0xf]
    %v973 = vld [vmem:[#allocation4 + $0x14] sm:$0xf]
    %v974 = vld [vmem:[#allocation4 + $0x18] sm:$0xf]
    %v975 = vld [vmem:[#allocation4 + $0x1c] sm:$0xf]
    %v976 = vld [vmem:[#allocation4 + $0x20] sm:$0xf]
    %v977 = vld [vmem:[#allocation4 + $0x24] sm:$0xf]
    %v978 = vld [vmem:[#allocation4 + $0x28] sm:$0xf]
    %v979 = vld [vmem:[#allocation4 + $0x2c] sm:$0xf]
    %v980 = vld [vmem:[#allocation4 + $0x30] sm:$0xf]
    %v981 = vld [vmem:[#allocation4 + $0x34] sm:$0xf]
    %v982 = vld [vmem:[#allocation4 + $0x38] sm:$0xf]
    %v983 = vld [vmem:[#allocation4 + $0x3c] sm:$0xf]
    %v984 = vld [vmem:[#allocation2 + $0x100] sm:$0xff]
    %v985 = vld [vmem:[#allocation2 + $0x108] sm:$0xff]
    %v986 = vld [vmem:[#allocation2 + $0x110] sm:$0xff]
    %v987 = vld [vmem:[#allocation2 + $0x118] sm:$0xff]
    %v988 = vld [vmem:[#allocation2 + $0x120] sm:$0xff]
    %v989 = vld [vmem:[#allocation2 + $0x128] sm:$0xff]
    %v990 = vld [vmem:[#allocation2 + $0x130] sm:$0xff]
    %v991 = vld [vmem:[#allocation2 + $0x138] sm:$0xff]
    %v992 = vld [vmem:[#allocation2 + $0x140] sm:$0xff]
    %v993 = vld [vmem:[#allocation2 + $0x148] sm:$0xff]
    %v994 = vld [vmem:[#allocation2 + $0x150] sm:$0xff]
    %v995 = vld [vmem:[#allocation2 + $0x158] sm:$0xff]
    %v996 = vld [vmem:[#allocation2 + $0x160] sm:$0xff]
    %v997 = vld [vmem:[#allocation2 + $0x168] sm:$0xff]
    %v998 = vld [vmem:[#allocation2 + $0x170] sm:$0xff]
    %v999 = vld [vmem:[#allocation2 + $0x178] sm:$0xff]
    %v1000 = vld [vmem:[#allocation2 + $0x180] sm:$0xff]
    %v1001 = vld [vmem:[#allocation2 + $0x188] sm:$0xff]
    %v1002 = vld [vmem:[#allocation2 + $0x190] sm:$0xff]
    %v1003 = vld [vmem:[#allocation2 + $0x198] sm:$0xff]
    %v1004 = vld [vmem:[#allocation2 + $0x1a0] sm:$0xff]
    %v1005 = vld [vmem:[#allocation2 + $0x1a8] sm:$0xff]
    %v1006 = vld [vmem:[#allocation2 + $0x1b0] sm:$0xff]
    %v1007 = vld [vmem:[#allocation2 + $0x1b8] sm:$0xff]
    %v1008 = vld [vmem:[#allocation2 + $0x1c0] sm:$0xff]
    %v1009 = vld [vmem:[#allocation2 + $0x1c8] sm:$0xff]
    %v1010 = vld [vmem:[#allocation2 + $0x1d0] sm:$0xff]
    %v1011 = vld [vmem:[#allocation2 + $0x1d8] sm:$0xff]
    %v1012 = vld [vmem:[#allocation2 + $0x1e0] sm:$0xff]
    %v1013 = vld [vmem:[#allocation2 + $0x1e8] sm:$0xff]
    %v1014 = vld [vmem:[#allocation2 + $0x1f0] sm:$0xff]
    %v1015 = vld [vmem:[#allocation2 + $0x1f8] sm:$0xff]
    %v1048 = vunpack.c.l.b16 %v984
    %v1049 = vunpack.c.h.b16 %v984
    %v1050 = vunpack.c.l.b16 %v985
    %v1051 = vunpack.c.h.b16 %v985
    %v1052 = vunpack.c.l.b16 %v986
    %v1053 = vunpack.c.h.b16 %v986
    %v1054 = vunpack.c.l.b16 %v987
    %v1055 = vunpack.c.h.b16 %v987
    %v1056 = vunpack.c.l.b16 %v988
    %v1057 = vunpack.c.h.b16 %v988
    %v1058 = vunpack.c.l.b16 %v989
    %v1059 = vunpack.c.h.b16 %v989
    %v1060 = vunpack.c.l.b16 %v990
    %v1061 = vunpack.c.h.b16 %v990
    %v1062 = vunpack.c.l.b16 %v991
    %v1063 = vunpack.c.h.b16 %v991
    %v1064 = vunpack.c.l.b16 %v992
    %v1065 = vunpack.c.h.b16 %v992
    %v1066 = vunpack.c.l.b16 %v993
    %v1067 = vunpack.c.h.b16 %v993
    %v1068 = vunpack.c.l.b16 %v994
    %v1069 = vunpack.c.h.b16 %v994
    %v1070 = vunpack.c.l.b16 %v995
    %v1071 = vunpack.c.h.b16 %v995
    %v1072 = vunpack.c.l.b16 %v996
    %v1073 = vunpack.c.h.b16 %v996
    %v1074 = vunpack.c.l.b16 %v997
    %v1075 = vunpack.c.h.b16 %v997
    %v1076 = vunpack.c.l.b16 %v998
    %v1077 = vunpack.c.h.b16 %v998
    %v1078 = vunpack.c.l.b16 %v999
    %v1079 = vunpack.c.h.b16 %v999
    %v1080 = vunpack.c.l.b16 %v1000
    %v1081 = vunpack.c.h.b16 %v1000
    %v1082 = vunpack.c.l.b16 %v1001
    %v1083 = vunpack.c.h.b16 %v1001
    %v1084 = vunpack.c.l.b16 %v1002
    %v1085 = vunpack.c.h.b16 %v1002
    %v1086 = vunpack.c.l.b16 %v1003
    %v1087 = vunpack.c.h.b16 %v1003
    %v1088 = vunpack.c.l.b16 %v1004
    %v1089 = vunpack.c.h.b16 %v1004
    %v1090 = vunpack.c.l.b16 %v1005
    %v1091 = vunpack.c.h.b16 %v1005
    %v1092 = vunpack.c.l.b16 %v1006
    %v1093 = vunpack.c.h.b16 %v1006
    %v1094 = vunpack.c.l.b16 %v1007
    %v1095 = vunpack.c.h.b16 %v1007
    %v1096 = vunpack.c.l.b16 %v1008
    %v1097 = vunpack.c.h.b16 %v1008
    %v1098 = vunpack.c.l.b16 %v1009
    %v1099 = vunpack.c.h.b16 %v1009
    %v1100 = vunpack.c.l.b16 %v1010
    %v1101 = vunpack.c.h.b16 %v1010
    %v1102 = vunpack.c.l.b16 %v1011
    %v1103 = vunpack.c.h.b16 %v1011
    %v1104 = vunpack.c.l.b16 %v1012
    %v1105 = vunpack.c.h.b16 %v1012
    %v1106 = vunpack.c.l.b16 %v1013
    %v1107 = vunpack.c.h.b16 %v1013
    %v1108 = vunpack.c.l.b16 %v1014
    %v1109 = vunpack.c.h.b16 %v1014
    %v1110 = vunpack.c.l.b16 %v1015
    %v1111 = vunpack.c.h.b16 %v1015
    %v1112 = vpack.c.b16 %v1052, %v1048
    %v1113 = vpack.c.b16 %v1053, %v1049
    %v1114 = vpack.c.b16 %v1054, %v1050
    %v1115 = vpack.c.b16 %v1055, %v1051
    %v1116 = vpack.c.b16 %v1060, %v1056
    %v1117 = vpack.c.b16 %v1061, %v1057
    %v1118 = vpack.c.b16 %v1062, %v1058
    %v1119 = vpack.c.b16 %v1063, %v1059
    %v1120 = vpack.c.b16 %v1068, %v1064
    %v1121 = vpack.c.b16 %v1069, %v1065
    %v1122 = vpack.c.b16 %v1070, %v1066
    %v1123 = vpack.c.b16 %v1071, %v1067
    %v1124 = vpack.c.b16 %v1076, %v1072
    %v1125 = vpack.c.b16 %v1077, %v1073
    %v1126 = vpack.c.b16 %v1078, %v1074
    %v1127 = vpack.c.b16 %v1079, %v1075
    %v1128 = vpack.c.b16 %v1084, %v1080
    %v1129 = vpack.c.b16 %v1085, %v1081
    %v1130 = vpack.c.b16 %v1086, %v1082
    %v1131 = vpack.c.b16 %v1087, %v1083
    %v1132 = vpack.c.b16 %v1092, %v1088
    %v1133 = vpack.c.b16 %v1093, %v1089
    %v1134 = vpack.c.b16 %v1094, %v1090
    %v1135 = vpack.c.b16 %v1095, %v1091
    %v1136 = vpack.c.b16 %v1100, %v1096
    %v1137 = vpack.c.b16 %v1101, %v1097
    %v1138 = vpack.c.b16 %v1102, %v1098
    %v1139 = vpack.c.b16 %v1103, %v1099
    %v1140 = vpack.c.b16 %v1108, %v1104
    %v1141 = vpack.c.b16 %v1109, %v1105
    %v1142 = vpack.c.b16 %v1110, %v1106
    %v1143 = vpack.c.b16 %v1111, %v1107
    %1176 = vmatprep.subr.bf16.mxu0 0
    %1177 = vmatpush1.bf16.msra.mxu0 %v702
    %1178 = vmatprep.subr.bf16.mxu0 0
    %1179 = vmatpush1.bf16.msra.mxu0 %v703
    %1180 = vmatprep.subr.bf16.mxu0 0
    %1181 = vmatpush1.bf16.msra.mxu0 %v704
    %1182 = vmatprep.subr.bf16.mxu0 0
    %1183 = vmatpush1.bf16.msra.mxu0 %v705
    %1184 = vmatprep.subr.bf16.mxu0 0
    %1185 = vmatpush1.bf16.msra.mxu0 %v706
    %1186 = vmatprep.subr.bf16.mxu0 0
    %1187 = vmatpush1.bf16.msra.mxu0 %v707
    %1188 = vmatprep.subr.bf16.mxu0 0
    %1189 = vmatpush1.bf16.msra.mxu0 %v708
    %1190 = vmatprep.subr.bf16.mxu0 0
    %1191 = vmatpush1.bf16.msra.mxu0 %v709
    %1192 = vmatprep.subr.bf16.mxu0 0
    %1193 = vmatpush1.bf16.msra.mxu0 %v710
    %1194 = vmatprep.subr.bf16.mxu0 0
    %1195 = vmatpush1.bf16.msra.mxu0 %v711
    %1196 = vmatprep.subr.bf16.mxu0 0
    %1197 = vmatpush1.bf16.msra.mxu0 %v712
    %1198 = vmatprep.subr.bf16.mxu0 0
    %1199 = vmatpush1.bf16.msra.mxu0 %v713
    %1200 = vmatprep.subr.bf16.mxu0 0
    %1201 = vmatpush1.bf16.msra.mxu0 %v714
    %1202 = vmatprep.subr.bf16.mxu0 0
    %1203 = vmatpush1.bf16.msra.mxu0 %v715
    %1204 = vmatprep.subr.bf16.mxu0 0
    %1205 = vmatpush1.bf16.msra.mxu0 %v716
    %1206 = vmatprep.subr.bf16.mxu0 0
    %1207 = vmatpush1.bf16.msra.mxu0 %v717
    %1208 = vmatprep.mubr.bf16.mxu0 %v1113
    %1209 = vmatmul.mubr.bf16.gmra.mrb[0].mxu0 %v1112
    %v1210 = vpop.f32.mrb[0].mxu0
    %v1211 = vadd.f32 0.0, %v1210
    %v1212 = vpop.f32.mrb[0].mxu0
    %v1213 = vpop.f32.mrb[0].mxu0
    %v1214 = vadd.f32 0.0, %v1213
    %v1215 = vpop.f32.mrb[0].mxu0
    %1216 = vmatprep.mubr.bf16.mxu0 %v1117
    %1217 = vmatmul.mubr.bf16.gmra.mrb[0].mxu0 %v1116
    %v1218 = vpop.f32.mrb[0].mxu0
    %v1219 = vadd.f32 0.0, %v1218
    %v1220 = vpop.f32.mrb[0].mxu0
    %v1221 = vpop.f32.mrb[0].mxu0
    %v1222 = vadd.f32 0.0, %v1221
    %v1223 = vpop.f32.mrb[0].mxu0
    %1224 = vmatprep.mubr.bf16.mxu0 %v1121
    %1225 = vmatmul.mubr.bf16.gmra.mrb[0].mxu0 %v1120
    %v1226 = vpop.f32.mrb[0].mxu0
    %v1227 = vadd.f32 0.0, %v1226
    %v1228 = vpop.f32.mrb[0].mxu0
    %v1229 = vpop.f32.mrb[0].mxu0
    %v1230 = vadd.f32 0.0, %v1229
    %v1231 = vpop.f32.mrb[0].mxu0
    %1232 = vmatprep.mubr.bf16.mxu0 %v1125
    %1233 = vmatmul.mubr.bf16.gmra.mrb[0].mxu0 %v1124
    %v1234 = vpop.f32.mrb[0].mxu0
    %v1235 = vadd.f32 0.0, %v1234
    %v1236 = vpop.f32.mrb[0].mxu0
    %v1237 = vpop.f32.mrb[0].mxu0
    %v1238 = vadd.f32 0.0, %v1237
    %v1239 = vpop.f32.mrb[0].mxu0
    %1240 = vmatprep.mubr.bf16.mxu0 %v1129
    %1241 = vmatmul.mubr.bf16.gmra.mrb[0].mxu0 %v1128
    %v1242 = vpop.f32.mrb[0].mxu0
    %v1243 = vadd.f32 0.0, %v1242
    %v1244 = vpop.f32.mrb[0].mxu0
    %v1245 = vpop.f32.mrb[0].mxu0
    %v1246 = vadd.f32 0.0, %v1245
    %v1247 = vpop.f32.mrb[0].mxu0
    %1248 = vmatprep.mubr.bf16.mxu0 %v1133
    %1249 = vmatmul.mubr.bf16.gmra.mrb[0].mxu0 %v1132
    %v1250 = vpop.f32.mrb[0].mxu0
    %v1251 = vadd.f32 0.0, %v1250
    %v1252 = vpop.f32.mrb[0].mxu0
    %v1253 = vpop.f32.mrb[0].mxu0
    %v1254 = vadd.f32 0.0, %v1253
    %v1255 = vpop.f32.mrb[0].mxu0
    %1256 = vmatprep.mubr.bf16.mxu0 %v1137
    %1257 = vmatmul.mubr.bf16.gmra.mrb[0].mxu0 %v1136
    %v1258 = vpop.f32.mrb[0].mxu0
    %v1259 = vadd.f32 0.0, %v1258
    %v1260 = vpop.f32.mrb[0].mxu0
    %v1261 = vpop.f32.mrb[0].mxu0
    %v1262 = vadd.f32 0.0, %v1261
    %v1263 = vpop.f32.mrb[0].mxu0
    %1264 = vmatprep.mubr.bf16.mxu0 %v1141
    %1265 = vmatmul.mubr.bf16.gmra.mrb[0].mxu0 %v1140
    %v1266 = vpop.f32.mrb[0].mxu0
    %v1267 = vadd.f32 0.0, %v1266
    %v1268 = vpop.f32.mrb[0].mxu0
    %v1269 = vpop.f32.mrb[0].mxu0
    %v1270 = vadd.f32 0.0, %v1269
    %v1271 = vpop.f32.mrb[0].mxu0
    %1272 = vdwg.mxu0
    %1273 = vmatprep.subr.bf16.mxu0 0
    %1274 = vmatpush1.bf16.msra.mxu0 %v718
    %1275 = vmatprep.subr.bf16.mxu0 0
    %1276 = vmatpush1.bf16.msra.mxu0 %v719
    %1277 = vmatprep.subr.bf16.mxu0 0
    %1278 = vmatpush1.bf16.msra.mxu0 %v720
    %1279 = vmatprep.subr.bf16.mxu0 0
    %1280 = vmatpush1.bf16.msra.mxu0 %v721
    %1281 = vmatprep.subr.bf16.mxu0 0
    %1282 = vmatpush1.bf16.msra.mxu0 %v722
    %1283 = vmatprep.subr.bf16.mxu0 0
    %1284 = vmatpush1.bf16.msra.mxu0 %v723
    %1285 = vmatprep.subr.bf16.mxu0 0
    %1286 = vmatpush1.bf16.msra.mxu0 %v724
    %1287 = vmatprep.subr.bf16.mxu0 0
    %1288 = vmatpush1.bf16.msra.mxu0 %v725
    %1289 = vmatprep.subr.bf16.mxu0 0
    %1290 = vmatpush1.bf16.msra.mxu0 %v726
    %1291 = vmatprep.subr.bf16.mxu0 0
    %1292 = vmatpush1.bf16.msra.mxu0 %v727
    %1293 = vmatprep.subr.bf16.mxu0 0
    %1294 = vmatpush1.bf16.msra.mxu0 %v728
    %1295 = vmatprep.subr.bf16.mxu0 0
    %1296 = vmatpush1.bf16.msra.mxu0 %v729
    %1297 = vmatprep.subr.bf16.mxu0 0
    %1298 = vmatpush1.bf16.msra.mxu0 %v730
    %1299 = vmatprep.subr.bf16.mxu0 0
    %1300 = vmatpush1.bf16.msra.mxu0 %v731
    %1301 = vmatprep.subr.bf16.mxu0 0
    %1302 = vmatpush1.bf16.msra.mxu0 %v732
    %1303 = vmatprep.subr.bf16.mxu0 0
    %1304 = vmatpush1.bf16.msra.mxu0 %v733
    %1305 = vmatprep.mubr.bf16.mxu0 %v1115
    %1306 = vmatmul.mubr.bf16.gmra.mrb[0].mxu0 %v1114
    %v1307 = vpop.f32.mrb[0].mxu0
    %v1308 = vadd.f32 %v1211, %v1307
    %v1309 = vpop.f32.mrb[0].mxu0
    %v1310 = vpop.f32.mrb[0].mxu0
    %v1311 = vadd.f32 %v1214, %v1310
    %v1312 = vpop.f32.mrb[0].mxu0
    %1313 = vmatprep.mubr.bf16.mxu0 %v1119
    %1314 = vmatmul.mubr.bf16.gmra.mrb[0].mxu0 %v1118
    %v1315 = vpop.f32.mrb[0].mxu0
    %v1316 = vadd.f32 %v1219, %v1315
    %v1317 = vpop.f32.mrb[0].mxu0
    %v1318 = vpop.f32.mrb[0].mxu0
    %v1319 = vadd.f32 %v1222, %v1318
    %v1320 = vpop.f32.mrb[0].mxu0
    %1321 = vmatprep.mubr.bf16.mxu0 %v1123
    %1322 = vmatmul.mubr.bf16.gmra.mrb[0].mxu0 %v1122
    %v1323 = vpop.f32.mrb[0].mxu0
    %v1324 = vadd.f32 %v1227, %v1323
    %v1325 = vpop.f32.mrb[0].mxu0
    %v1326 = vpop.f32.mrb[0].mxu0
    %v1327 = vadd.f32 %v1230, %v1326
    %v1328 = vpop.f32.mrb[0].mxu0
    %1329 = vmatprep.mubr.bf16.mxu0 %v1127
    %1330 = vmatmul.mubr.bf16.gmra.mrb[0].mxu0 %v1126
    %v1331 = vpop.f32.mrb[0].mxu0
    %v1332 = vadd.f32 %v1235, %v1331
    %v1333 = vpop.f32.mrb[0].mxu0
    %v1334 = vpop.f32.mrb[0].mxu0
    %v1335 = vadd.f32 %v1238, %v1334
    %v1336 = vpop.f32.mrb[0].mxu0
    %1337 = vmatprep.mubr.bf16.mxu0 %v1131
    %1338 = vmatmul.mubr.bf16.gmra.mrb[0].mxu0 %v1130
    %v1339 = vpop.f32.mrb[0].mxu0
    %v1340 = vadd.f32 %v1243, %v1339
    %v1341 = vpop.f32.mrb[0].mxu0
    %v1342 = vpop.f32.mrb[0].mxu0
    %v1343 = vadd.f32 %v1246, %v1342
    %v1344 = vpop.f32.mrb[0].mxu0
    %1345 = vmatprep.mubr.bf16.mxu0 %v1135
    %1346 = vmatmul.mubr.bf16.gmra.mrb[0].mxu0 %v1134
    %v1347 = vpop.f32.mrb[0].mxu0
    %v1348 = vadd.f32 %v1251, %v1347
    %v1349 = vpop.f32.mrb[0].mxu0
    %v1350 = vpop.f32.mrb[0].mxu0
    %v1351 = vadd.f32 %v1254, %v1350
    %v1352 = vpop.f32.mrb[0].mxu0
    %1353 = vmatprep.mubr.bf16.mxu0 %v1139
    %1354 = vmatmul.mubr.bf16.gmra.mrb[0].mxu0 %v1138
    %v1355 = vpop.f32.mrb[0].mxu0
    %v1356 = vadd.f32 %v1259, %v1355
    %v1357 = vpop.f32.mrb[0].mxu0
    %v1358 = vpop.f32.mrb[0].mxu0
    %v1359 = vadd.f32 %v1262, %v1358
    %v1360 = vpop.f32.mrb[0].mxu0
    %1361 = vmatprep.mubr.bf16.mxu0 %v1143
    %1362 = vmatmul.mubr.bf16.gmra.mrb[0].mxu0 %v1142
    %v1363 = vpop.f32.mrb[0].mxu0
    %v1364 = vadd.f32 %v1267, %v1363
    %v1365 = vpop.f32.mrb[0].mxu0
    %v1366 = vpop.f32.mrb[0].mxu0
    %v1367 = vadd.f32 %v1270, %v1366
    %v1368 = vpop.f32.mrb[0].mxu0
    %1369 = vdwg.mxu0
    %v1370 = vpack.c.bf16 %v1311, %v1308
    %v1371 = vpack.c.bf16 %v1319, %v1316
    %v1372 = vpack.c.bf16 %v1327, %v1324
    %v1373 = vpack.c.bf16 %v1335, %v1332
    %v1374 = vpack.c.bf16 %v1343, %v1340
    %v1375 = vpack.c.bf16 %v1351, %v1348
    %v1376 = vpack.c.bf16 %v1359, %v1356
    %v1377 = vpack.c.bf16 %v1367, %v1364
    %v1378 = vld [vmem:[#allocation4 + $0x40] sm:$0xf]
    %v1379 = vld [vmem:[#allocation4 + $0x44] sm:$0xf]
    %v1380 = vld [vmem:[#allocation4 + $0x48] sm:$0xf]
    %v1381 = vld [vmem:[#allocation4 + $0x4c] sm:$0xf]
    %v1382 = vld [vmem:[#allocation4 + $0x50] sm:$0xf]
    %v1383 = vld [vmem:[#allocation4 + $0x54] sm:$0xf]
    %v1384 = vld [vmem:[#allocation4 + $0x58] sm:$0xf]
    %v1385 = vld [vmem:[#allocation4 + $0x5c] sm:$0xf]
    %v1386 = vld [vmem:[#allocation4 + $0x60] sm:$0xf]
    %v1387 = vld [vmem:[#allocation4 + $0x64] sm:$0xf]
    %v1388 = vld [vmem:[#allocation4 + $0x68] sm:$0xf]
    %v1389 = vld [vmem:[#allocation4 + $0x6c] sm:$0xf]
    %v1390 = vld [vmem:[#allocation4 + $0x70] sm:$0xf]
    %v1391 = vld [vmem:[#allocation4 + $0x74] sm:$0xf]
    %v1392 = vld [vmem:[#allocation4 + $0x78] sm:$0xf]
    %v1393 = vld [vmem:[#allocation4 + $0x7c] sm:$0xf]
    %v1410 = vunpack.c.l.b16 %v1378
    %v1411 = vunpack.c.l.b16 %v1379
    %v1412 = vunpack.c.l.b16 %v1380
    %v1413 = vunpack.c.l.b16 %v1381
    %v1414 = vunpack.c.l.b16 %v1382
    %v1415 = vunpack.c.l.b16 %v1383
    %v1416 = vunpack.c.l.b16 %v1384
    %v1417 = vunpack.c.l.b16 %v1385
    %v1418 = vunpack.c.l.b16 %v1386
    %v1419 = vunpack.c.l.b16 %v1387
    %v1420 = vunpack.c.l.b16 %v1388
    %v1421 = vunpack.c.l.b16 %v1389
    %v1422 = vunpack.c.l.b16 %v1390
    %v1423 = vunpack.c.l.b16 %v1391
    %v1424 = vunpack.c.l.b16 %v1392
    %v1425 = vunpack.c.l.b16 %v1393
    %v1426 = vpack.c.b16 %v1411, %v1410
    %v1427 = vpack.c.b16 %v1413, %v1412
    %v1428 = vpack.c.b16 %v1415, %v1414
    %v1429 = vpack.c.b16 %v1417, %v1416
    %v1430 = vpack.c.b16 %v1419, %v1418
    %v1431 = vpack.c.b16 %v1421, %v1420
    %v1432 = vpack.c.b16 %v1423, %v1422
    %v1433 = vpack.c.b16 %v1425, %v1424
    %1442 = vmatprep.subr.bf16.mxu0 0
    %1443 = vmatpush1.bf16.msra.mxu0 %v1426
    %1444 = vmatprep.subr.bf16.mxu0 0
    %1445 = vmatpush1.bf16.msra.mxu0 %v1427
    %1446 = vmatprep.subr.bf16.mxu0 0
    %1447 = vmatpush1.bf16.msra.mxu0 %v1428
    %1448 = vmatprep.subr.bf16.mxu0 0
    %1449 = vmatpush1.bf16.msra.mxu0 %v1429
    %1450 = vmatprep.subr.bf16.mxu0 0
    %1451 = vmatpush1.bf16.msra.mxu0 %v1430
    %1452 = vmatprep.subr.bf16.mxu0 0
    %1453 = vmatpush1.bf16.msra.mxu0 %v1431
    %1454 = vmatprep.subr.bf16.mxu0 0
    %1455 = vmatpush1.bf16.msra.mxu0 %v1432
    %1456 = vmatprep.subr.bf16.mxu0 0
    %1457 = vmatpush1.bf16.msra.mxu0 %v1433
    %1458 = vmatprep.subr.bf16.mxu0 0
    %1459 = vmatpush1.bf16.msra.mxu0 0
    %1460 = vmatprep.subr.bf16.mxu0 0
    %1461 = vmatpush1.bf16.msra.mxu0 0
    %1462 = vmatprep.subr.bf16.mxu0 0
    %1463 = vmatpush1.bf16.msra.mxu0 0
    %1464 = vmatprep.subr.bf16.mxu0 0
    %1465 = vmatpush1.bf16.msra.mxu0 0
    %1466 = vmatprep.subr.bf16.mxu0 0
    %1467 = vmatpush1.bf16.msra.mxu0 0
    %1468 = vmatprep.subr.bf16.mxu0 0
    %1469 = vmatpush1.bf16.msra.mxu0 0
    %1470 = vmatprep.subr.bf16.mxu0 0
    %1471 = vmatpush1.bf16.msra.mxu0 0
    %1472 = vmatprep.subr.bf16.mxu0 0
    %1473 = vmatpush1.bf16.msra.mxu0 0
    %1474 = vmatprep.mubr.bf16.mxu0 0
    %1475 = vmatmul.mubr.bf16.gmra.mrb[0].mxu0 %v1370
    %v1476 = vpop.f32.mrb[0].mxu0
    %v1477 = vadd.f32 0.0, %v1476
    %v1478 = vpop.f32.mrb[0].mxu0
    %v1479 = vpop.f32.mrb[0].mxu0
    %v1480 = vadd.f32 0.0, %v1479
    %v1481 = vpop.f32.mrb[0].mxu0
    %1482 = vmatprep.mubr.bf16.mxu0 0
    %1483 = vmatmul.mubr.bf16.gmra.mrb[0].mxu0 %v1371
    %v1484 = vpop.f32.mrb[0].mxu0
    %v1485 = vadd.f32 0.0, %v1484
    %v1486 = vpop.f32.mrb[0].mxu0
    %v1487 = vpop.f32.mrb[0].mxu0
    %v1488 = vadd.f32 0.0, %v1487
    %v1489 = vpop.f32.mrb[0].mxu0
    %1490 = vmatprep.mubr.bf16.mxu0 0
    %1491 = vmatmul.mubr.bf16.gmra.mrb[0].mxu0 %v1372
    %v1492 = vpop.f32.mrb[0].mxu0
    %v1493 = vadd.f32 0.0, %v1492
    %v1494 = vpop.f32.mrb[0].mxu0
    %v1495 = vpop.f32.mrb[0].mxu0
    %v1496 = vadd.f32 0.0, %v1495
    %v1497 = vpop.f32.mrb[0].mxu0
    %1498 = vmatprep.mubr.bf16.mxu0 0
    %1499 = vmatmul.mubr.bf16.gmra.mrb[0].mxu0 %v1373
    %v1500 = vpop.f32.mrb[0].mxu0
    %v1501 = vadd.f32 0.0, %v1500
    %v1502 = vpop.f32.mrb[0].mxu0
    %v1503 = vpop.f32.mrb[0].mxu0
    %v1504 = vadd.f32 0.0, %v1503
    %v1505 = vpop.f32.mrb[0].mxu0
    %1506 = vmatprep.mubr.bf16.mxu0 0
    %1507 = vmatmul.mubr.bf16.gmra.mrb[0].mxu0 %v1374
    %v1508 = vpop.f32.mrb[0].mxu0
    %v1509 = vadd.f32 0.0, %v1508
    %v1510 = vpop.f32.mrb[0].mxu0
    %v1511 = vpop.f32.mrb[0].mxu0
    %v1512 = vadd.f32 0.0, %v1511
    %v1513 = vpop.f32.mrb[0].mxu0
    %1514 = vmatprep.mubr.bf16.mxu0 0
    %1515 = vmatmul.mubr.bf16.gmra.mrb[0].mxu0 %v1375
    %v1516 = vpop.f32.mrb[0].mxu0
    %v1517 = vadd.f32 0.0, %v1516
    %v1518 = vpop.f32.mrb[0].mxu0
    %v1519 = vpop.f32.mrb[0].mxu0
    %v1520 = vadd.f32 0.0, %v1519
    %v1521 = vpop.f32.mrb[0].mxu0
    %1522 = vmatprep.mubr.bf16.mxu0 0
    %1523 = vmatmul.mubr.bf16.gmra.mrb[0].mxu0 %v1376
    %v1524 = vpop.f32.mrb[0].mxu0
    %v1525 = vadd.f32 0.0, %v1524
    %v1526 = vpop.f32.mrb[0].mxu0
    %v1527 = vpop.f32.mrb[0].mxu0
    %v1528 = vadd.f32 0.0, %v1527
    %v1529 = vpop.f32.mrb[0].mxu0
    %1530 = vmatprep.mubr.bf16.mxu0 0
    %1531 = vmatmul.mubr.bf16.gmra.mrb[0].mxu0 %v1377
    %v1532 = vpop.f32.mrb[0].mxu0
    %v1533 = vadd.f32 0.0, %v1532
    %v1534 = vpop.f32.mrb[0].mxu0
    %v1535 = vpop.f32.mrb[0].mxu0
    %v1536 = vadd.f32 0.0, %v1535
    %v1537 = vpop.f32.mrb[0].mxu0
    %1538 = vdwg.mxu0
    %v1555 = vunpack.c.l.b16 %v968
    %v1556 = vunpack.c.l.b16 %v969
    %v1557 = vunpack.c.l.b16 %v970
    %v1558 = vunpack.c.l.b16 %v971
    %v1559 = vunpack.c.l.b16 %v972
    %v1560 = vunpack.c.l.b16 %v973
    %v1561 = vunpack.c.l.b16 %v974
    %v1562 = vunpack.c.l.b16 %v975
    %v1563 = vunpack.c.l.b16 %v976
    %v1564 = vunpack.c.l.b16 %v977
    %v1565 = vunpack.c.l.b16 %v978
    %v1566 = vunpack.c.l.b16 %v979
    %v1567 = vunpack.c.l.b16 %v980
    %v1568 = vunpack.c.l.b16 %v981
    %v1569 = vunpack.c.l.b16 %v982
    %v1570 = vunpack.c.l.b16 %v983
    %v1571 = vpack.c.b16 %v1556, %v1555
    %v1572 = vpack.c.b16 %v1558, %v1557
    %v1573 = vpack.c.b16 %v1560, %v1559
    %v1574 = vpack.c.b16 %v1562, %v1561
    %v1575 = vpack.c.b16 %v1564, %v1563
    %v1576 = vpack.c.b16 %v1566, %v1565
    %v1577 = vpack.c.b16 %v1568, %v1567
    %v1578 = vpack.c.b16 %v1570, %v1569
    %1587 = vmatprep.subr.bf16.mxu0 0
    %1588 = vmatpush1.bf16.msra.mxu0 %v1571
    %1589 = vmatprep.subr.bf16.mxu0 0
    %1590 = vmatpush1.bf16.msra.mxu0 %v1572
    %1591 = vmatprep.subr.bf16.mxu0 0
    %1592 = vmatpush1.bf16.msra.mxu0 %v1573
    %1593 = vmatprep.subr.bf16.mxu0 0
    %1594 = vmatpush1.bf16.msra.mxu0 %v1574
    %1595 = vmatprep.subr.bf16.mxu0 0
    %1596 = vmatpush1.bf16.msra.mxu0 %v1575
    %1597 = vmatprep.subr.bf16.mxu0 0
    %1598 = vmatpush1.bf16.msra.mxu0 %v1576
    %1599 = vmatprep.subr.bf16.mxu0 0
    %1600 = vmatpush1.bf16.msra.mxu0 %v1577
    %1601 = vmatprep.subr.bf16.mxu0 0
    %1602 = vmatpush1.bf16.msra.mxu0 %v1578
    %1603 = vmatprep.subr.bf16.mxu0 0
    %1604 = vmatpush1.bf16.msra.mxu0 0
    %1605 = vmatprep.subr.bf16.mxu0 0
    %1606 = vmatpush1.bf16.msra.mxu0 0
    %1607 = vmatprep.subr.bf16.mxu0 0
    %1608 = vmatpush1.bf16.msra.mxu0 0
    %1609 = vmatprep.subr.bf16.mxu0 0
    %1610 = vmatpush1.bf16.msra.mxu0 0
    %1611 = vmatprep.subr.bf16.mxu0 0
    %1612 = vmatpush1.bf16.msra.mxu0 0
    %1613 = vmatprep.subr.bf16.mxu0 0
    %1614 = vmatpush1.bf16.msra.mxu0 0
    %1615 = vmatprep.subr.bf16.mxu0 0
    %1616 = vmatpush1.bf16.msra.mxu0 0
    %1617 = vmatprep.subr.bf16.mxu0 0
    %1618 = vmatpush1.bf16.msra.mxu0 0
    %1619 = vmatprep.mubr.bf16.mxu0 0
    %1620 = vmatmul.mubr.bf16.gmra.mrb[0].mxu0 %v960
    %v1621 = vpop.f32.mrb[0].mxu0
    %v1622 = vadd.f32 %v1477, %v1621
    %v1623 = vpop.f32.mrb[0].mxu0
    %v1624 = vpop.f32.mrb[0].mxu0
    %v1625 = vadd.f32 %v1480, %v1624
    %v1626 = vpop.f32.mrb[0].mxu0
    %1627 = vmatprep.mubr.bf16.mxu0 0
    %1628 = vmatmul.mubr.bf16.gmra.mrb[0].mxu0 %v961
    %v1629 = vpop.f32.mrb[0].mxu0
    %v1630 = vadd.f32 %v1485, %v1629
    %v1631 = vpop.f32.mrb[0].mxu0
    %v1632 = vpop.f32.mrb[0].mxu0
    %v1633 = vadd.f32 %v1488, %v1632
    %v1634 = vpop.f32.mrb[0].mxu0
    %1635 = vmatprep.mubr.bf16.mxu0 0
    %1636 = vmatmul.mubr.bf16.gmra.mrb[0].mxu0 %v962
    %v1637 = vpop.f32.mrb[0].mxu0
    %v1638 = vadd.f32 %v1493, %v1637
    %v1639 = vpop.f32.mrb[0].mxu0
    %v1640 = vpop.f32.mrb[0].mxu0
    %v1641 = vadd.f32 %v1496, %v1640
    %v1642 = vpop.f32.mrb[0].mxu0
    %1643 = vmatprep.mubr.bf16.mxu0 0
    %1644 = vmatmul.mubr.bf16.gmra.mrb[0].mxu0 %v963
    %v1645 = vpop.f32.mrb[0].mxu0
    %v1646 = vadd.f32 %v1501, %v1645
    %v1647 = vpop.f32.mrb[0].mxu0
    %v1648 = vpop.f32.mrb[0].mxu0
    %v1649 = vadd.f32 %v1504, %v1648
    %v1650 = vpop.f32.mrb[0].mxu0
    %1651 = vmatprep.mubr.bf16.mxu0 0
    %1652 = vmatmul.mubr.bf16.gmra.mrb[0].mxu0 %v964
    %v1653 = vpop.f32.mrb[0].mxu0
    %v1654 = vadd.f32 %v1509, %v1653
    %v1655 = vpop.f32.mrb[0].mxu0
    %v1656 = vpop.f32.mrb[0].mxu0
    %v1657 = vadd.f32 %v1512, %v1656
    %v1658 = vpop.f32.mrb[0].mxu0
    %1659 = vmatprep.mubr.bf16.mxu0 0
    %1660 = vmatmul.mubr.bf16.gmra.mrb[0].mxu0 %v965
    %v1661 = vpop.f32.mrb[0].mxu0
    %v1662 = vadd.f32 %v1517, %v1661
    %v1663 = vpop.f32.mrb[0].mxu0
    %v1664 = vpop.f32.mrb[0].mxu0
    %v1665 = vadd.f32 %v1520, %v1664
    %v1666 = vpop.f32.mrb[0].mxu0
    %1667 = vmatprep.mubr.bf16.mxu0 0
    %1668 = vmatmul.mubr.bf16.gmra.mrb[0].mxu0 %v966
    %v1669 = vpop.f32.mrb[0].mxu0
    %v1670 = vadd.f32 %v1525, %v1669
    %v1671 = vpop.f32.mrb[0].mxu0
    %v1672 = vpop.f32.mrb[0].mxu0
    %v1673 = vadd.f32 %v1528, %v1672
    %v1674 = vpop.f32.mrb[0].mxu0
    %1675 = vmatprep.mubr.bf16.mxu0 0
    %1676 = vmatmul.mubr.bf16.gmra.mrb[0].mxu0 %v967
    %v1677 = vpop.f32.mrb[0].mxu0
    %v1678 = vadd.f32 %v1533, %v1677
    %v1679 = vpop.f32.mrb[0].mxu0
    %v1680 = vpop.f32.mrb[0].mxu0
    %v1681 = vadd.f32 %v1536, %v1680
    %v1682 = vpop.f32.mrb[0].mxu0
    %1683 = vdwg.mxu0
    %v1684 = vld [vmem:[#allocation2 + $0x200] sm:$0xff]
    %v1685 = vld [vmem:[#allocation2 + $0x208] sm:$0xff]
    %v1686 = vld [vmem:[#allocation2 + $0x210] sm:$0xff]
    %v1687 = vld [vmem:[#allocation2 + $0x218] sm:$0xff]
    %v1688 = vld [vmem:[#allocation2 + $0x220] sm:$0xff]
    %v1689 = vld [vmem:[#allocation2 + $0x228] sm:$0xff]
    %v1690 = vld [vmem:[#allocation2 + $0x230] sm:$0xff]
    %v1691 = vld [vmem:[#allocation2 + $0x238] sm:$0xff]
    %v1692 = vld [vmem:[#allocation2 + $0x240] sm:$0xff]
    %v1693 = vld [vmem:[#allocation2 + $0x248] sm:$0xff]
    %v1694 = vld [vmem:[#allocation2 + $0x250] sm:$0xff]
    %v1695 = vld [vmem:[#allocation2 + $0x258] sm:$0xff]
    %v1696 = vld [vmem:[#allocation2 + $0x260] sm:$0xff]
    %v1697 = vld [vmem:[#allocation2 + $0x268] sm:$0xff]
    %v1698 = vld [vmem:[#allocation2 + $0x270] sm:$0xff]
    %v1699 = vld [vmem:[#allocation2 + $0x278] sm:$0xff]
    %v1700 = vld [vmem:[#allocation2 + $0x280] sm:$0xff]
    %v1701 = vld [vmem:[#allocation2 + $0x288] sm:$0xff]
    %v1702 = vld [vmem:[#allocation2 + $0x290] sm:$0xff]
    %v1703 = vld [vmem:[#allocation2 + $0x298] sm:$0xff]
    %v1704 = vld [vmem:[#allocation2 + $0x2a0] sm:$0xff]
    %v1705 = vld [vmem:[#allocation2 + $0x2a8] sm:$0xff]
    %v1706 = vld [vmem:[#allocation2 + $0x2b0] sm:$0xff]
    %v1707 = vld [vmem:[#allocation2 + $0x2b8] sm:$0xff]
    %v1708 = vld [vmem:[#allocation2 + $0x2c0] sm:$0xff]
    %v1709 = vld [vmem:[#allocation2 + $0x2c8] sm:$0xff]
    %v1710 = vld [vmem:[#allocation2 + $0x2d0] sm:$0xff]
    %v1711 = vld [vmem:[#allocation2 + $0x2d8] sm:$0xff]
    %v1712 = vld [vmem:[#allocation2 + $0x2e0] sm:$0xff]
    %v1713 = vld [vmem:[#allocation2 + $0x2e8] sm:$0xff]
    %v1714 = vld [vmem:[#allocation2 + $0x2f0] sm:$0xff]
    %v1715 = vld [vmem:[#allocation2 + $0x2f8] sm:$0xff]
    %v1748 = vunpack.c.l.b16 %v1684
    %v1749 = vunpack.c.h.b16 %v1684
    %v1750 = vunpack.c.l.b16 %v1685
    %v1751 = vunpack.c.h.b16 %v1685
    %v1752 = vunpack.c.l.b16 %v1686
    %v1753 = vunpack.c.h.b16 %v1686
    %v1754 = vunpack.c.l.b16 %v1687
    %v1755 = vunpack.c.h.b16 %v1687
    %v1756 = vunpack.c.l.b16 %v1688
    %v1757 = vunpack.c.h.b16 %v1688
    %v1758 = vunpack.c.l.b16 %v1689
    %v1759 = vunpack.c.h.b16 %v1689
    %v1760 = vunpack.c.l.b16 %v1690
    %v1761 = vunpack.c.h.b16 %v1690
    %v1762 = vunpack.c.l.b16 %v1691
    %v1763 = vunpack.c.h.b16 %v1691
    %v1764 = vunpack.c.l.b16 %v1692
    %v1765 = vunpack.c.h.b16 %v1692
    %v1766 = vunpack.c.l.b16 %v1693
    %v1767 = vunpack.c.h.b16 %v1693
    %v1768 = vunpack.c.l.b16 %v1694
    %v1769 = vunpack.c.h.b16 %v1694
    %v1770 = vunpack.c.l.b16 %v1695
    %v1771 = vunpack.c.h.b16 %v1695
    %v1772 = vunpack.c.l.b16 %v1696
    %v1773 = vunpack.c.h.b16 %v1696
    %v1774 = vunpack.c.l.b16 %v1697
    %v1775 = vunpack.c.h.b16 %v1697
    %v1776 = vunpack.c.l.b16 %v1698
    %v1777 = vunpack.c.h.b16 %v1698
    %v1778 = vunpack.c.l.b16 %v1699
    %v1779 = vunpack.c.h.b16 %v1699
    %v1780 = vunpack.c.l.b16 %v1700
    %v1781 = vunpack.c.h.b16 %v1700
    %v1782 = vunpack.c.l.b16 %v1701
    %v1783 = vunpack.c.h.b16 %v1701
    %v1784 = vunpack.c.l.b16 %v1702
    %v1785 = vunpack.c.h.b16 %v1702
    %v1786 = vunpack.c.l.b16 %v1703
    %v1787 = vunpack.c.h.b16 %v1703
    %v1788 = vunpack.c.l.b16 %v1704
    %v1789 = vunpack.c.h.b16 %v1704
    %v1790 = vunpack.c.l.b16 %v1705
    %v1791 = vunpack.c.h.b16 %v1705
    %v1792 = vunpack.c.l.b16 %v1706
    %v1793 = vunpack.c.h.b16 %v1706
    %v1794 = vunpack.c.l.b16 %v1707
    %v1795 = vunpack.c.h.b16 %v1707
    %v1796 = vunpack.c.l.b16 %v1708
    %v1797 = vunpack.c.h.b16 %v1708
    %v1798 = vunpack.c.l.b16 %v1709
    %v1799 = vunpack.c.h.b16 %v1709
    %v1800 = vunpack.c.l.b16 %v1710
    %v1801 = vunpack.c.h.b16 %v1710
    %v1802 = vunpack.c.l.b16 %v1711
    %v1803 = vunpack.c.h.b16 %v1711
    %v1804 = vunpack.c.l.b16 %v1712
    %v1805 = vunpack.c.h.b16 %v1712
    %v1806 = vunpack.c.l.b16 %v1713
    %v1807 = vunpack.c.h.b16 %v1713
    %v1808 = vunpack.c.l.b16 %v1714
    %v1809 = vunpack.c.h.b16 %v1714
    %v1810 = vunpack.c.l.b16 %v1715
    %v1811 = vunpack.c.h.b16 %v1715
    %v1812 = vpack.c.b16 %v1752, %v1748
    %v1813 = vpack.c.b16 %v1753, %v1749
    %v1814 = vpack.c.b16 %v1754, %v1750
    %v1815 = vpack.c.b16 %v1755, %v1751
    %v1816 = vpack.c.b16 %v1760, %v1756
    %v1817 = vpack.c.b16 %v1761, %v1757
    %v1818 = vpack.c.b16 %v1762, %v1758
    %v1819 = vpack.c.b16 %v1763, %v1759
    %v1820 = vpack.c.b16 %v1768, %v1764
    %v1821 = vpack.c.b16 %v1769, %v1765
    %v1822 = vpack.c.b16 %v1770, %v1766
    %v1823 = vpack.c.b16 %v1771, %v1767
    %v1824 = vpack.c.b16 %v1776, %v1772
    %v1825 = vpack.c.b16 %v1777, %v1773
    %v1826 = vpack.c.b16 %v1778, %v1774
    %v1827 = vpack.c.b16 %v1779, %v1775
    %v1828 = vpack.c.b16 %v1784, %v1780
    %v1829 = vpack.c.b16 %v1785, %v1781
    %v1830 = vpack.c.b16 %v1786, %v1782
    %v1831 = vpack.c.b16 %v1787, %v1783
    %v1832 = vpack.c.b16 %v1792, %v1788
    %v1833 = vpack.c.b16 %v1793, %v1789
    %v1834 = vpack.c.b16 %v1794, %v1790
    %v1835 = vpack.c.b16 %v1795, %v1791
    %v1836 = vpack.c.b16 %v1800, %v1796
    %v1837 = vpack.c.b16 %v1801, %v1797
    %v1838 = vpack.c.b16 %v1802, %v1798
    %v1839 = vpack.c.b16 %v1803, %v1799
    %v1840 = vpack.c.b16 %v1808, %v1804
    %v1841 = vpack.c.b16 %v1809, %v1805
    %v1842 = vpack.c.b16 %v1810, %v1806
    %v1843 = vpack.c.b16 %v1811, %v1807
    %1876 = vmatprep.subr.bf16.mxu0 0
    %1877 = vmatpush1.bf16.msra.mxu0 %v702
    %1878 = vmatprep.subr.bf16.mxu0 0
    %1879 = vmatpush1.bf16.msra.mxu0 %v703
    %1880 = vmatprep.subr.bf16.mxu0 0
    %1881 = vmatpush1.bf16.msra.mxu0 %v704
    %1882 = vmatprep.subr.bf16.mxu0 0
    %1883 = vmatpush1.bf16.msra.mxu0 %v705
    %1884 = vmatprep.subr.bf16.mxu0 0
    %1885 = vmatpush1.bf16.msra.mxu0 %v706
    %1886 = vmatprep.subr.bf16.mxu0 0
    %1887 = vmatpush1.bf16.msra.mxu0 %v707
    %1888 = vmatprep.subr.bf16.mxu0 0
    %1889 = vmatpush1.bf16.msra.mxu0 %v708
    %1890 = vmatprep.subr.bf16.mxu0 0
    %1891 = vmatpush1.bf16.msra.mxu0 %v709
    %1892 = vmatprep.subr.bf16.mxu0 0
    %1893 = vmatpush1.bf16.msra.mxu0 %v710
    %1894 = vmatprep.subr.bf16.mxu0 0
    %1895 = vmatpush1.bf16.msra.mxu0 %v711
    %1896 = vmatprep.subr.bf16.mxu0 0
    %1897 = vmatpush1.bf16.msra.mxu0 %v712
    %1898 = vmatprep.subr.bf16.mxu0 0
    %1899 = vmatpush1.bf16.msra.mxu0 %v713
    %1900 = vmatprep.subr.bf16.mxu0 0
    %1901 = vmatpush1.bf16.msra.mxu0 %v714
    %1902 = vmatprep.subr.bf16.mxu0 0
    %1903 = vmatpush1.bf16.msra.mxu0 %v715
    %1904 = vmatprep.subr.bf16.mxu0 0
    %1905 = vmatpush1.bf16.msra.mxu0 %v716
    %1906 = vmatprep.subr.bf16.mxu0 0
    %1907 = vmatpush1.bf16.msra.mxu0 %v717
    %1908 = vmatprep.mubr.bf16.mxu0 %v1813
    %1909 = vmatmul.mubr.bf16.gmra.mrb[0].mxu0 %v1812
    %v1910 = vpop.f32.mrb[0].mxu0
    %v1911 = vadd.f32 0.0, %v1910
    %v1912 = vpop.f32.mrb[0].mxu0
    %v1913 = vpop.f32.mrb[0].mxu0
    %v1914 = vadd.f32 0.0, %v1913
    %v1915 = vpop.f32.mrb[0].mxu0
    %1916 = vmatprep.mubr.bf16.mxu0 %v1817
    %1917 = vmatmul.mubr.bf16.gmra.mrb[0].mxu0 %v1816
    %v1918 = vpop.f32.mrb[0].mxu0
    %v1919 = vadd.f32 0.0, %v1918
    %v1920 = vpop.f32.mrb[0].mxu0
    %v1921 = vpop.f32.mrb[0].mxu0
    %v1922 = vadd.f32 0.0, %v1921
    %v1923 = vpop.f32.mrb[0].mxu0
    %1924 = vmatprep.mubr.bf16.mxu0 %v1821
    %1925 = vmatmul.mubr.bf16.gmra.mrb[0].mxu0 %v1820
    %v1926 = vpop.f32.mrb[0].mxu0
    %v1927 = vadd.f32 0.0, %v1926
    %v1928 = vpop.f32.mrb[0].mxu0
    %v1929 = vpop.f32.mrb[0].mxu0
    %v1930 = vadd.f32 0.0, %v1929
    %v1931 = vpop.f32.mrb[0].mxu0
    %1932 = vmatprep.mubr.bf16.mxu0 %v1825
    %1933 = vmatmul.mubr.bf16.gmra.mrb[0].mxu0 %v1824
    %v1934 = vpop.f32.mrb[0].mxu0
    %v1935 = vadd.f32 0.0, %v1934
    %v1936 = vpop.f32.mrb[0].mxu0
    %v1937 = vpop.f32.mrb[0].mxu0
    %v1938 = vadd.f32 0.0, %v1937
    %v1939 = vpop.f32.mrb[0].mxu0
    %1940 = vmatprep.mubr.bf16.mxu0 %v1829
    %1941 = vmatmul.mubr.bf16.gmra.mrb[0].mxu0 %v1828
    %v1942 = vpop.f32.mrb[0].mxu0
    %v1943 = vadd.f32 0.0, %v1942
    %v1944 = vpop.f32.mrb[0].mxu0
    %v1945 = vpop.f32.mrb[0].mxu0
    %v1946 = vadd.f32 0.0, %v1945
    %v1947 = vpop.f32.mrb[0].mxu0
    %1948 = vmatprep.mubr.bf16.mxu0 %v1833
    %1949 = vmatmul.mubr.bf16.gmra.mrb[0].mxu0 %v1832
    %v1950 = vpop.f32.mrb[0].mxu0
    %v1951 = vadd.f32 0.0, %v1950
    %v1952 = vpop.f32.mrb[0].mxu0
    %v1953 = vpop.f32.mrb[0].mxu0
    %v1954 = vadd.f32 0.0, %v1953
    %v1955 = vpop.f32.mrb[0].mxu0
    %1956 = vmatprep.mubr.bf16.mxu0 %v1837
    %1957 = vmatmul.mubr.bf16.gmra.mrb[0].mxu0 %v1836
    %v1958 = vpop.f32.mrb[0].mxu0
    %v1959 = vadd.f32 0.0, %v1958
    %v1960 = vpop.f32.mrb[0].mxu0
    %v1961 = vpop.f32.mrb[0].mxu0
    %v1962 = vadd.f32 0.0, %v1961
    %v1963 = vpop.f32.mrb[0].mxu0
    %1964 = vmatprep.mubr.bf16.mxu0 %v1841
    %1965 = vmatmul.mubr.bf16.gmra.mrb[0].mxu0 %v1840
    %v1966 = vpop.f32.mrb[0].mxu0
    %v1967 = vadd.f32 0.0, %v1966
    %v1968 = vpop.f32.mrb[0].mxu0
    %v1969 = vpop.f32.mrb[0].mxu0
    %v1970 = vadd.f32 0.0, %v1969
    %v1971 = vpop.f32.mrb[0].mxu0
    %1972 = vdwg.mxu0
    %1973 = vmatprep.subr.bf16.mxu0 0
    %1974 = vmatpush1.bf16.msra.mxu0 %v718
    %1975 = vmatprep.subr.bf16.mxu0 0
    %1976 = vmatpush1.bf16.msra.mxu0 %v719
    %1977 = vmatprep.subr.bf16.mxu0 0
    %1978 = vmatpush1.bf16.msra.mxu0 %v720
    %1979 = vmatprep.subr.bf16.mxu0 0
    %1980 = vmatpush1.bf16.msra.mxu0 %v721
    %1981 = vmatprep.subr.bf16.mxu0 0
    %1982 = vmatpush1.bf16.msra.mxu0 %v722
    %1983 = vmatprep.subr.bf16.mxu0 0
    %1984 = vmatpush1.bf16.msra.mxu0 %v723
    %1985 = vmatprep.subr.bf16.mxu0 0
    %1986 = vmatpush1.bf16.msra.mxu0 %v724
    %1987 = vmatprep.subr.bf16.mxu0 0
    %1988 = vmatpush1.bf16.msra.mxu0 %v725
    %1989 = vmatprep.subr.bf16.mxu0 0
    %1990 = vmatpush1.bf16.msra.mxu0 %v726
    %1991 = vmatprep.subr.bf16.mxu0 0
    %1992 = vmatpush1.bf16.msra.mxu0 %v727
    %1993 = vmatprep.subr.bf16.mxu0 0
    %1994 = vmatpush1.bf16.msra.mxu0 %v728
    %1995 = vmatprep.subr.bf16.mxu0 0
    %1996 = vmatpush1.bf16.msra.mxu0 %v729
    %1997 = vmatprep.subr.bf16.mxu0 0
    %1998 = vmatpush1.bf16.msra.mxu0 %v730
    %1999 = vmatprep.subr.bf16.mxu0 0
    %2000 = vmatpush1.bf16.msra.mxu0 %v731
    %2001 = vmatprep.subr.bf16.mxu0 0
    %2002 = vmatpush1.bf16.msra.mxu0 %v732
    %2003 = vmatprep.subr.bf16.mxu0 0
    %2004 = vmatpush1.bf16.msra.mxu0 %v733
    %2005 = vmatprep.mubr.bf16.mxu0 %v1815
    %2006 = vmatmul.mubr.bf16.gmra.mrb[0].mxu0 %v1814
    %v2007 = vpop.f32.mrb[0].mxu0
    %v2008 = vadd.f32 %v1911, %v2007
    %v2009 = vpop.f32.mrb[0].mxu0
    %v2010 = vpop.f32.mrb[0].mxu0
    %v2011 = vadd.f32 %v1914, %v2010
    %v2012 = vpop.f32.mrb[0].mxu0
    %2013 = vmatprep.mubr.bf16.mxu0 %v1819
    %2014 = vmatmul.mubr.bf16.gmra.mrb[0].mxu0 %v1818
    %v2015 = vpop.f32.mrb[0].mxu0
    %v2016 = vadd.f32 %v1919, %v2015
    %v2017 = vpop.f32.mrb[0].mxu0
    %v2018 = vpop.f32.mrb[0].mxu0
    %v2019 = vadd.f32 %v1922, %v2018
    %v2020 = vpop.f32.mrb[0].mxu0
    %2021 = vmatprep.mubr.bf16.mxu0 %v1823
    %2022 = vmatmul.mubr.bf16.gmra.mrb[0].mxu0 %v1822
    %v2023 = vpop.f32.mrb[0].mxu0
    %v2024 = vadd.f32 %v1927, %v2023
    %v2025 = vpop.f32.mrb[0].mxu0
    %v2026 = vpop.f32.mrb[0].mxu0
    %v2027 = vadd.f32 %v1930, %v2026
    %v2028 = vpop.f32.mrb[0].mxu0
    %2029 = vmatprep.mubr.bf16.mxu0 %v1827
    %2030 = vmatmul.mubr.bf16.gmra.mrb[0].mxu0 %v1826
    %v2031 = vpop.f32.mrb[0].mxu0
    %v2032 = vadd.f32 %v1935, %v2031
    %v2033 = vpop.f32.mrb[0].mxu0
    %v2034 = vpop.f32.mrb[0].mxu0
    %v2035 = vadd.f32 %v1938, %v2034
    %v2036 = vpop.f32.mrb[0].mxu0
    %2037 = vmatprep.mubr.bf16.mxu0 %v1831
    %2038 = vmatmul.mubr.bf16.gmra.mrb[0].mxu0 %v1830
    %v2039 = vpop.f32.mrb[0].mxu0
    %v2040 = vadd.f32 %v1943, %v2039
    %v2041 = vpop.f32.mrb[0].mxu0
    %v2042 = vpop.f32.mrb[0].mxu0
    %v2043 = vadd.f32 %v1946, %v2042
    %v2044 = vpop.f32.mrb[0].mxu0
    %2045 = vmatprep.mubr.bf16.mxu0 %v1835
    %2046 = vmatmul.mubr.bf16.gmra.mrb[0].mxu0 %v1834
    %v2047 = vpop.f32.mrb[0].mxu0
    %v2048 = vadd.f32 %v1951, %v2047
    %v2049 = vpop.f32.mrb[0].mxu0
    %v2050 = vpop.f32.mrb[0].mxu0
    %v2051 = vadd.f32 %v1954, %v2050
    %v2052 = vpop.f32.mrb[0].mxu0
    %2053 = vmatprep.mubr.bf16.mxu0 %v1839
    %2054 = vmatmul.mubr.bf16.gmra.mrb[0].mxu0 %v1838
    %v2055 = vpop.f32.mrb[0].mxu0
    %v2056 = vadd.f32 %v1959, %v2055
    %v2057 = vpop.f32.mrb[0].mxu0
    %v2058 = vpop.f32.mrb[0].mxu0
    %v2059 = vadd.f32 %v1962, %v2058
    %v2060 = vpop.f32.mrb[0].mxu0
    %2061 = vmatprep.mubr.bf16.mxu0 %v1843
    %2062 = vmatmul.mubr.bf16.gmra.mrb[0].mxu0 %v1842
    %v2063 = vpop.f32.mrb[0].mxu0
    %v2064 = vadd.f32 %v1967, %v2063
    %v2065 = vpop.f32.mrb[0].mxu0
    %v2066 = vpop.f32.mrb[0].mxu0
    %v2067 = vadd.f32 %v1970, %v2066
    %v2068 = vpop.f32.mrb[0].mxu0
    %2069 = vdwg.mxu0
    %v2070 = vpack.c.bf16 %v2011, %v2008
    %v2071 = vpack.c.bf16 %v2019, %v2016
    %v2072 = vpack.c.bf16 %v2027, %v2024
    %v2073 = vpack.c.bf16 %v2035, %v2032
    %v2074 = vpack.c.bf16 %v2043, %v2040
    %v2075 = vpack.c.bf16 %v2051, %v2048
    %v2076 = vpack.c.bf16 %v2059, %v2056
    %v2077 = vpack.c.bf16 %v2067, %v2064
    %v2078 = vld [vmem:[#allocation4 + $0x80] sm:$0xf]
    %v2079 = vld [vmem:[#allocation4 + $0x84] sm:$0xf]
    %v2080 = vld [vmem:[#allocation4 + $0x88] sm:$0xf]
    %v2081 = vld [vmem:[#allocation4 + $0x8c] sm:$0xf]
    %v2082 = vld [vmem:[#allocation4 + $0x90] sm:$0xf]
    %v2083 = vld [vmem:[#allocation4 + $0x94] sm:$0xf]
    %v2084 = vld [vmem:[#allocation4 + $0x98] sm:$0xf]
    %v2085 = vld [vmem:[#allocation4 + $0x9c] sm:$0xf]
    %v2086 = vld [vmem:[#allocation4 + $0xa0] sm:$0xf]
    %v2087 = vld [vmem:[#allocation4 + $0xa4] sm:$0xf]
    %v2088 = vld [vmem:[#allocation4 + $0xa8] sm:$0xf]
    %v2089 = vld [vmem:[#allocation4 + $0xac] sm:$0xf]
    %v2090 = vld [vmem:[#allocation4 + $0xb0] sm:$0xf]
    %v2091 = vld [vmem:[#allocation4 + $0xb4] sm:$0xf]
    %v2092 = vld [vmem:[#allocation4 + $0xb8] sm:$0xf]
    %v2093 = vld [vmem:[#allocation4 + $0xbc] sm:$0xf]
    %v2110 = vunpack.c.l.b16 %v2078
    %v2111 = vunpack.c.l.b16 %v2079
    %v2112 = vunpack.c.l.b16 %v2080
    %v2113 = vunpack.c.l.b16 %v2081
    %v2114 = vunpack.c.l.b16 %v2082
    %v2115 = vunpack.c.l.b16 %v2083
    %v2116 = vunpack.c.l.b16 %v2084
    %v2117 = vunpack.c.l.b16 %v2085
    %v2118 = vunpack.c.l.b16 %v2086
    %v2119 = vunpack.c.l.b16 %v2087
    %v2120 = vunpack.c.l.b16 %v2088
    %v2121 = vunpack.c.l.b16 %v2089
    %v2122 = vunpack.c.l.b16 %v2090
    %v2123 = vunpack.c.l.b16 %v2091
    %v2124 = vunpack.c.l.b16 %v2092
    %v2125 = vunpack.c.l.b16 %v2093
    %v2126 = vpack.c.b16 %v2111, %v2110
    %v2127 = vpack.c.b16 %v2113, %v2112
    %v2128 = vpack.c.b16 %v2115, %v2114
    %v2129 = vpack.c.b16 %v2117, %v2116
    %v2130 = vpack.c.b16 %v2119, %v2118
    %v2131 = vpack.c.b16 %v2121, %v2120
    %v2132 = vpack.c.b16 %v2123, %v2122
    %v2133 = vpack.c.b16 %v2125, %v2124
    %2142 = vmatprep.subr.bf16.mxu0 0
    %2143 = vmatpush1.bf16.msra.mxu0 %v2126
    %2144 = vmatprep.subr.bf16.mxu0 0
    %2145 = vmatpush1.bf16.msra.mxu0 %v2127
    %2146 = vmatprep.subr.bf16.mxu0 0
    %2147 = vmatpush1.bf16.msra.mxu0 %v2128
    %2148 = vmatprep.subr.bf16.mxu0 0
    %2149 = vmatpush1.bf16.msra.mxu0 %v2129
    %2150 = vmatprep.subr.bf16.mxu0 0
    %2151 = vmatpush1.bf16.msra.mxu0 %v2130
    %2152 = vmatprep.subr.bf16.mxu0 0
    %2153 = vmatpush1.bf16.msra.mxu0 %v2131
    %2154 = vmatprep.subr.bf16.mxu0 0
    %2155 = vmatpush1.bf16.msra.mxu0 %v2132
    %2156 = vmatprep.subr.bf16.mxu0 0
    %2157 = vmatpush1.bf16.msra.mxu0 %v2133
    %2158 = vmatprep.subr.bf16.mxu0 0
    %2159 = vmatpush1.bf16.msra.mxu0 0
    %2160 = vmatprep.subr.bf16.mxu0 0
    %2161 = vmatpush1.bf16.msra.mxu0 0
    %2162 = vmatprep.subr.bf16.mxu0 0
    %2163 = vmatpush1.bf16.msra.mxu0 0
    %2164 = vmatprep.subr.bf16.mxu0 0
    %2165 = vmatpush1.bf16.msra.mxu0 0
    %2166 = vmatprep.subr.bf16.mxu0 0
    %2167 = vmatpush1.bf16.msra.mxu0 0
    %2168 = vmatprep.subr.bf16.mxu0 0
    %2169 = vmatpush1.bf16.msra.mxu0 0
    %2170 = vmatprep.subr.bf16.mxu0 0
    %2171 = vmatpush1.bf16.msra.mxu0 0
    %2172 = vmatprep.subr.bf16.mxu0 0
    %2173 = vmatpush1.bf16.msra.mxu0 0
    %2174 = vmatprep.mubr.bf16.mxu0 0
    %2175 = vmatmul.mubr.bf16.gmra.mrb[0].mxu0 %v2070
    %v2176 = vpop.f32.mrb[0].mxu0
    %v2177 = vadd.f32 0.0, %v2176
    %v2178 = vpop.f32.mrb[0].mxu0
    %v2179 = vpop.f32.mrb[0].mxu0
    %v2180 = vadd.f32 0.0, %v2179
    %v2181 = vpop.f32.mrb[0].mxu0
    %2182 = vmatprep.mubr.bf16.mxu0 0
    %2183 = vmatmul.mubr.bf16.gmra.mrb[0].mxu0 %v2071
    %v2184 = vpop.f32.mrb[0].mxu0
    %v2185 = vadd.f32 0.0, %v2184
    %v2186 = vpop.f32.mrb[0].mxu0
    %v2187 = vpop.f32.mrb[0].mxu0
    %v2188 = vadd.f32 0.0, %v2187
    %v2189 = vpop.f32.mrb[0].mxu0
    %2190 = vmatprep.mubr.bf16.mxu0 0
    %2191 = vmatmul.mubr.bf16.gmra.mrb[0].mxu0 %v2072
    %v2192 = vpop.f32.mrb[0].mxu0
    %v2193 = vadd.f32 0.0, %v2192
    %v2194 = vpop.f32.mrb[0].mxu0
    %v2195 = vpop.f32.mrb[0].mxu0
    %v2196 = vadd.f32 0.0, %v2195
    %v2197 = vpop.f32.mrb[0].mxu0
    %2198 = vmatprep.mubr.bf16.mxu0 0
    %2199 = vmatmul.mubr.bf16.gmra.mrb[0].mxu0 %v2073
    %v2200 = vpop.f32.mrb[0].mxu0
    %v2201 = vadd.f32 0.0, %v2200
    %v2202 = vpop.f32.mrb[0].mxu0
    %v2203 = vpop.f32.mrb[0].mxu0
    %v2204 = vadd.f32 0.0, %v2203
    %v2205 = vpop.f32.mrb[0].mxu0
    %2206 = vmatprep.mubr.bf16.mxu0 0
    %2207 = vmatmul.mubr.bf16.gmra.mrb[0].mxu0 %v2074
    %v2208 = vpop.f32.mrb[0].mxu0
    %v2209 = vadd.f32 0.0, %v2208
    %v2210 = vpop.f32.mrb[0].mxu0
    %v2211 = vpop.f32.mrb[0].mxu0
    %v2212 = vadd.f32 0.0, %v2211
    %v2213 = vpop.f32.mrb[0].mxu0
    %2214 = vmatprep.mubr.bf16.mxu0 0
    %2215 = vmatmul.mubr.bf16.gmra.mrb[0].mxu0 %v2075
    %v2216 = vpop.f32.mrb[0].mxu0
    %v2217 = vadd.f32 0.0, %v2216
    %v2218 = vpop.f32.mrb[0].mxu0
    %v2219 = vpop.f32.mrb[0].mxu0
    %v2220 = vadd.f32 0.0, %v2219
    %v2221 = vpop.f32.mrb[0].mxu0
    %2222 = vmatprep.mubr.bf16.mxu0 0
    %2223 = vmatmul.mubr.bf16.gmra.mrb[0].mxu0 %v2076
    %v2224 = vpop.f32.mrb[0].mxu0
    %v2225 = vadd.f32 0.0, %v2224
    %v2226 = vpop.f32.mrb[0].mxu0
    %v2227 = vpop.f32.mrb[0].mxu0
    %v2228 = vadd.f32 0.0, %v2227
    %v2229 = vpop.f32.mrb[0].mxu0
    %2230 = vmatprep.mubr.bf16.mxu0 0
    %2231 = vmatmul.mubr.bf16.gmra.mrb[0].mxu0 %v2077
    %v2232 = vpop.f32.mrb[0].mxu0
    %v2233 = vadd.f32 0.0, %v2232
    %v2234 = vpop.f32.mrb[0].mxu0
    %v2235 = vpop.f32.mrb[0].mxu0
    %v2236 = vadd.f32 0.0, %v2235
    %v2237 = vpop.f32.mrb[0].mxu0
    %2238 = vdwg.mxu0
    %v2239 = vadd.f32 %v1622, %v2177
    %v2240 = vadd.f32 %v1625, %v2180
    %v2241 = vadd.f32 %v1630, %v2185
    %v2242 = vadd.f32 %v1633, %v2188
    %v2243 = vadd.f32 %v1638, %v2193
    %v2244 = vadd.f32 %v1641, %v2196
    %v2245 = vadd.f32 %v1646, %v2201
    %v2246 = vadd.f32 %v1649, %v2204
    %v2247 = vadd.f32 %v1654, %v2209
    %v2248 = vadd.f32 %v1657, %v2212
    %v2249 = vadd.f32 %v1662, %v2217
    %v2250 = vadd.f32 %v1665, %v2220
    %v2251 = vadd.f32 %v1670, %v2225
    %v2252 = vadd.f32 %v1673, %v2228
    %v2253 = vadd.f32 %v1678, %v2233
    %v2254 = vadd.f32 %v1681, %v2236
    %v2255 = vld [vmem:[#allocation2 + $0x300] sm:$0xff]
    %v2256 = vld [vmem:[#allocation2 + $0x308] sm:$0xff]
    %v2257 = vld [vmem:[#allocation2 + $0x310] sm:$0xff]
    %v2258 = vld [vmem:[#allocation2 + $0x318] sm:$0xff]
    %v2259 = vld [vmem:[#allocation2 + $0x320] sm:$0xff]
    %v2260 = vld [vmem:[#allocation2 + $0x328] sm:$0xff]
    %v2261 = vld [vmem:[#allocation2 + $0x330] sm:$0xff]
    %v2262 = vld [vmem:[#allocation2 + $0x338] sm:$0xff]
    %v2263 = vld [vmem:[#allocation2 + $0x340] sm:$0xff]
    %v2264 = vld [vmem:[#allocation2 + $0x348] sm:$0xff]
    %v2265 = vld [vmem:[#allocation2 + $0x350] sm:$0xff]
    %v2266 = vld [vmem:[#allocation2 + $0x358] sm:$0xff]
    %v2267 = vld [vmem:[#allocation2 + $0x360] sm:$0xff]
    %v2268 = vld [vmem:[#allocation2 + $0x368] sm:$0xff]
    %v2269 = vld [vmem:[#allocation2 + $0x370] sm:$0xff]
    %v2270 = vld [vmem:[#allocation2 + $0x378] sm:$0xff]
    %v2271 = vld [vmem:[#allocation2 + $0x380] sm:$0xff]
    %v2272 = vld [vmem:[#allocation2 + $0x388] sm:$0xff]
    %v2273 = vld [vmem:[#allocation2 + $0x390] sm:$0xff]
    %v2274 = vld [vmem:[#allocation2 + $0x398] sm:$0xff]
    %v2275 = vld [vmem:[#allocation2 + $0x3a0] sm:$0xff]
    %v2276 = vld [vmem:[#allocation2 + $0x3a8] sm:$0xff]
    %v2277 = vld [vmem:[#allocation2 + $0x3b0] sm:$0xff]
    %v2278 = vld [vmem:[#allocation2 + $0x3b8] sm:$0xff]
    %v2279 = vld [vmem:[#allocation2 + $0x3c0] sm:$0xff]
    %v2280 = vld [vmem:[#allocation2 + $0x3c8] sm:$0xff]
    %v2281 = vld [vmem:[#allocation2 + $0x3d0] sm:$0xff]
    %v2282 = vld [vmem:[#allocation2 + $0x3d8] sm:$0xff]
    %v2283 = vld [vmem:[#allocation2 + $0x3e0] sm:$0xff]
    %v2284 = vld [vmem:[#allocation2 + $0x3e8] sm:$0xff]
    %v2285 = vld [vmem:[#allocation2 + $0x3f0] sm:$0xff]
    %v2286 = vld [vmem:[#allocation2 + $0x3f8] sm:$0xff]
    %v2319 = vunpack.c.l.b16 %v2255
    %v2320 = vunpack.c.h.b16 %v2255
    %v2321 = vunpack.c.l.b16 %v2256
    %v2322 = vunpack.c.h.b16 %v2256
    %v2323 = vunpack.c.l.b16 %v2257
    %v2324 = vunpack.c.h.b16 %v2257
    %v2325 = vunpack.c.l.b16 %v2258
    %v2326 = vunpack.c.h.b16 %v2258
    %v2327 = vunpack.c.l.b16 %v2259
    %v2328 = vunpack.c.h.b16 %v2259
    %v2329 = vunpack.c.l.b16 %v2260
    %v2330 = vunpack.c.h.b16 %v2260
    %v2331 = vunpack.c.l.b16 %v2261
    %v2332 = vunpack.c.h.b16 %v2261
    %v2333 = vunpack.c.l.b16 %v2262
    %v2334 = vunpack.c.h.b16 %v2262
    %v2335 = vunpack.c.l.b16 %v2263
    %v2336 = vunpack.c.h.b16 %v2263
    %v2337 = vunpack.c.l.b16 %v2264
    %v2338 = vunpack.c.h.b16 %v2264
    %v2339 = vunpack.c.l.b16 %v2265
    %v2340 = vunpack.c.h.b16 %v2265
    %v2341 = vunpack.c.l.b16 %v2266
    %v2342 = vunpack.c.h.b16 %v2266
    %v2343 = vunpack.c.l.b16 %v2267
    %v2344 = vunpack.c.h.b16 %v2267
    %v2345 = vunpack.c.l.b16 %v2268
    %v2346 = vunpack.c.h.b16 %v2268
    %v2347 = vunpack.c.l.b16 %v2269
    %v2348 = vunpack.c.h.b16 %v2269
    %v2349 = vunpack.c.l.b16 %v2270
    %v2350 = vunpack.c.h.b16 %v2270
    %v2351 = vunpack.c.l.b16 %v2271
    %v2352 = vunpack.c.h.b16 %v2271
    %v2353 = vunpack.c.l.b16 %v2272
    %v2354 = vunpack.c.h.b16 %v2272
    %v2355 = vunpack.c.l.b16 %v2273
    %v2356 = vunpack.c.h.b16 %v2273
    %v2357 = vunpack.c.l.b16 %v2274
    %v2358 = vunpack.c.h.b16 %v2274
    %v2359 = vunpack.c.l.b16 %v2275
    %v2360 = vunpack.c.h.b16 %v2275
    %v2361 = vunpack.c.l.b16 %v2276
    %v2362 = vunpack.c.h.b16 %v2276
    %v2363 = vunpack.c.l.b16 %v2277
    %v2364 = vunpack.c.h.b16 %v2277
    %v2365 = vunpack.c.l.b16 %v2278
    %v2366 = vunpack.c.h.b16 %v2278
    %v2367 = vunpack.c.l.b16 %v2279
    %v2368 = vunpack.c.h.b16 %v2279
    %v2369 = vunpack.c.l.b16 %v2280
    %v2370 = vunpack.c.h.b16 %v2280
    %v2371 = vunpack.c.l.b16 %v2281
    %v2372 = vunpack.c.h.b16 %v2281
    %v2373 = vunpack.c.l.b16 %v2282
    %v2374 = vunpack.c.h.b16 %v2282
    %v2375 = vunpack.c.l.b16 %v2283
    %v2376 = vunpack.c.h.b16 %v2283
    %v2377 = vunpack.c.l.b16 %v2284
    %v2378 = vunpack.c.h.b16 %v2284
    %v2379 = vunpack.c.l.b16 %v2285
    %v2380 = vunpack.c.h.b16 %v2285
    %v2381 = vunpack.c.l.b16 %v2286
    %v2382 = vunpack.c.h.b16 %v2286
    %v2383 = vpack.c.b16 %v2323, %v2319
    %v2384 = vpack.c.b16 %v2324, %v2320
    %v2385 = vpack.c.b16 %v2325, %v2321
    %v2386 = vpack.c.b16 %v2326, %v2322
    %v2387 = vpack.c.b16 %v2331, %v2327
    %v2388 = vpack.c.b16 %v2332, %v2328
    %v2389 = vpack.c.b16 %v2333, %v2329
    %v2390 = vpack.c.b16 %v2334, %v2330
    %v2391 = vpack.c.b16 %v2339, %v2335
    %v2392 = vpack.c.b16 %v2340, %v2336
    %v2393 = vpack.c.b16 %v2341, %v2337
    %v2394 = vpack.c.b16 %v2342, %v2338
    %v2395 = vpack.c.b16 %v2347, %v2343
    %v2396 = vpack.c.b16 %v2348, %v2344
    %v2397 = vpack.c.b16 %v2349, %v2345
    %v2398 = vpack.c.b16 %v2350, %v2346
    %v2399 = vpack.c.b16 %v2355, %v2351
    %v2400 = vpack.c.b16 %v2356, %v2352
    %v2401 = vpack.c.b16 %v2357, %v2353
    %v2402 = vpack.c.b16 %v2358, %v2354
    %v2403 = vpack.c.b16 %v2363, %v2359
    %v2404 = vpack.c.b16 %v2364, %v2360
    %v2405 = vpack.c.b16 %v2365, %v2361
    %v2406 = vpack.c.b16 %v2366, %v2362
    %v2407 = vpack.c.b16 %v2371, %v2367
    %v2408 = vpack.c.b16 %v2372, %v2368
    %v2409 = vpack.c.b16 %v2373, %v2369
    %v2410 = vpack.c.b16 %v2374, %v2370
    %v2411 = vpack.c.b16 %v2379, %v2375
    %v2412 = vpack.c.b16 %v2380, %v2376
    %v2413 = vpack.c.b16 %v2381, %v2377
    %v2414 = vpack.c.b16 %v2382, %v2378
    %2447 = vmatprep.subr.bf16.mxu0 0
    %2448 = vmatpush1.bf16.msra.mxu0 %v702
    %2449 = vmatprep.subr.bf16.mxu0 0
    %2450 = vmatpush1.bf16.msra.mxu0 %v703
    %2451 = vmatprep.subr.bf16.mxu0 0
    %2452 = vmatpush1.bf16.msra.mxu0 %v704
    %2453 = vmatprep.subr.bf16.mxu0 0
    %2454 = vmatpush1.bf16.msra.mxu0 %v705
    %2455 = vmatprep.subr.bf16.mxu0 0
    %2456 = vmatpush1.bf16.msra.mxu0 %v706
    %2457 = vmatprep.subr.bf16.mxu0 0
    %2458 = vmatpush1.bf16.msra.mxu0 %v707
    %2459 = vmatprep.subr.bf16.mxu0 0
    %2460 = vmatpush1.bf16.msra.mxu0 %v708
    %2461 = vmatprep.subr.bf16.mxu0 0
    %2462 = vmatpush1.bf16.msra.mxu0 %v709
    %2463 = vmatprep.subr.bf16.mxu0 0
    %2464 = vmatpush1.bf16.msra.mxu0 %v710
    %2465 = vmatprep.subr.bf16.mxu0 0
    %2466 = vmatpush1.bf16.msra.mxu0 %v711
    %2467 = vmatprep.subr.bf16.mxu0 0
    %2468 = vmatpush1.bf16.msra.mxu0 %v712
    %2469 = vmatprep.subr.bf16.mxu0 0
    %2470 = vmatpush1.bf16.msra.mxu0 %v713
    %2471 = vmatprep.subr.bf16.mxu0 0
    %2472 = vmatpush1.bf16.msra.mxu0 %v714
    %2473 = vmatprep.subr.bf16.mxu0 0
    %2474 = vmatpush1.bf16.msra.mxu0 %v715
    %2475 = vmatprep.subr.bf16.mxu0 0
    %2476 = vmatpush1.bf16.msra.mxu0 %v716
    %2477 = vmatprep.subr.bf16.mxu0 0
    %2478 = vmatpush1.bf16.msra.mxu0 %v717
    %2479 = vmatprep.mubr.bf16.mxu0 %v2384
    %2480 = vmatmul.mubr.bf16.gmra.mrb[0].mxu0 %v2383
    %v2481 = vpop.f32.mrb[0].mxu0
    %v2482 = vadd.f32 0.0, %v2481
    %v2483 = vpop.f32.mrb[0].mxu0
    %v2484 = vpop.f32.mrb[0].mxu0
    %v2485 = vadd.f32 0.0, %v2484
    %v2486 = vpop.f32.mrb[0].mxu0
    %2487 = vmatprep.mubr.bf16.mxu0 %v2388
    %2488 = vmatmul.mubr.bf16.gmra.mrb[0].mxu0 %v2387
    %v2489 = vpop.f32.mrb[0].mxu0
    %v2490 = vadd.f32 0.0, %v2489
    %v2491 = vpop.f32.mrb[0].mxu0
    %v2492 = vpop.f32.mrb[0].mxu0
    %v2493 = vadd.f32 0.0, %v2492
    %v2494 = vpop.f32.mrb[0].mxu0
    %2495 = vmatprep.mubr.bf16.mxu0 %v2392
    %2496 = vmatmul.mubr.bf16.gmra.mrb[0].mxu0 %v2391
    %v2497 = vpop.f32.mrb[0].mxu0
    %v2498 = vadd.f32 0.0, %v2497
    %v2499 = vpop.f32.mrb[0].mxu0
    %v2500 = vpop.f32.mrb[0].mxu0
    %v2501 = vadd.f32 0.0, %v2500
    %v2502 = vpop.f32.mrb[0].mxu0
    %2503 = vmatprep.mubr.bf16.mxu0 %v2396
    %2504 = vmatmul.mubr.bf16.gmra.mrb[0].mxu0 %v2395
    %v2505 = vpop.f32.mrb[0].mxu0
    %v2506 = vadd.f32 0.0, %v2505
    %v2507 = vpop.f32.mrb[0].mxu0
    %v2508 = vpop.f32.mrb[0].mxu0
    %v2509 = vadd.f32 0.0, %v2508
    %v2510 = vpop.f32.mrb[0].mxu0
    %2511 = vmatprep.mubr.bf16.mxu0 %v2400
    %2512 = vmatmul.mubr.bf16.gmra.mrb[0].mxu0 %v2399
    %v2513 = vpop.f32.mrb[0].mxu0
    %v2514 = vadd.f32 0.0, %v2513
    %v2515 = vpop.f32.mrb[0].mxu0
    %v2516 = vpop.f32.mrb[0].mxu0
    %v2517 = vadd.f32 0.0, %v2516
    %v2518 = vpop.f32.mrb[0].mxu0
    %2519 = vmatprep.mubr.bf16.mxu0 %v2404
    %2520 = vmatmul.mubr.bf16.gmra.mrb[0].mxu0 %v2403
    %v2521 = vpop.f32.mrb[0].mxu0
    %v2522 = vadd.f32 0.0, %v2521
    %v2523 = vpop.f32.mrb[0].mxu0
    %v2524 = vpop.f32.mrb[0].mxu0
    %v2525 = vadd.f32 0.0, %v2524
    %v2526 = vpop.f32.mrb[0].mxu0
    %2527 = vmatprep.mubr.bf16.mxu0 %v2408
    %2528 = vmatmul.mubr.bf16.gmra.mrb[0].mxu0 %v2407
    %v2529 = vpop.f32.mrb[0].mxu0
    %v2530 = vadd.f32 0.0, %v2529
    %v2531 = vpop.f32.mrb[0].mxu0
    %v2532 = vpop.f32.mrb[0].mxu0
    %v2533 = vadd.f32 0.0, %v2532
    %v2534 = vpop.f32.mrb[0].mxu0
    %2535 = vmatprep.mubr.bf16.mxu0 %v2412
    %2536 = vmatmul.mubr.bf16.gmra.mrb[0].mxu0 %v2411
    %v2537 = vpop.f32.mrb[0].mxu0
    %v2538 = vadd.f32 0.0, %v2537
    %v2539 = vpop.f32.mrb[0].mxu0
    %v2540 = vpop.f32.mrb[0].mxu0
    %v2541 = vadd.f32 0.0, %v2540
    %v2542 = vpop.f32.mrb[0].mxu0
    %2543 = vdwg.mxu0
    %2544 = vmatprep.subr.bf16.mxu0 0
    %2545 = vmatpush1.bf16.msra.mxu0 %v718
    %2546 = vmatprep.subr.bf16.mxu0 0
    %2547 = vmatpush1.bf16.msra.mxu0 %v719
    %2548 = vmatprep.subr.bf16.mxu0 0
    %2549 = vmatpush1.bf16.msra.mxu0 %v720
    %2550 = vmatprep.subr.bf16.mxu0 0
    %2551 = vmatpush1.bf16.msra.mxu0 %v721
    %2552 = vmatprep.subr.bf16.mxu0 0
    %2553 = vmatpush1.bf16.msra.mxu0 %v722
    %2554 = vmatprep.subr.bf16.mxu0 0
    %2555 = vmatpush1.bf16.msra.mxu0 %v723
    %2556 = vmatprep.subr.bf16.mxu0 0
    %2557 = vmatpush1.bf16.msra.mxu0 %v724
    %2558 = vmatprep.subr.bf16.mxu0 0
    %2559 = vmatpush1.bf16.msra.mxu0 %v725
    %2560 = vmatprep.subr.bf16.mxu0 0
    %2561 = vmatpush1.bf16.msra.mxu0 %v726
    %2562 = vmatprep.subr.bf16.mxu0 0
    %2563 = vmatpush1.bf16.msra.mxu0 %v727
    %2564 = vmatprep.subr.bf16.mxu0 0
    %2565 = vmatpush1.bf16.msra.mxu0 %v728
    %2566 = vmatprep.subr.bf16.mxu0 0
    %2567 = vmatpush1.bf16.msra.mxu0 %v729
    %2568 = vmatprep.subr.bf16.mxu0 0
    %2569 = vmatpush1.bf16.msra.mxu0 %v730
    %2570 = vmatprep.subr.bf16.mxu0 0
    %2571 = vmatpush1.bf16.msra.mxu0 %v731
    %2572 = vmatprep.subr.bf16.mxu0 0
    %2573 = vmatpush1.bf16.msra.mxu0 %v732
    %2574 = vmatprep.subr.bf16.mxu0 0
    %2575 = vmatpush1.bf16.msra.mxu0 %v733
    %2576 = vmatprep.mubr.bf16.mxu0 %v2386
    %2577 = vmatmul.mubr.bf16.gmra.mrb[0].mxu0 %v2385
    %v2578 = vpop.f32.mrb[0].mxu0
    %v2579 = vadd.f32 %v2482, %v2578
    %v2580 = vpop.f32.mrb[0].mxu0
    %v2581 = vpop.f32.mrb[0].mxu0
    %v2582 = vadd.f32 %v2485, %v2581
    %v2583 = vpop.f32.mrb[0].mxu0
    %2584 = vmatprep.mubr.bf16.mxu0 %v2390
    %2585 = vmatmul.mubr.bf16.gmra.mrb[0].mxu0 %v2389
    %v2586 = vpop.f32.mrb[0].mxu0
    %v2587 = vadd.f32 %v2490, %v2586
    %v2588 = vpop.f32.mrb[0].mxu0
    %v2589 = vpop.f32.mrb[0].mxu0
    %v2590 = vadd.f32 %v2493, %v2589
    %v2591 = vpop.f32.mrb[0].mxu0
    %2592 = vmatprep.mubr.bf16.mxu0 %v2394
    %2593 = vmatmul.mubr.bf16.gmra.mrb[0].mxu0 %v2393
    %v2594 = vpop.f32.mrb[0].mxu0
    %v2595 = vadd.f32 %v2498, %v2594
    %v2596 = vpop.f32.mrb[0].mxu0
    %v2597 = vpop.f32.mrb[0].mxu0
    %v2598 = vadd.f32 %v2501, %v2597
    %v2599 = vpop.f32.mrb[0].mxu0
    %2600 = vmatprep.mubr.bf16.mxu0 %v2398
    %2601 = vmatmul.mubr.bf16.gmra.mrb[0].mxu0 %v2397
    %v2602 = vpop.f32.mrb[0].mxu0
    %v2603 = vadd.f32 %v2506, %v2602
    %v2604 = vpop.f32.mrb[0].mxu0
    %v2605 = vpop.f32.mrb[0].mxu0
    %v2606 = vadd.f32 %v2509, %v2605
    %v2607 = vpop.f32.mrb[0].mxu0
    %2608 = vmatprep.mubr.bf16.mxu0 %v2402
    %2609 = vmatmul.mubr.bf16.gmra.mrb[0].mxu0 %v2401
    %v2610 = vpop.f32.mrb[0].mxu0
    %v2611 = vadd.f32 %v2514, %v2610
    %v2612 = vpop.f32.mrb[0].mxu0
    %v2613 = vpop.f32.mrb[0].mxu0
    %v2614 = vadd.f32 %v2517, %v2613
    %v2615 = vpop.f32.mrb[0].mxu0
    %2616 = vmatprep.mubr.bf16.mxu0 %v2406
    %2617 = vmatmul.mubr.bf16.gmra.mrb[0].mxu0 %v2405
    %v2618 = vpop.f32.mrb[0].mxu0
    %v2619 = vadd.f32 %v2522, %v2618
    %v2620 = vpop.f32.mrb[0].mxu0
    %v2621 = vpop.f32.mrb[0].mxu0
    %v2622 = vadd.f32 %v2525, %v2621
    %v2623 = vpop.f32.mrb[0].mxu0
    %2624 = vmatprep.mubr.bf16.mxu0 %v2410
    %2625 = vmatmul.mubr.bf16.gmra.mrb[0].mxu0 %v2409
    %v2626 = vpop.f32.mrb[0].mxu0
    %v2627 = vadd.f32 %v2530, %v2626
    %v2628 = vpop.f32.mrb[0].mxu0
    %v2629 = vpop.f32.mrb[0].mxu0
    %v2630 = vadd.f32 %v2533, %v2629
    %v2631 = vpop.f32.mrb[0].mxu0
    %2632 = vmatprep.mubr.bf16.mxu0 %v2414
    %2633 = vmatmul.mubr.bf16.gmra.mrb[0].mxu0 %v2413
    %v2634 = vpop.f32.mrb[0].mxu0
    %v2635 = vadd.f32 %v2538, %v2634
    %v2636 = vpop.f32.mrb[0].mxu0
    %v2637 = vpop.f32.mrb[0].mxu0
    %v2638 = vadd.f32 %v2541, %v2637
    %v2639 = vpop.f32.mrb[0].mxu0
    %2640 = vdwg.mxu0
    %v2641 = vpack.c.bf16 %v2582, %v2579
    %v2642 = vpack.c.bf16 %v2590, %v2587
    %v2643 = vpack.c.bf16 %v2598, %v2595
    %v2644 = vpack.c.bf16 %v2606, %v2603
    %v2645 = vpack.c.bf16 %v2614, %v2611
    %v2646 = vpack.c.bf16 %v2622, %v2619
    %v2647 = vpack.c.bf16 %v2630, %v2627
    %v2648 = vpack.c.bf16 %v2638, %v2635
    %v2649 = vld [vmem:[#allocation4 + $0xc0] sm:$0xf]
    %v2650 = vld [vmem:[#allocation4 + $0xc4] sm:$0xf]
    %v2651 = vld [vmem:[#allocation4 + $0xc8] sm:$0xf]
    %v2652 = vld [vmem:[#allocation4 + $0xcc] sm:$0xf]
    %v2653 = vld [vmem:[#allocation4 + $0xd0] sm:$0xf]
    %v2654 = vld [vmem:[#allocation4 + $0xd4] sm:$0xf]
    %v2655 = vld [vmem:[#allocation4 + $0xd8] sm:$0xf]
    %v2656 = vld [vmem:[#allocation4 + $0xdc] sm:$0xf]
    %v2657 = vld [vmem:[#allocation4 + $0xe0] sm:$0xf]
    %v2658 = vld [vmem:[#allocation4 + $0xe4] sm:$0xf]
    %v2659 = vld [vmem:[#allocation4 + $0xe8] sm:$0xf]
    %v2660 = vld [vmem:[#allocation4 + $0xec] sm:$0xf]
    %v2661 = vld [vmem:[#allocation4 + $0xf0] sm:$0xf]
    %v2662 = vld [vmem:[#allocation4 + $0xf4] sm:$0xf]
    %v2663 = vld [vmem:[#allocation4 + $0xf8] sm:$0xf]
    %v2664 = vld [vmem:[#allocation4 + $0xfc] sm:$0xf]
    %v2681 = vunpack.c.l.b16 %v2649
    %v2682 = vunpack.c.l.b16 %v2650
    %v2683 = vunpack.c.l.b16 %v2651
    %v2684 = vunpack.c.l.b16 %v2652
    %v2685 = vunpack.c.l.b16 %v2653
    %v2686 = vunpack.c.l.b16 %v2654
    %v2687 = vunpack.c.l.b16 %v2655
    %v2688 = vunpack.c.l.b16 %v2656
    %v2689 = vunpack.c.l.b16 %v2657
    %v2690 = vunpack.c.l.b16 %v2658
    %v2691 = vunpack.c.l.b16 %v2659
    %v2692 = vunpack.c.l.b16 %v2660
    %v2693 = vunpack.c.l.b16 %v2661
    %v2694 = vunpack.c.l.b16 %v2662
    %v2695 = vunpack.c.l.b16 %v2663
    %v2696 = vunpack.c.l.b16 %v2664
    %v2697 = vpack.c.b16 %v2682, %v2681
    %v2698 = vpack.c.b16 %v2684, %v2683
    %v2699 = vpack.c.b16 %v2686, %v2685
    %v2700 = vpack.c.b16 %v2688, %v2687
    %v2701 = vpack.c.b16 %v2690, %v2689
    %v2702 = vpack.c.b16 %v2692, %v2691
    %v2703 = vpack.c.b16 %v2694, %v2693
    %v2704 = vpack.c.b16 %v2696, %v2695
    %2713 = vmatprep.subr.bf16.mxu0 0
    %2714 = vmatpush1.bf16.msra.mxu0 %v2697
    %2715 = vmatprep.subr.bf16.mxu0 0
    %2716 = vmatpush1.bf16.msra.mxu0 %v2698
    %2717 = vmatprep.subr.bf16.mxu0 0
    %2718 = vmatpush1.bf16.msra.mxu0 %v2699
    %2719 = vmatprep.subr.bf16.mxu0 0
    %2720 = vmatpush1.bf16.msra.mxu0 %v2700
    %2721 = vmatprep.subr.bf16.mxu0 0
    %2722 = vmatpush1.bf16.msra.mxu0 %v2701
    %2723 = vmatprep.subr.bf16.mxu0 0
    %2724 = vmatpush1.bf16.msra.mxu0 %v2702
    %2725 = vmatprep.subr.bf16.mxu0 0
    %2726 = vmatpush1.bf16.msra.mxu0 %v2703
    %2727 = vmatprep.subr.bf16.mxu0 0
    %2728 = vmatpush1.bf16.msra.mxu0 %v2704
    %2729 = vmatprep.subr.bf16.mxu0 0
    %2730 = vmatpush1.bf16.msra.mxu0 0
    %2731 = vmatprep.subr.bf16.mxu0 0
    %2732 = vmatpush1.bf16.msra.mxu0 0
    %2733 = vmatprep.subr.bf16.mxu0 0
    %2734 = vmatpush1.bf16.msra.mxu0 0
    %2735 = vmatprep.subr.bf16.mxu0 0
    %2736 = vmatpush1.bf16.msra.mxu0 0
    %2737 = vmatprep.subr.bf16.mxu0 0
    %2738 = vmatpush1.bf16.msra.mxu0 0
    %2739 = vmatprep.subr.bf16.mxu0 0
    %2740 = vmatpush1.bf16.msra.mxu0 0
    %2741 = vmatprep.subr.bf16.mxu0 0
    %2742 = vmatpush1.bf16.msra.mxu0 0
    %2743 = vmatprep.subr.bf16.mxu0 0
    %2744 = vmatpush1.bf16.msra.mxu0 0
    %2745 = vmatprep.mubr.bf16.mxu0 0
    %2746 = vmatmul.mubr.bf16.gmra.mrb[0].mxu0 %v2641
    %v2747 = vpop.f32.mrb[0].mxu0
    %v2748 = vadd.f32 0.0, %v2747
    %v2749 = vpop.f32.mrb[0].mxu0
    %v2750 = vpop.f32.mrb[0].mxu0
    %v2751 = vadd.f32 0.0, %v2750
    %v2752 = vpop.f32.mrb[0].mxu0
    %2753 = vmatprep.mubr.bf16.mxu0 0
    %2754 = vmatmul.mubr.bf16.gmra.mrb[0].mxu0 %v2642
    %v2755 = vpop.f32.mrb[0].mxu0
    %v2756 = vadd.f32 0.0, %v2755
    %v2757 = vpop.f32.mrb[0].mxu0
    %v2758 = vpop.f32.mrb[0].mxu0
    %v2759 = vadd.f32 0.0, %v2758
    %v2760 = vpop.f32.mrb[0].mxu0
    %2761 = vmatprep.mubr.bf16.mxu0 0
    %2762 = vmatmul.mubr.bf16.gmra.mrb[0].mxu0 %v2643
    %v2763 = vpop.f32.mrb[0].mxu0
    %v2764 = vadd.f32 0.0, %v2763
    %v2765 = vpop.f32.mrb[0].mxu0
    %v2766 = vpop.f32.mrb[0].mxu0
    %v2767 = vadd.f32 0.0, %v2766
    %v2768 = vpop.f32.mrb[0].mxu0
    %2769 = vmatprep.mubr.bf16.mxu0 0
    %2770 = vmatmul.mubr.bf16.gmra.mrb[0].mxu0 %v2644
    %v2771 = vpop.f32.mrb[0].mxu0
    %v2772 = vadd.f32 0.0, %v2771
    %v2773 = vpop.f32.mrb[0].mxu0
    %v2774 = vpop.f32.mrb[0].mxu0
    %v2775 = vadd.f32 0.0, %v2774
    %v2776 = vpop.f32.mrb[0].mxu0
    %2777 = vmatprep.mubr.bf16.mxu0 0
    %2778 = vmatmul.mubr.bf16.gmra.mrb[0].mxu0 %v2645
    %v2779 = vpop.f32.mrb[0].mxu0
    %v2780 = vadd.f32 0.0, %v2779
    %v2781 = vpop.f32.mrb[0].mxu0
    %v2782 = vpop.f32.mrb[0].mxu0
    %v2783 = vadd.f32 0.0, %v2782
    %v2784 = vpop.f32.mrb[0].mxu0
    %2785 = vmatprep.mubr.bf16.mxu0 0
    %2786 = vmatmul.mubr.bf16.gmra.mrb[0].mxu0 %v2646
    %v2787 = vpop.f32.mrb[0].mxu0
    %v2788 = vadd.f32 0.0, %v2787
    %v2789 = vpop.f32.mrb[0].mxu0
    %v2790 = vpop.f32.mrb[0].mxu0
    %v2791 = vadd.f32 0.0, %v2790
    %v2792 = vpop.f32.mrb[0].mxu0
    %2793 = vmatprep.mubr.bf16.mxu0 0
    %2794 = vmatmul.mubr.bf16.gmra.mrb[0].mxu0 %v2647
    %v2795 = vpop.f32.mrb[0].mxu0
    %v2796 = vadd.f32 0.0, %v2795
    %v2797 = vpop.f32.mrb[0].mxu0
    %v2798 = vpop.f32.mrb[0].mxu0
    %v2799 = vadd.f32 0.0, %v2798
    %v2800 = vpop.f32.mrb[0].mxu0
    %2801 = vmatprep.mubr.bf16.mxu0 0
    %2802 = vmatmul.mubr.bf16.gmra.mrb[0].mxu0 %v2648
    %v2803 = vpop.f32.mrb[0].mxu0
    %v2804 = vadd.f32 0.0, %v2803
    %v2805 = vpop.f32.mrb[0].mxu0
    %v2806 = vpop.f32.mrb[0].mxu0
    %v2807 = vadd.f32 0.0, %v2806
    %v2808 = vpop.f32.mrb[0].mxu0
    %2809 = vdwg.mxu0
    %v2810 = vadd.f32 %v2239, %v2748
    %v2811 = vadd.f32 %v2240, %v2751
    %v2812 = vadd.f32 %v2241, %v2756
    %v2813 = vadd.f32 %v2242, %v2759
    %v2814 = vadd.f32 %v2243, %v2764
    %v2815 = vadd.f32 %v2244, %v2767
    %v2816 = vadd.f32 %v2245, %v2772
    %v2817 = vadd.f32 %v2246, %v2775
    %v2818 = vadd.f32 %v2247, %v2780
    %v2819 = vadd.f32 %v2248, %v2783
    %v2820 = vadd.f32 %v2249, %v2788
    %v2821 = vadd.f32 %v2250, %v2791
    %v2822 = vadd.f32 %v2251, %v2796
    %v2823 = vadd.f32 %v2252, %v2799
    %v2824 = vadd.f32 %v2253, %v2804
    %v2825 = vadd.f32 %v2254, %v2807
    %v2826 = vld [vmem:[#allocation2 + $0x400] sm:$0xff]
    %v2827 = vld [vmem:[#allocation2 + $0x408] sm:$0xff]
    %v2828 = vld [vmem:[#allocation2 + $0x410] sm:$0xff]
    %v2829 = vld [vmem:[#allocation2 + $0x418] sm:$0xff]
    %v2830 = vld [vmem:[#allocation2 + $0x420] sm:$0xff]
    %v2831 = vld [vmem:[#allocation2 + $0x428] sm:$0xff]
    %v2832 = vld [vmem:[#allocation2 + $0x430] sm:$0xff]
    %v2833 = vld [vmem:[#allocation2 + $0x438] sm:$0xff]
    %v2834 = vld [vmem:[#allocation2 + $0x440] sm:$0xff]
    %v2835 = vld [vmem:[#allocation2 + $0x448] sm:$0xff]
    %v2836 = vld [vmem:[#allocation2 + $0x450] sm:$0xff]
    %v2837 = vld [vmem:[#allocation2 + $0x458] sm:$0xff]
    %v2838 = vld [vmem:[#allocation2 + $0x460] sm:$0xff]
    %v2839 = vld [vmem:[#allocation2 + $0x468] sm:$0xff]
    %v2840 = vld [vmem:[#allocation2 + $0x470] sm:$0xff]
    %v2841 = vld [vmem:[#allocation2 + $0x478] sm:$0xff]
    %v2842 = vld [vmem:[#allocation2 + $0x480] sm:$0xff]
    %v2843 = vld [vmem:[#allocation2 + $0x488] sm:$0xff]
    %v2844 = vld [vmem:[#allocation2 + $0x490] sm:$0xff]
    %v2845 = vld [vmem:[#allocation2 + $0x498] sm:$0xff]
    %v2846 = vld [vmem:[#allocation2 + $0x4a0] sm:$0xff]
    %v2847 = vld [vmem:[#allocation2 + $0x4a8] sm:$0xff]
    %v2848 = vld [vmem:[#allocation2 + $0x4b0] sm:$0xff]
    %v2849 = vld [vmem:[#allocation2 + $0x4b8] sm:$0xff]
    %v2850 = vld [vmem:[#allocation2 + $0x4c0] sm:$0xff]
    %v2851 = vld [vmem:[#allocation2 + $0x4c8] sm:$0xff]
    %v2852 = vld [vmem:[#allocation2 + $0x4d0] sm:$0xff]
    %v2853 = vld [vmem:[#allocation2 + $0x4d8] sm:$0xff]
    %v2854 = vld [vmem:[#allocation2 + $0x4e0] sm:$0xff]
    %v2855 = vld [vmem:[#allocation2 + $0x4e8] sm:$0xff]
    %v2856 = vld [vmem:[#allocation2 + $0x4f0] sm:$0xff]
    %v2857 = vld [vmem:[#allocation2 + $0x4f8] sm:$0xff]
    %v2890 = vunpack.c.l.b16 %v2826
    %v2891 = vunpack.c.h.b16 %v2826
    %v2892 = vunpack.c.l.b16 %v2827
    %v2893 = vunpack.c.h.b16 %v2827
    %v2894 = vunpack.c.l.b16 %v2828
    %v2895 = vunpack.c.h.b16 %v2828
    %v2896 = vunpack.c.l.b16 %v2829
    %v2897 = vunpack.c.h.b16 %v2829
    %v2898 = vunpack.c.l.b16 %v2830
    %v2899 = vunpack.c.h.b16 %v2830
    %v2900 = vunpack.c.l.b16 %v2831
    %v2901 = vunpack.c.h.b16 %v2831
    %v2902 = vunpack.c.l.b16 %v2832
    %v2903 = vunpack.c.h.b16 %v2832
    %v2904 = vunpack.c.l.b16 %v2833
    %v2905 = vunpack.c.h.b16 %v2833
    %v2906 = vunpack.c.l.b16 %v2834
    %v2907 = vunpack.c.h.b16 %v2834
    %v2908 = vunpack.c.l.b16 %v2835
    %v2909 = vunpack.c.h.b16 %v2835
    %v2910 = vunpack.c.l.b16 %v2836
    %v2911 = vunpack.c.h.b16 %v2836
    %v2912 = vunpack.c.l.b16 %v2837
    %v2913 = vunpack.c.h.b16 %v2837
    %v2914 = vunpack.c.l.b16 %v2838
    %v2915 = vunpack.c.h.b16 %v2838
    %v2916 = vunpack.c.l.b16 %v2839
    %v2917 = vunpack.c.h.b16 %v2839
    %v2918 = vunpack.c.l.b16 %v2840
    %v2919 = vunpack.c.h.b16 %v2840
    %v2920 = vunpack.c.l.b16 %v2841
    %v2921 = vunpack.c.h.b16 %v2841
    %v2922 = vunpack.c.l.b16 %v2842
    %v2923 = vunpack.c.h.b16 %v2842
    %v2924 = vunpack.c.l.b16 %v2843
    %v2925 = vunpack.c.h.b16 %v2843
    %v2926 = vunpack.c.l.b16 %v2844
    %v2927 = vunpack.c.h.b16 %v2844
    %v2928 = vunpack.c.l.b16 %v2845
    %v2929 = vunpack.c.h.b16 %v2845
    %v2930 = vunpack.c.l.b16 %v2846
    %v2931 = vunpack.c.h.b16 %v2846
    %v2932 = vunpack.c.l.b16 %v2847
    %v2933 = vunpack.c.h.b16 %v2847
    %v2934 = vunpack.c.l.b16 %v2848
    %v2935 = vunpack.c.h.b16 %v2848
    %v2936 = vunpack.c.l.b16 %v2849
    %v2937 = vunpack.c.h.b16 %v2849
    %v2938 = vunpack.c.l.b16 %v2850
    %v2939 = vunpack.c.h.b16 %v2850
    %v2940 = vunpack.c.l.b16 %v2851
    %v2941 = vunpack.c.h.b16 %v2851
    %v2942 = vunpack.c.l.b16 %v2852
    %v2943 = vunpack.c.h.b16 %v2852
    %v2944 = vunpack.c.l.b16 %v2853
    %v2945 = vunpack.c.h.b16 %v2853
    %v2946 = vunpack.c.l.b16 %v2854
    %v2947 = vunpack.c.h.b16 %v2854
    %v2948 = vunpack.c.l.b16 %v2855
    %v2949 = vunpack.c.h.b16 %v2855
    %v2950 = vunpack.c.l.b16 %v2856
    %v2951 = vunpack.c.h.b16 %v2856
    %v2952 = vunpack.c.l.b16 %v2857
    %v2953 = vunpack.c.h.b16 %v2857
    %v2954 = vpack.c.b16 %v2894, %v2890
    %v2955 = vpack.c.b16 %v2895, %v2891
    %v2956 = vpack.c.b16 %v2896, %v2892
    %v2957 = vpack.c.b16 %v2897, %v2893
    %v2958 = vpack.c.b16 %v2902, %v2898
    %v2959 = vpack.c.b16 %v2903, %v2899
    %v2960 = vpack.c.b16 %v2904, %v2900
    %v2961 = vpack.c.b16 %v2905, %v2901
    %v2962 = vpack.c.b16 %v2910, %v2906
    %v2963 = vpack.c.b16 %v2911, %v2907
    %v2964 = vpack.c.b16 %v2912, %v2908
    %v2965 = vpack.c.b16 %v2913, %v2909
    %v2966 = vpack.c.b16 %v2918, %v2914
    %v2967 = vpack.c.b16 %v2919, %v2915
    %v2968 = vpack.c.b16 %v2920, %v2916
    %v2969 = vpack.c.b16 %v2921, %v2917
    %v2970 = vpack.c.b16 %v2926, %v2922
    %v2971 = vpack.c.b16 %v2927, %v2923
    %v2972 = vpack.c.b16 %v2928, %v2924
    %v2973 = vpack.c.b16 %v2929, %v2925
    %v2974 = vpack.c.b16 %v2934, %v2930
    %v2975 = vpack.c.b16 %v2935, %v2931
    %v2976 = vpack.c.b16 %v2936, %v2932
    %v2977 = vpack.c.b16 %v2937, %v2933
    %v2978 = vpack.c.b16 %v2942, %v2938
    %v2979 = vpack.c.b16 %v2943, %v2939
    %v2980 = vpack.c.b16 %v2944, %v2940
    %v2981 = vpack.c.b16 %v2945, %v2941
    %v2982 = vpack.c.b16 %v2950, %v2946
    %v2983 = vpack.c.b16 %v2951, %v2947
    %v2984 = vpack.c.b16 %v2952, %v2948
    %v2985 = vpack.c.b16 %v2953, %v2949
    %3018 = vmatprep.subr.bf16.mxu0 0
    %3019 = vmatpush1.bf16.msra.mxu0 %v702
    %3020 = vmatprep.subr.bf16.mxu0 0
    %3021 = vmatpush1.bf16.msra.mxu0 %v703
    %3022 = vmatprep.subr.bf16.mxu0 0
    %3023 = vmatpush1.bf16.msra.mxu0 %v704
    %3024 = vmatprep.subr.bf16.mxu0 0
    %3025 = vmatpush1.bf16.msra.mxu0 %v705
    %3026 = vmatprep.subr.bf16.mxu0 0
    %3027 = vmatpush1.bf16.msra.mxu0 %v706
    %3028 = vmatprep.subr.bf16.mxu0 0
    %3029 = vmatpush1.bf16.msra.mxu0 %v707
    %3030 = vmatprep.subr.bf16.mxu0 0
    %3031 = vmatpush1.bf16.msra.mxu0 %v708
    %3032 = vmatprep.subr.bf16.mxu0 0
    %3033 = vmatpush1.bf16.msra.mxu0 %v709
    %3034 = vmatprep.subr.bf16.mxu0 0
    %3035 = vmatpush1.bf16.msra.mxu0 %v710
    %3036 = vmatprep.subr.bf16.mxu0 0
    %3037 = vmatpush1.bf16.msra.mxu0 %v711
    %3038 = vmatprep.subr.bf16.mxu0 0
    %3039 = vmatpush1.bf16.msra.mxu0 %v712
    %3040 = vmatprep.subr.bf16.mxu0 0
    %3041 = vmatpush1.bf16.msra.mxu0 %v713
    %3042 = vmatprep.subr.bf16.mxu0 0
    %3043 = vmatpush1.bf16.msra.mxu0 %v714
    %3044 = vmatprep.subr.bf16.mxu0 0
    %3045 = vmatpush1.bf16.msra.mxu0 %v715
    %3046 = vmatprep.subr.bf16.mxu0 0
    %3047 = vmatpush1.bf16.msra.mxu0 %v716
    %3048 = vmatprep.subr.bf16.mxu0 0
    %3049 = vmatpush1.bf16.msra.mxu0 %v717
    %3050 = vmatprep.mubr.bf16.mxu0 %v2955
    %3051 = vmatmul.mubr.bf16.gmra.mrb[0].mxu0 %v2954
    %v3052 = vpop.f32.mrb[0].mxu0
    %v3053 = vadd.f32 0.0, %v3052
    %v3054 = vpop.f32.mrb[0].mxu0
    %v3055 = vpop.f32.mrb[0].mxu0
    %v3056 = vadd.f32 0.0, %v3055
    %v3057 = vpop.f32.mrb[0].mxu0
    %3058 = vmatprep.mubr.bf16.mxu0 %v2959
    %3059 = vmatmul.mubr.bf16.gmra.mrb[0].mxu0 %v2958
    %v3060 = vpop.f32.mrb[0].mxu0
    %v3061 = vadd.f32 0.0, %v3060
    %v3062 = vpop.f32.mrb[0].mxu0
    %v3063 = vpop.f32.mrb[0].mxu0
    %v3064 = vadd.f32 0.0, %v3063
    %v3065 = vpop.f32.mrb[0].mxu0
    %3066 = vmatprep.mubr.bf16.mxu0 %v2963
    %3067 = vmatmul.mubr.bf16.gmra.mrb[0].mxu0 %v2962
    %v3068 = vpop.f32.mrb[0].mxu0
    %v3069 = vadd.f32 0.0, %v3068
    %v3070 = vpop.f32.mrb[0].mxu0
    %v3071 = vpop.f32.mrb[0].mxu0
    %v3072 = vadd.f32 0.0, %v3071
    %v3073 = vpop.f32.mrb[0].mxu0
    %3074 = vmatprep.mubr.bf16.mxu0 %v2967
    %3075 = vmatmul.mubr.bf16.gmra.mrb[0].mxu0 %v2966
    %v3076 = vpop.f32.mrb[0].mxu0
    %v3077 = vadd.f32 0.0, %v3076
    %v3078 = vpop.f32.mrb[0].mxu0
    %v3079 = vpop.f32.mrb[0].mxu0
    %v3080 = vadd.f32 0.0, %v3079
    %v3081 = vpop.f32.mrb[0].mxu0
    %3082 = vmatprep.mubr.bf16.mxu0 %v2971
    %3083 = vmatmul.mubr.bf16.gmra.mrb[0].mxu0 %v2970
    %v3084 = vpop.f32.mrb[0].mxu0
    %v3085 = vadd.f32 0.0, %v3084
    %v3086 = vpop.f32.mrb[0].mxu0
    %v3087 = vpop.f32.mrb[0].mxu0
    %v3088 = vadd.f32 0.0, %v3087
    %v3089 = vpop.f32.mrb[0].mxu0
    %3090 = vmatprep.mubr.bf16.mxu0 %v2975
    %3091 = vmatmul.mubr.bf16.gmra.mrb[0].mxu0 %v2974
    %v3092 = vpop.f32.mrb[0].mxu0
    %v3093 = vadd.f32 0.0, %v3092
    %v3094 = vpop.f32.mrb[0].mxu0
    %v3095 = vpop.f32.mrb[0].mxu0
    %v3096 = vadd.f32 0.0, %v3095
    %v3097 = vpop.f32.mrb[0].mxu0
    %3098 = vmatprep.mubr.bf16.mxu0 %v2979
    %3099 = vmatmul.mubr.bf16.gmra.mrb[0].mxu0 %v2978
    %v3100 = vpop.f32.mrb[0].mxu0
    %v3101 = vadd.f32 0.0, %v3100
    %v3102 = vpop.f32.mrb[0].mxu0
    %v3103 = vpop.f32.mrb[0].mxu0
    %v3104 = vadd.f32 0.0, %v3103
    %v3105 = vpop.f32.mrb[0].mxu0
    %3106 = vmatprep.mubr.bf16.mxu0 %v2983
    %3107 = vmatmul.mubr.bf16.gmra.mrb[0].mxu0 %v2982
    %v3108 = vpop.f32.mrb[0].mxu0
    %v3109 = vadd.f32 0.0, %v3108
    %v3110 = vpop.f32.mrb[0].mxu0
    %v3111 = vpop.f32.mrb[0].mxu0
    %v3112 = vadd.f32 0.0, %v3111
    %v3113 = vpop.f32.mrb[0].mxu0
    %3114 = vdwg.mxu0
    %3115 = vmatprep.subr.bf16.mxu0 0
    %3116 = vmatpush1.bf16.msra.mxu0 %v718
    %3117 = vmatprep.subr.bf16.mxu0 0
    %3118 = vmatpush1.bf16.msra.mxu0 %v719
    %3119 = vmatprep.subr.bf16.mxu0 0
    %3120 = vmatpush1.bf16.msra.mxu0 %v720
    %3121 = vmatprep.subr.bf16.mxu0 0
    %3122 = vmatpush1.bf16.msra.mxu0 %v721
    %3123 = vmatprep.subr.bf16.mxu0 0
    %3124 = vmatpush1.bf16.msra.mxu0 %v722
    %3125 = vmatprep.subr.bf16.mxu0 0
    %3126 = vmatpush1.bf16.msra.mxu0 %v723
    %3127 = vmatprep.subr.bf16.mxu0 0
    %3128 = vmatpush1.bf16.msra.mxu0 %v724
    %3129 = vmatprep.subr.bf16.mxu0 0
    %3130 = vmatpush1.bf16.msra.mxu0 %v725
    %3131 = vmatprep.subr.bf16.mxu0 0
    %3132 = vmatpush1.bf16.msra.mxu0 %v726
    %3133 = vmatprep.subr.bf16.mxu0 0
    %3134 = vmatpush1.bf16.msra.mxu0 %v727
    %3135 = vmatprep.subr.bf16.mxu0 0
    %3136 = vmatpush1.bf16.msra.mxu0 %v728
    %3137 = vmatprep.subr.bf16.mxu0 0
    %3138 = vmatpush1.bf16.msra.mxu0 %v729
    %3139 = vmatprep.subr.bf16.mxu0 0
    %3140 = vmatpush1.bf16.msra.mxu0 %v730
    %3141 = vmatprep.subr.bf16.mxu0 0
    %3142 = vmatpush1.bf16.msra.mxu0 %v731
    %3143 = vmatprep.subr.bf16.mxu0 0
    %3144 = vmatpush1.bf16.msra.mxu0 %v732
    %3145 = vmatprep.subr.bf16.mxu0 0
    %3146 = vmatpush1.bf16.msra.mxu0 %v733
    %3147 = vmatprep.mubr.bf16.mxu0 %v2957
    %3148 = vmatmul.mubr.bf16.gmra.mrb[0].mxu0 %v2956
    %v3149 = vpop.f32.mrb[0].mxu0
    %v3150 = vadd.f32 %v3053, %v3149
    %v3151 = vpop.f32.mrb[0].mxu0
    %v3152 = vpop.f32.mrb[0].mxu0
    %v3153 = vadd.f32 %v3056, %v3152
    %v3154 = vpop.f32.mrb[0].mxu0
    %3155 = vmatprep.mubr.bf16.mxu0 %v2961
    %3156 = vmatmul.mubr.bf16.gmra.mrb[0].mxu0 %v2960
    %v3157 = vpop.f32.mrb[0].mxu0
    %v3158 = vadd.f32 %v3061, %v3157
    %v3159 = vpop.f32.mrb[0].mxu0
    %v3160 = vpop.f32.mrb[0].mxu0
    %v3161 = vadd.f32 %v3064, %v3160
    %v3162 = vpop.f32.mrb[0].mxu0
    %3163 = vmatprep.mubr.bf16.mxu0 %v2965
    %3164 = vmatmul.mubr.bf16.gmra.mrb[0].mxu0 %v2964
    %v3165 = vpop.f32.mrb[0].mxu0
    %v3166 = vadd.f32 %v3069, %v3165
    %v3167 = vpop.f32.mrb[0].mxu0
    %v3168 = vpop.f32.mrb[0].mxu0
    %v3169 = vadd.f32 %v3072, %v3168
    %v3170 = vpop.f32.mrb[0].mxu0
    %3171 = vmatprep.mubr.bf16.mxu0 %v2969
    %3172 = vmatmul.mubr.bf16.gmra.mrb[0].mxu0 %v2968
    %v3173 = vpop.f32.mrb[0].mxu0
    %v3174 = vadd.f32 %v3077, %v3173
    %v3175 = vpop.f32.mrb[0].mxu0
    %v3176 = vpop.f32.mrb[0].mxu0
    %v3177 = vadd.f32 %v3080, %v3176
    %v3178 = vpop.f32.mrb[0].mxu0
    %3179 = vmatprep.mubr.bf16.mxu0 %v2973
    %3180 = vmatmul.mubr.bf16.gmra.mrb[0].mxu0 %v2972
    %v3181 = vpop.f32.mrb[0].mxu0
    %v3182 = vadd.f32 %v3085, %v3181
    %v3183 = vpop.f32.mrb[0].mxu0
    %v3184 = vpop.f32.mrb[0].mxu0
    %v3185 = vadd.f32 %v3088, %v3184
    %v3186 = vpop.f32.mrb[0].mxu0
    %3187 = vmatprep.mubr.bf16.mxu0 %v2977
    %3188 = vmatmul.mubr.bf16.gmra.mrb[0].mxu0 %v2976
    %v3189 = vpop.f32.mrb[0].mxu0
    %v3190 = vadd.f32 %v3093, %v3189
    %v3191 = vpop.f32.mrb[0].mxu0
    %v3192 = vpop.f32.mrb[0].mxu0
    %v3193 = vadd.f32 %v3096, %v3192
    %v3194 = vpop.f32.mrb[0].mxu0
    %3195 = vmatprep.mubr.bf16.mxu0 %v2981
    %3196 = vmatmul.mubr.bf16.gmra.mrb[0].mxu0 %v2980
    %v3197 = vpop.f32.mrb[0].mxu0
    %v3198 = vadd.f32 %v3101, %v3197
    %v3199 = vpop.f32.mrb[0].mxu0
    %v3200 = vpop.f32.mrb[0].mxu0
    %v3201 = vadd.f32 %v3104, %v3200
    %v3202 = vpop.f32.mrb[0].mxu0
    %3203 = vmatprep.mubr.bf16.mxu0 %v2985
    %3204 = vmatmul.mubr.bf16.gmra.mrb[0].mxu0 %v2984
    %v3205 = vpop.f32.mrb[0].mxu0
    %v3206 = vadd.f32 %v3109, %v3205
    %v3207 = vpop.f32.mrb[0].mxu0
    %v3208 = vpop.f32.mrb[0].mxu0
    %v3209 = vadd.f32 %v3112, %v3208
    %v3210 = vpop.f32.mrb[0].mxu0
    %3211 = vdwg.mxu0
    %v3212 = vpack.c.bf16 %v3153, %v3150
    %v3213 = vpack.c.bf16 %v3161, %v3158
    %v3214 = vpack.c.bf16 %v3169, %v3166
    %v3215 = vpack.c.bf16 %v3177, %v3174
    %v3216 = vpack.c.bf16 %v3185, %v3182
    %v3217 = vpack.c.bf16 %v3193, %v3190
    %v3218 = vpack.c.bf16 %v3201, %v3198
    %v3219 = vpack.c.bf16 %v3209, %v3206
    %v3220 = vld [vmem:[#allocation4 + $0x100] sm:$0xf]
    %v3221 = vld [vmem:[#allocation4 + $0x104] sm:$0xf]
    %v3222 = vld [vmem:[#allocation4 + $0x108] sm:$0xf]
    %v3223 = vld [vmem:[#allocation4 + $0x10c] sm:$0xf]
    %v3224 = vld [vmem:[#allocation4 + $0x110] sm:$0xf]
    %v3225 = vld [vmem:[#allocation4 + $0x114] sm:$0xf]
    %v3226 = vld [vmem:[#allocation4 + $0x118] sm:$0xf]
    %v3227 = vld [vmem:[#allocation4 + $0x11c] sm:$0xf]
    %v3228 = vld [vmem:[#allocation4 + $0x120] sm:$0xf]
    %v3229 = vld [vmem:[#allocation4 + $0x124] sm:$0xf]
    %v3230 = vld [vmem:[#allocation4 + $0x128] sm:$0xf]
    %v3231 = vld [vmem:[#allocation4 + $0x12c] sm:$0xf]
    %v3232 = vld [vmem:[#allocation4 + $0x130] sm:$0xf]
    %v3233 = vld [vmem:[#allocation4 + $0x134] sm:$0xf]
    %v3234 = vld [vmem:[#allocation4 + $0x138] sm:$0xf]
    %v3235 = vld [vmem:[#allocation4 + $0x13c] sm:$0xf]
    %v3252 = vunpack.c.l.b16 %v3220
    %v3253 = vunpack.c.l.b16 %v3221
    %v3254 = vunpack.c.l.b16 %v3222
    %v3255 = vunpack.c.l.b16 %v3223
    %v3256 = vunpack.c.l.b16 %v3224
    %v3257 = vunpack.c.l.b16 %v3225
    %v3258 = vunpack.c.l.b16 %v3226
    %v3259 = vunpack.c.l.b16 %v3227
    %v3260 = vunpack.c.l.b16 %v3228
    %v3261 = vunpack.c.l.b16 %v3229
    %v3262 = vunpack.c.l.b16 %v3230
    %v3263 = vunpack.c.l.b16 %v3231
    %v3264 = vunpack.c.l.b16 %v3232
    %v3265 = vunpack.c.l.b16 %v3233
    %v3266 = vunpack.c.l.b16 %v3234
    %v3267 = vunpack.c.l.b16 %v3235
    %v3268 = vpack.c.b16 %v3253, %v3252
    %v3269 = vpack.c.b16 %v3255, %v3254
    %v3270 = vpack.c.b16 %v3257, %v3256
    %v3271 = vpack.c.b16 %v3259, %v3258
    %v3272 = vpack.c.b16 %v3261, %v3260
    %v3273 = vpack.c.b16 %v3263, %v3262
    %v3274 = vpack.c.b16 %v3265, %v3264
    %v3275 = vpack.c.b16 %v3267, %v3266
    %3284 = vmatprep.subr.bf16.mxu0 0
    %3285 = vmatpush1.bf16.msra.mxu0 %v3268
    %3286 = vmatprep.subr.bf16.mxu0 0
    %3287 = vmatpush1.bf16.msra.mxu0 %v3269
    %3288 = vmatprep.subr.bf16.mxu0 0
    %3289 = vmatpush1.bf16.msra.mxu0 %v3270
    %3290 = vmatprep.subr.bf16.mxu0 0
    %3291 = vmatpush1.bf16.msra.mxu0 %v3271
    %3292 = vmatprep.subr.bf16.mxu0 0
    %3293 = vmatpush1.bf16.msra.mxu0 %v3272
    %3294 = vmatprep.subr.bf16.mxu0 0
    %3295 = vmatpush1.bf16.msra.mxu0 %v3273
    %3296 = vmatprep.subr.bf16.mxu0 0
    %3297 = vmatpush1.bf16.msra.mxu0 %v3274
    %3298 = vmatprep.subr.bf16.mxu0 0
    %3299 = vmatpush1.bf16.msra.mxu0 %v3275
    %3300 = vmatprep.subr.bf16.mxu0 0
    %3301 = vmatpush1.bf16.msra.mxu0 0
    %3302 = vmatprep.subr.bf16.mxu0 0
    %3303 = vmatpush1.bf16.msra.mxu0 0
    %3304 = vmatprep.subr.bf16.mxu0 0
    %3305 = vmatpush1.bf16.msra.mxu0 0
    %3306 = vmatprep.subr.bf16.mxu0 0
    %3307 = vmatpush1.bf16.msra.mxu0 0
    %3308 = vmatprep.subr.bf16.mxu0 0
    %3309 = vmatpush1.bf16.msra.mxu0 0
    %3310 = vmatprep.subr.bf16.mxu0 0
    %3311 = vmatpush1.bf16.msra.mxu0 0
    %3312 = vmatprep.subr.bf16.mxu0 0
    %3313 = vmatpush1.bf16.msra.mxu0 0
    %3314 = vmatprep.subr.bf16.mxu0 0
    %3315 = vmatpush1.bf16.msra.mxu0 0
    %3316 = vmatprep.mubr.bf16.mxu0 0
    %3317 = vmatmul.mubr.bf16.gmra.mrb[0].mxu0 %v3212
    %v3318 = vpop.f32.mrb[0].mxu0
    %v3319 = vadd.f32 0.0, %v3318
    %v3320 = vpop.f32.mrb[0].mxu0
    %v3321 = vpop.f32.mrb[0].mxu0
    %v3322 = vadd.f32 0.0, %v3321
    %v3323 = vpop.f32.mrb[0].mxu0
    %3324 = vmatprep.mubr.bf16.mxu0 0
    %3325 = vmatmul.mubr.bf16.gmra.mrb[0].mxu0 %v3213
    %v3326 = vpop.f32.mrb[0].mxu0
    %v3327 = vadd.f32 0.0, %v3326
    %v3328 = vpop.f32.mrb[0].mxu0
    %v3329 = vpop.f32.mrb[0].mxu0
    %v3330 = vadd.f32 0.0, %v3329
    %v3331 = vpop.f32.mrb[0].mxu0
    %3332 = vmatprep.mubr.bf16.mxu0 0
    %3333 = vmatmul.mubr.bf16.gmra.mrb[0].mxu0 %v3214
    %v3334 = vpop.f32.mrb[0].mxu0
    %v3335 = vadd.f32 0.0, %v3334
    %v3336 = vpop.f32.mrb[0].mxu0
    %v3337 = vpop.f32.mrb[0].mxu0
    %v3338 = vadd.f32 0.0, %v3337
    %v3339 = vpop.f32.mrb[0].mxu0
    %3340 = vmatprep.mubr.bf16.mxu0 0
    %3341 = vmatmul.mubr.bf16.gmra.mrb[0].mxu0 %v3215
    %v3342 = vpop.f32.mrb[0].mxu0
    %v3343 = vadd.f32 0.0, %v3342
    %v3344 = vpop.f32.mrb[0].mxu0
    %v3345 = vpop.f32.mrb[0].mxu0
    %v3346 = vadd.f32 0.0, %v3345
    %v3347 = vpop.f32.mrb[0].mxu0
    %3348 = vmatprep.mubr.bf16.mxu0 0
    %3349 = vmatmul.mubr.bf16.gmra.mrb[0].mxu0 %v3216
    %v3350 = vpop.f32.mrb[0].mxu0
    %v3351 = vadd.f32 0.0, %v3350
    %v3352 = vpop.f32.mrb[0].mxu0
    %v3353 = vpop.f32.mrb[0].mxu0
    %v3354 = vadd.f32 0.0, %v3353
    %v3355 = vpop.f32.mrb[0].mxu0
    %3356 = vmatprep.mubr.bf16.mxu0 0
    %3357 = vmatmul.mubr.bf16.gmra.mrb[0].mxu0 %v3217
    %v3358 = vpop.f32.mrb[0].mxu0
    %v3359 = vadd.f32 0.0, %v3358
    %v3360 = vpop.f32.mrb[0].mxu0
    %v3361 = vpop.f32.mrb[0].mxu0
    %v3362 = vadd.f32 0.0, %v3361
    %v3363 = vpop.f32.mrb[0].mxu0
    %3364 = vmatprep.mubr.bf16.mxu0 0
    %3365 = vmatmul.mubr.bf16.gmra.mrb[0].mxu0 %v3218
    %v3366 = vpop.f32.mrb[0].mxu0
    %v3367 = vadd.f32 0.0, %v3366
    %v3368 = vpop.f32.mrb[0].mxu0
    %v3369 = vpop.f32.mrb[0].mxu0
    %v3370 = vadd.f32 0.0, %v3369
    %v3371 = vpop.f32.mrb[0].mxu0
    %3372 = vmatprep.mubr.bf16.mxu0 0
    %3373 = vmatmul.mubr.bf16.gmra.mrb[0].mxu0 %v3219
    %v3374 = vpop.f32.mrb[0].mxu0
    %v3375 = vadd.f32 0.0, %v3374
    %v3376 = vpop.f32.mrb[0].mxu0
    %v3377 = vpop.f32.mrb[0].mxu0
    %v3378 = vadd.f32 0.0, %v3377
    %v3379 = vpop.f32.mrb[0].mxu0
    %3380 = vdwg.mxu0
    %v3381 = vadd.f32 %v2810, %v3319
    %v3382 = vadd.f32 %v2811, %v3322
    %v3383 = vadd.f32 %v2812, %v3327
    %v3384 = vadd.f32 %v2813, %v3330
    %v3385 = vadd.f32 %v2814, %v3335
    %v3386 = vadd.f32 %v2815, %v3338
    %v3387 = vadd.f32 %v2816, %v3343
    %v3388 = vadd.f32 %v2817, %v3346
    %v3389 = vadd.f32 %v2818, %v3351
    %v3390 = vadd.f32 %v2819, %v3354
    %v3391 = vadd.f32 %v2820, %v3359
    %v3392 = vadd.f32 %v2821, %v3362
    %v3393 = vadd.f32 %v2822, %v3367
    %v3394 = vadd.f32 %v2823, %v3370
    %v3395 = vadd.f32 %v2824, %v3375
    %v3396 = vadd.f32 %v2825, %v3378
    %v3397 = vld [vmem:[#allocation2 + $0x500] sm:$0xff]
    %v3398 = vld [vmem:[#allocation2 + $0x508] sm:$0xff]
    %v3399 = vld [vmem:[#allocation2 + $0x510] sm:$0xff]
    %v3400 = vld [vmem:[#allocation2 + $0x518] sm:$0xff]
    %v3401 = vld [vmem:[#allocation2 + $0x520] sm:$0xff]
    %v3402 = vld [vmem:[#allocation2 + $0x528] sm:$0xff]
    %v3403 = vld [vmem:[#allocation2 + $0x530] sm:$0xff]
    %v3404 = vld [vmem:[#allocation2 + $0x538] sm:$0xff]
    %v3405 = vld [vmem:[#allocation2 + $0x540] sm:$0xff]
    %v3406 = vld [vmem:[#allocation2 + $0x548] sm:$0xff]
    %v3407 = vld [vmem:[#allocation2 + $0x550] sm:$0xff]
    %v3408 = vld [vmem:[#allocation2 + $0x558] sm:$0xff]
    %v3409 = vld [vmem:[#allocation2 + $0x560] sm:$0xff]
    %v3410 = vld [vmem:[#allocation2 + $0x568] sm:$0xff]
    %v3411 = vld [vmem:[#allocation2 + $0x570] sm:$0xff]
    %v3412 = vld [vmem:[#allocation2 + $0x578] sm:$0xff]
    %v3413 = vld [vmem:[#allocation2 + $0x580] sm:$0xff]
    %v3414 = vld [vmem:[#allocation2 + $0x588] sm:$0xff]
    %v3415 = vld [vmem:[#allocation2 + $0x590] sm:$0xff]
    %v3416 = vld [vmem:[#allocation2 + $0x598] sm:$0xff]
    %v3417 = vld [vmem:[#allocation2 + $0x5a0] sm:$0xff]
    %v3418 = vld [vmem:[#allocation2 + $0x5a8] sm:$0xff]
    %v3419 = vld [vmem:[#allocation2 + $0x5b0] sm:$0xff]
    %v3420 = vld [vmem:[#allocation2 + $0x5b8] sm:$0xff]
    %v3421 = vld [vmem:[#allocation2 + $0x5c0] sm:$0xff]
    %v3422 = vld [vmem:[#allocation2 + $0x5c8] sm:$0xff]
    %v3423 = vld [vmem:[#allocation2 + $0x5d0] sm:$0xff]
    %v3424 = vld [vmem:[#allocation2 + $0x5d8] sm:$0xff]
    %v3425 = vld [vmem:[#allocation2 + $0x5e0] sm:$0xff]
    %v3426 = vld [vmem:[#allocation2 + $0x5e8] sm:$0xff]
    %v3427 = vld [vmem:[#allocation2 + $0x5f0] sm:$0xff]
    %v3428 = vld [vmem:[#allocation2 + $0x5f8] sm:$0xff]
    %v3461 = vunpack.c.l.b16 %v3397
    %v3462 = vunpack.c.h.b16 %v3397
    %v3463 = vunpack.c.l.b16 %v3398
    %v3464 = vunpack.c.h.b16 %v3398
    %v3465 = vunpack.c.l.b16 %v3399
    %v3466 = vunpack.c.h.b16 %v3399
    %v3467 = vunpack.c.l.b16 %v3400
    %v3468 = vunpack.c.h.b16 %v3400
    %v3469 = vunpack.c.l.b16 %v3401
    %v3470 = vunpack.c.h.b16 %v3401
    %v3471 = vunpack.c.l.b16 %v3402
    %v3472 = vunpack.c.h.b16 %v3402
    %v3473 = vunpack.c.l.b16 %v3403
    %v3474 = vunpack.c.h.b16 %v3403
    %v3475 = vunpack.c.l.b16 %v3404
    %v3476 = vunpack.c.h.b16 %v3404
    %v3477 = vunpack.c.l.b16 %v3405
    %v3478 = vunpack.c.h.b16 %v3405
    %v3479 = vunpack.c.l.b16 %v3406
    %v3480 = vunpack.c.h.b16 %v3406
    %v3481 = vunpack.c.l.b16 %v3407
    %v3482 = vunpack.c.h.b16 %v3407
    %v3483 = vunpack.c.l.b16 %v3408
    %v3484 = vunpack.c.h.b16 %v3408
    %v3485 = vunpack.c.l.b16 %v3409
    %v3486 = vunpack.c.h.b16 %v3409
    %v3487 = vunpack.c.l.b16 %v3410
    %v3488 = vunpack.c.h.b16 %v3410
    %v3489 = vunpack.c.l.b16 %v3411
    %v3490 = vunpack.c.h.b16 %v3411
    %v3491 = vunpack.c.l.b16 %v3412
    %v3492 = vunpack.c.h.b16 %v3412
    %v3493 = vunpack.c.l.b16 %v3413
    %v3494 = vunpack.c.h.b16 %v3413
    %v3495 = vunpack.c.l.b16 %v3414
    %v3496 = vunpack.c.h.b16 %v3414
    %v3497 = vunpack.c.l.b16 %v3415
    %v3498 = vunpack.c.h.b16 %v3415
    %v3499 = vunpack.c.l.b16 %v3416
    %v3500 = vunpack.c.h.b16 %v3416
    %v3501 = vunpack.c.l.b16 %v3417
    %v3502 = vunpack.c.h.b16 %v3417
    %v3503 = vunpack.c.l.b16 %v3418
    %v3504 = vunpack.c.h.b16 %v3418
    %v3505 = vunpack.c.l.b16 %v3419
    %v3506 = vunpack.c.h.b16 %v3419
    %v3507 = vunpack.c.l.b16 %v3420
    %v3508 = vunpack.c.h.b16 %v3420
    %v3509 = vunpack.c.l.b16 %v3421
    %v3510 = vunpack.c.h.b16 %v3421
    %v3511 = vunpack.c.l.b16 %v3422
    %v3512 = vunpack.c.h.b16 %v3422
    %v3513 = vunpack.c.l.b16 %v3423
    %v3514 = vunpack.c.h.b16 %v3423
    %v3515 = vunpack.c.l.b16 %v3424
    %v3516 = vunpack.c.h.b16 %v3424
    %v3517 = vunpack.c.l.b16 %v3425
    %v3518 = vunpack.c.h.b16 %v3425
    %v3519 = vunpack.c.l.b16 %v3426
    %v3520 = vunpack.c.h.b16 %v3426
    %v3521 = vunpack.c.l.b16 %v3427
    %v3522 = vunpack.c.h.b16 %v3427
    %v3523 = vunpack.c.l.b16 %v3428
    %v3524 = vunpack.c.h.b16 %v3428
    %v3525 = vpack.c.b16 %v3465, %v3461
    %v3526 = vpack.c.b16 %v3466, %v3462
    %v3527 = vpack.c.b16 %v3467, %v3463
    %v3528 = vpack.c.b16 %v3468, %v3464
    %v3529 = vpack.c.b16 %v3473, %v3469
    %v3530 = vpack.c.b16 %v3474, %v3470
    %v3531 = vpack.c.b16 %v3475, %v3471
    %v3532 = vpack.c.b16 %v3476, %v3472
    %v3533 = vpack.c.b16 %v3481, %v3477
    %v3534 = vpack.c.b16 %v3482, %v3478
    %v3535 = vpack.c.b16 %v3483, %v3479
    %v3536 = vpack.c.b16 %v3484, %v3480
    %v3537 = vpack.c.b16 %v3489, %v3485
    %v3538 = vpack.c.b16 %v3490, %v3486
    %v3539 = vpack.c.b16 %v3491, %v3487
    %v3540 = vpack.c.b16 %v3492, %v3488
    %v3541 = vpack.c.b16 %v3497, %v3493
    %v3542 = vpack.c.b16 %v3498, %v3494
    %v3543 = vpack.c.b16 %v3499, %v3495
    %v3544 = vpack.c.b16 %v3500, %v3496
    %v3545 = vpack.c.b16 %v3505, %v3501
    %v3546 = vpack.c.b16 %v3506, %v3502
    %v3547 = vpack.c.b16 %v3507, %v3503
    %v3548 = vpack.c.b16 %v3508, %v3504
    %v3549 = vpack.c.b16 %v3513, %v3509
    %v3550 = vpack.c.b16 %v3514, %v3510
    %v3551 = vpack.c.b16 %v3515, %v3511
    %v3552 = vpack.c.b16 %v3516, %v3512
    %v3553 = vpack.c.b16 %v3521, %v3517
    %v3554 = vpack.c.b16 %v3522, %v3518
    %v3555 = vpack.c.b16 %v3523, %v3519
    %v3556 = vpack.c.b16 %v3524, %v3520
    %3589 = vmatprep.subr.bf16.mxu0 0
    %3590 = vmatpush1.bf16.msra.mxu0 %v702
    %3591 = vmatprep.subr.bf16.mxu0 0
    %3592 = vmatpush1.bf16.msra.mxu0 %v703
    %3593 = vmatprep.subr.bf16.mxu0 0
    %3594 = vmatpush1.bf16.msra.mxu0 %v704
    %3595 = vmatprep.subr.bf16.mxu0 0
    %3596 = vmatpush1.bf16.msra.mxu0 %v705
    %3597 = vmatprep.subr.bf16.mxu0 0
    %3598 = vmatpush1.bf16.msra.mxu0 %v706
    %3599 = vmatprep.subr.bf16.mxu0 0
    %3600 = vmatpush1.bf16.msra.mxu0 %v707
    %3601 = vmatprep.subr.bf16.mxu0 0
    %3602 = vmatpush1.bf16.msra.mxu0 %v708
    %3603 = vmatprep.subr.bf16.mxu0 0
    %3604 = vmatpush1.bf16.msra.mxu0 %v709
    %3605 = vmatprep.subr.bf16.mxu0 0
    %3606 = vmatpush1.bf16.msra.mxu0 %v710
    %3607 = vmatprep.subr.bf16.mxu0 0
    %3608 = vmatpush1.bf16.msra.mxu0 %v711
    %3609 = vmatprep.subr.bf16.mxu0 0
    %3610 = vmatpush1.bf16.msra.mxu0 %v712
    %3611 = vmatprep.subr.bf16.mxu0 0
    %3612 = vmatpush1.bf16.msra.mxu0 %v713
    %3613 = vmatprep.subr.bf16.mxu0 0
    %3614 = vmatpush1.bf16.msra.mxu0 %v714
    %3615 = vmatprep.subr.bf16.mxu0 0
    %3616 = vmatpush1.bf16.msra.mxu0 %v715
    %3617 = vmatprep.subr.bf16.mxu0 0
    %3618 = vmatpush1.bf16.msra.mxu0 %v716
    %3619 = vmatprep.subr.bf16.mxu0 0
    %3620 = vmatpush1.bf16.msra.mxu0 %v717
    %3621 = vmatprep.mubr.bf16.mxu0 %v3526
    %3622 = vmatmul.mubr.bf16.gmra.mrb[0].mxu0 %v3525
    %v3623 = vpop.f32.mrb[0].mxu0
    %v3624 = vadd.f32 0.0, %v3623
    %v3625 = vpop.f32.mrb[0].mxu0
    %v3626 = vpop.f32.mrb[0].mxu0
    %v3627 = vadd.f32 0.0, %v3626
    %v3628 = vpop.f32.mrb[0].mxu0
    %3629 = vmatprep.mubr.bf16.mxu0 %v3530
    %3630 = vmatmul.mubr.bf16.gmra.mrb[0].mxu0 %v3529
    %v3631 = vpop.f32.mrb[0].mxu0
    %v3632 = vadd.f32 0.0, %v3631
    %v3633 = vpop.f32.mrb[0].mxu0
    %v3634 = vpop.f32.mrb[0].mxu0
    %v3635 = vadd.f32 0.0, %v3634
    %v3636 = vpop.f32.mrb[0].mxu0
    %3637 = vmatprep.mubr.bf16.mxu0 %v3534
    %3638 = vmatmul.mubr.bf16.gmra.mrb[0].mxu0 %v3533
    %v3639 = vpop.f32.mrb[0].mxu0
    %v3640 = vadd.f32 0.0, %v3639
    %v3641 = vpop.f32.mrb[0].mxu0
    %v3642 = vpop.f32.mrb[0].mxu0
    %v3643 = vadd.f32 0.0, %v3642
    %v3644 = vpop.f32.mrb[0].mxu0
    %3645 = vmatprep.mubr.bf16.mxu0 %v3538
    %3646 = vmatmul.mubr.bf16.gmra.mrb[0].mxu0 %v3537
    %v3647 = vpop.f32.mrb[0].mxu0
    %v3648 = vadd.f32 0.0, %v3647
    %v3649 = vpop.f32.mrb[0].mxu0
    %v3650 = vpop.f32.mrb[0].mxu0
    %v3651 = vadd.f32 0.0, %v3650
    %v3652 = vpop.f32.mrb[0].mxu0
    %3653 = vmatprep.mubr.bf16.mxu0 %v3542
    %3654 = vmatmul.mubr.bf16.gmra.mrb[0].mxu0 %v3541
    %v3655 = vpop.f32.mrb[0].mxu0
    %v3656 = vadd.f32 0.0, %v3655
    %v3657 = vpop.f32.mrb[0].mxu0
    %v3658 = vpop.f32.mrb[0].mxu0
    %v3659 = vadd.f32 0.0, %v3658
    %v3660 = vpop.f32.mrb[0].mxu0
    %3661 = vmatprep.mubr.bf16.mxu0 %v3546
    %3662 = vmatmul.mubr.bf16.gmra.mrb[0].mxu0 %v3545
    %v3663 = vpop.f32.mrb[0].mxu0
    %v3664 = vadd.f32 0.0, %v3663
    %v3665 = vpop.f32.mrb[0].mxu0
    %v3666 = vpop.f32.mrb[0].mxu0
    %v3667 = vadd.f32 0.0, %v3666
    %v3668 = vpop.f32.mrb[0].mxu0
    %3669 = vmatprep.mubr.bf16.mxu0 %v3550
    %3670 = vmatmul.mubr.bf16.gmra.mrb[0].mxu0 %v3549
    %v3671 = vpop.f32.mrb[0].mxu0
    %v3672 = vadd.f32 0.0, %v3671
    %v3673 = vpop.f32.mrb[0].mxu0
    %v3674 = vpop.f32.mrb[0].mxu0
    %v3675 = vadd.f32 0.0, %v3674
    %v3676 = vpop.f32.mrb[0].mxu0
    %3677 = vmatprep.mubr.bf16.mxu0 %v3554
    %3678 = vmatmul.mubr.bf16.gmra.mrb[0].mxu0 %v3553
    %v3679 = vpop.f32.mrb[0].mxu0
    %v3680 = vadd.f32 0.0, %v3679
    %v3681 = vpop.f32.mrb[0].mxu0
    %v3682 = vpop.f32.mrb[0].mxu0
    %v3683 = vadd.f32 0.0, %v3682
    %v3684 = vpop.f32.mrb[0].mxu0
    %3685 = vdwg.mxu0
    %3686 = vmatprep.subr.bf16.mxu0 0
    %3687 = vmatpush1.bf16.msra.mxu0 %v718
    %3688 = vmatprep.subr.bf16.mxu0 0
    %3689 = vmatpush1.bf16.msra.mxu0 %v719
    %3690 = vmatprep.subr.bf16.mxu0 0
    %3691 = vmatpush1.bf16.msra.mxu0 %v720
    %3692 = vmatprep.subr.bf16.mxu0 0
    %3693 = vmatpush1.bf16.msra.mxu0 %v721
    %3694 = vmatprep.subr.bf16.mxu0 0
    %3695 = vmatpush1.bf16.msra.mxu0 %v722
    %3696 = vmatprep.subr.bf16.mxu0 0
    %3697 = vmatpush1.bf16.msra.mxu0 %v723
    %3698 = vmatprep.subr.bf16.mxu0 0
    %3699 = vmatpush1.bf16.msra.mxu0 %v724
    %3700 = vmatprep.subr.bf16.mxu0 0
    %3701 = vmatpush1.bf16.msra.mxu0 %v725
    %3702 = vmatprep.subr.bf16.mxu0 0
    %3703 = vmatpush1.bf16.msra.mxu0 %v726
    %3704 = vmatprep.subr.bf16.mxu0 0
    %3705 = vmatpush1.bf16.msra.mxu0 %v727
    %3706 = vmatprep.subr.bf16.mxu0 0
    %3707 = vmatpush1.bf16.msra.mxu0 %v728
    %3708 = vmatprep.subr.bf16.mxu0 0
    %3709 = vmatpush1.bf16.msra.mxu0 %v729
    %3710 = vmatprep.subr.bf16.mxu0 0
    %3711 = vmatpush1.bf16.msra.mxu0 %v730
    %3712 = vmatprep.subr.bf16.mxu0 0
    %3713 = vmatpush1.bf16.msra.mxu0 %v731
    %3714 = vmatprep.subr.bf16.mxu0 0
    %3715 = vmatpush1.bf16.msra.mxu0 %v732
    %3716 = vmatprep.subr.bf16.mxu0 0
    %3717 = vmatpush1.bf16.msra.mxu0 %v733
    %3718 = vmatprep.mubr.bf16.mxu0 %v3528
    %3719 = vmatmul.mubr.bf16.gmra.mrb[0].mxu0 %v3527
    %v3720 = vpop.f32.mrb[0].mxu0
    %v3721 = vadd.f32 %v3624, %v3720
    %v3722 = vpop.f32.mrb[0].mxu0
    %v3723 = vpop.f32.mrb[0].mxu0
    %v3724 = vadd.f32 %v3627, %v3723
    %v3725 = vpop.f32.mrb[0].mxu0
    %3726 = vmatprep.mubr.bf16.mxu0 %v3532
    %3727 = vmatmul.mubr.bf16.gmra.mrb[0].mxu0 %v3531
    %v3728 = vpop.f32.mrb[0].mxu0
    %v3729 = vadd.f32 %v3632, %v3728
    %v3730 = vpop.f32.mrb[0].mxu0
    %v3731 = vpop.f32.mrb[0].mxu0
    %v3732 = vadd.f32 %v3635, %v3731
    %v3733 = vpop.f32.mrb[0].mxu0
    %3734 = vmatprep.mubr.bf16.mxu0 %v3536
    %3735 = vmatmul.mubr.bf16.gmra.mrb[0].mxu0 %v3535
    %v3736 = vpop.f32.mrb[0].mxu0
    %v3737 = vadd.f32 %v3640, %v3736
    %v3738 = vpop.f32.mrb[0].mxu0
    %v3739 = vpop.f32.mrb[0].mxu0
    %v3740 = vadd.f32 %v3643, %v3739
    %v3741 = vpop.f32.mrb[0].mxu0
    %3742 = vmatprep.mubr.bf16.mxu0 %v3540
    %3743 = vmatmul.mubr.bf16.gmra.mrb[0].mxu0 %v3539
    %v3744 = vpop.f32.mrb[0].mxu0
    %v3745 = vadd.f32 %v3648, %v3744
    %v3746 = vpop.f32.mrb[0].mxu0
    %v3747 = vpop.f32.mrb[0].mxu0
    %v3748 = vadd.f32 %v3651, %v3747
    %v3749 = vpop.f32.mrb[0].mxu0
    %3750 = vmatprep.mubr.bf16.mxu0 %v3544
    %3751 = vmatmul.mubr.bf16.gmra.mrb[0].mxu0 %v3543
    %v3752 = vpop.f32.mrb[0].mxu0
    %v3753 = vadd.f32 %v3656, %v3752
    %v3754 = vpop.f32.mrb[0].mxu0
    %v3755 = vpop.f32.mrb[0].mxu0
    %v3756 = vadd.f32 %v3659, %v3755
    %v3757 = vpop.f32.mrb[0].mxu0
    %3758 = vmatprep.mubr.bf16.mxu0 %v3548
    %3759 = vmatmul.mubr.bf16.gmra.mrb[0].mxu0 %v3547
    %v3760 = vpop.f32.mrb[0].mxu0
    %v3761 = vadd.f32 %v3664, %v3760
    %v3762 = vpop.f32.mrb[0].mxu0
    %v3763 = vpop.f32.mrb[0].mxu0
    %v3764 = vadd.f32 %v3667, %v3763
    %v3765 = vpop.f32.mrb[0].mxu0
    %3766 = vmatprep.mubr.bf16.mxu0 %v3552
    %3767 = vmatmul.mubr.bf16.gmra.mrb[0].mxu0 %v3551
    %v3768 = vpop.f32.mrb[0].mxu0
    %v3769 = vadd.f32 %v3672, %v3768
    %v3770 = vpop.f32.mrb[0].mxu0
    %v3771 = vpop.f32.mrb[0].mxu0
    %v3772 = vadd.f32 %v3675, %v3771
    %v3773 = vpop.f32.mrb[0].mxu0
    %3774 = vmatprep.mubr.bf16.mxu0 %v3556
    %3775 = vmatmul.mubr.bf16.gmra.mrb[0].mxu0 %v3555
    %v3776 = vpop.f32.mrb[0].mxu0
    %v3777 = vadd.f32 %v3680, %v3776
    %v3778 = vpop.f32.mrb[0].mxu0
    %v3779 = vpop.f32.mrb[0].mxu0
    %v3780 = vadd.f32 %v3683, %v3779
    %v3781 = vpop.f32.mrb[0].mxu0
    %3782 = vdwg.mxu0
    %v3783 = vpack.c.bf16 %v3724, %v3721
    %v3784 = vpack.c.bf16 %v3732, %v3729
    %v3785 = vpack.c.bf16 %v3740, %v3737
    %v3786 = vpack.c.bf16 %v3748, %v3745
    %v3787 = vpack.c.bf16 %v3756, %v3753
    %v3788 = vpack.c.bf16 %v3764, %v3761
    %v3789 = vpack.c.bf16 %v3772, %v3769
    %v3790 = vpack.c.bf16 %v3780, %v3777
    %v3791 = vld [vmem:[#allocation4 + $0x140] sm:$0xf]
    %v3792 = vld [vmem:[#allocation4 + $0x144] sm:$0xf]
    %v3793 = vld [vmem:[#allocation4 + $0x148] sm:$0xf]
    %v3794 = vld [vmem:[#allocation4 + $0x14c] sm:$0xf]
    %v3795 = vld [vmem:[#allocation4 + $0x150] sm:$0xf]
    %v3796 = vld [vmem:[#allocation4 + $0x154] sm:$0xf]
    %v3797 = vld [vmem:[#allocation4 + $0x158] sm:$0xf]
    %v3798 = vld [vmem:[#allocation4 + $0x15c] sm:$0xf]
    %v3799 = vld [vmem:[#allocation4 + $0x160] sm:$0xf]
    %v3800 = vld [vmem:[#allocation4 + $0x164] sm:$0xf]
    %v3801 = vld [vmem:[#allocation4 + $0x168] sm:$0xf]
    %v3802 = vld [vmem:[#allocation4 + $0x16c] sm:$0xf]
    %v3803 = vld [vmem:[#allocation4 + $0x170] sm:$0xf]
    %v3804 = vld [vmem:[#allocation4 + $0x174] sm:$0xf]
    %v3805 = vld [vmem:[#allocation4 + $0x178] sm:$0xf]
    %v3806 = vld [vmem:[#allocation4 + $0x17c] sm:$0xf]
    %v3823 = vunpack.c.l.b16 %v3791
    %v3824 = vunpack.c.l.b16 %v3792
    %v3825 = vunpack.c.l.b16 %v3793
    %v3826 = vunpack.c.l.b16 %v3794
    %v3827 = vunpack.c.l.b16 %v3795
    %v3828 = vunpack.c.l.b16 %v3796
    %v3829 = vunpack.c.l.b16 %v3797
    %v3830 = vunpack.c.l.b16 %v3798
    %v3831 = vunpack.c.l.b16 %v3799
    %v3832 = vunpack.c.l.b16 %v3800
    %v3833 = vunpack.c.l.b16 %v3801
    %v3834 = vunpack.c.l.b16 %v3802
    %v3835 = vunpack.c.l.b16 %v3803
    %v3836 = vunpack.c.l.b16 %v3804
    %v3837 = vunpack.c.l.b16 %v3805
    %v3838 = vunpack.c.l.b16 %v3806
    %v3839 = vpack.c.b16 %v3824, %v3823
    %v3840 = vpack.c.b16 %v3826, %v3825
    %v3841 = vpack.c.b16 %v3828, %v3827
    %v3842 = vpack.c.b16 %v3830, %v3829
    %v3843 = vpack.c.b16 %v3832, %v3831
    %v3844 = vpack.c.b16 %v3834, %v3833
    %v3845 = vpack.c.b16 %v3836, %v3835
    %v3846 = vpack.c.b16 %v3838, %v3837
    %3855 = vmatprep.subr.bf16.mxu0 0
    %3856 = vmatpush1.bf16.msra.mxu0 %v3839
    %3857 = vmatprep.subr.bf16.mxu0 0
    %3858 = vmatpush1.bf16.msra.mxu0 %v3840
    %3859 = vmatprep.subr.bf16.mxu0 0
    %3860 = vmatpush1.bf16.msra.mxu0 %v3841
    %3861 = vmatprep.subr.bf16.mxu0 0
    %3862 = vmatpush1.bf16.msra.mxu0 %v3842
    %3863 = vmatprep.subr.bf16.mxu0 0
    %3864 = vmatpush1.bf16.msra.mxu0 %v3843
    %3865 = vmatprep.subr.bf16.mxu0 0
    %3866 = vmatpush1.bf16.msra.mxu0 %v3844
    %3867 = vmatprep.subr.bf16.mxu0 0
    %3868 = vmatpush1.bf16.msra.mxu0 %v3845
    %3869 = vmatprep.subr.bf16.mxu0 0
    %3870 = vmatpush1.bf16.msra.mxu0 %v3846
    %3871 = vmatprep.subr.bf16.mxu0 0
    %3872 = vmatpush1.bf16.msra.mxu0 0
    %3873 = vmatprep.subr.bf16.mxu0 0
    %3874 = vmatpush1.bf16.msra.mxu0 0
    %3875 = vmatprep.subr.bf16.mxu0 0
    %3876 = vmatpush1.bf16.msra.mxu0 0
    %3877 = vmatprep.subr.bf16.mxu0 0
    %3878 = vmatpush1.bf16.msra.mxu0 0
    %3879 = vmatprep.subr.bf16.mxu0 0
    %3880 = vmatpush1.bf16.msra.mxu0 0
    %3881 = vmatprep.subr.bf16.mxu0 0
    %3882 = vmatpush1.bf16.msra.mxu0 0
    %3883 = vmatprep.subr.bf16.mxu0 0
    %3884 = vmatpush1.bf16.msra.mxu0 0
    %3885 = vmatprep.subr.bf16.mxu0 0
    %3886 = vmatpush1.bf16.msra.mxu0 0
    %3887 = vmatprep.mubr.bf16.mxu0 0
    %3888 = vmatmul.mubr.bf16.gmra.mrb[0].mxu0 %v3783
    %v3889 = vpop.f32.mrb[0].mxu0
    %v3890 = vadd.f32 0.0, %v3889
    %v3891 = vpop.f32.mrb[0].mxu0
    %v3892 = vpop.f32.mrb[0].mxu0
    %v3893 = vadd.f32 0.0, %v3892
    %v3894 = vpop.f32.mrb[0].mxu0
    %3895 = vmatprep.mubr.bf16.mxu0 0
    %3896 = vmatmul.mubr.bf16.gmra.mrb[0].mxu0 %v3784
    %v3897 = vpop.f32.mrb[0].mxu0
    %v3898 = vadd.f32 0.0, %v3897
    %v3899 = vpop.f32.mrb[0].mxu0
    %v3900 = vpop.f32.mrb[0].mxu0
    %v3901 = vadd.f32 0.0, %v3900
    %v3902 = vpop.f32.mrb[0].mxu0
    %3903 = vmatprep.mubr.bf16.mxu0 0
    %3904 = vmatmul.mubr.bf16.gmra.mrb[0].mxu0 %v3785
    %v3905 = vpop.f32.mrb[0].mxu0
    %v3906 = vadd.f32 0.0, %v3905
    %v3907 = vpop.f32.mrb[0].mxu0
    %v3908 = vpop.f32.mrb[0].mxu0
    %v3909 = vadd.f32 0.0, %v3908
    %v3910 = vpop.f32.mrb[0].mxu0
    %3911 = vmatprep.mubr.bf16.mxu0 0
    %3912 = vmatmul.mubr.bf16.gmra.mrb[0].mxu0 %v3786
    %v3913 = vpop.f32.mrb[0].mxu0
    %v3914 = vadd.f32 0.0, %v3913
    %v3915 = vpop.f32.mrb[0].mxu0
    %v3916 = vpop.f32.mrb[0].mxu0
    %v3917 = vadd.f32 0.0, %v3916
    %v3918 = vpop.f32.mrb[0].mxu0
    %3919 = vmatprep.mubr.bf16.mxu0 0
    %3920 = vmatmul.mubr.bf16.gmra.mrb[0].mxu0 %v3787
    %v3921 = vpop.f32.mrb[0].mxu0
    %v3922 = vadd.f32 0.0, %v3921
    %v3923 = vpop.f32.mrb[0].mxu0
    %v3924 = vpop.f32.mrb[0].mxu0
    %v3925 = vadd.f32 0.0, %v3924
    %v3926 = vpop.f32.mrb[0].mxu0
    %3927 = vmatprep.mubr.bf16.mxu0 0
    %3928 = vmatmul.mubr.bf16.gmra.mrb[0].mxu0 %v3788
    %v3929 = vpop.f32.mrb[0].mxu0
    %v3930 = vadd.f32 0.0, %v3929
    %v3931 = vpop.f32.mrb[0].mxu0
    %v3932 = vpop.f32.mrb[0].mxu0
    %v3933 = vadd.f32 0.0, %v3932
    %v3934 = vpop.f32.mrb[0].mxu0
    %3935 = vmatprep.mubr.bf16.mxu0 0
    %3936 = vmatmul.mubr.bf16.gmra.mrb[0].mxu0 %v3789
    %v3937 = vpop.f32.mrb[0].mxu0
    %v3938 = vadd.f32 0.0, %v3937
    %v3939 = vpop.f32.mrb[0].mxu0
    %v3940 = vpop.f32.mrb[0].mxu0
    %v3941 = vadd.f32 0.0, %v3940
    %v3942 = vpop.f32.mrb[0].mxu0
    %3943 = vmatprep.mubr.bf16.mxu0 0
    %3944 = vmatmul.mubr.bf16.gmra.mrb[0].mxu0 %v3790
    %v3945 = vpop.f32.mrb[0].mxu0
    %v3946 = vadd.f32 0.0, %v3945
    %v3947 = vpop.f32.mrb[0].mxu0
    %v3948 = vpop.f32.mrb[0].mxu0
    %v3949 = vadd.f32 0.0, %v3948
    %v3950 = vpop.f32.mrb[0].mxu0
    %3951 = vdwg.mxu0
    %v3952 = vadd.f32 %v3381, %v3890
    %v3953 = vadd.f32 %v3382, %v3893
    %v3954 = vadd.f32 %v3383, %v3898
    %v3955 = vadd.f32 %v3384, %v3901
    %v3956 = vadd.f32 %v3385, %v3906
    %v3957 = vadd.f32 %v3386, %v3909
    %v3958 = vadd.f32 %v3387, %v3914
    %v3959 = vadd.f32 %v3388, %v3917
    %v3960 = vadd.f32 %v3389, %v3922
    %v3961 = vadd.f32 %v3390, %v3925
    %v3962 = vadd.f32 %v3391, %v3930
    %v3963 = vadd.f32 %v3392, %v3933
    %v3964 = vadd.f32 %v3393, %v3938
    %v3965 = vadd.f32 %v3394, %v3941
    %v3966 = vadd.f32 %v3395, %v3946
    %v3967 = vadd.f32 %v3396, %v3949
    %v3968 = vld [vmem:[#allocation2 + $0x600] sm:$0xff]
    %v3969 = vld [vmem:[#allocation2 + $0x608] sm:$0xff]
    %v3970 = vld [vmem:[#allocation2 + $0x610] sm:$0xff]
    %v3971 = vld [vmem:[#allocation2 + $0x618] sm:$0xff]
    %v3972 = vld [vmem:[#allocation2 + $0x620] sm:$0xff]
    %v3973 = vld [vmem:[#allocation2 + $0x628] sm:$0xff]
    %v3974 = vld [vmem:[#allocation2 + $0x630] sm:$0xff]
    %v3975 = vld [vmem:[#allocation2 + $0x638] sm:$0xff]
    %v3976 = vld [vmem:[#allocation2 + $0x640] sm:$0xff]
    %v3977 = vld [vmem:[#allocation2 + $0x648] sm:$0xff]
    %v3978 = vld [vmem:[#allocation2 + $0x650] sm:$0xff]
    %v3979 = vld [vmem:[#allocation2 + $0x658] sm:$0xff]
    %v3980 = vld [vmem:[#allocation2 + $0x660] sm:$0xff]
    %v3981 = vld [vmem:[#allocation2 + $0x668] sm:$0xff]
    %v3982 = vld [vmem:[#allocation2 + $0x670] sm:$0xff]
    %v3983 = vld [vmem:[#allocation2 + $0x678] sm:$0xff]
    %v3984 = vld [vmem:[#allocation2 + $0x680] sm:$0xff]
    %v3985 = vld [vmem:[#allocation2 + $0x688] sm:$0xff]
    %v3986 = vld [vmem:[#allocation2 + $0x690] sm:$0xff]
    %v3987 = vld [vmem:[#allocation2 + $0x698] sm:$0xff]
    %v3988 = vld [vmem:[#allocation2 + $0x6a0] sm:$0xff]
    %v3989 = vld [vmem:[#allocation2 + $0x6a8] sm:$0xff]
    %v3990 = vld [vmem:[#allocation2 + $0x6b0] sm:$0xff]
    %v3991 = vld [vmem:[#allocation2 + $0x6b8] sm:$0xff]
    %v3992 = vld [vmem:[#allocation2 + $0x6c0] sm:$0xff]
    %v3993 = vld [vmem:[#allocation2 + $0x6c8] sm:$0xff]
    %v3994 = vld [vmem:[#allocation2 + $0x6d0] sm:$0xff]
    %v3995 = vld [vmem:[#allocation2 + $0x6d8] sm:$0xff]
    %v3996 = vld [vmem:[#allocation2 + $0x6e0] sm:$0xff]
    %v3997 = vld [vmem:[#allocation2 + $0x6e8] sm:$0xff]
    %v3998 = vld [vmem:[#allocation2 + $0x6f0] sm:$0xff]
    %v3999 = vld [vmem:[#allocation2 + $0x6f8] sm:$0xff]
    %v4032 = vunpack.c.l.b16 %v3968
    %v4033 = vunpack.c.h.b16 %v3968
    %v4034 = vunpack.c.l.b16 %v3969
    %v4035 = vunpack.c.h.b16 %v3969
    %v4036 = vunpack.c.l.b16 %v3970
    %v4037 = vunpack.c.h.b16 %v3970
    %v4038 = vunpack.c.l.b16 %v3971
    %v4039 = vunpack.c.h.b16 %v3971
    %v4040 = vunpack.c.l.b16 %v3972
    %v4041 = vunpack.c.h.b16 %v3972
    %v4042 = vunpack.c.l.b16 %v3973
    %v4043 = vunpack.c.h.b16 %v3973
    %v4044 = vunpack.c.l.b16 %v3974
    %v4045 = vunpack.c.h.b16 %v3974
    %v4046 = vunpack.c.l.b16 %v3975
    %v4047 = vunpack.c.h.b16 %v3975
    %v4048 = vunpack.c.l.b16 %v3976
    %v4049 = vunpack.c.h.b16 %v3976
    %v4050 = vunpack.c.l.b16 %v3977
    %v4051 = vunpack.c.h.b16 %v3977
    %v4052 = vunpack.c.l.b16 %v3978
    %v4053 = vunpack.c.h.b16 %v3978
    %v4054 = vunpack.c.l.b16 %v3979
    %v4055 = vunpack.c.h.b16 %v3979
    %v4056 = vunpack.c.l.b16 %v3980
    %v4057 = vunpack.c.h.b16 %v3980
    %v4058 = vunpack.c.l.b16 %v3981
    %v4059 = vunpack.c.h.b16 %v3981
    %v4060 = vunpack.c.l.b16 %v3982
    %v4061 = vunpack.c.h.b16 %v3982
    %v4062 = vunpack.c.l.b16 %v3983
    %v4063 = vunpack.c.h.b16 %v3983
    %v4064 = vunpack.c.l.b16 %v3984
    %v4065 = vunpack.c.h.b16 %v3984
    %v4066 = vunpack.c.l.b16 %v3985
    %v4067 = vunpack.c.h.b16 %v3985
    %v4068 = vunpack.c.l.b16 %v3986
    %v4069 = vunpack.c.h.b16 %v3986
    %v4070 = vunpack.c.l.b16 %v3987
    %v4071 = vunpack.c.h.b16 %v3987
    %v4072 = vunpack.c.l.b16 %v3988
    %v4073 = vunpack.c.h.b16 %v3988
    %v4074 = vunpack.c.l.b16 %v3989
    %v4075 = vunpack.c.h.b16 %v3989
    %v4076 = vunpack.c.l.b16 %v3990
    %v4077 = vunpack.c.h.b16 %v3990
    %v4078 = vunpack.c.l.b16 %v3991
    %v4079 = vunpack.c.h.b16 %v3991
    %v4080 = vunpack.c.l.b16 %v3992
    %v4081 = vunpack.c.h.b16 %v3992
    %v4082 = vunpack.c.l.b16 %v3993
    %v4083 = vunpack.c.h.b16 %v3993
    %v4084 = vunpack.c.l.b16 %v3994
    %v4085 = vunpack.c.h.b16 %v3994
    %v4086 = vunpack.c.l.b16 %v3995
    %v4087 = vunpack.c.h.b16 %v3995
    %v4088 = vunpack.c.l.b16 %v3996
    %v4089 = vunpack.c.h.b16 %v3996
    %v4090 = vunpack.c.l.b16 %v3997
    %v4091 = vunpack.c.h.b16 %v3997
    %v4092 = vunpack.c.l.b16 %v3998
    %v4093 = vunpack.c.h.b16 %v3998
    %v4094 = vunpack.c.l.b16 %v3999
    %v4095 = vunpack.c.h.b16 %v3999
    %v4096 = vpack.c.b16 %v4036, %v4032
    %v4097 = vpack.c.b16 %v4037, %v4033
    %v4098 = vpack.c.b16 %v4038, %v4034
    %v4099 = vpack.c.b16 %v4039, %v4035
    %v4100 = vpack.c.b16 %v4044, %v4040
    %v4101 = vpack.c.b16 %v4045, %v4041
    %v4102 = vpack.c.b16 %v4046, %v4042
    %v4103 = vpack.c.b16 %v4047, %v4043
    %v4104 = vpack.c.b16 %v4052, %v4048
    %v4105 = vpack.c.b16 %v4053, %v4049
    %v4106 = vpack.c.b16 %v4054, %v4050
    %v4107 = vpack.c.b16 %v4055, %v4051
    %v4108 = vpack.c.b16 %v4060, %v4056
    %v4109 = vpack.c.b16 %v4061, %v4057
    %v4110 = vpack.c.b16 %v4062, %v4058
    %v4111 = vpack.c.b16 %v4063, %v4059
    %v4112 = vpack.c.b16 %v4068, %v4064
    %v4113 = vpack.c.b16 %v4069, %v4065
    %v4114 = vpack.c.b16 %v4070, %v4066
    %v4115 = vpack.c.b16 %v4071, %v4067
    %v4116 = vpack.c.b16 %v4076, %v4072
    %v4117 = vpack.c.b16 %v4077, %v4073
    %v4118 = vpack.c.b16 %v4078, %v4074
    %v4119 = vpack.c.b16 %v4079, %v4075
    %v4120 = vpack.c.b16 %v4084, %v4080
    %v4121 = vpack.c.b16 %v4085, %v4081
    %v4122 = vpack.c.b16 %v4086, %v4082
    %v4123 = vpack.c.b16 %v4087, %v4083
    %v4124 = vpack.c.b16 %v4092, %v4088
    %v4125 = vpack.c.b16 %v4093, %v4089
    %v4126 = vpack.c.b16 %v4094, %v4090
    %v4127 = vpack.c.b16 %v4095, %v4091
    %4160 = vmatprep.subr.bf16.mxu0 0
    %4161 = vmatpush1.bf16.msra.mxu0 %v702
    %4162 = vmatprep.subr.bf16.mxu0 0
    %4163 = vmatpush1.bf16.msra.mxu0 %v703
    %4164 = vmatprep.subr.bf16.mxu0 0
    %4165 = vmatpush1.bf16.msra.mxu0 %v704
    %4166 = vmatprep.subr.bf16.mxu0 0
    %4167 = vmatpush1.bf16.msra.mxu0 %v705
    %4168 = vmatprep.subr.bf16.mxu0 0
    %4169 = vmatpush1.bf16.msra.mxu0 %v706
    %4170 = vmatprep.subr.bf16.mxu0 0
    %4171 = vmatpush1.bf16.msra.mxu0 %v707
    %4172 = vmatprep.subr.bf16.mxu0 0
    %4173 = vmatpush1.bf16.msra.mxu0 %v708
    %4174 = vmatprep.subr.bf16.mxu0 0
    %4175 = vmatpush1.bf16.msra.mxu0 %v709
    %4176 = vmatprep.subr.bf16.mxu0 0
    %4177 = vmatpush1.bf16.msra.mxu0 %v710
    %4178 = vmatprep.subr.bf16.mxu0 0
    %4179 = vmatpush1.bf16.msra.mxu0 %v711
    %4180 = vmatprep.subr.bf16.mxu0 0
    %4181 = vmatpush1.bf16.msra.mxu0 %v712
    %4182 = vmatprep.subr.bf16.mxu0 0
    %4183 = vmatpush1.bf16.msra.mxu0 %v713
    %4184 = vmatprep.subr.bf16.mxu0 0
    %4185 = vmatpush1.bf16.msra.mxu0 %v714
    %4186 = vmatprep.subr.bf16.mxu0 0
    %4187 = vmatpush1.bf16.msra.mxu0 %v715
    %4188 = vmatprep.subr.bf16.mxu0 0
    %4189 = vmatpush1.bf16.msra.mxu0 %v716
    %4190 = vmatprep.subr.bf16.mxu0 0
    %4191 = vmatpush1.bf16.msra.mxu0 %v717
    %4192 = vmatprep.mubr.bf16.mxu0 %v4097
    %4193 = vmatmul.mubr.bf16.gmra.mrb[0].mxu0 %v4096
    %v4194 = vpop.f32.mrb[0].mxu0
    %v4195 = vadd.f32 0.0, %v4194
    %v4196 = vpop.f32.mrb[0].mxu0
    %v4197 = vpop.f32.mrb[0].mxu0
    %v4198 = vadd.f32 0.0, %v4197
    %v4199 = vpop.f32.mrb[0].mxu0
    %4200 = vmatprep.mubr.bf16.mxu0 %v4101
    %4201 = vmatmul.mubr.bf16.gmra.mrb[0].mxu0 %v4100
    %v4202 = vpop.f32.mrb[0].mxu0
    %v4203 = vadd.f32 0.0, %v4202
    %v4204 = vpop.f32.mrb[0].mxu0
    %v4205 = vpop.f32.mrb[0].mxu0
    %v4206 = vadd.f32 0.0, %v4205
    %v4207 = vpop.f32.mrb[0].mxu0
    %4208 = vmatprep.mubr.bf16.mxu0 %v4105
    %4209 = vmatmul.mubr.bf16.gmra.mrb[0].mxu0 %v4104
    %v4210 = vpop.f32.mrb[0].mxu0
    %v4211 = vadd.f32 0.0, %v4210
    %v4212 = vpop.f32.mrb[0].mxu0
    %v4213 = vpop.f32.mrb[0].mxu0
    %v4214 = vadd.f32 0.0, %v4213
    %v4215 = vpop.f32.mrb[0].mxu0
    %4216 = vmatprep.mubr.bf16.mxu0 %v4109
    %4217 = vmatmul.mubr.bf16.gmra.mrb[0].mxu0 %v4108
    %v4218 = vpop.f32.mrb[0].mxu0
    %v4219 = vadd.f32 0.0, %v4218
    %v4220 = vpop.f32.mrb[0].mxu0
    %v4221 = vpop.f32.mrb[0].mxu0
    %v4222 = vadd.f32 0.0, %v4221
    %v4223 = vpop.f32.mrb[0].mxu0
    %4224 = vmatprep.mubr.bf16.mxu0 %v4113
    %4225 = vmatmul.mubr.bf16.gmra.mrb[0].mxu0 %v4112
    %v4226 = vpop.f32.mrb[0].mxu0
    %v4227 = vadd.f32 0.0, %v4226
    %v4228 = vpop.f32.mrb[0].mxu0
    %v4229 = vpop.f32.mrb[0].mxu0
    %v4230 = vadd.f32 0.0, %v4229
    %v4231 = vpop.f32.mrb[0].mxu0
    %4232 = vmatprep.mubr.bf16.mxu0 %v4117
    %4233 = vmatmul.mubr.bf16.gmra.mrb[0].mxu0 %v4116
    %v4234 = vpop.f32.mrb[0].mxu0
    %v4235 = vadd.f32 0.0, %v4234
    %v4236 = vpop.f32.mrb[0].mxu0
    %v4237 = vpop.f32.mrb[0].mxu0
    %v4238 = vadd.f32 0.0, %v4237
    %v4239 = vpop.f32.mrb[0].mxu0
    %4240 = vmatprep.mubr.bf16.mxu0 %v4121
    %4241 = vmatmul.mubr.bf16.gmra.mrb[0].mxu0 %v4120
    %v4242 = vpop.f32.mrb[0].mxu0
    %v4243 = vadd.f32 0.0, %v4242
    %v4244 = vpop.f32.mrb[0].mxu0
    %v4245 = vpop.f32.mrb[0].mxu0
    %v4246 = vadd.f32 0.0, %v4245
    %v4247 = vpop.f32.mrb[0].mxu0
    %4248 = vmatprep.mubr.bf16.mxu0 %v4125
    %4249 = vmatmul.mubr.bf16.gmra.mrb[0].mxu0 %v4124
    %v4250 = vpop.f32.mrb[0].mxu0
    %v4251 = vadd.f32 0.0, %v4250
    %v4252 = vpop.f32.mrb[0].mxu0
    %v4253 = vpop.f32.mrb[0].mxu0
    %v4254 = vadd.f32 0.0, %v4253
    %v4255 = vpop.f32.mrb[0].mxu0
    %4256 = vdwg.mxu0
    %4257 = vmatprep.subr.bf16.mxu0 0
    %4258 = vmatpush1.bf16.msra.mxu0 %v718
    %4259 = vmatprep.subr.bf16.mxu0 0
    %4260 = vmatpush1.bf16.msra.mxu0 %v719
    %4261 = vmatprep.subr.bf16.mxu0 0
    %4262 = vmatpush1.bf16.msra.mxu0 %v720
    %4263 = vmatprep.subr.bf16.mxu0 0
    %4264 = vmatpush1.bf16.msra.mxu0 %v721
    %4265 = vmatprep.subr.bf16.mxu0 0
    %4266 = vmatpush1.bf16.msra.mxu0 %v722
    %4267 = vmatprep.subr.bf16.mxu0 0
    %4268 = vmatpush1.bf16.msra.mxu0 %v723
    %4269 = vmatprep.subr.bf16.mxu0 0
    %4270 = vmatpush1.bf16.msra.mxu0 %v724
    %4271 = vmatprep.subr.bf16.mxu0 0
    %4272 = vmatpush1.bf16.msra.mxu0 %v725
    %4273 = vmatprep.subr.bf16.mxu0 0
    %4274 = vmatpush1.bf16.msra.mxu0 %v726
    %4275 = vmatprep.subr.bf16.mxu0 0
    %4276 = vmatpush1.bf16.msra.mxu0 %v727
    %4277 = vmatprep.subr.bf16.mxu0 0
    %4278 = vmatpush1.bf16.msra.mxu0 %v728
    %4279 = vmatprep.subr.bf16.mxu0 0
    %4280 = vmatpush1.bf16.msra.mxu0 %v729
    %4281 = vmatprep.subr.bf16.mxu0 0
    %4282 = vmatpush1.bf16.msra.mxu0 %v730
    %4283 = vmatprep.subr.bf16.mxu0 0
    %4284 = vmatpush1.bf16.msra.mxu0 %v731
    %4285 = vmatprep.subr.bf16.mxu0 0
    %4286 = vmatpush1.bf16.msra.mxu0 %v732
    %4287 = vmatprep.subr.bf16.mxu0 0
    %4288 = vmatpush1.bf16.msra.mxu0 %v733
    %4289 = vmatprep.mubr.bf16.mxu0 %v4099
    %4290 = vmatmul.mubr.bf16.gmra.mrb[0].mxu0 %v4098
    %v4291 = vpop.f32.mrb[0].mxu0
    %v4292 = vadd.f32 %v4195, %v4291
    %v4293 = vpop.f32.mrb[0].mxu0
    %v4294 = vpop.f32.mrb[0].mxu0
    %v4295 = vadd.f32 %v4198, %v4294
    %v4296 = vpop.f32.mrb[0].mxu0
    %4297 = vmatprep.mubr.bf16.mxu0 %v4103
    %4298 = vmatmul.mubr.bf16.gmra.mrb[0].mxu0 %v4102
    %v4299 = vpop.f32.mrb[0].mxu0
    %v4300 = vadd.f32 %v4203, %v4299
    %v4301 = vpop.f32.mrb[0].mxu0
    %v4302 = vpop.f32.mrb[0].mxu0
    %v4303 = vadd.f32 %v4206, %v4302
    %v4304 = vpop.f32.mrb[0].mxu0
    %4305 = vmatprep.mubr.bf16.mxu0 %v4107
    %4306 = vmatmul.mubr.bf16.gmra.mrb[0].mxu0 %v4106
    %v4307 = vpop.f32.mrb[0].mxu0
    %v4308 = vadd.f32 %v4211, %v4307
    %v4309 = vpop.f32.mrb[0].mxu0
    %v4310 = vpop.f32.mrb[0].mxu0
    %v4311 = vadd.f32 %v4214, %v4310
    %v4312 = vpop.f32.mrb[0].mxu0
    %4313 = vmatprep.mubr.bf16.mxu0 %v4111
    %4314 = vmatmul.mubr.bf16.gmra.mrb[0].mxu0 %v4110
    %v4315 = vpop.f32.mrb[0].mxu0
    %v4316 = vadd.f32 %v4219, %v4315
    %v4317 = vpop.f32.mrb[0].mxu0
    %v4318 = vpop.f32.mrb[0].mxu0
    %v4319 = vadd.f32 %v4222, %v4318
    %v4320 = vpop.f32.mrb[0].mxu0
    %4321 = vmatprep.mubr.bf16.mxu0 %v4115
    %4322 = vmatmul.mubr.bf16.gmra.mrb[0].mxu0 %v4114
    %v4323 = vpop.f32.mrb[0].mxu0
    %v4324 = vadd.f32 %v4227, %v4323
    %v4325 = vpop.f32.mrb[0].mxu0
    %v4326 = vpop.f32.mrb[0].mxu0
    %v4327 = vadd.f32 %v4230, %v4326
    %v4328 = vpop.f32.mrb[0].mxu0
    %4329 = vmatprep.mubr.bf16.mxu0 %v4119
    %4330 = vmatmul.mubr.bf16.gmra.mrb[0].mxu0 %v4118
    %v4331 = vpop.f32.mrb[0].mxu0
    %v4332 = vadd.f32 %v4235, %v4331
    %v4333 = vpop.f32.mrb[0].mxu0
    %v4334 = vpop.f32.mrb[0].mxu0
    %v4335 = vadd.f32 %v4238, %v4334
    %v4336 = vpop.f32.mrb[0].mxu0
    %4337 = vmatprep.mubr.bf16.mxu0 %v4123
    %4338 = vmatmul.mubr.bf16.gmra.mrb[0].mxu0 %v4122
    %v4339 = vpop.f32.mrb[0].mxu0
    %v4340 = vadd.f32 %v4243, %v4339
    %v4341 = vpop.f32.mrb[0].mxu0
    %v4342 = vpop.f32.mrb[0].mxu0
    %v4343 = vadd.f32 %v4246, %v4342
    %v4344 = vpop.f32.mrb[0].mxu0
    %4345 = vmatprep.mubr.bf16.mxu0 %v4127
    %4346 = vmatmul.mubr.bf16.gmra.mrb[0].mxu0 %v4126
    %v4347 = vpop.f32.mrb[0].mxu0
    %v4348 = vadd.f32 %v4251, %v4347
    %v4349 = vpop.f32.mrb[0].mxu0
    %v4350 = vpop.f32.mrb[0].mxu0
    %v4351 = vadd.f32 %v4254, %v4350
    %v4352 = vpop.f32.mrb[0].mxu0
    %4353 = vdwg.mxu0
    %v4354 = vpack.c.bf16 %v4295, %v4292
    %v4355 = vpack.c.bf16 %v4303, %v4300
    %v4356 = vpack.c.bf16 %v4311, %v4308
    %v4357 = vpack.c.bf16 %v4319, %v4316
    %v4358 = vpack.c.bf16 %v4327, %v4324
    %v4359 = vpack.c.bf16 %v4335, %v4332
    %v4360 = vpack.c.bf16 %v4343, %v4340
    %v4361 = vpack.c.bf16 %v4351, %v4348
    %v4362 = vld [vmem:[#allocation4 + $0x180] sm:$0xf]
    %v4363 = vld [vmem:[#allocation4 + $0x184] sm:$0xf]
    %v4364 = vld [vmem:[#allocation4 + $0x188] sm:$0xf]
    %v4365 = vld [vmem:[#allocation4 + $0x18c] sm:$0xf]
    %v4366 = vld [vmem:[#allocation4 + $0x190] sm:$0xf]
    %v4367 = vld [vmem:[#allocation4 + $0x194] sm:$0xf]
    %v4368 = vld [vmem:[#allocation4 + $0x198] sm:$0xf]
    %v4369 = vld [vmem:[#allocation4 + $0x19c] sm:$0xf]
    %v4370 = vld [vmem:[#allocation4 + $0x1a0] sm:$0xf]
    %v4371 = vld [vmem:[#allocation4 + $0x1a4] sm:$0xf]
    %v4372 = vld [vmem:[#allocation4 + $0x1a8] sm:$0xf]
    %v4373 = vld [vmem:[#allocation4 + $0x1ac] sm:$0xf]
    %v4374 = vld [vmem:[#allocation4 + $0x1b0] sm:$0xf]
    %v4375 = vld [vmem:[#allocation4 + $0x1b4] sm:$0xf]
    %v4376 = vld [vmem:[#allocation4 + $0x1b8] sm:$0xf]
    %v4377 = vld [vmem:[#allocation4 + $0x1bc] sm:$0xf]
    %v4394 = vunpack.c.l.b16 %v4362
    %v4395 = vunpack.c.l.b16 %v4363
    %v4396 = vunpack.c.l.b16 %v4364
    %v4397 = vunpack.c.l.b16 %v4365
    %v4398 = vunpack.c.l.b16 %v4366
    %v4399 = vunpack.c.l.b16 %v4367
    %v4400 = vunpack.c.l.b16 %v4368
    %v4401 = vunpack.c.l.b16 %v4369
    %v4402 = vunpack.c.l.b16 %v4370
    %v4403 = vunpack.c.l.b16 %v4371
    %v4404 = vunpack.c.l.b16 %v4372
    %v4405 = vunpack.c.l.b16 %v4373
    %v4406 = vunpack.c.l.b16 %v4374
    %v4407 = vunpack.c.l.b16 %v4375
    %v4408 = vunpack.c.l.b16 %v4376
    %v4409 = vunpack.c.l.b16 %v4377
    %v4410 = vpack.c.b16 %v4395, %v4394
    %v4411 = vpack.c.b16 %v4397, %v4396
    %v4412 = vpack.c.b16 %v4399, %v4398
    %v4413 = vpack.c.b16 %v4401, %v4400
    %v4414 = vpack.c.b16 %v4403, %v4402
    %v4415 = vpack.c.b16 %v4405, %v4404
    %v4416 = vpack.c.b16 %v4407, %v4406
    %v4417 = vpack.c.b16 %v4409, %v4408
    %4426 = vmatprep.subr.bf16.mxu0 0
    %4427 = vmatpush1.bf16.msra.mxu0 %v4410
    %4428 = vmatprep.subr.bf16.mxu0 0
    %4429 = vmatpush1.bf16.msra.mxu0 %v4411
    %4430 = vmatprep.subr.bf16.mxu0 0
    %4431 = vmatpush1.bf16.msra.mxu0 %v4412
    %4432 = vmatprep.subr.bf16.mxu0 0
    %4433 = vmatpush1.bf16.msra.mxu0 %v4413
    %4434 = vmatprep.subr.bf16.mxu0 0
    %4435 = vmatpush1.bf16.msra.mxu0 %v4414
    %4436 = vmatprep.subr.bf16.mxu0 0
    %4437 = vmatpush1.bf16.msra.mxu0 %v4415
    %4438 = vmatprep.subr.bf16.mxu0 0
    %4439 = vmatpush1.bf16.msra.mxu0 %v4416
    %4440 = vmatprep.subr.bf16.mxu0 0
    %4441 = vmatpush1.bf16.msra.mxu0 %v4417
    %4442 = vmatprep.subr.bf16.mxu0 0
    %4443 = vmatpush1.bf16.msra.mxu0 0
    %4444 = vmatprep.subr.bf16.mxu0 0
    %4445 = vmatpush1.bf16.msra.mxu0 0
    %4446 = vmatprep.subr.bf16.mxu0 0
    %4447 = vmatpush1.bf16.msra.mxu0 0
    %4448 = vmatprep.subr.bf16.mxu0 0
    %4449 = vmatpush1.bf16.msra.mxu0 0
    %4450 = vmatprep.subr.bf16.mxu0 0
    %4451 = vmatpush1.bf16.msra.mxu0 0
    %4452 = vmatprep.subr.bf16.mxu0 0
    %4453 = vmatpush1.bf16.msra.mxu0 0
    %4454 = vmatprep.subr.bf16.mxu0 0
    %4455 = vmatpush1.bf16.msra.mxu0 0
    %4456 = vmatprep.subr.bf16.mxu0 0
    %4457 = vmatpush1.bf16.msra.mxu0 0
    %4458 = vmatprep.mubr.bf16.mxu0 0
    %4459 = vmatmul.mubr.bf16.gmra.mrb[0].mxu0 %v4354
    %v4460 = vpop.f32.mrb[0].mxu0
    %v4461 = vadd.f32 0.0, %v4460
    %v4462 = vpop.f32.mrb[0].mxu0
    %v4463 = vpop.f32.mrb[0].mxu0
    %v4464 = vadd.f32 0.0, %v4463
    %v4465 = vpop.f32.mrb[0].mxu0
    %4466 = vmatprep.mubr.bf16.mxu0 0
    %4467 = vmatmul.mubr.bf16.gmra.mrb[0].mxu0 %v4355
    %v4468 = vpop.f32.mrb[0].mxu0
    %v4469 = vadd.f32 0.0, %v4468
    %v4470 = vpop.f32.mrb[0].mxu0
    %v4471 = vpop.f32.mrb[0].mxu0
    %v4472 = vadd.f32 0.0, %v4471
    %v4473 = vpop.f32.mrb[0].mxu0
    %4474 = vmatprep.mubr.bf16.mxu0 0
    %4475 = vmatmul.mubr.bf16.gmra.mrb[0].mxu0 %v4356
    %v4476 = vpop.f32.mrb[0].mxu0
    %v4477 = vadd.f32 0.0, %v4476
    %v4478 = vpop.f32.mrb[0].mxu0
    %v4479 = vpop.f32.mrb[0].mxu0
    %v4480 = vadd.f32 0.0, %v4479
    %v4481 = vpop.f32.mrb[0].mxu0
    %4482 = vmatprep.mubr.bf16.mxu0 0
    %4483 = vmatmul.mubr.bf16.gmra.mrb[0].mxu0 %v4357
    %v4484 = vpop.f32.mrb[0].mxu0
    %v4485 = vadd.f32 0.0, %v4484
    %v4486 = vpop.f32.mrb[0].mxu0
    %v4487 = vpop.f32.mrb[0].mxu0
    %v4488 = vadd.f32 0.0, %v4487
    %v4489 = vpop.f32.mrb[0].mxu0
    %4490 = vmatprep.mubr.bf16.mxu0 0
    %4491 = vmatmul.mubr.bf16.gmra.mrb[0].mxu0 %v4358
    %v4492 = vpop.f32.mrb[0].mxu0
    %v4493 = vadd.f32 0.0, %v4492
    %v4494 = vpop.f32.mrb[0].mxu0
    %v4495 = vpop.f32.mrb[0].mxu0
    %v4496 = vadd.f32 0.0, %v4495
    %v4497 = vpop.f32.mrb[0].mxu0
    %4498 = vmatprep.mubr.bf16.mxu0 0
    %4499 = vmatmul.mubr.bf16.gmra.mrb[0].mxu0 %v4359
    %v4500 = vpop.f32.mrb[0].mxu0
    %v4501 = vadd.f32 0.0, %v4500
    %v4502 = vpop.f32.mrb[0].mxu0
    %v4503 = vpop.f32.mrb[0].mxu0
    %v4504 = vadd.f32 0.0, %v4503
    %v4505 = vpop.f32.mrb[0].mxu0
    %4506 = vmatprep.mubr.bf16.mxu0 0
    %4507 = vmatmul.mubr.bf16.gmra.mrb[0].mxu0 %v4360
    %v4508 = vpop.f32.mrb[0].mxu0
    %v4509 = vadd.f32 0.0, %v4508
    %v4510 = vpop.f32.mrb[0].mxu0
    %v4511 = vpop.f32.mrb[0].mxu0
    %v4512 = vadd.f32 0.0, %v4511
    %v4513 = vpop.f32.mrb[0].mxu0
    %4514 = vmatprep.mubr.bf16.mxu0 0
    %4515 = vmatmul.mubr.bf16.gmra.mrb[0].mxu0 %v4361
    %v4516 = vpop.f32.mrb[0].mxu0
    %v4517 = vadd.f32 0.0, %v4516
    %v4518 = vpop.f32.mrb[0].mxu0
    %v4519 = vpop.f32.mrb[0].mxu0
    %v4520 = vadd.f32 0.0, %v4519
    %v4521 = vpop.f32.mrb[0].mxu0
    %4522 = vdwg.mxu0
    %v4523 = vadd.f32 %v3952, %v4461
    %v4524 = vadd.f32 %v3953, %v4464
    %v4525 = vadd.f32 %v3954, %v4469
    %v4526 = vadd.f32 %v3955, %v4472
    %v4527 = vadd.f32 %v3956, %v4477
    %v4528 = vadd.f32 %v3957, %v4480
    %v4529 = vadd.f32 %v3958, %v4485
    %v4530 = vadd.f32 %v3959, %v4488
    %v4531 = vadd.f32 %v3960, %v4493
    %v4532 = vadd.f32 %v3961, %v4496
    %v4533 = vadd.f32 %v3962, %v4501
    %v4534 = vadd.f32 %v3963, %v4504
    %v4535 = vadd.f32 %v3964, %v4509
    %v4536 = vadd.f32 %v3965, %v4512
    %v4537 = vadd.f32 %v3966, %v4517
    %v4538 = vadd.f32 %v3967, %v4520
    %v4539 = vld [vmem:[#allocation2 + $0x700] sm:$0xff]
    %v4540 = vld [vmem:[#allocation2 + $0x708] sm:$0xff]
    %v4541 = vld [vmem:[#allocation2 + $0x710] sm:$0xff]
    %v4542 = vld [vmem:[#allocation2 + $0x718] sm:$0xff]
    %v4543 = vld [vmem:[#allocation2 + $0x720] sm:$0xff]
    %v4544 = vld [vmem:[#allocation2 + $0x728] sm:$0xff]
    %v4545 = vld [vmem:[#allocation2 + $0x730] sm:$0xff]
    %v4546 = vld [vmem:[#allocation2 + $0x738] sm:$0xff]
    %v4547 = vld [vmem:[#allocation2 + $0x740] sm:$0xff]
    %v4548 = vld [vmem:[#allocation2 + $0x748] sm:$0xff]
    %v4549 = vld [vmem:[#allocation2 + $0x750] sm:$0xff]
    %v4550 = vld [vmem:[#allocation2 + $0x758] sm:$0xff]
    %v4551 = vld [vmem:[#allocation2 + $0x760] sm:$0xff]
    %v4552 = vld [vmem:[#allocation2 + $0x768] sm:$0xff]
    %v4553 = vld [vmem:[#allocation2 + $0x770] sm:$0xff]
    %v4554 = vld [vmem:[#allocation2 + $0x778] sm:$0xff]
    %v4555 = vld [vmem:[#allocation2 + $0x780] sm:$0xff]
    %v4556 = vld [vmem:[#allocation2 + $0x788] sm:$0xff]
    %v4557 = vld [vmem:[#allocation2 + $0x790] sm:$0xff]
    %v4558 = vld [vmem:[#allocation2 + $0x798] sm:$0xff]
    %v4559 = vld [vmem:[#allocation2 + $0x7a0] sm:$0xff]
    %v4560 = vld [vmem:[#allocation2 + $0x7a8] sm:$0xff]
    %v4561 = vld [vmem:[#allocation2 + $0x7b0] sm:$0xff]
    %v4562 = vld [vmem:[#allocation2 + $0x7b8] sm:$0xff]
    %v4563 = vld [vmem:[#allocation2 + $0x7c0] sm:$0xff]
    %v4564 = vld [vmem:[#allocation2 + $0x7c8] sm:$0xff]
    %v4565 = vld [vmem:[#allocation2 + $0x7d0] sm:$0xff]
    %v4566 = vld [vmem:[#allocation2 + $0x7d8] sm:$0xff]
    %v4567 = vld [vmem:[#allocation2 + $0x7e0] sm:$0xff]
    %v4568 = vld [vmem:[#allocation2 + $0x7e8] sm:$0xff]
    %v4569 = vld [vmem:[#allocation2 + $0x7f0] sm:$0xff]
    %v4570 = vld [vmem:[#allocation2 + $0x7f8] sm:$0xff]
    %v4603 = vunpack.c.l.b16 %v4539
    %v4604 = vunpack.c.h.b16 %v4539
    %v4605 = vunpack.c.l.b16 %v4540
    %v4606 = vunpack.c.h.b16 %v4540
    %v4607 = vunpack.c.l.b16 %v4541
    %v4608 = vunpack.c.h.b16 %v4541
    %v4609 = vunpack.c.l.b16 %v4542
    %v4610 = vunpack.c.h.b16 %v4542
    %v4611 = vunpack.c.l.b16 %v4543
    %v4612 = vunpack.c.h.b16 %v4543
    %v4613 = vunpack.c.l.b16 %v4544
    %v4614 = vunpack.c.h.b16 %v4544
    %v4615 = vunpack.c.l.b16 %v4545
    %v4616 = vunpack.c.h.b16 %v4545
    %v4617 = vunpack.c.l.b16 %v4546
    %v4618 = vunpack.c.h.b16 %v4546
    %v4619 = vunpack.c.l.b16 %v4547
    %v4620 = vunpack.c.h.b16 %v4547
    %v4621 = vunpack.c.l.b16 %v4548
    %v4622 = vunpack.c.h.b16 %v4548
    %v4623 = vunpack.c.l.b16 %v4549
    %v4624 = vunpack.c.h.b16 %v4549
    %v4625 = vunpack.c.l.b16 %v4550
    %v4626 = vunpack.c.h.b16 %v4550
    %v4627 = vunpack.c.l.b16 %v4551
    %v4628 = vunpack.c.h.b16 %v4551
    %v4629 = vunpack.c.l.b16 %v4552
    %v4630 = vunpack.c.h.b16 %v4552
    %v4631 = vunpack.c.l.b16 %v4553
    %v4632 = vunpack.c.h.b16 %v4553
    %v4633 = vunpack.c.l.b16 %v4554
    %v4634 = vunpack.c.h.b16 %v4554
    %v4635 = vunpack.c.l.b16 %v4555
    %v4636 = vunpack.c.h.b16 %v4555
    %v4637 = vunpack.c.l.b16 %v4556
    %v4638 = vunpack.c.h.b16 %v4556
    %v4639 = vunpack.c.l.b16 %v4557
    %v4640 = vunpack.c.h.b16 %v4557
    %v4641 = vunpack.c.l.b16 %v4558
    %v4642 = vunpack.c.h.b16 %v4558
    %v4643 = vunpack.c.l.b16 %v4559
    %v4644 = vunpack.c.h.b16 %v4559
    %v4645 = vunpack.c.l.b16 %v4560
    %v4646 = vunpack.c.h.b16 %v4560
    %v4647 = vunpack.c.l.b16 %v4561
    %v4648 = vunpack.c.h.b16 %v4561
    %v4649 = vunpack.c.l.b16 %v4562
    %v4650 = vunpack.c.h.b16 %v4562
    %v4651 = vunpack.c.l.b16 %v4563
    %v4652 = vunpack.c.h.b16 %v4563
    %v4653 = vunpack.c.l.b16 %v4564
    %v4654 = vunpack.c.h.b16 %v4564
    %v4655 = vunpack.c.l.b16 %v4565
    %v4656 = vunpack.c.h.b16 %v4565
    %v4657 = vunpack.c.l.b16 %v4566
    %v4658 = vunpack.c.h.b16 %v4566
    %v4659 = vunpack.c.l.b16 %v4567
    %v4660 = vunpack.c.h.b16 %v4567
    %v4661 = vunpack.c.l.b16 %v4568
    %v4662 = vunpack.c.h.b16 %v4568
    %v4663 = vunpack.c.l.b16 %v4569
    %v4664 = vunpack.c.h.b16 %v4569
    %v4665 = vunpack.c.l.b16 %v4570
    %v4666 = vunpack.c.h.b16 %v4570
    %v4667 = vpack.c.b16 %v4607, %v4603
    %v4668 = vpack.c.b16 %v4608, %v4604
    %v4669 = vpack.c.b16 %v4609, %v4605
    %v4670 = vpack.c.b16 %v4610, %v4606
    %v4671 = vpack.c.b16 %v4615, %v4611
    %v4672 = vpack.c.b16 %v4616, %v4612
    %v4673 = vpack.c.b16 %v4617, %v4613
    %v4674 = vpack.c.b16 %v4618, %v4614
    %v4675 = vpack.c.b16 %v4623, %v4619
    %v4676 = vpack.c.b16 %v4624, %v4620
    %v4677 = vpack.c.b16 %v4625, %v4621
    %v4678 = vpack.c.b16 %v4626, %v4622
    %v4679 = vpack.c.b16 %v4631, %v4627
    %v4680 = vpack.c.b16 %v4632, %v4628
    %v4681 = vpack.c.b16 %v4633, %v4629
    %v4682 = vpack.c.b16 %v4634, %v4630
    %v4683 = vpack.c.b16 %v4639, %v4635
    %v4684 = vpack.c.b16 %v4640, %v4636
    %v4685 = vpack.c.b16 %v4641, %v4637
    %v4686 = vpack.c.b16 %v4642, %v4638
    %v4687 = vpack.c.b16 %v4647, %v4643
    %v4688 = vpack.c.b16 %v4648, %v4644
    %v4689 = vpack.c.b16 %v4649, %v4645
    %v4690 = vpack.c.b16 %v4650, %v4646
    %v4691 = vpack.c.b16 %v4655, %v4651
    %v4692 = vpack.c.b16 %v4656, %v4652
    %v4693 = vpack.c.b16 %v4657, %v4653
    %v4694 = vpack.c.b16 %v4658, %v4654
    %v4695 = vpack.c.b16 %v4663, %v4659
    %v4696 = vpack.c.b16 %v4664, %v4660
    %v4697 = vpack.c.b16 %v4665, %v4661
    %v4698 = vpack.c.b16 %v4666, %v4662
    %4731 = vmatprep.subr.bf16.mxu0 0
    %4732 = vmatpush1.bf16.msra.mxu0 %v702
    %4733 = vmatprep.subr.bf16.mxu0 0
    %4734 = vmatpush1.bf16.msra.mxu0 %v703
    %4735 = vmatprep.subr.bf16.mxu0 0
    %4736 = vmatpush1.bf16.msra.mxu0 %v704
    %4737 = vmatprep.subr.bf16.mxu0 0
    %4738 = vmatpush1.bf16.msra.mxu0 %v705
    %4739 = vmatprep.subr.bf16.mxu0 0
    %4740 = vmatpush1.bf16.msra.mxu0 %v706
    %4741 = vmatprep.subr.bf16.mxu0 0
    %4742 = vmatpush1.bf16.msra.mxu0 %v707
    %4743 = vmatprep.subr.bf16.mxu0 0
    %4744 = vmatpush1.bf16.msra.mxu0 %v708
    %4745 = vmatprep.subr.bf16.mxu0 0
    %4746 = vmatpush1.bf16.msra.mxu0 %v709
    %4747 = vmatprep.subr.bf16.mxu0 0
    %4748 = vmatpush1.bf16.msra.mxu0 %v710
    %4749 = vmatprep.subr.bf16.mxu0 0
    %4750 = vmatpush1.bf16.msra.mxu0 %v711
    %4751 = vmatprep.subr.bf16.mxu0 0
    %4752 = vmatpush1.bf16.msra.mxu0 %v712
    %4753 = vmatprep.subr.bf16.mxu0 0
    %4754 = vmatpush1.bf16.msra.mxu0 %v713
    %4755 = vmatprep.subr.bf16.mxu0 0
    %4756 = vmatpush1.bf16.msra.mxu0 %v714
    %4757 = vmatprep.subr.bf16.mxu0 0
    %4758 = vmatpush1.bf16.msra.mxu0 %v715
    %4759 = vmatprep.subr.bf16.mxu0 0
    %4760 = vmatpush1.bf16.msra.mxu0 %v716
    %4761 = vmatprep.subr.bf16.mxu0 0
    %4762 = vmatpush1.bf16.msra.mxu0 %v717
    %4763 = vmatprep.mubr.bf16.mxu0 %v4668
    %4764 = vmatmul.mubr.bf16.gmra.mrb[0].mxu0 %v4667
    %v4765 = vpop.f32.mrb[0].mxu0
    %v4766 = vadd.f32 0.0, %v4765
    %v4767 = vpop.f32.mrb[0].mxu0
    %v4768 = vpop.f32.mrb[0].mxu0
    %v4769 = vadd.f32 0.0, %v4768
    %v4770 = vpop.f32.mrb[0].mxu0
    %4771 = vmatprep.mubr.bf16.mxu0 %v4672
    %4772 = vmatmul.mubr.bf16.gmra.mrb[0].mxu0 %v4671
    %v4773 = vpop.f32.mrb[0].mxu0
    %v4774 = vadd.f32 0.0, %v4773
    %v4775 = vpop.f32.mrb[0].mxu0
    %v4776 = vpop.f32.mrb[0].mxu0
    %v4777 = vadd.f32 0.0, %v4776
    %v4778 = vpop.f32.mrb[0].mxu0
    %4779 = vmatprep.mubr.bf16.mxu0 %v4676
    %4780 = vmatmul.mubr.bf16.gmra.mrb[0].mxu0 %v4675
    %v4781 = vpop.f32.mrb[0].mxu0
    %v4782 = vadd.f32 0.0, %v4781
    %v4783 = vpop.f32.mrb[0].mxu0
    %v4784 = vpop.f32.mrb[0].mxu0
    %v4785 = vadd.f32 0.0, %v4784
    %v4786 = vpop.f32.mrb[0].mxu0
    %4787 = vmatprep.mubr.bf16.mxu0 %v4680
    %4788 = vmatmul.mubr.bf16.gmra.mrb[0].mxu0 %v4679
    %v4789 = vpop.f32.mrb[0].mxu0
    %v4790 = vadd.f32 0.0, %v4789
    %v4791 = vpop.f32.mrb[0].mxu0
    %v4792 = vpop.f32.mrb[0].mxu0
    %v4793 = vadd.f32 0.0, %v4792
    %v4794 = vpop.f32.mrb[0].mxu0
    %4795 = vmatprep.mubr.bf16.mxu0 %v4684
    %4796 = vmatmul.mubr.bf16.gmra.mrb[0].mxu0 %v4683
    %v4797 = vpop.f32.mrb[0].mxu0
    %v4798 = vadd.f32 0.0, %v4797
    %v4799 = vpop.f32.mrb[0].mxu0
    %v4800 = vpop.f32.mrb[0].mxu0
    %v4801 = vadd.f32 0.0, %v4800
    %v4802 = vpop.f32.mrb[0].mxu0
    %4803 = vmatprep.mubr.bf16.mxu0 %v4688
    %4804 = vmatmul.mubr.bf16.gmra.mrb[0].mxu0 %v4687
    %v4805 = vpop.f32.mrb[0].mxu0
    %v4806 = vadd.f32 0.0, %v4805
    %v4807 = vpop.f32.mrb[0].mxu0
    %v4808 = vpop.f32.mrb[0].mxu0
    %v4809 = vadd.f32 0.0, %v4808
    %v4810 = vpop.f32.mrb[0].mxu0
    %4811 = vmatprep.mubr.bf16.mxu0 %v4692
    %4812 = vmatmul.mubr.bf16.gmra.mrb[0].mxu0 %v4691
    %v4813 = vpop.f32.mrb[0].mxu0
    %v4814 = vadd.f32 0.0, %v4813
    %v4815 = vpop.f32.mrb[0].mxu0
    %v4816 = vpop.f32.mrb[0].mxu0
    %v4817 = vadd.f32 0.0, %v4816
    %v4818 = vpop.f32.mrb[0].mxu0
    %4819 = vmatprep.mubr.bf16.mxu0 %v4696
    %4820 = vmatmul.mubr.bf16.gmra.mrb[0].mxu0 %v4695
    %v4821 = vpop.f32.mrb[0].mxu0
    %v4822 = vadd.f32 0.0, %v4821
    %v4823 = vpop.f32.mrb[0].mxu0
    %v4824 = vpop.f32.mrb[0].mxu0
    %v4825 = vadd.f32 0.0, %v4824
    %v4826 = vpop.f32.mrb[0].mxu0
    %4827 = vdwg.mxu0
    %4828 = vmatprep.subr.bf16.mxu0 0
    %4829 = vmatpush1.bf16.msra.mxu0 %v718
    %4830 = vmatprep.subr.bf16.mxu0 0
    %4831 = vmatpush1.bf16.msra.mxu0 %v719
    %4832 = vmatprep.subr.bf16.mxu0 0
    %4833 = vmatpush1.bf16.msra.mxu0 %v720
    %4834 = vmatprep.subr.bf16.mxu0 0
    %4835 = vmatpush1.bf16.msra.mxu0 %v721
    %4836 = vmatprep.subr.bf16.mxu0 0
    %4837 = vmatpush1.bf16.msra.mxu0 %v722
    %4838 = vmatprep.subr.bf16.mxu0 0
    %4839 = vmatpush1.bf16.msra.mxu0 %v723
    %4840 = vmatprep.subr.bf16.mxu0 0
    %4841 = vmatpush1.bf16.msra.mxu0 %v724
    %4842 = vmatprep.subr.bf16.mxu0 0
    %4843 = vmatpush1.bf16.msra.mxu0 %v725
    %4844 = vmatprep.subr.bf16.mxu0 0
    %4845 = vmatpush1.bf16.msra.mxu0 %v726
    %4846 = vmatprep.subr.bf16.mxu0 0
    %4847 = vmatpush1.bf16.msra.mxu0 %v727
    %4848 = vmatprep.subr.bf16.mxu0 0
    %4849 = vmatpush1.bf16.msra.mxu0 %v728
    %4850 = vmatprep.subr.bf16.mxu0 0
    %4851 = vmatpush1.bf16.msra.mxu0 %v729
    %4852 = vmatprep.subr.bf16.mxu0 0
    %4853 = vmatpush1.bf16.msra.mxu0 %v730
    %4854 = vmatprep.subr.bf16.mxu0 0
    %4855 = vmatpush1.bf16.msra.mxu0 %v731
    %4856 = vmatprep.subr.bf16.mxu0 0
    %4857 = vmatpush1.bf16.msra.mxu0 %v732
    %4858 = vmatprep.subr.bf16.mxu0 0
    %4859 = vmatpush1.bf16.msra.mxu0 %v733
    %4860 = vmatprep.mubr.bf16.mxu0 %v4670
    %4861 = vmatmul.mubr.bf16.gmra.mrb[0].mxu0 %v4669
    %v4862 = vpop.f32.mrb[0].mxu0
    %v4863 = vadd.f32 %v4766, %v4862
    %v4864 = vpop.f32.mrb[0].mxu0
    %v4865 = vpop.f32.mrb[0].mxu0
    %v4866 = vadd.f32 %v4769, %v4865
    %v4867 = vpop.f32.mrb[0].mxu0
    %4868 = vmatprep.mubr.bf16.mxu0 %v4674
    %4869 = vmatmul.mubr.bf16.gmra.mrb[0].mxu0 %v4673
    %v4870 = vpop.f32.mrb[0].mxu0
    %v4871 = vadd.f32 %v4774, %v4870
    %v4872 = vpop.f32.mrb[0].mxu0
    %v4873 = vpop.f32.mrb[0].mxu0
    %v4874 = vadd.f32 %v4777, %v4873
    %v4875 = vpop.f32.mrb[0].mxu0
    %4876 = vmatprep.mubr.bf16.mxu0 %v4678
    %4877 = vmatmul.mubr.bf16.gmra.mrb[0].mxu0 %v4677
    %v4878 = vpop.f32.mrb[0].mxu0
    %v4879 = vadd.f32 %v4782, %v4878
    %v4880 = vpop.f32.mrb[0].mxu0
    %v4881 = vpop.f32.mrb[0].mxu0
    %v4882 = vadd.f32 %v4785, %v4881
    %v4883 = vpop.f32.mrb[0].mxu0
    %4884 = vmatprep.mubr.bf16.mxu0 %v4682
    %4885 = vmatmul.mubr.bf16.gmra.mrb[0].mxu0 %v4681
    %v4886 = vpop.f32.mrb[0].mxu0
    %v4887 = vadd.f32 %v4790, %v4886
    %v4888 = vpop.f32.mrb[0].mxu0
    %v4889 = vpop.f32.mrb[0].mxu0
    %v4890 = vadd.f32 %v4793, %v4889
    %v4891 = vpop.f32.mrb[0].mxu0
    %4892 = vmatprep.mubr.bf16.mxu0 %v4686
    %4893 = vmatmul.mubr.bf16.gmra.mrb[0].mxu0 %v4685
    %v4894 = vpop.f32.mrb[0].mxu0
    %v4895 = vadd.f32 %v4798, %v4894
    %v4896 = vpop.f32.mrb[0].mxu0
    %v4897 = vpop.f32.mrb[0].mxu0
    %v4898 = vadd.f32 %v4801, %v4897
    %v4899 = vpop.f32.mrb[0].mxu0
    %4900 = vmatprep.mubr.bf16.mxu0 %v4690
    %4901 = vmatmul.mubr.bf16.gmra.mrb[0].mxu0 %v4689
    %v4902 = vpop.f32.mrb[0].mxu0
    %v4903 = vadd.f32 %v4806, %v4902
    %v4904 = vpop.f32.mrb[0].mxu0
    %v4905 = vpop.f32.mrb[0].mxu0
    %v4906 = vadd.f32 %v4809, %v4905
    %v4907 = vpop.f32.mrb[0].mxu0
    %4908 = vmatprep.mubr.bf16.mxu0 %v4694
    %4909 = vmatmul.mubr.bf16.gmra.mrb[0].mxu0 %v4693
    %v4910 = vpop.f32.mrb[0].mxu0
    %v4911 = vadd.f32 %v4814, %v4910
    %v4912 = vpop.f32.mrb[0].mxu0
    %v4913 = vpop.f32.mrb[0].mxu0
    %v4914 = vadd.f32 %v4817, %v4913
    %v4915 = vpop.f32.mrb[0].mxu0
    %4916 = vmatprep.mubr.bf16.mxu0 %v4698
    %4917 = vmatmul.mubr.bf16.gmra.mrb[0].mxu0 %v4697
    %v4918 = vpop.f32.mrb[0].mxu0
    %v4919 = vadd.f32 %v4822, %v4918
    %v4920 = vpop.f32.mrb[0].mxu0
    %v4921 = vpop.f32.mrb[0].mxu0
    %v4922 = vadd.f32 %v4825, %v4921
    %v4923 = vpop.f32.mrb[0].mxu0
    %4924 = vdwg.mxu0
    %v4925 = vpack.c.bf16 %v4866, %v4863
    %v4926 = vpack.c.bf16 %v4874, %v4871
    %v4927 = vpack.c.bf16 %v4882, %v4879
    %v4928 = vpack.c.bf16 %v4890, %v4887
    %v4929 = vpack.c.bf16 %v4898, %v4895
    %v4930 = vpack.c.bf16 %v4906, %v4903
    %v4931 = vpack.c.bf16 %v4914, %v4911
    %v4932 = vpack.c.bf16 %v4922, %v4919
    %v4933 = vld [vmem:[#allocation4 + $0x1c0] sm:$0xf]
    %v4934 = vld [vmem:[#allocation4 + $0x1c4] sm:$0xf]
    %v4935 = vld [vmem:[#allocation4 + $0x1c8] sm:$0xf]
    %v4936 = vld [vmem:[#allocation4 + $0x1cc] sm:$0xf]
    %v4937 = vld [vmem:[#allocation4 + $0x1d0] sm:$0xf]
    %v4938 = vld [vmem:[#allocation4 + $0x1d4] sm:$0xf]
    %v4939 = vld [vmem:[#allocation4 + $0x1d8] sm:$0xf]
    %v4940 = vld [vmem:[#allocation4 + $0x1dc] sm:$0xf]
    %v4941 = vld [vmem:[#allocation4 + $0x1e0] sm:$0xf]
    %v4942 = vld [vmem:[#allocation4 + $0x1e4] sm:$0xf]
    %v4943 = vld [vmem:[#allocation4 + $0x1e8] sm:$0xf]
    %v4944 = vld [vmem:[#allocation4 + $0x1ec] sm:$0xf]
    %v4945 = vld [vmem:[#allocation4 + $0x1f0] sm:$0xf]
    %v4946 = vld [vmem:[#allocation4 + $0x1f4] sm:$0xf]
    %v4947 = vld [vmem:[#allocation4 + $0x1f8] sm:$0xf]
    %v4948 = vld [vmem:[#allocation4 + $0x1fc] sm:$0xf]
    %v4965 = vunpack.c.l.b16 %v4933
    %v4966 = vunpack.c.l.b16 %v4934
    %v4967 = vunpack.c.l.b16 %v4935
    %v4968 = vunpack.c.l.b16 %v4936
    %v4969 = vunpack.c.l.b16 %v4937
    %v4970 = vunpack.c.l.b16 %v4938
    %v4971 = vunpack.c.l.b16 %v4939
    %v4972 = vunpack.c.l.b16 %v4940
    %v4973 = vunpack.c.l.b16 %v4941
    %v4974 = vunpack.c.l.b16 %v4942
    %v4975 = vunpack.c.l.b16 %v4943
    %v4976 = vunpack.c.l.b16 %v4944
    %v4977 = vunpack.c.l.b16 %v4945
    %v4978 = vunpack.c.l.b16 %v4946
    %v4979 = vunpack.c.l.b16 %v4947
    %v4980 = vunpack.c.l.b16 %v4948
    %v4981 = vpack.c.b16 %v4966, %v4965
    %v4982 = vpack.c.b16 %v4968, %v4967
    %v4983 = vpack.c.b16 %v4970, %v4969
    %v4984 = vpack.c.b16 %v4972, %v4971
    %v4985 = vpack.c.b16 %v4974, %v4973
    %v4986 = vpack.c.b16 %v4976, %v4975
    %v4987 = vpack.c.b16 %v4978, %v4977
    %v4988 = vpack.c.b16 %v4980, %v4979
    %4997 = vmatprep.subr.bf16.mxu0 0
    %4998 = vmatpush1.bf16.msra.mxu0 %v4981
    %4999 = vmatprep.subr.bf16.mxu0 0
    %5000 = vmatpush1.bf16.msra.mxu0 %v4982
    %5001 = vmatprep.subr.bf16.mxu0 0
    %5002 = vmatpush1.bf16.msra.mxu0 %v4983
    %5003 = vmatprep.subr.bf16.mxu0 0
    %5004 = vmatpush1.bf16.msra.mxu0 %v4984
    %5005 = vmatprep.subr.bf16.mxu0 0
    %5006 = vmatpush1.bf16.msra.mxu0 %v4985
    %5007 = vmatprep.subr.bf16.mxu0 0
    %5008 = vmatpush1.bf16.msra.mxu0 %v4986
    %5009 = vmatprep.subr.bf16.mxu0 0
    %5010 = vmatpush1.bf16.msra.mxu0 %v4987
    %5011 = vmatprep.subr.bf16.mxu0 0
    %5012 = vmatpush1.bf16.msra.mxu0 %v4988
    %5013 = vmatprep.subr.bf16.mxu0 0
    %5014 = vmatpush1.bf16.msra.mxu0 0
    %5015 = vmatprep.subr.bf16.mxu0 0
    %5016 = vmatpush1.bf16.msra.mxu0 0
    %5017 = vmatprep.subr.bf16.mxu0 0
    %5018 = vmatpush1.bf16.msra.mxu0 0
    %5019 = vmatprep.subr.bf16.mxu0 0
    %5020 = vmatpush1.bf16.msra.mxu0 0
    %5021 = vmatprep.subr.bf16.mxu0 0
    %5022 = vmatpush1.bf16.msra.mxu0 0
    %5023 = vmatprep.subr.bf16.mxu0 0
    %5024 = vmatpush1.bf16.msra.mxu0 0
    %5025 = vmatprep.subr.bf16.mxu0 0
    %5026 = vmatpush1.bf16.msra.mxu0 0
    %5027 = vmatprep.subr.bf16.mxu0 0
    %5028 = vmatpush1.bf16.msra.mxu0 0
    %5029 = vmatprep.mubr.bf16.mxu0 0
    %5030 = vmatmul.mubr.bf16.gmra.mrb[0].mxu0 %v4925
    %v5031 = vpop.f32.mrb[0].mxu0
    %v5032 = vadd.f32 0.0, %v5031
    %v5033 = vpop.f32.mrb[0].mxu0
    %v5034 = vpop.f32.mrb[0].mxu0
    %v5035 = vadd.f32 0.0, %v5034
    %v5036 = vpop.f32.mrb[0].mxu0
    %5037 = vmatprep.mubr.bf16.mxu0 0
    %5038 = vmatmul.mubr.bf16.gmra.mrb[0].mxu0 %v4926
    %v5039 = vpop.f32.mrb[0].mxu0
    %v5040 = vadd.f32 0.0, %v5039
    %v5041 = vpop.f32.mrb[0].mxu0
    %v5042 = vpop.f32.mrb[0].mxu0
    %v5043 = vadd.f32 0.0, %v5042
    %v5044 = vpop.f32.mrb[0].mxu0
    %5045 = vmatprep.mubr.bf16.mxu0 0
    %5046 = vmatmul.mubr.bf16.gmra.mrb[0].mxu0 %v4927
    %v5047 = vpop.f32.mrb[0].mxu0
    %v5048 = vadd.f32 0.0, %v5047
    %v5049 = vpop.f32.mrb[0].mxu0
    %v5050 = vpop.f32.mrb[0].mxu0
    %v5051 = vadd.f32 0.0, %v5050
    %v5052 = vpop.f32.mrb[0].mxu0
    %5053 = vmatprep.mubr.bf16.mxu0 0
    %5054 = vmatmul.mubr.bf16.gmra.mrb[0].mxu0 %v4928
    %v5055 = vpop.f32.mrb[0].mxu0
    %v5056 = vadd.f32 0.0, %v5055
    %v5057 = vpop.f32.mrb[0].mxu0
    %v5058 = vpop.f32.mrb[0].mxu0
    %v5059 = vadd.f32 0.0, %v5058
    %v5060 = vpop.f32.mrb[0].mxu0
    %5061 = vmatprep.mubr.bf16.mxu0 0
    %5062 = vmatmul.mubr.bf16.gmra.mrb[0].mxu0 %v4929
    %v5063 = vpop.f32.mrb[0].mxu0
    %v5064 = vadd.f32 0.0, %v5063
    %v5065 = vpop.f32.mrb[0].mxu0
    %v5066 = vpop.f32.mrb[0].mxu0
    %v5067 = vadd.f32 0.0, %v5066
    %v5068 = vpop.f32.mrb[0].mxu0
    %5069 = vmatprep.mubr.bf16.mxu0 0
    %5070 = vmatmul.mubr.bf16.gmra.mrb[0].mxu0 %v4930
    %v5071 = vpop.f32.mrb[0].mxu0
    %v5072 = vadd.f32 0.0, %v5071
    %v5073 = vpop.f32.mrb[0].mxu0
    %v5074 = vpop.f32.mrb[0].mxu0
    %v5075 = vadd.f32 0.0, %v5074
    %v5076 = vpop.f32.mrb[0].mxu0
    %5077 = vmatprep.mubr.bf16.mxu0 0
    %5078 = vmatmul.mubr.bf16.gmra.mrb[0].mxu0 %v4931
    %v5079 = vpop.f32.mrb[0].mxu0
    %v5080 = vadd.f32 0.0, %v5079
    %v5081 = vpop.f32.mrb[0].mxu0
    %v5082 = vpop.f32.mrb[0].mxu0
    %v5083 = vadd.f32 0.0, %v5082
    %v5084 = vpop.f32.mrb[0].mxu0
    %5085 = vmatprep.mubr.bf16.mxu0 0
    %5086 = vmatmul.mubr.bf16.gmra.mrb[0].mxu0 %v4932
    %v5087 = vpop.f32.mrb[0].mxu0
    %v5088 = vadd.f32 0.0, %v5087
    %v5089 = vpop.f32.mrb[0].mxu0
    %v5090 = vpop.f32.mrb[0].mxu0
    %v5091 = vadd.f32 0.0, %v5090
    %v5092 = vpop.f32.mrb[0].mxu0
    %5093 = vdwg.mxu0
    %v5094 = vadd.f32 %v4523, %v5032
    %v5095 = vadd.f32 %v4524, %v5035
    %v5096 = vadd.f32 %v4525, %v5040
    %v5097 = vadd.f32 %v4526, %v5043
    %v5098 = vadd.f32 %v4527, %v5048
    %v5099 = vadd.f32 %v4528, %v5051
    %v5100 = vadd.f32 %v4529, %v5056
    %v5101 = vadd.f32 %v4530, %v5059
    %v5102 = vadd.f32 %v4531, %v5064
    %v5103 = vadd.f32 %v4532, %v5067
    %v5104 = vadd.f32 %v4533, %v5072
    %v5105 = vadd.f32 %v4534, %v5075
    %v5106 = vadd.f32 %v4535, %v5080
    %v5107 = vadd.f32 %v4536, %v5083
    %v5108 = vadd.f32 %v4537, %v5088
    %v5109 = vadd.f32 %v4538, %v5091
    %v5110 = vld [vmem:[#allocation2 + $0x800] sm:$0xff]
    %v5111 = vld [vmem:[#allocation2 + $0x808] sm:$0xff]
    %v5112 = vld [vmem:[#allocation2 + $0x810] sm:$0xff]
    %v5113 = vld [vmem:[#allocation2 + $0x818] sm:$0xff]
    %v5114 = vld [vmem:[#allocation2 + $0x820] sm:$0xff]
    %v5115 = vld [vmem:[#allocation2 + $0x828] sm:$0xff]
    %v5116 = vld [vmem:[#allocation2 + $0x830] sm:$0xff]
    %v5117 = vld [vmem:[#allocation2 + $0x838] sm:$0xff]
    %v5118 = vld [vmem:[#allocation2 + $0x840] sm:$0xff]
    %v5119 = vld [vmem:[#allocation2 + $0x848] sm:$0xff]
    %v5120 = vld [vmem:[#allocation2 + $0x850] sm:$0xff]
    %v5121 = vld [vmem:[#allocation2 + $0x858] sm:$0xff]
    %v5122 = vld [vmem:[#allocation2 + $0x860] sm:$0xff]
    %v5123 = vld [vmem:[#allocation2 + $0x868] sm:$0xff]
    %v5124 = vld [vmem:[#allocation2 + $0x870] sm:$0xff]
    %v5125 = vld [vmem:[#allocation2 + $0x878] sm:$0xff]
    %v5126 = vld [vmem:[#allocation2 + $0x880] sm:$0xff]
    %v5127 = vld [vmem:[#allocation2 + $0x888] sm:$0xff]
    %v5128 = vld [vmem:[#allocation2 + $0x890] sm:$0xff]
    %v5129 = vld [vmem:[#allocation2 + $0x898] sm:$0xff]
    %v5130 = vld [vmem:[#allocation2 + $0x8a0] sm:$0xff]
    %v5131 = vld [vmem:[#allocation2 + $0x8a8] sm:$0xff]
    %v5132 = vld [vmem:[#allocation2 + $0x8b0] sm:$0xff]
    %v5133 = vld [vmem:[#allocation2 + $0x8b8] sm:$0xff]
    %v5134 = vld [vmem:[#allocation2 + $0x8c0] sm:$0xff]
    %v5135 = vld [vmem:[#allocation2 + $0x8c8] sm:$0xff]
    %v5136 = vld [vmem:[#allocation2 + $0x8d0] sm:$0xff]
    %v5137 = vld [vmem:[#allocation2 + $0x8d8] sm:$0xff]
    %v5138 = vld [vmem:[#allocation2 + $0x8e0] sm:$0xff]
    %v5139 = vld [vmem:[#allocation2 + $0x8e8] sm:$0xff]
    %v5140 = vld [vmem:[#allocation2 + $0x8f0] sm:$0xff]
    %v5141 = vld [vmem:[#allocation2 + $0x8f8] sm:$0xff]
    %v5174 = vunpack.c.l.b16 %v5110
    %v5175 = vunpack.c.h.b16 %v5110
    %v5176 = vunpack.c.l.b16 %v5111
    %v5177 = vunpack.c.h.b16 %v5111
    %v5178 = vunpack.c.l.b16 %v5112
    %v5179 = vunpack.c.h.b16 %v5112
    %v5180 = vunpack.c.l.b16 %v5113
    %v5181 = vunpack.c.h.b16 %v5113
    %v5182 = vunpack.c.l.b16 %v5114
    %v5183 = vunpack.c.h.b16 %v5114
    %v5184 = vunpack.c.l.b16 %v5115
    %v5185 = vunpack.c.h.b16 %v5115
    %v5186 = vunpack.c.l.b16 %v5116
    %v5187 = vunpack.c.h.b16 %v5116
    %v5188 = vunpack.c.l.b16 %v5117
    %v5189 = vunpack.c.h.b16 %v5117
    %v5190 = vunpack.c.l.b16 %v5118
    %v5191 = vunpack.c.h.b16 %v5118
    %v5192 = vunpack.c.l.b16 %v5119
    %v5193 = vunpack.c.h.b16 %v5119
    %v5194 = vunpack.c.l.b16 %v5120
    %v5195 = vunpack.c.h.b16 %v5120
    %v5196 = vunpack.c.l.b16 %v5121
    %v5197 = vunpack.c.h.b16 %v5121
    %v5198 = vunpack.c.l.b16 %v5122
    %v5199 = vunpack.c.h.b16 %v5122
    %v5200 = vunpack.c.l.b16 %v5123
    %v5201 = vunpack.c.h.b16 %v5123
    %v5202 = vunpack.c.l.b16 %v5124
    %v5203 = vunpack.c.h.b16 %v5124
    %v5204 = vunpack.c.l.b16 %v5125
    %v5205 = vunpack.c.h.b16 %v5125
    %v5206 = vunpack.c.l.b16 %v5126
    %v5207 = vunpack.c.h.b16 %v5126
    %v5208 = vunpack.c.l.b16 %v5127
    %v5209 = vunpack.c.h.b16 %v5127
    %v5210 = vunpack.c.l.b16 %v5128
    %v5211 = vunpack.c.h.b16 %v5128
    %v5212 = vunpack.c.l.b16 %v5129
    %v5213 = vunpack.c.h.b16 %v5129
    %v5214 = vunpack.c.l.b16 %v5130
    %v5215 = vunpack.c.h.b16 %v5130
    %v5216 = vunpack.c.l.b16 %v5131
    %v5217 = vunpack.c.h.b16 %v5131
    %v5218 = vunpack.c.l.b16 %v5132
    %v5219 = vunpack.c.h.b16 %v5132
    %v5220 = vunpack.c.l.b16 %v5133
    %v5221 = vunpack.c.h.b16 %v5133
    %v5222 = vunpack.c.l.b16 %v5134
    %v5223 = vunpack.c.h.b16 %v5134
    %v5224 = vunpack.c.l.b16 %v5135
    %v5225 = vunpack.c.h.b16 %v5135
    %v5226 = vunpack.c.l.b16 %v5136
    %v5227 = vunpack.c.h.b16 %v5136
    %v5228 = vunpack.c.l.b16 %v5137
    %v5229 = vunpack.c.h.b16 %v5137
    %v5230 = vunpack.c.l.b16 %v5138
    %v5231 = vunpack.c.h.b16 %v5138
    %v5232 = vunpack.c.l.b16 %v5139
    %v5233 = vunpack.c.h.b16 %v5139
    %v5234 = vunpack.c.l.b16 %v5140
    %v5235 = vunpack.c.h.b16 %v5140
    %v5236 = vunpack.c.l.b16 %v5141
    %v5237 = vunpack.c.h.b16 %v5141
    %v5238 = vpack.c.b16 %v5178, %v5174
    %v5239 = vpack.c.b16 %v5179, %v5175
    %v5240 = vpack.c.b16 %v5180, %v5176
    %v5241 = vpack.c.b16 %v5181, %v5177
    %v5242 = vpack.c.b16 %v5186, %v5182
    %v5243 = vpack.c.b16 %v5187, %v5183
    %v5244 = vpack.c.b16 %v5188, %v5184
    %v5245 = vpack.c.b16 %v5189, %v5185
    %v5246 = vpack.c.b16 %v5194, %v5190
    %v5247 = vpack.c.b16 %v5195, %v5191
    %v5248 = vpack.c.b16 %v5196, %v5192
    %v5249 = vpack.c.b16 %v5197, %v5193
    %v5250 = vpack.c.b16 %v5202, %v5198
    %v5251 = vpack.c.b16 %v5203, %v5199
    %v5252 = vpack.c.b16 %v5204, %v5200
    %v5253 = vpack.c.b16 %v5205, %v5201
    %v5254 = vpack.c.b16 %v5210, %v5206
    %v5255 = vpack.c.b16 %v5211, %v5207
    %v5256 = vpack.c.b16 %v5212, %v5208
    %v5257 = vpack.c.b16 %v5213, %v5209
    %v5258 = vpack.c.b16 %v5218, %v5214
    %v5259 = vpack.c.b16 %v5219, %v5215
    %v5260 = vpack.c.b16 %v5220, %v5216
    %v5261 = vpack.c.b16 %v5221, %v5217
    %v5262 = vpack.c.b16 %v5226, %v5222
    %v5263 = vpack.c.b16 %v5227, %v5223
    %v5264 = vpack.c.b16 %v5228, %v5224
    %v5265 = vpack.c.b16 %v5229, %v5225
    %v5266 = vpack.c.b16 %v5234, %v5230
    %v5267 = vpack.c.b16 %v5235, %v5231
    %v5268 = vpack.c.b16 %v5236, %v5232
    %v5269 = vpack.c.b16 %v5237, %v5233
    %5302 = vmatprep.subr.bf16.mxu0 0
    %5303 = vmatpush1.bf16.msra.mxu0 %v702
    %5304 = vmatprep.subr.bf16.mxu0 0
    %5305 = vmatpush1.bf16.msra.mxu0 %v703
    %5306 = vmatprep.subr.bf16.mxu0 0
    %5307 = vmatpush1.bf16.msra.mxu0 %v704
    %5308 = vmatprep.subr.bf16.mxu0 0
    %5309 = vmatpush1.bf16.msra.mxu0 %v705
    %5310 = vmatprep.subr.bf16.mxu0 0
    %5311 = vmatpush1.bf16.msra.mxu0 %v706
    %5312 = vmatprep.subr.bf16.mxu0 0
    %5313 = vmatpush1.bf16.msra.mxu0 %v707
    %5314 = vmatprep.subr.bf16.mxu0 0
    %5315 = vmatpush1.bf16.msra.mxu0 %v708
    %5316 = vmatprep.subr.bf16.mxu0 0
    %5317 = vmatpush1.bf16.msra.mxu0 %v709
    %5318 = vmatprep.subr.bf16.mxu0 0
    %5319 = vmatpush1.bf16.msra.mxu0 %v710
    %5320 = vmatprep.subr.bf16.mxu0 0
    %5321 = vmatpush1.bf16.msra.mxu0 %v711
    %5322 = vmatprep.subr.bf16.mxu0 0
    %5323 = vmatpush1.bf16.msra.mxu0 %v712
    %5324 = vmatprep.subr.bf16.mxu0 0
    %5325 = vmatpush1.bf16.msra.mxu0 %v713
    %5326 = vmatprep.subr.bf16.mxu0 0
    %5327 = vmatpush1.bf16.msra.mxu0 %v714
    %5328 = vmatprep.subr.bf16.mxu0 0
    %5329 = vmatpush1.bf16.msra.mxu0 %v715
    %5330 = vmatprep.subr.bf16.mxu0 0
    %5331 = vmatpush1.bf16.msra.mxu0 %v716
    %5332 = vmatprep.subr.bf16.mxu0 0
    %5333 = vmatpush1.bf16.msra.mxu0 %v717
    %5334 = vmatprep.mubr.bf16.mxu0 %v5239
    %5335 = vmatmul.mubr.bf16.gmra.mrb[0].mxu0 %v5238
    %v5336 = vpop.f32.mrb[0].mxu0
    %v5337 = vadd.f32 0.0, %v5336
    %v5338 = vpop.f32.mrb[0].mxu0
    %v5339 = vpop.f32.mrb[0].mxu0
    %v5340 = vadd.f32 0.0, %v5339
    %v5341 = vpop.f32.mrb[0].mxu0
    %5342 = vmatprep.mubr.bf16.mxu0 %v5243
    %5343 = vmatmul.mubr.bf16.gmra.mrb[0].mxu0 %v5242
    %v5344 = vpop.f32.mrb[0].mxu0
    %v5345 = vadd.f32 0.0, %v5344
    %v5346 = vpop.f32.mrb[0].mxu0
    %v5347 = vpop.f32.mrb[0].mxu0
    %v5348 = vadd.f32 0.0, %v5347
    %v5349 = vpop.f32.mrb[0].mxu0
    %5350 = vmatprep.mubr.bf16.mxu0 %v5247
    %5351 = vmatmul.mubr.bf16.gmra.mrb[0].mxu0 %v5246
    %v5352 = vpop.f32.mrb[0].mxu0
    %v5353 = vadd.f32 0.0, %v5352
    %v5354 = vpop.f32.mrb[0].mxu0
    %v5355 = vpop.f32.mrb[0].mxu0
    %v5356 = vadd.f32 0.0, %v5355
    %v5357 = vpop.f32.mrb[0].mxu0
    %5358 = vmatprep.mubr.bf16.mxu0 %v5251
    %5359 = vmatmul.mubr.bf16.gmra.mrb[0].mxu0 %v5250
    %v5360 = vpop.f32.mrb[0].mxu0
    %v5361 = vadd.f32 0.0, %v5360
    %v5362 = vpop.f32.mrb[0].mxu0
    %v5363 = vpop.f32.mrb[0].mxu0
    %v5364 = vadd.f32 0.0, %v5363
    %v5365 = vpop.f32.mrb[0].mxu0
    %5366 = vmatprep.mubr.bf16.mxu0 %v5255
    %5367 = vmatmul.mubr.bf16.gmra.mrb[0].mxu0 %v5254
    %v5368 = vpop.f32.mrb[0].mxu0
    %v5369 = vadd.f32 0.0, %v5368
    %v5370 = vpop.f32.mrb[0].mxu0
    %v5371 = vpop.f32.mrb[0].mxu0
    %v5372 = vadd.f32 0.0, %v5371
    %v5373 = vpop.f32.mrb[0].mxu0
    %5374 = vmatprep.mubr.bf16.mxu0 %v5259
    %5375 = vmatmul.mubr.bf16.gmra.mrb[0].mxu0 %v5258
    %v5376 = vpop.f32.mrb[0].mxu0
    %v5377 = vadd.f32 0.0, %v5376
    %v5378 = vpop.f32.mrb[0].mxu0
    %v5379 = vpop.f32.mrb[0].mxu0
    %v5380 = vadd.f32 0.0, %v5379
    %v5381 = vpop.f32.mrb[0].mxu0
    %5382 = vmatprep.mubr.bf16.mxu0 %v5263
    %5383 = vmatmul.mubr.bf16.gmra.mrb[0].mxu0 %v5262
    %v5384 = vpop.f32.mrb[0].mxu0
    %v5385 = vadd.f32 0.0, %v5384
    %v5386 = vpop.f32.mrb[0].mxu0
    %v5387 = vpop.f32.mrb[0].mxu0
    %v5388 = vadd.f32 0.0, %v5387
    %v5389 = vpop.f32.mrb[0].mxu0
    %5390 = vmatprep.mubr.bf16.mxu0 %v5267
    %5391 = vmatmul.mubr.bf16.gmra.mrb[0].mxu0 %v5266
    %v5392 = vpop.f32.mrb[0].mxu0
    %v5393 = vadd.f32 0.0, %v5392
    %v5394 = vpop.f32.mrb[0].mxu0
    %v5395 = vpop.f32.mrb[0].mxu0
    %v5396 = vadd.f32 0.0, %v5395
    %v5397 = vpop.f32.mrb[0].mxu0
    %5398 = vdwg.mxu0
    %5399 = vmatprep.subr.bf16.mxu0 0
    %5400 = vmatpush1.bf16.msra.mxu0 %v718
    %5401 = vmatprep.subr.bf16.mxu0 0
    %5402 = vmatpush1.bf16.msra.mxu0 %v719
    %5403 = vmatprep.subr.bf16.mxu0 0
    %5404 = vmatpush1.bf16.msra.mxu0 %v720
    %5405 = vmatprep.subr.bf16.mxu0 0
    %5406 = vmatpush1.bf16.msra.mxu0 %v721
    %5407 = vmatprep.subr.bf16.mxu0 0
    %5408 = vmatpush1.bf16.msra.mxu0 %v722
    %5409 = vmatprep.subr.bf16.mxu0 0
    %5410 = vmatpush1.bf16.msra.mxu0 %v723
    %5411 = vmatprep.subr.bf16.mxu0 0
    %5412 = vmatpush1.bf16.msra.mxu0 %v724
    %5413 = vmatprep.subr.bf16.mxu0 0
    %5414 = vmatpush1.bf16.msra.mxu0 %v725
    %5415 = vmatprep.subr.bf16.mxu0 0
    %5416 = vmatpush1.bf16.msra.mxu0 %v726
    %5417 = vmatprep.subr.bf16.mxu0 0
    %5418 = vmatpush1.bf16.msra.mxu0 %v727
    %5419 = vmatprep.subr.bf16.mxu0 0
    %5420 = vmatpush1.bf16.msra.mxu0 %v728
    %5421 = vmatprep.subr.bf16.mxu0 0
    %5422 = vmatpush1.bf16.msra.mxu0 %v729
    %5423 = vmatprep.subr.bf16.mxu0 0
    %5424 = vmatpush1.bf16.msra.mxu0 %v730
    %5425 = vmatprep.subr.bf16.mxu0 0
    %5426 = vmatpush1.bf16.msra.mxu0 %v731
    %5427 = vmatprep.subr.bf16.mxu0 0
    %5428 = vmatpush1.bf16.msra.mxu0 %v732
    %5429 = vmatprep.subr.bf16.mxu0 0
    %5430 = vmatpush1.bf16.msra.mxu0 %v733
    %5431 = vmatprep.mubr.bf16.mxu0 %v5241
    %5432 = vmatmul.mubr.bf16.gmra.mrb[0].mxu0 %v5240
    %v5433 = vpop.f32.mrb[0].mxu0
    %v5434 = vadd.f32 %v5337, %v5433
    %v5435 = vpop.f32.mrb[0].mxu0
    %v5436 = vpop.f32.mrb[0].mxu0
    %v5437 = vadd.f32 %v5340, %v5436
    %v5438 = vpop.f32.mrb[0].mxu0
    %5439 = vmatprep.mubr.bf16.mxu0 %v5245
    %5440 = vmatmul.mubr.bf16.gmra.mrb[0].mxu0 %v5244
    %v5441 = vpop.f32.mrb[0].mxu0
    %v5442 = vadd.f32 %v5345, %v5441
    %v5443 = vpop.f32.mrb[0].mxu0
    %v5444 = vpop.f32.mrb[0].mxu0
    %v5445 = vadd.f32 %v5348, %v5444
    %v5446 = vpop.f32.mrb[0].mxu0
    %5447 = vmatprep.mubr.bf16.mxu0 %v5249
    %5448 = vmatmul.mubr.bf16.gmra.mrb[0].mxu0 %v5248
    %v5449 = vpop.f32.mrb[0].mxu0
    %v5450 = vadd.f32 %v5353, %v5449
    %v5451 = vpop.f32.mrb[0].mxu0
    %v5452 = vpop.f32.mrb[0].mxu0
    %v5453 = vadd.f32 %v5356, %v5452
    %v5454 = vpop.f32.mrb[0].mxu0
    %5455 = vmatprep.mubr.bf16.mxu0 %v5253
    %5456 = vmatmul.mubr.bf16.gmra.mrb[0].mxu0 %v5252
    %v5457 = vpop.f32.mrb[0].mxu0
    %v5458 = vadd.f32 %v5361, %v5457
    %v5459 = vpop.f32.mrb[0].mxu0
    %v5460 = vpop.f32.mrb[0].mxu0
    %v5461 = vadd.f32 %v5364, %v5460
    %v5462 = vpop.f32.mrb[0].mxu0
    %5463 = vmatprep.mubr.bf16.mxu0 %v5257
    %5464 = vmatmul.mubr.bf16.gmra.mrb[0].mxu0 %v5256
    %v5465 = vpop.f32.mrb[0].mxu0
    %v5466 = vadd.f32 %v5369, %v5465
    %v5467 = vpop.f32.mrb[0].mxu0
    %v5468 = vpop.f32.mrb[0].mxu0
    %v5469 = vadd.f32 %v5372, %v5468
    %v5470 = vpop.f32.mrb[0].mxu0
    %5471 = vmatprep.mubr.bf16.mxu0 %v5261
    %5472 = vmatmul.mubr.bf16.gmra.mrb[0].mxu0 %v5260
    %v5473 = vpop.f32.mrb[0].mxu0
    %v5474 = vadd.f32 %v5377, %v5473
    %v5475 = vpop.f32.mrb[0].mxu0
    %v5476 = vpop.f32.mrb[0].mxu0
    %v5477 = vadd.f32 %v5380, %v5476
    %v5478 = vpop.f32.mrb[0].mxu0
    %5479 = vmatprep.mubr.bf16.mxu0 %v5265
    %5480 = vmatmul.mubr.bf16.gmra.mrb[0].mxu0 %v5264
    %v5481 = vpop.f32.mrb[0].mxu0
    %v5482 = vadd.f32 %v5385, %v5481
    %v5483 = vpop.f32.mrb[0].mxu0
    %v5484 = vpop.f32.mrb[0].mxu0
    %v5485 = vadd.f32 %v5388, %v5484
    %v5486 = vpop.f32.mrb[0].mxu0
    %5487 = vmatprep.mubr.bf16.mxu0 %v5269
    %5488 = vmatmul.mubr.bf16.gmra.mrb[0].mxu0 %v5268
    %v5489 = vpop.f32.mrb[0].mxu0
    %v5490 = vadd.f32 %v5393, %v5489
    %v5491 = vpop.f32.mrb[0].mxu0
    %v5492 = vpop.f32.mrb[0].mxu0
    %v5493 = vadd.f32 %v5396, %v5492
    %v5494 = vpop.f32.mrb[0].mxu0
    %5495 = vdwg.mxu0
    %v5496 = vpack.c.bf16 %v5437, %v5434
    %v5497 = vpack.c.bf16 %v5445, %v5442
    %v5498 = vpack.c.bf16 %v5453, %v5450
    %v5499 = vpack.c.bf16 %v5461, %v5458
    %v5500 = vpack.c.bf16 %v5469, %v5466
    %v5501 = vpack.c.bf16 %v5477, %v5474
    %v5502 = vpack.c.bf16 %v5485, %v5482
    %v5503 = vpack.c.bf16 %v5493, %v5490
    %v5504 = vld [vmem:[#allocation4 + $0x200] sm:$0xf]
    %v5505 = vld [vmem:[#allocation4 + $0x204] sm:$0xf]
    %v5506 = vld [vmem:[#allocation4 + $0x208] sm:$0xf]
    %v5507 = vld [vmem:[#allocation4 + $0x20c] sm:$0xf]
    %v5508 = vld [vmem:[#allocation4 + $0x210] sm:$0xf]
    %v5509 = vld [vmem:[#allocation4 + $0x214] sm:$0xf]
    %v5510 = vld [vmem:[#allocation4 + $0x218] sm:$0xf]
    %v5511 = vld [vmem:[#allocation4 + $0x21c] sm:$0xf]
    %v5512 = vld [vmem:[#allocation4 + $0x220] sm:$0xf]
    %v5513 = vld [vmem:[#allocation4 + $0x224] sm:$0xf]
    %v5514 = vld [vmem:[#allocation4 + $0x228] sm:$0xf]
    %v5515 = vld [vmem:[#allocation4 + $0x22c] sm:$0xf]
    %v5516 = vld [vmem:[#allocation4 + $0x230] sm:$0xf]
    %v5517 = vld [vmem:[#allocation4 + $0x234] sm:$0xf]
    %v5518 = vld [vmem:[#allocation4 + $0x238] sm:$0xf]
    %v5519 = vld [vmem:[#allocation4 + $0x23c] sm:$0xf]
    %v5536 = vunpack.c.l.b16 %v5504
    %v5537 = vunpack.c.l.b16 %v5505
    %v5538 = vunpack.c.l.b16 %v5506
    %v5539 = vunpack.c.l.b16 %v5507
    %v5540 = vunpack.c.l.b16 %v5508
    %v5541 = vunpack.c.l.b16 %v5509
    %v5542 = vunpack.c.l.b16 %v5510
    %v5543 = vunpack.c.l.b16 %v5511
    %v5544 = vunpack.c.l.b16 %v5512
    %v5545 = vunpack.c.l.b16 %v5513
    %v5546 = vunpack.c.l.b16 %v5514
    %v5547 = vunpack.c.l.b16 %v5515
    %v5548 = vunpack.c.l.b16 %v5516
    %v5549 = vunpack.c.l.b16 %v5517
    %v5550 = vunpack.c.l.b16 %v5518
    %v5551 = vunpack.c.l.b16 %v5519
    %v5552 = vpack.c.b16 %v5537, %v5536
    %v5553 = vpack.c.b16 %v5539, %v5538
    %v5554 = vpack.c.b16 %v5541, %v5540
    %v5555 = vpack.c.b16 %v5543, %v5542
    %v5556 = vpack.c.b16 %v5545, %v5544
    %v5557 = vpack.c.b16 %v5547, %v5546
    %v5558 = vpack.c.b16 %v5549, %v5548
    %v5559 = vpack.c.b16 %v5551, %v5550
    %5568 = vmatprep.subr.bf16.mxu0 0
    %5569 = vmatpush1.bf16.msra.mxu0 %v5552
    %5570 = vmatprep.subr.bf16.mxu0 0
    %5571 = vmatpush1.bf16.msra.mxu0 %v5553
    %5572 = vmatprep.subr.bf16.mxu0 0
    %5573 = vmatpush1.bf16.msra.mxu0 %v5554
    %5574 = vmatprep.subr.bf16.mxu0 0
    %5575 = vmatpush1.bf16.msra.mxu0 %v5555
    %5576 = vmatprep.subr.bf16.mxu0 0
    %5577 = vmatpush1.bf16.msra.mxu0 %v5556
    %5578 = vmatprep.subr.bf16.mxu0 0
    %5579 = vmatpush1.bf16.msra.mxu0 %v5557
    %5580 = vmatprep.subr.bf16.mxu0 0
    %5581 = vmatpush1.bf16.msra.mxu0 %v5558
    %5582 = vmatprep.subr.bf16.mxu0 0
    %5583 = vmatpush1.bf16.msra.mxu0 %v5559
    %5584 = vmatprep.subr.bf16.mxu0 0
    %5585 = vmatpush1.bf16.msra.mxu0 0
    %5586 = vmatprep.subr.bf16.mxu0 0
    %5587 = vmatpush1.bf16.msra.mxu0 0
    %5588 = vmatprep.subr.bf16.mxu0 0
    %5589 = vmatpush1.bf16.msra.mxu0 0
    %5590 = vmatprep.subr.bf16.mxu0 0
    %5591 = vmatpush1.bf16.msra.mxu0 0
    %5592 = vmatprep.subr.bf16.mxu0 0
    %5593 = vmatpush1.bf16.msra.mxu0 0
    %5594 = vmatprep.subr.bf16.mxu0 0
    %5595 = vmatpush1.bf16.msra.mxu0 0
    %5596 = vmatprep.subr.bf16.mxu0 0
    %5597 = vmatpush1.bf16.msra.mxu0 0
    %5598 = vmatprep.subr.bf16.mxu0 0
    %5599 = vmatpush1.bf16.msra.mxu0 0
    %5600 = vmatprep.mubr.bf16.mxu0 0
    %5601 = vmatmul.mubr.bf16.gmra.mrb[0].mxu0 %v5496
    %v5602 = vpop.f32.mrb[0].mxu0
    %v5603 = vadd.f32 0.0, %v5602
    %v5604 = vpop.f32.mrb[0].mxu0
    %v5605 = vpop.f32.mrb[0].mxu0
    %v5606 = vadd.f32 0.0, %v5605
    %v5607 = vpop.f32.mrb[0].mxu0
    %5608 = vmatprep.mubr.bf16.mxu0 0
    %5609 = vmatmul.mubr.bf16.gmra.mrb[0].mxu0 %v5497
    %v5610 = vpop.f32.mrb[0].mxu0
    %v5611 = vadd.f32 0.0, %v5610
    %v5612 = vpop.f32.mrb[0].mxu0
    %v5613 = vpop.f32.mrb[0].mxu0
    %v5614 = vadd.f32 0.0, %v5613
    %v5615 = vpop.f32.mrb[0].mxu0
    %5616 = vmatprep.mubr.bf16.mxu0 0
    %5617 = vmatmul.mubr.bf16.gmra.mrb[0].mxu0 %v5498
    %v5618 = vpop.f32.mrb[0].mxu0
    %v5619 = vadd.f32 0.0, %v5618
    %v5620 = vpop.f32.mrb[0].mxu0
    %v5621 = vpop.f32.mrb[0].mxu0
    %v5622 = vadd.f32 0.0, %v5621
    %v5623 = vpop.f32.mrb[0].mxu0
    %5624 = vmatprep.mubr.bf16.mxu0 0
    %5625 = vmatmul.mubr.bf16.gmra.mrb[0].mxu0 %v5499
    %v5626 = vpop.f32.mrb[0].mxu0
    %v5627 = vadd.f32 0.0, %v5626
    %v5628 = vpop.f32.mrb[0].mxu0
    %v5629 = vpop.f32.mrb[0].mxu0
    %v5630 = vadd.f32 0.0, %v5629
    %v5631 = vpop.f32.mrb[0].mxu0
    %5632 = vmatprep.mubr.bf16.mxu0 0
    %5633 = vmatmul.mubr.bf16.gmra.mrb[0].mxu0 %v5500
    %v5634 = vpop.f32.mrb[0].mxu0
    %v5635 = vadd.f32 0.0, %v5634
    %v5636 = vpop.f32.mrb[0].mxu0
    %v5637 = vpop.f32.mrb[0].mxu0
    %v5638 = vadd.f32 0.0, %v5637
    %v5639 = vpop.f32.mrb[0].mxu0
    %5640 = vmatprep.mubr.bf16.mxu0 0
    %5641 = vmatmul.mubr.bf16.gmra.mrb[0].mxu0 %v5501
    %v5642 = vpop.f32.mrb[0].mxu0
    %v5643 = vadd.f32 0.0, %v5642
    %v5644 = vpop.f32.mrb[0].mxu0
    %v5645 = vpop.f32.mrb[0].mxu0
    %v5646 = vadd.f32 0.0, %v5645
    %v5647 = vpop.f32.mrb[0].mxu0
    %5648 = vmatprep.mubr.bf16.mxu0 0
    %5649 = vmatmul.mubr.bf16.gmra.mrb[0].mxu0 %v5502
    %v5650 = vpop.f32.mrb[0].mxu0
    %v5651 = vadd.f32 0.0, %v5650
    %v5652 = vpop.f32.mrb[0].mxu0
    %v5653 = vpop.f32.mrb[0].mxu0
    %v5654 = vadd.f32 0.0, %v5653
    %v5655 = vpop.f32.mrb[0].mxu0
    %5656 = vmatprep.mubr.bf16.mxu0 0
    %5657 = vmatmul.mubr.bf16.gmra.mrb[0].mxu0 %v5503
    %v5658 = vpop.f32.mrb[0].mxu0
    %v5659 = vadd.f32 0.0, %v5658
    %v5660 = vpop.f32.mrb[0].mxu0
    %v5661 = vpop.f32.mrb[0].mxu0
    %v5662 = vadd.f32 0.0, %v5661
    %v5663 = vpop.f32.mrb[0].mxu0
    %5664 = vdwg.mxu0
    %v5665 = vadd.f32 %v5094, %v5603
    %v5666 = vadd.f32 %v5095, %v5606
    %v5667 = vadd.f32 %v5096, %v5611
    %v5668 = vadd.f32 %v5097, %v5614
    %v5669 = vadd.f32 %v5098, %v5619
    %v5670 = vadd.f32 %v5099, %v5622
    %v5671 = vadd.f32 %v5100, %v5627
    %v5672 = vadd.f32 %v5101, %v5630
    %v5673 = vadd.f32 %v5102, %v5635
    %v5674 = vadd.f32 %v5103, %v5638
    %v5675 = vadd.f32 %v5104, %v5643
    %v5676 = vadd.f32 %v5105, %v5646
    %v5677 = vadd.f32 %v5106, %v5651
    %v5678 = vadd.f32 %v5107, %v5654
    %v5679 = vadd.f32 %v5108, %v5659
    %v5680 = vadd.f32 %v5109, %v5662
    %v5681 = vld [vmem:[#allocation6] sm:$0x1]
    %v5683 = vlaneseq
    %v5684 = vshrl.u32 %v5683, 7
    %v5685 = vsub.s32 0, %v5684
    %v5686 = vrot.slane %v5681, %v5685
    %v5688 = vadd.f32 %v5665, %v5686
    %v5689 = vadd.f32 %v5666, %v5686
    %v5690 = vadd.f32 %v5667, %v5686
    %v5691 = vadd.f32 %v5668, %v5686
    %v5692 = vadd.f32 %v5669, %v5686
    %v5693 = vadd.f32 %v5670, %v5686
    %v5694 = vadd.f32 %v5671, %v5686
    %v5695 = vadd.f32 %v5672, %v5686
    %v5696 = vadd.f32 %v5673, %v5686
    %v5697 = vadd.f32 %v5674, %v5686
    %v5698 = vadd.f32 %v5675, %v5686
    %v5699 = vadd.f32 %v5676, %v5686
    %v5700 = vadd.f32 %v5677, %v5686
    %v5701 = vadd.f32 %v5678, %v5686
    %v5702 = vadd.f32 %v5679, %v5686
    %v5703 = vadd.f32 %v5680, %v5686
    %v5704 = vmax.f32 %v5688, 0.0
    %v5705 = vmax.f32 %v5689, 0.0
    %v5706 = vmax.f32 %v5690, 0.0
    %v5707 = vmax.f32 %v5691, 0.0
    %v5708 = vmax.f32 %v5692, 0.0
    %v5709 = vmax.f32 %v5693, 0.0
    %v5710 = vmax.f32 %v5694, 0.0
    %v5711 = vmax.f32 %v5695, 0.0
    %v5712 = vmax.f32 %v5696, 0.0
    %v5713 = vmax.f32 %v5697, 0.0
    %v5714 = vmax.f32 %v5698, 0.0
    %v5715 = vmax.f32 %v5699, 0.0
    %v5716 = vmax.f32 %v5700, 0.0
    %v5717 = vmax.f32 %v5701, 0.0
    %v5718 = vmax.f32 %v5702, 0.0
    %v5719 = vmax.f32 %v5703, 0.0
    %v5720 = vpack.c.bf16 %v5705, %v5704
    %v5721 = vpack.c.bf16 %v5707, %v5706
    %v5722 = vpack.c.bf16 %v5709, %v5708
    %v5723 = vpack.c.bf16 %v5711, %v5710
    %v5724 = vpack.c.bf16 %v5713, %v5712
    %v5725 = vpack.c.bf16 %v5715, %v5714
    %v5726 = vpack.c.bf16 %v5717, %v5716
    %v5727 = vpack.c.bf16 %v5719, %v5718
    %v5728 = vld [vmem:[#allocation7] sm:$0xf]
    %v5729 = vld [vmem:[#allocation7 + $0x4] sm:$0xf]
    %v5730 = vld [vmem:[#allocation7 + $0x8] sm:$0xf]
    %v5731 = vld [vmem:[#allocation7 + $0xc] sm:$0xf]
    %v5736 = vunpack.c.l.b16 %v5728
    %v5737 = vunpack.c.l.b16 %v5729
    %v5738 = vunpack.c.l.b16 %v5730
    %v5739 = vunpack.c.l.b16 %v5731
    %v5740 = vpack.c.b16 %v5737, %v5736
    %v5741 = vpack.c.b16 %v5739, %v5738
    %5744 = vmatprep.subr.bf16.mxu0 0
    %5745 = vmatpush1.bf16.msra.mxu0 %v5720
    %5746 = vmatprep.subr.bf16.mxu0 0
    %5747 = vmatpush1.bf16.msra.mxu0 %v5721
    %5748 = vmatprep.subr.bf16.mxu0 0
    %5749 = vmatpush1.bf16.msra.mxu0 %v5722
    %5750 = vmatprep.subr.bf16.mxu0 0
    %5751 = vmatpush1.bf16.msra.mxu0 %v5723
    %5752 = vmatprep.subr.bf16.mxu0 0
    %5753 = vmatpush1.bf16.msra.mxu0 %v5724
    %5754 = vmatprep.subr.bf16.mxu0 0
    %5755 = vmatpush1.bf16.msra.mxu0 %v5725
    %5756 = vmatprep.subr.bf16.mxu0 0
    %5757 = vmatpush1.bf16.msra.mxu0 %v5726
    %5758 = vmatprep.subr.bf16.mxu0 0
    %5759 = vmatpush1.bf16.msra.mxu0 %v5727
    %5760 = vmatprep.subr.bf16.mxu0 0
    %5761 = vmatpush1.bf16.msra.mxu0 0
    %5762 = vmatprep.subr.bf16.mxu0 0
    %5763 = vmatpush1.bf16.msra.mxu0 0
    %5764 = vmatprep.subr.bf16.mxu0 0
    %5765 = vmatpush1.bf16.msra.mxu0 0
    %5766 = vmatprep.subr.bf16.mxu0 0
    %5767 = vmatpush1.bf16.msra.mxu0 0
    %5768 = vmatprep.subr.bf16.mxu0 0
    %5769 = vmatpush1.bf16.msra.mxu0 0
    %5770 = vmatprep.subr.bf16.mxu0 0
    %5771 = vmatpush1.bf16.msra.mxu0 0
    %5772 = vmatprep.subr.bf16.mxu0 0
    %5773 = vmatpush1.bf16.msra.mxu0 0
    %5774 = vmatprep.subr.bf16.mxu0 0
    %5775 = vmatpush1.bf16.msra.mxu0 0
    %5776 = vmatprep.mubr.bf16.mxu0 0
    %5777 = vmatmul.mubr.bf16.gmra.mrb[0].mxu0 %v5740
    %v5778 = vpop.f32.mrb[0].mxu0
    %v5779 = vadd.f32 0.0, %v5778
    %v5780 = vpop.f32.mrb[0].mxu0
    %v5781 = vpop.f32.mrb[0].mxu0
    %v5782 = vadd.f32 0.0, %v5781
    %v5783 = vpop.f32.mrb[0].mxu0
    %5784 = vmatprep.mubr.bf16.mxu0 0
    %5785 = vmatmul.mubr.bf16.gmra.mrb[0].mxu0 %v5741
    %v5786 = vpop.f32.mrb[0].mxu0
    %v5787 = vadd.f32 0.0, %v5786
    %v5788 = vpop.f32.mrb[0].mxu0
    %v5789 = vpop.f32.mrb[0].mxu0
    %v5790 = vadd.f32 0.0, %v5789
    %v5791 = vpop.f32.mrb[0].mxu0
    %5792 = vdwg.mxu0
    %v5793 = vpack.c.bf16 %v5782, %v5779
    %v5794 = vpack.c.bf16 %v5790, %v5787
    %v5795 = vld [vmem:[#allocation9] sm:$0xf]
    %v5796 = vld [vmem:[#allocation9 + $0x4] sm:$0xf]
    %v5797 = vld [vmem:[#allocation9 + $0x8] sm:$0xf]
    %v5798 = vld [vmem:[#allocation9 + $0xc] sm:$0xf]
    %v5799 = vld [vmem:[#allocation9 + $0x10] sm:$0xf]
    %v5800 = vld [vmem:[#allocation9 + $0x14] sm:$0xf]
    %v5801 = vld [vmem:[#allocation9 + $0x18] sm:$0xf]
    %v5802 = vld [vmem:[#allocation9 + $0x1c] sm:$0xf]
    %v5803 = vld [vmem:[#allocation9 + $0x20] sm:$0xf]
    %v5804 = vld [vmem:[#allocation9 + $0x24] sm:$0xf]
    %v5805 = vld [vmem:[#allocation9 + $0x28] sm:$0xf]
    %v5806 = vld [vmem:[#allocation9 + $0x2c] sm:$0xf]
    %v5807 = vld [vmem:[#allocation9 + $0x30] sm:$0xf]
    %v5808 = vld [vmem:[#allocation9 + $0x34] sm:$0xf]
    %v5809 = vld [vmem:[#allocation9 + $0x38] sm:$0xf]
    %v5810 = vld [vmem:[#allocation9 + $0x3c] sm:$0xf]
    %v5811 = vld [vmem:[#allocation7 + $0x10] sm:$0xf]
    %v5812 = vld [vmem:[#allocation7 + $0x14] sm:$0xf]
    %v5813 = vld [vmem:[#allocation7 + $0x18] sm:$0xf]
    %v5814 = vld [vmem:[#allocation7 + $0x1c] sm:$0xf]
    %v5819 = vunpack.c.l.b16 %v5811
    %v5820 = vunpack.c.l.b16 %v5812
    %v5821 = vunpack.c.l.b16 %v5813
    %v5822 = vunpack.c.l.b16 %v5814
    %v5823 = vpack.c.b16 %v5820, %v5819
    %v5824 = vpack.c.b16 %v5822, %v5821
    %5827 = vmatprep.subr.bf16.mxu0 0
    %5828 = vmatpush1.bf16.msra.mxu0 %v5720
    %5829 = vmatprep.subr.bf16.mxu0 0
    %5830 = vmatpush1.bf16.msra.mxu0 %v5721
    %5831 = vmatprep.subr.bf16.mxu0 0
    %5832 = vmatpush1.bf16.msra.mxu0 %v5722
    %5833 = vmatprep.subr.bf16.mxu0 0
    %5834 = vmatpush1.bf16.msra.mxu0 %v5723
    %5835 = vmatprep.subr.bf16.mxu0 0
    %5836 = vmatpush1.bf16.msra.mxu0 %v5724
    %5837 = vmatprep.subr.bf16.mxu0 0
    %5838 = vmatpush1.bf16.msra.mxu0 %v5725
    %5839 = vmatprep.subr.bf16.mxu0 0
    %5840 = vmatpush1.bf16.msra.mxu0 %v5726
    %5841 = vmatprep.subr.bf16.mxu0 0
    %5842 = vmatpush1.bf16.msra.mxu0 %v5727
    %5843 = vmatprep.subr.bf16.mxu0 0
    %5844 = vmatpush1.bf16.msra.mxu0 0
    %5845 = vmatprep.subr.bf16.mxu0 0
    %5846 = vmatpush1.bf16.msra.mxu0 0
    %5847 = vmatprep.subr.bf16.mxu0 0
    %5848 = vmatpush1.bf16.msra.mxu0 0
    %5849 = vmatprep.subr.bf16.mxu0 0
    %5850 = vmatpush1.bf16.msra.mxu0 0
    %5851 = vmatprep.subr.bf16.mxu0 0
    %5852 = vmatpush1.bf16.msra.mxu0 0
    %5853 = vmatprep.subr.bf16.mxu0 0
    %5854 = vmatpush1.bf16.msra.mxu0 0
    %5855 = vmatprep.subr.bf16.mxu0 0
    %5856 = vmatpush1.bf16.msra.mxu0 0
    %5857 = vmatprep.subr.bf16.mxu0 0
    %5858 = vmatpush1.bf16.msra.mxu0 0
    %5859 = vmatprep.mubr.bf16.mxu0 0
    %5860 = vmatmul.mubr.bf16.gmra.mrb[0].mxu0 %v5823
    %v5861 = vpop.f32.mrb[0].mxu0
    %v5862 = vadd.f32 0.0, %v5861
    %v5863 = vpop.f32.mrb[0].mxu0
    %v5864 = vpop.f32.mrb[0].mxu0
    %v5865 = vadd.f32 0.0, %v5864
    %v5866 = vpop.f32.mrb[0].mxu0
    %5867 = vmatprep.mubr.bf16.mxu0 0
    %5868 = vmatmul.mubr.bf16.gmra.mrb[0].mxu0 %v5824
    %v5869 = vpop.f32.mrb[0].mxu0
    %v5870 = vadd.f32 0.0, %v5869
    %v5871 = vpop.f32.mrb[0].mxu0
    %v5872 = vpop.f32.mrb[0].mxu0
    %v5873 = vadd.f32 0.0, %v5872
    %v5874 = vpop.f32.mrb[0].mxu0
    %5875 = vdwg.mxu0
    %v5876 = vpack.c.bf16 %v5865, %v5862
    %v5877 = vpack.c.bf16 %v5873, %v5870
    %v5878 = vld [vmem:[#allocation9 + $0x40] sm:$0xf]
    %v5879 = vld [vmem:[#allocation9 + $0x44] sm:$0xf]
    %v5880 = vld [vmem:[#allocation9 + $0x48] sm:$0xf]
    %v5881 = vld [vmem:[#allocation9 + $0x4c] sm:$0xf]
    %v5882 = vld [vmem:[#allocation9 + $0x50] sm:$0xf]
    %v5883 = vld [vmem:[#allocation9 + $0x54] sm:$0xf]
    %v5884 = vld [vmem:[#allocation9 + $0x58] sm:$0xf]
    %v5885 = vld [vmem:[#allocation9 + $0x5c] sm:$0xf]
    %v5886 = vld [vmem:[#allocation9 + $0x60] sm:$0xf]
    %v5887 = vld [vmem:[#allocation9 + $0x64] sm:$0xf]
    %v5888 = vld [vmem:[#allocation9 + $0x68] sm:$0xf]
    %v5889 = vld [vmem:[#allocation9 + $0x6c] sm:$0xf]
    %v5890 = vld [vmem:[#allocation9 + $0x70] sm:$0xf]
    %v5891 = vld [vmem:[#allocation9 + $0x74] sm:$0xf]
    %v5892 = vld [vmem:[#allocation9 + $0x78] sm:$0xf]
    %v5893 = vld [vmem:[#allocation9 + $0x7c] sm:$0xf]
    %v5910 = vunpack.c.l.b16 %v5878
    %v5911 = vunpack.c.l.b16 %v5879
    %v5912 = vunpack.c.l.b16 %v5880
    %v5913 = vunpack.c.l.b16 %v5881
    %v5914 = vunpack.c.l.b16 %v5882
    %v5915 = vunpack.c.l.b16 %v5883
    %v5916 = vunpack.c.l.b16 %v5884
    %v5917 = vunpack.c.l.b16 %v5885
    %v5918 = vunpack.c.l.b16 %v5886
    %v5919 = vunpack.c.l.b16 %v5887
    %v5920 = vunpack.c.l.b16 %v5888
    %v5921 = vunpack.c.l.b16 %v5889
    %v5922 = vunpack.c.l.b16 %v5890
    %v5923 = vunpack.c.l.b16 %v5891
    %v5924 = vunpack.c.l.b16 %v5892
    %v5925 = vunpack.c.l.b16 %v5893
    %v5926 = vpack.c.b16 %v5911, %v5910
    %v5927 = vpack.c.b16 %v5913, %v5912
    %v5928 = vpack.c.b16 %v5915, %v5914
    %v5929 = vpack.c.b16 %v5917, %v5916
    %v5930 = vpack.c.b16 %v5919, %v5918
    %v5931 = vpack.c.b16 %v5921, %v5920
    %v5932 = vpack.c.b16 %v5923, %v5922
    %v5933 = vpack.c.b16 %v5925, %v5924
    %5942 = vmatprep.subr.bf16.mxu0 0
    %5943 = vmatpush1.bf16.msra.mxu0 %v5926
    %5944 = vmatprep.subr.bf16.mxu0 0
    %5945 = vmatpush1.bf16.msra.mxu0 %v5927
    %5946 = vmatprep.subr.bf16.mxu0 0
    %5947 = vmatpush1.bf16.msra.mxu0 %v5928
    %5948 = vmatprep.subr.bf16.mxu0 0
    %5949 = vmatpush1.bf16.msra.mxu0 %v5929
    %5950 = vmatprep.subr.bf16.mxu0 0
    %5951 = vmatpush1.bf16.msra.mxu0 %v5930
    %5952 = vmatprep.subr.bf16.mxu0 0
    %5953 = vmatpush1.bf16.msra.mxu0 %v5931
    %5954 = vmatprep.subr.bf16.mxu0 0
    %5955 = vmatpush1.bf16.msra.mxu0 %v5932
    %5956 = vmatprep.subr.bf16.mxu0 0
    %5957 = vmatpush1.bf16.msra.mxu0 %v5933
    %5958 = vmatprep.subr.bf16.mxu0 0
    %5959 = vmatpush1.bf16.msra.mxu0 0
    %5960 = vmatprep.subr.bf16.mxu0 0
    %5961 = vmatpush1.bf16.msra.mxu0 0
    %5962 = vmatprep.subr.bf16.mxu0 0
    %5963 = vmatpush1.bf16.msra.mxu0 0
    %5964 = vmatprep.subr.bf16.mxu0 0
    %5965 = vmatpush1.bf16.msra.mxu0 0
    %5966 = vmatprep.subr.bf16.mxu0 0
    %5967 = vmatpush1.bf16.msra.mxu0 0
    %5968 = vmatprep.subr.bf16.mxu0 0
    %5969 = vmatpush1.bf16.msra.mxu0 0
    %5970 = vmatprep.subr.bf16.mxu0 0
    %5971 = vmatpush1.bf16.msra.mxu0 0
    %5972 = vmatprep.subr.bf16.mxu0 0
    %5973 = vmatpush1.bf16.msra.mxu0 0
    %5974 = vmatprep.mubr.bf16.mxu0 0
    %5975 = vmatmul.mubr.bf16.gmra.mrb[0].mxu0 %v5876
    %v5976 = vpop.f32.mrb[0].mxu0
    %v5977 = vadd.f32 0.0, %v5976
    %v5978 = vpop.f32.mrb[0].mxu0
    %v5979 = vpop.f32.mrb[0].mxu0
    %v5980 = vadd.f32 0.0, %v5979
    %v5981 = vpop.f32.mrb[0].mxu0
    %5982 = vmatprep.mubr.bf16.mxu0 0
    %5983 = vmatmul.mubr.bf16.gmra.mrb[0].mxu0 %v5877
    %v5984 = vpop.f32.mrb[0].mxu0
    %v5985 = vadd.f32 0.0, %v5984
    %v5986 = vpop.f32.mrb[0].mxu0
    %v5987 = vpop.f32.mrb[0].mxu0
    %v5988 = vadd.f32 0.0, %v5987
    %v5989 = vpop.f32.mrb[0].mxu0
    %5990 = vdwg.mxu0
    %v6007 = vunpack.c.l.b16 %v5795
    %v6008 = vunpack.c.l.b16 %v5796
    %v6009 = vunpack.c.l.b16 %v5797
    %v6010 = vunpack.c.l.b16 %v5798
    %v6011 = vunpack.c.l.b16 %v5799
    %v6012 = vunpack.c.l.b16 %v5800
    %v6013 = vunpack.c.l.b16 %v5801
    %v6014 = vunpack.c.l.b16 %v5802
    %v6015 = vunpack.c.l.b16 %v5803
    %v6016 = vunpack.c.l.b16 %v5804
    %v6017 = vunpack.c.l.b16 %v5805
    %v6018 = vunpack.c.l.b16 %v5806
    %v6019 = vunpack.c.l.b16 %v5807
    %v6020 = vunpack.c.l.b16 %v5808
    %v6021 = vunpack.c.l.b16 %v5809
    %v6022 = vunpack.c.l.b16 %v5810
    %v6023 = vpack.c.b16 %v6008, %v6007
    %v6024 = vpack.c.b16 %v6010, %v6009
    %v6025 = vpack.c.b16 %v6012, %v6011
    %v6026 = vpack.c.b16 %v6014, %v6013
    %v6027 = vpack.c.b16 %v6016, %v6015
    %v6028 = vpack.c.b16 %v6018, %v6017
    %v6029 = vpack.c.b16 %v6020, %v6019
    %v6030 = vpack.c.b16 %v6022, %v6021
    %6039 = vmatprep.subr.bf16.mxu0 0
    %6040 = vmatpush1.bf16.msra.mxu0 %v6023
    %6041 = vmatprep.subr.bf16.mxu0 0
    %6042 = vmatpush1.bf16.msra.mxu0 %v6024
    %6043 = vmatprep.subr.bf16.mxu0 0
    %6044 = vmatpush1.bf16.msra.mxu0 %v6025
    %6045 = vmatprep.subr.bf16.mxu0 0
    %6046 = vmatpush1.bf16.msra.mxu0 %v6026
    %6047 = vmatprep.subr.bf16.mxu0 0
    %6048 = vmatpush1.bf16.msra.mxu0 %v6027
    %6049 = vmatprep.subr.bf16.mxu0 0
    %6050 = vmatpush1.bf16.msra.mxu0 %v6028
    %6051 = vmatprep.subr.bf16.mxu0 0
    %6052 = vmatpush1.bf16.msra.mxu0 %v6029
    %6053 = vmatprep.subr.bf16.mxu0 0
    %6054 = vmatpush1.bf16.msra.mxu0 %v6030
    %6055 = vmatprep.subr.bf16.mxu0 0
    %6056 = vmatpush1.bf16.msra.mxu0 0
    %6057 = vmatprep.subr.bf16.mxu0 0
    %6058 = vmatpush1.bf16.msra.mxu0 0
    %6059 = vmatprep.subr.bf16.mxu0 0
    %6060 = vmatpush1.bf16.msra.mxu0 0
    %6061 = vmatprep.subr.bf16.mxu0 0
    %6062 = vmatpush1.bf16.msra.mxu0 0
    %6063 = vmatprep.subr.bf16.mxu0 0
    %6064 = vmatpush1.bf16.msra.mxu0 0
    %6065 = vmatprep.subr.bf16.mxu0 0
    %6066 = vmatpush1.bf16.msra.mxu0 0
    %6067 = vmatprep.subr.bf16.mxu0 0
    %6068 = vmatpush1.bf16.msra.mxu0 0
    %6069 = vmatprep.subr.bf16.mxu0 0
    %6070 = vmatpush1.bf16.msra.mxu0 0
    %6071 = vmatprep.mubr.bf16.mxu0 0
    %6072 = vmatmul.mubr.bf16.gmra.mrb[0].mxu0 %v5793
    %v6073 = vpop.f32.mrb[0].mxu0
    %v6074 = vadd.f32 %v5977, %v6073
    %v6075 = vpop.f32.mrb[0].mxu0
    %v6076 = vpop.f32.mrb[0].mxu0
    %v6077 = vadd.f32 %v5980, %v6076
    %v6078 = vpop.f32.mrb[0].mxu0
    %6079 = vmatprep.mubr.bf16.mxu0 0
    %6080 = vmatmul.mubr.bf16.gmra.mrb[0].mxu0 %v5794
    %v6081 = vpop.f32.mrb[0].mxu0
    %v6082 = vadd.f32 %v5985, %v6081
    %v6083 = vpop.f32.mrb[0].mxu0
    %v6084 = vpop.f32.mrb[0].mxu0
    %v6085 = vadd.f32 %v5988, %v6084
    %v6086 = vpop.f32.mrb[0].mxu0
    %6087 = vdwg.mxu0
    %v6088 = vld [vmem:[#allocation7 + $0x20] sm:$0xf]
    %v6089 = vld [vmem:[#allocation7 + $0x24] sm:$0xf]
    %v6090 = vld [vmem:[#allocation7 + $0x28] sm:$0xf]
    %v6091 = vld [vmem:[#allocation7 + $0x2c] sm:$0xf]
    %v6096 = vunpack.c.l.b16 %v6088
    %v6097 = vunpack.c.l.b16 %v6089
    %v6098 = vunpack.c.l.b16 %v6090
    %v6099 = vunpack.c.l.b16 %v6091
    %v6100 = vpack.c.b16 %v6097, %v6096
    %v6101 = vpack.c.b16 %v6099, %v6098
    %6104 = vmatprep.subr.bf16.mxu0 0
    %6105 = vmatpush1.bf16.msra.mxu0 %v5720
    %6106 = vmatprep.subr.bf16.mxu0 0
    %6107 = vmatpush1.bf16.msra.mxu0 %v5721
    %6108 = vmatprep.subr.bf16.mxu0 0
    %6109 = vmatpush1.bf16.msra.mxu0 %v5722
    %6110 = vmatprep.subr.bf16.mxu0 0
    %6111 = vmatpush1.bf16.msra.mxu0 %v5723
    %6112 = vmatprep.subr.bf16.mxu0 0
    %6113 = vmatpush1.bf16.msra.mxu0 %v5724
    %6114 = vmatprep.subr.bf16.mxu0 0
    %6115 = vmatpush1.bf16.msra.mxu0 %v5725
    %6116 = vmatprep.subr.bf16.mxu0 0
    %6117 = vmatpush1.bf16.msra.mxu0 %v5726
    %6118 = vmatprep.subr.bf16.mxu0 0
    %6119 = vmatpush1.bf16.msra.mxu0 %v5727
    %6120 = vmatprep.subr.bf16.mxu0 0
    %6121 = vmatpush1.bf16.msra.mxu0 0
    %6122 = vmatprep.subr.bf16.mxu0 0
    %6123 = vmatpush1.bf16.msra.mxu0 0
    %6124 = vmatprep.subr.bf16.mxu0 0
    %6125 = vmatpush1.bf16.msra.mxu0 0
    %6126 = vmatprep.subr.bf16.mxu0 0
    %6127 = vmatpush1.bf16.msra.mxu0 0
    %6128 = vmatprep.subr.bf16.mxu0 0
    %6129 = vmatpush1.bf16.msra.mxu0 0
    %6130 = vmatprep.subr.bf16.mxu0 0
    %6131 = vmatpush1.bf16.msra.mxu0 0
    %6132 = vmatprep.subr.bf16.mxu0 0
    %6133 = vmatpush1.bf16.msra.mxu0 0
    %6134 = vmatprep.subr.bf16.mxu0 0
    %6135 = vmatpush1.bf16.msra.mxu0 0
    %6136 = vmatprep.mubr.bf16.mxu0 0
    %6137 = vmatmul.mubr.bf16.gmra.mrb[0].mxu0 %v6100
    %v6138 = vpop.f32.mrb[0].mxu0
    %v6139 = vadd.f32 0.0, %v6138
    %v6140 = vpop.f32.mrb[0].mxu0
    %v6141 = vpop.f32.mrb[0].mxu0
    %v6142 = vadd.f32 0.0, %v6141
    %v6143 = vpop.f32.mrb[0].mxu0
    %6144 = vmatprep.mubr.bf16.mxu0 0
    %6145 = vmatmul.mubr.bf16.gmra.mrb[0].mxu0 %v6101
    %v6146 = vpop.f32.mrb[0].mxu0
    %v6147 = vadd.f32 0.0, %v6146
    %v6148 = vpop.f32.mrb[0].mxu0
    %v6149 = vpop.f32.mrb[0].mxu0
    %v6150 = vadd.f32 0.0, %v6149
    %v6151 = vpop.f32.mrb[0].mxu0
    %6152 = vdwg.mxu0
    %v6153 = vpack.c.bf16 %v6142, %v6139
    %v6154 = vpack.c.bf16 %v6150, %v6147
    %v6155 = vld [vmem:[#allocation9 + $0x80] sm:$0xf]
    %v6156 = vld [vmem:[#allocation9 + $0x84] sm:$0xf]
    %v6157 = vld [vmem:[#allocation9 + $0x88] sm:$0xf]
    %v6158 = vld [vmem:[#allocation9 + $0x8c] sm:$0xf]
    %v6159 = vld [vmem:[#allocation9 + $0x90] sm:$0xf]
    %v6160 = vld [vmem:[#allocation9 + $0x94] sm:$0xf]
    %v6161 = vld [vmem:[#allocation9 + $0x98] sm:$0xf]
    %v6162 = vld [vmem:[#allocation9 + $0x9c] sm:$0xf]
    %v6163 = vld [vmem:[#allocation9 + $0xa0] sm:$0xf]
    %v6164 = vld [vmem:[#allocation9 + $0xa4] sm:$0xf]
    %v6165 = vld [vmem:[#allocation9 + $0xa8] sm:$0xf]
    %v6166 = vld [vmem:[#allocation9 + $0xac] sm:$0xf]
    %v6167 = vld [vmem:[#allocation9 + $0xb0] sm:$0xf]
    %v6168 = vld [vmem:[#allocation9 + $0xb4] sm:$0xf]
    %v6169 = vld [vmem:[#allocation9 + $0xb8] sm:$0xf]
    %v6170 = vld [vmem:[#allocation9 + $0xbc] sm:$0xf]
    %v6187 = vunpack.c.l.b16 %v6155
    %v6188 = vunpack.c.l.b16 %v6156
    %v6189 = vunpack.c.l.b16 %v6157
    %v6190 = vunpack.c.l.b16 %v6158
    %v6191 = vunpack.c.l.b16 %v6159
    %v6192 = vunpack.c.l.b16 %v6160
    %v6193 = vunpack.c.l.b16 %v6161
    %v6194 = vunpack.c.l.b16 %v6162
    %v6195 = vunpack.c.l.b16 %v6163
    %v6196 = vunpack.c.l.b16 %v6164
    %v6197 = vunpack.c.l.b16 %v6165
    %v6198 = vunpack.c.l.b16 %v6166
    %v6199 = vunpack.c.l.b16 %v6167
    %v6200 = vunpack.c.l.b16 %v6168
    %v6201 = vunpack.c.l.b16 %v6169
    %v6202 = vunpack.c.l.b16 %v6170
    %v6203 = vpack.c.b16 %v6188, %v6187
    %v6204 = vpack.c.b16 %v6190, %v6189
    %v6205 = vpack.c.b16 %v6192, %v6191
    %v6206 = vpack.c.b16 %v6194, %v6193
    %v6207 = vpack.c.b16 %v6196, %v6195
    %v6208 = vpack.c.b16 %v6198, %v6197
    %v6209 = vpack.c.b16 %v6200, %v6199
    %v6210 = vpack.c.b16 %v6202, %v6201
    %6219 = vmatprep.subr.bf16.mxu0 0
    %6220 = vmatpush1.bf16.msra.mxu0 %v6203
    %6221 = vmatprep.subr.bf16.mxu0 0
    %6222 = vmatpush1.bf16.msra.mxu0 %v6204
    %6223 = vmatprep.subr.bf16.mxu0 0
    %6224 = vmatpush1.bf16.msra.mxu0 %v6205
    %6225 = vmatprep.subr.bf16.mxu0 0
    %6226 = vmatpush1.bf16.msra.mxu0 %v6206
    %6227 = vmatprep.subr.bf16.mxu0 0
    %6228 = vmatpush1.bf16.msra.mxu0 %v6207
    %6229 = vmatprep.subr.bf16.mxu0 0
    %6230 = vmatpush1.bf16.msra.mxu0 %v6208
    %6231 = vmatprep.subr.bf16.mxu0 0
    %6232 = vmatpush1.bf16.msra.mxu0 %v6209
    %6233 = vmatprep.subr.bf16.mxu0 0
    %6234 = vmatpush1.bf16.msra.mxu0 %v6210
    %6235 = vmatprep.subr.bf16.mxu0 0
    %6236 = vmatpush1.bf16.msra.mxu0 0
    %6237 = vmatprep.subr.bf16.mxu0 0
    %6238 = vmatpush1.bf16.msra.mxu0 0
    %6239 = vmatprep.subr.bf16.mxu0 0
    %6240 = vmatpush1.bf16.msra.mxu0 0
    %6241 = vmatprep.subr.bf16.mxu0 0
    %6242 = vmatpush1.bf16.msra.mxu0 0
    %6243 = vmatprep.subr.bf16.mxu0 0
    %6244 = vmatpush1.bf16.msra.mxu0 0
    %6245 = vmatprep.subr.bf16.mxu0 0
    %6246 = vmatpush1.bf16.msra.mxu0 0
    %6247 = vmatprep.subr.bf16.mxu0 0
    %6248 = vmatpush1.bf16.msra.mxu0 0
    %6249 = vmatprep.subr.bf16.mxu0 0
    %6250 = vmatpush1.bf16.msra.mxu0 0
    %6251 = vmatprep.mubr.bf16.mxu0 0
    %6252 = vmatmul.mubr.bf16.gmra.mrb[0].mxu0 %v6153
    %v6253 = vpop.f32.mrb[0].mxu0
    %v6254 = vadd.f32 0.0, %v6253
    %v6255 = vpop.f32.mrb[0].mxu0
    %v6256 = vpop.f32.mrb[0].mxu0
    %v6257 = vadd.f32 0.0, %v6256
    %v6258 = vpop.f32.mrb[0].mxu0
    %6259 = vmatprep.mubr.bf16.mxu0 0
    %6260 = vmatmul.mubr.bf16.gmra.mrb[0].mxu0 %v6154
    %v6261 = vpop.f32.mrb[0].mxu0
    %v6262 = vadd.f32 0.0, %v6261
    %v6263 = vpop.f32.mrb[0].mxu0
    %v6264 = vpop.f32.mrb[0].mxu0
    %v6265 = vadd.f32 0.0, %v6264
    %v6266 = vpop.f32.mrb[0].mxu0
    %6267 = vdwg.mxu0
    %v6268 = vadd.f32 %v6074, %v6254
    %v6269 = vadd.f32 %v6077, %v6257
    %v6270 = vadd.f32 %v6082, %v6262
    %v6271 = vadd.f32 %v6085, %v6265
    %v6272 = vld [vmem:[#allocation7 + $0x30] sm:$0xf]
    %v6273 = vld [vmem:[#allocation7 + $0x34] sm:$0xf]
    %v6274 = vld [vmem:[#allocation7 + $0x38] sm:$0xf]
    %v6275 = vld [vmem:[#allocation7 + $0x3c] sm:$0xf]
    %v6280 = vunpack.c.l.b16 %v6272
    %v6281 = vunpack.c.l.b16 %v6273
    %v6282 = vunpack.c.l.b16 %v6274
    %v6283 = vunpack.c.l.b16 %v6275
    %v6284 = vpack.c.b16 %v6281, %v6280
    %v6285 = vpack.c.b16 %v6283, %v6282
    %6288 = vmatprep.subr.bf16.mxu0 0
    %6289 = vmatpush1.bf16.msra.mxu0 %v5720
    %6290 = vmatprep.subr.bf16.mxu0 0
    %6291 = vmatpush1.bf16.msra.mxu0 %v5721
    %6292 = vmatprep.subr.bf16.mxu0 0
    %6293 = vmatpush1.bf16.msra.mxu0 %v5722
    %6294 = vmatprep.subr.bf16.mxu0 0
    %6295 = vmatpush1.bf16.msra.mxu0 %v5723
    %6296 = vmatprep.subr.bf16.mxu0 0
    %6297 = vmatpush1.bf16.msra.mxu0 %v5724
    %6298 = vmatprep.subr.bf16.mxu0 0
    %6299 = vmatpush1.bf16.msra.mxu0 %v5725
    %6300 = vmatprep.subr.bf16.mxu0 0
    %6301 = vmatpush1.bf16.msra.mxu0 %v5726
    %6302 = vmatprep.subr.bf16.mxu0 0
    %6303 = vmatpush1.bf16.msra.mxu0 %v5727
    %6304 = vmatprep.subr.bf16.mxu0 0
    %6305 = vmatpush1.bf16.msra.mxu0 0
    %6306 = vmatprep.subr.bf16.mxu0 0
    %6307 = vmatpush1.bf16.msra.mxu0 0
    %6308 = vmatprep.subr.bf16.mxu0 0
    %6309 = vmatpush1.bf16.msra.mxu0 0
    %6310 = vmatprep.subr.bf16.mxu0 0
    %6311 = vmatpush1.bf16.msra.mxu0 0
    %6312 = vmatprep.subr.bf16.mxu0 0
    %6313 = vmatpush1.bf16.msra.mxu0 0
    %6314 = vmatprep.subr.bf16.mxu0 0
    %6315 = vmatpush1.bf16.msra.mxu0 0
    %6316 = vmatprep.subr.bf16.mxu0 0
    %6317 = vmatpush1.bf16.msra.mxu0 0
    %6318 = vmatprep.subr.bf16.mxu0 0
    %6319 = vmatpush1.bf16.msra.mxu0 0
    %6320 = vmatprep.mubr.bf16.mxu0 0
    %6321 = vmatmul.mubr.bf16.gmra.mrb[0].mxu0 %v6284
    %v6322 = vpop.f32.mrb[0].mxu0
    %v6323 = vadd.f32 0.0, %v6322
    %v6324 = vpop.f32.mrb[0].mxu0
    %v6325 = vpop.f32.mrb[0].mxu0
    %v6326 = vadd.f32 0.0, %v6325
    %v6327 = vpop.f32.mrb[0].mxu0
    %6328 = vmatprep.mubr.bf16.mxu0 0
    %6329 = vmatmul.mubr.bf16.gmra.mrb[0].mxu0 %v6285
    %v6330 = vpop.f32.mrb[0].mxu0
    %v6331 = vadd.f32 0.0, %v6330
    %v6332 = vpop.f32.mrb[0].mxu0
    %v6333 = vpop.f32.mrb[0].mxu0
    %v6334 = vadd.f32 0.0, %v6333
    %v6335 = vpop.f32.mrb[0].mxu0
    %6336 = vdwg.mxu0
    %v6337 = vpack.c.bf16 %v6326, %v6323
    %v6338 = vpack.c.bf16 %v6334, %v6331
    %v6339 = vld [vmem:[#allocation9 + $0xc0] sm:$0xf]
    %v6340 = vld [vmem:[#allocation9 + $0xc4] sm:$0xf]
    %v6341 = vld [vmem:[#allocation9 + $0xc8] sm:$0xf]
    %v6342 = vld [vmem:[#allocation9 + $0xcc] sm:$0xf]
    %v6343 = vld [vmem:[#allocation9 + $0xd0] sm:$0xf]
    %v6344 = vld [vmem:[#allocation9 + $0xd4] sm:$0xf]
    %v6345 = vld [vmem:[#allocation9 + $0xd8] sm:$0xf]
    %v6346 = vld [vmem:[#allocation9 + $0xdc] sm:$0xf]
    %v6347 = vld [vmem:[#allocation9 + $0xe0] sm:$0xf]
    %v6348 = vld [vmem:[#allocation9 + $0xe4] sm:$0xf]
    %v6349 = vld [vmem:[#allocation9 + $0xe8] sm:$0xf]
    %v6350 = vld [vmem:[#allocation9 + $0xec] sm:$0xf]
    %v6351 = vld [vmem:[#allocation9 + $0xf0] sm:$0xf]
    %v6352 = vld [vmem:[#allocation9 + $0xf4] sm:$0xf]
    %v6353 = vld [vmem:[#allocation9 + $0xf8] sm:$0xf]
    %v6354 = vld [vmem:[#allocation9 + $0xfc] sm:$0xf]
    %v6371 = vunpack.c.l.b16 %v6339
    %v6372 = vunpack.c.l.b16 %v6340
    %v6373 = vunpack.c.l.b16 %v6341
    %v6374 = vunpack.c.l.b16 %v6342
    %v6375 = vunpack.c.l.b16 %v6343
    %v6376 = vunpack.c.l.b16 %v6344
    %v6377 = vunpack.c.l.b16 %v6345
    %v6378 = vunpack.c.l.b16 %v6346
    %v6379 = vunpack.c.l.b16 %v6347
    %v6380 = vunpack.c.l.b16 %v6348
    %v6381 = vunpack.c.l.b16 %v6349
    %v6382 = vunpack.c.l.b16 %v6350
    %v6383 = vunpack.c.l.b16 %v6351
    %v6384 = vunpack.c.l.b16 %v6352
    %v6385 = vunpack.c.l.b16 %v6353
    %v6386 = vunpack.c.l.b16 %v6354
    %v6387 = vpack.c.b16 %v6372, %v6371
    %v6388 = vpack.c.b16 %v6374, %v6373
    %v6389 = vpack.c.b16 %v6376, %v6375
    %v6390 = vpack.c.b16 %v6378, %v6377
    %v6391 = vpack.c.b16 %v6380, %v6379
    %v6392 = vpack.c.b16 %v6382, %v6381
    %v6393 = vpack.c.b16 %v6384, %v6383
    %v6394 = vpack.c.b16 %v6386, %v6385
    %6403 = vmatprep.subr.bf16.mxu0 0
    %6404 = vmatpush1.bf16.msra.mxu0 %v6387
    %6405 = vmatprep.subr.bf16.mxu0 0
    %6406 = vmatpush1.bf16.msra.mxu0 %v6388
    %6407 = vmatprep.subr.bf16.mxu0 0
    %6408 = vmatpush1.bf16.msra.mxu0 %v6389
    %6409 = vmatprep.subr.bf16.mxu0 0
    %6410 = vmatpush1.bf16.msra.mxu0 %v6390
    %6411 = vmatprep.subr.bf16.mxu0 0
    %6412 = vmatpush1.bf16.msra.mxu0 %v6391
    %6413 = vmatprep.subr.bf16.mxu0 0
    %6414 = vmatpush1.bf16.msra.mxu0 %v6392
    %6415 = vmatprep.subr.bf16.mxu0 0
    %6416 = vmatpush1.bf16.msra.mxu0 %v6393
    %6417 = vmatprep.subr.bf16.mxu0 0
    %6418 = vmatpush1.bf16.msra.mxu0 %v6394
    %6419 = vmatprep.subr.bf16.mxu0 0
    %6420 = vmatpush1.bf16.msra.mxu0 0
    %6421 = vmatprep.subr.bf16.mxu0 0
    %6422 = vmatpush1.bf16.msra.mxu0 0
    %6423 = vmatprep.subr.bf16.mxu0 0
    %6424 = vmatpush1.bf16.msra.mxu0 0
    %6425 = vmatprep.subr.bf16.mxu0 0
    %6426 = vmatpush1.bf16.msra.mxu0 0
    %6427 = vmatprep.subr.bf16.mxu0 0
    %6428 = vmatpush1.bf16.msra.mxu0 0
    %6429 = vmatprep.subr.bf16.mxu0 0
    %6430 = vmatpush1.bf16.msra.mxu0 0
    %6431 = vmatprep.subr.bf16.mxu0 0
    %6432 = vmatpush1.bf16.msra.mxu0 0
    %6433 = vmatprep.subr.bf16.mxu0 0
    %6434 = vmatpush1.bf16.msra.mxu0 0
    %6435 = vmatprep.mubr.bf16.mxu0 0
    %6436 = vmatmul.mubr.bf16.gmra.mrb[0].mxu0 %v6337
    %v6437 = vpop.f32.mrb[0].mxu0
    %v6438 = vadd.f32 0.0, %v6437
    %v6439 = vpop.f32.mrb[0].mxu0
    %v6440 = vpop.f32.mrb[0].mxu0
    %v6441 = vadd.f32 0.0, %v6440
    %v6442 = vpop.f32.mrb[0].mxu0
    %6443 = vmatprep.mubr.bf16.mxu0 0
    %6444 = vmatmul.mubr.bf16.gmra.mrb[0].mxu0 %v6338
    %v6445 = vpop.f32.mrb[0].mxu0
    %v6446 = vadd.f32 0.0, %v6445
    %v6447 = vpop.f32.mrb[0].mxu0
    %v6448 = vpop.f32.mrb[0].mxu0
    %v6449 = vadd.f32 0.0, %v6448
    %v6450 = vpop.f32.mrb[0].mxu0
    %6451 = vdwg.mxu0
    %v6452 = vadd.f32 %v6268, %v6438
    %v6453 = vadd.f32 %v6269, %v6441
    %v6454 = vadd.f32 %v6270, %v6446
    %v6455 = vadd.f32 %v6271, %v6449
    %v6456 = vld [vmem:[#allocation7 + $0x40] sm:$0xf]
    %v6457 = vld [vmem:[#allocation7 + $0x44] sm:$0xf]
    %v6458 = vld [vmem:[#allocation7 + $0x48] sm:$0xf]
    %v6459 = vld [vmem:[#allocation7 + $0x4c] sm:$0xf]
    %v6464 = vunpack.c.l.b16 %v6456
    %v6465 = vunpack.c.l.b16 %v6457
    %v6466 = vunpack.c.l.b16 %v6458
    %v6467 = vunpack.c.l.b16 %v6459
    %v6468 = vpack.c.b16 %v6465, %v6464
    %v6469 = vpack.c.b16 %v6467, %v6466
    %6472 = vmatprep.subr.bf16.mxu0 0
    %6473 = vmatpush1.bf16.msra.mxu0 %v5720
    %6474 = vmatprep.subr.bf16.mxu0 0
    %6475 = vmatpush1.bf16.msra.mxu0 %v5721
    %6476 = vmatprep.subr.bf16.mxu0 0
    %6477 = vmatpush1.bf16.msra.mxu0 %v5722
    %6478 = vmatprep.subr.bf16.mxu0 0
    %6479 = vmatpush1.bf16.msra.mxu0 %v5723
    %6480 = vmatprep.subr.bf16.mxu0 0
    %6481 = vmatpush1.bf16.msra.mxu0 %v5724
    %6482 = vmatprep.subr.bf16.mxu0 0
    %6483 = vmatpush1.bf16.msra.mxu0 %v5725
    %6484 = vmatprep.subr.bf16.mxu0 0
    %6485 = vmatpush1.bf16.msra.mxu0 %v5726
    %6486 = vmatprep.subr.bf16.mxu0 0
    %6487 = vmatpush1.bf16.msra.mxu0 %v5727
    %6488 = vmatprep.subr.bf16.mxu0 0
    %6489 = vmatpush1.bf16.msra.mxu0 0
    %6490 = vmatprep.subr.bf16.mxu0 0
    %6491 = vmatpush1.bf16.msra.mxu0 0
    %6492 = vmatprep.subr.bf16.mxu0 0
    %6493 = vmatpush1.bf16.msra.mxu0 0
    %6494 = vmatprep.subr.bf16.mxu0 0
    %6495 = vmatpush1.bf16.msra.mxu0 0
    %6496 = vmatprep.subr.bf16.mxu0 0
    %6497 = vmatpush1.bf16.msra.mxu0 0
    %6498 = vmatprep.subr.bf16.mxu0 0
    %6499 = vmatpush1.bf16.msra.mxu0 0
    %6500 = vmatprep.subr.bf16.mxu0 0
    %6501 = vmatpush1.bf16.msra.mxu0 0
    %6502 = vmatprep.subr.bf16.mxu0 0
    %6503 = vmatpush1.bf16.msra.mxu0 0
    %6504 = vmatprep.mubr.bf16.mxu0 0
    %6505 = vmatmul.mubr.bf16.gmra.mrb[0].mxu0 %v6468
    %v6506 = vpop.f32.mrb[0].mxu0
    %v6507 = vadd.f32 0.0, %v6506
    %v6508 = vpop.f32.mrb[0].mxu0
    %v6509 = vpop.f32.mrb[0].mxu0
    %v6510 = vadd.f32 0.0, %v6509
    %v6511 = vpop.f32.mrb[0].mxu0
    %6512 = vmatprep.mubr.bf16.mxu0 0
    %6513 = vmatmul.mubr.bf16.gmra.mrb[0].mxu0 %v6469
    %v6514 = vpop.f32.mrb[0].mxu0
    %v6515 = vadd.f32 0.0, %v6514
    %v6516 = vpop.f32.mrb[0].mxu0
    %v6517 = vpop.f32.mrb[0].mxu0
    %v6518 = vadd.f32 0.0, %v6517
    %v6519 = vpop.f32.mrb[0].mxu0
    %6520 = vdwg.mxu0
    %v6521 = vpack.c.bf16 %v6510, %v6507
    %v6522 = vpack.c.bf16 %v6518, %v6515
    %v6523 = vld [vmem:[#allocation9 + $0x100] sm:$0xf]
    %v6524 = vld [vmem:[#allocation9 + $0x104] sm:$0xf]
    %v6525 = vld [vmem:[#allocation9 + $0x108] sm:$0xf]
    %v6526 = vld [vmem:[#allocation9 + $0x10c] sm:$0xf]
    %v6527 = vld [vmem:[#allocation9 + $0x110] sm:$0xf]
    %v6528 = vld [vmem:[#allocation9 + $0x114] sm:$0xf]
    %v6529 = vld [vmem:[#allocation9 + $0x118] sm:$0xf]
    %v6530 = vld [vmem:[#allocation9 + $0x11c] sm:$0xf]
    %v6531 = vld [vmem:[#allocation9 + $0x120] sm:$0xf]
    %v6532 = vld [vmem:[#allocation9 + $0x124] sm:$0xf]
    %v6533 = vld [vmem:[#allocation9 + $0x128] sm:$0xf]
    %v6534 = vld [vmem:[#allocation9 + $0x12c] sm:$0xf]
    %v6535 = vld [vmem:[#allocation9 + $0x130] sm:$0xf]
    %v6536 = vld [vmem:[#allocation9 + $0x134] sm:$0xf]
    %v6537 = vld [vmem:[#allocation9 + $0x138] sm:$0xf]
    %v6538 = vld [vmem:[#allocation9 + $0x13c] sm:$0xf]
    %v6555 = vunpack.c.l.b16 %v6523
    %v6556 = vunpack.c.l.b16 %v6524
    %v6557 = vunpack.c.l.b16 %v6525
    %v6558 = vunpack.c.l.b16 %v6526
    %v6559 = vunpack.c.l.b16 %v6527
    %v6560 = vunpack.c.l.b16 %v6528
    %v6561 = vunpack.c.l.b16 %v6529
    %v6562 = vunpack.c.l.b16 %v6530
    %v6563 = vunpack.c.l.b16 %v6531
    %v6564 = vunpack.c.l.b16 %v6532
    %v6565 = vunpack.c.l.b16 %v6533
    %v6566 = vunpack.c.l.b16 %v6534
    %v6567 = vunpack.c.l.b16 %v6535
    %v6568 = vunpack.c.l.b16 %v6536
    %v6569 = vunpack.c.l.b16 %v6537
    %v6570 = vunpack.c.l.b16 %v6538
    %v6571 = vpack.c.b16 %v6556, %v6555
    %v6572 = vpack.c.b16 %v6558, %v6557
    %v6573 = vpack.c.b16 %v6560, %v6559
    %v6574 = vpack.c.b16 %v6562, %v6561
    %v6575 = vpack.c.b16 %v6564, %v6563
    %v6576 = vpack.c.b16 %v6566, %v6565
    %v6577 = vpack.c.b16 %v6568, %v6567
    %v6578 = vpack.c.b16 %v6570, %v6569
    %6587 = vmatprep.subr.bf16.mxu0 0
    %6588 = vmatpush1.bf16.msra.mxu0 %v6571
    %6589 = vmatprep.subr.bf16.mxu0 0
    %6590 = vmatpush1.bf16.msra.mxu0 %v6572
    %6591 = vmatprep.subr.bf16.mxu0 0
    %6592 = vmatpush1.bf16.msra.mxu0 %v6573
    %6593 = vmatprep.subr.bf16.mxu0 0
    %6594 = vmatpush1.bf16.msra.mxu0 %v6574
    %6595 = vmatprep.subr.bf16.mxu0 0
    %6596 = vmatpush1.bf16.msra.mxu0 %v6575
    %6597 = vmatprep.subr.bf16.mxu0 0
    %6598 = vmatpush1.bf16.msra.mxu0 %v6576
    %6599 = vmatprep.subr.bf16.mxu0 0
    %6600 = vmatpush1.bf16.msra.mxu0 %v6577
    %6601 = vmatprep.subr.bf16.mxu0 0
    %6602 = vmatpush1.bf16.msra.mxu0 %v6578
    %6603 = vmatprep.subr.bf16.mxu0 0
    %6604 = vmatpush1.bf16.msra.mxu0 0
    %6605 = vmatprep.subr.bf16.mxu0 0
    %6606 = vmatpush1.bf16.msra.mxu0 0
    %6607 = vmatprep.subr.bf16.mxu0 0
    %6608 = vmatpush1.bf16.msra.mxu0 0
    %6609 = vmatprep.subr.bf16.mxu0 0
    %6610 = vmatpush1.bf16.msra.mxu0 0
    %6611 = vmatprep.subr.bf16.mxu0 0
    %6612 = vmatpush1.bf16.msra.mxu0 0
    %6613 = vmatprep.subr.bf16.mxu0 0
    %6614 = vmatpush1.bf16.msra.mxu0 0
    %6615 = vmatprep.subr.bf16.mxu0 0
    %6616 = vmatpush1.bf16.msra.mxu0 0
    %6617 = vmatprep.subr.bf16.mxu0 0
    %6618 = vmatpush1.bf16.msra.mxu0 0
    %6619 = vmatprep.mubr.bf16.mxu0 0
    %6620 = vmatmul.mubr.bf16.gmra.mrb[0].mxu0 %v6521
    %v6621 = vpop.f32.mrb[0].mxu0
    %v6622 = vadd.f32 0.0, %v6621
    %v6623 = vpop.f32.mrb[0].mxu0
    %v6624 = vpop.f32.mrb[0].mxu0
    %v6625 = vadd.f32 0.0, %v6624
    %v6626 = vpop.f32.mrb[0].mxu0
    %6627 = vmatprep.mubr.bf16.mxu0 0
    %6628 = vmatmul.mubr.bf16.gmra.mrb[0].mxu0 %v6522
    %v6629 = vpop.f32.mrb[0].mxu0
    %v6630 = vadd.f32 0.0, %v6629
    %v6631 = vpop.f32.mrb[0].mxu0
    %v6632 = vpop.f32.mrb[0].mxu0
    %v6633 = vadd.f32 0.0, %v6632
    %v6634 = vpop.f32.mrb[0].mxu0
    %6635 = vdwg.mxu0
    %v6636 = vadd.f32 %v6452, %v6622
    %v6637 = vadd.f32 %v6453, %v6625
    %v6638 = vadd.f32 %v6454, %v6630
    %v6639 = vadd.f32 %v6455, %v6633
    %v6640 = vld [vmem:[#allocation7 + $0x50] sm:$0xf]
    %v6641 = vld [vmem:[#allocation7 + $0x54] sm:$0xf]
    %v6642 = vld [vmem:[#allocation7 + $0x58] sm:$0xf]
    %v6643 = vld [vmem:[#allocation7 + $0x5c] sm:$0xf]
    %v6648 = vunpack.c.l.b16 %v6640
    %v6649 = vunpack.c.l.b16 %v6641
    %v6650 = vunpack.c.l.b16 %v6642
    %v6651 = vunpack.c.l.b16 %v6643
    %v6652 = vpack.c.b16 %v6649, %v6648
    %v6653 = vpack.c.b16 %v6651, %v6650
    %6656 = vmatprep.subr.bf16.mxu0 0
    %6657 = vmatpush1.bf16.msra.mxu0 %v5720
    %6658 = vmatprep.subr.bf16.mxu0 0
    %6659 = vmatpush1.bf16.msra.mxu0 %v5721
    %6660 = vmatprep.subr.bf16.mxu0 0
    %6661 = vmatpush1.bf16.msra.mxu0 %v5722
    %6662 = vmatprep.subr.bf16.mxu0 0
    %6663 = vmatpush1.bf16.msra.mxu0 %v5723
    %6664 = vmatprep.subr.bf16.mxu0 0
    %6665 = vmatpush1.bf16.msra.mxu0 %v5724
    %6666 = vmatprep.subr.bf16.mxu0 0
    %6667 = vmatpush1.bf16.msra.mxu0 %v5725
    %6668 = vmatprep.subr.bf16.mxu0 0
    %6669 = vmatpush1.bf16.msra.mxu0 %v5726
    %6670 = vmatprep.subr.bf16.mxu0 0
    %6671 = vmatpush1.bf16.msra.mxu0 %v5727
    %6672 = vmatprep.subr.bf16.mxu0 0
    %6673 = vmatpush1.bf16.msra.mxu0 0
    %6674 = vmatprep.subr.bf16.mxu0 0
    %6675 = vmatpush1.bf16.msra.mxu0 0
    %6676 = vmatprep.subr.bf16.mxu0 0
    %6677 = vmatpush1.bf16.msra.mxu0 0
    %6678 = vmatprep.subr.bf16.mxu0 0
    %6679 = vmatpush1.bf16.msra.mxu0 0
    %6680 = vmatprep.subr.bf16.mxu0 0
    %6681 = vmatpush1.bf16.msra.mxu0 0
    %6682 = vmatprep.subr.bf16.mxu0 0
    %6683 = vmatpush1.bf16.msra.mxu0 0
    %6684 = vmatprep.subr.bf16.mxu0 0
    %6685 = vmatpush1.bf16.msra.mxu0 0
    %6686 = vmatprep.subr.bf16.mxu0 0
    %6687 = vmatpush1.bf16.msra.mxu0 0
    %6688 = vmatprep.mubr.bf16.mxu0 0
    %6689 = vmatmul.mubr.bf16.gmra.mrb[0].mxu0 %v6652
    %v6690 = vpop.f32.mrb[0].mxu0
    %v6691 = vadd.f32 0.0, %v6690
    %v6692 = vpop.f32.mrb[0].mxu0
    %v6693 = vpop.f32.mrb[0].mxu0
    %v6694 = vadd.f32 0.0, %v6693
    %v6695 = vpop.f32.mrb[0].mxu0
    %6696 = vmatprep.mubr.bf16.mxu0 0
    %6697 = vmatmul.mubr.bf16.gmra.mrb[0].mxu0 %v6653
    %v6698 = vpop.f32.mrb[0].mxu0
    %v6699 = vadd.f32 0.0, %v6698
    %v6700 = vpop.f32.mrb[0].mxu0
    %v6701 = vpop.f32.mrb[0].mxu0
    %v6702 = vadd.f32 0.0, %v6701
    %v6703 = vpop.f32.mrb[0].mxu0
    %6704 = vdwg.mxu0
    %v6705 = vpack.c.bf16 %v6694, %v6691
    %v6706 = vpack.c.bf16 %v6702, %v6699
    %v6707 = vld [vmem:[#allocation9 + $0x140] sm:$0xf]
    %v6708 = vld [vmem:[#allocation9 + $0x144] sm:$0xf]
    %v6709 = vld [vmem:[#allocation9 + $0x148] sm:$0xf]
    %v6710 = vld [vmem:[#allocation9 + $0x14c] sm:$0xf]
    %v6711 = vld [vmem:[#allocation9 + $0x150] sm:$0xf]
    %v6712 = vld [vmem:[#allocation9 + $0x154] sm:$0xf]
    %v6713 = vld [vmem:[#allocation9 + $0x158] sm:$0xf]
    %v6714 = vld [vmem:[#allocation9 + $0x15c] sm:$0xf]
    %v6715 = vld [vmem:[#allocation9 + $0x160] sm:$0xf]
    %v6716 = vld [vmem:[#allocation9 + $0x164] sm:$0xf]
    %v6717 = vld [vmem:[#allocation9 + $0x168] sm:$0xf]
    %v6718 = vld [vmem:[#allocation9 + $0x16c] sm:$0xf]
    %v6719 = vld [vmem:[#allocation9 + $0x170] sm:$0xf]
    %v6720 = vld [vmem:[#allocation9 + $0x174] sm:$0xf]
    %v6721 = vld [vmem:[#allocation9 + $0x178] sm:$0xf]
    %v6722 = vld [vmem:[#allocation9 + $0x17c] sm:$0xf]
    %v6739 = vunpack.c.l.b16 %v6707
    %v6740 = vunpack.c.l.b16 %v6708
    %v6741 = vunpack.c.l.b16 %v6709
    %v6742 = vunpack.c.l.b16 %v6710
    %v6743 = vunpack.c.l.b16 %v6711
    %v6744 = vunpack.c.l.b16 %v6712
    %v6745 = vunpack.c.l.b16 %v6713
    %v6746 = vunpack.c.l.b16 %v6714
    %v6747 = vunpack.c.l.b16 %v6715
    %v6748 = vunpack.c.l.b16 %v6716
    %v6749 = vunpack.c.l.b16 %v6717
    %v6750 = vunpack.c.l.b16 %v6718
    %v6751 = vunpack.c.l.b16 %v6719
    %v6752 = vunpack.c.l.b16 %v6720
    %v6753 = vunpack.c.l.b16 %v6721
    %v6754 = vunpack.c.l.b16 %v6722
    %v6755 = vpack.c.b16 %v6740, %v6739
    %v6756 = vpack.c.b16 %v6742, %v6741
    %v6757 = vpack.c.b16 %v6744, %v6743
    %v6758 = vpack.c.b16 %v6746, %v6745
    %v6759 = vpack.c.b16 %v6748, %v6747
    %v6760 = vpack.c.b16 %v6750, %v6749
    %v6761 = vpack.c.b16 %v6752, %v6751
    %v6762 = vpack.c.b16 %v6754, %v6753
    %6771 = vmatprep.subr.bf16.mxu0 0
    %6772 = vmatpush1.bf16.msra.mxu0 %v6755
    %6773 = vmatprep.subr.bf16.mxu0 0
    %6774 = vmatpush1.bf16.msra.mxu0 %v6756
    %6775 = vmatprep.subr.bf16.mxu0 0
    %6776 = vmatpush1.bf16.msra.mxu0 %v6757
    %6777 = vmatprep.subr.bf16.mxu0 0
    %6778 = vmatpush1.bf16.msra.mxu0 %v6758
    %6779 = vmatprep.subr.bf16.mxu0 0
    %6780 = vmatpush1.bf16.msra.mxu0 %v6759
    %6781 = vmatprep.subr.bf16.mxu0 0
    %6782 = vmatpush1.bf16.msra.mxu0 %v6760
    %6783 = vmatprep.subr.bf16.mxu0 0
    %6784 = vmatpush1.bf16.msra.mxu0 %v6761
    %6785 = vmatprep.subr.bf16.mxu0 0
    %6786 = vmatpush1.bf16.msra.mxu0 %v6762
    %6787 = vmatprep.subr.bf16.mxu0 0
    %6788 = vmatpush1.bf16.msra.mxu0 0
    %6789 = vmatprep.subr.bf16.mxu0 0
    %6790 = vmatpush1.bf16.msra.mxu0 0
    %6791 = vmatprep.subr.bf16.mxu0 0
    %6792 = vmatpush1.bf16.msra.mxu0 0
    %6793 = vmatprep.subr.bf16.mxu0 0
    %6794 = vmatpush1.bf16.msra.mxu0 0
    %6795 = vmatprep.subr.bf16.mxu0 0
    %6796 = vmatpush1.bf16.msra.mxu0 0
    %6797 = vmatprep.subr.bf16.mxu0 0
    %6798 = vmatpush1.bf16.msra.mxu0 0
    %6799 = vmatprep.subr.bf16.mxu0 0
    %6800 = vmatpush1.bf16.msra.mxu0 0
    %6801 = vmatprep.subr.bf16.mxu0 0
    %6802 = vmatpush1.bf16.msra.mxu0 0
    %6803 = vmatprep.mubr.bf16.mxu0 0
    %6804 = vmatmul.mubr.bf16.gmra.mrb[0].mxu0 %v6705
    %v6805 = vpop.f32.mrb[0].mxu0
    %v6806 = vadd.f32 0.0, %v6805
    %v6807 = vpop.f32.mrb[0].mxu0
    %v6808 = vpop.f32.mrb[0].mxu0
    %v6809 = vadd.f32 0.0, %v6808
    %v6810 = vpop.f32.mrb[0].mxu0
    %6811 = vmatprep.mubr.bf16.mxu0 0
    %6812 = vmatmul.mubr.bf16.gmra.mrb[0].mxu0 %v6706
    %v6813 = vpop.f32.mrb[0].mxu0
    %v6814 = vadd.f32 0.0, %v6813
    %v6815 = vpop.f32.mrb[0].mxu0
    %v6816 = vpop.f32.mrb[0].mxu0
    %v6817 = vadd.f32 0.0, %v6816
    %v6818 = vpop.f32.mrb[0].mxu0
    %6819 = vdwg.mxu0
    %v6820 = vadd.f32 %v6636, %v6806
    %v6821 = vadd.f32 %v6637, %v6809
    %v6822 = vadd.f32 %v6638, %v6814
    %v6823 = vadd.f32 %v6639, %v6817
    %v6824 = vld [vmem:[#allocation7 + $0x60] sm:$0xf]
    %v6825 = vld [vmem:[#allocation7 + $0x64] sm:$0xf]
    %v6826 = vld [vmem:[#allocation7 + $0x68] sm:$0xf]
    %v6827 = vld [vmem:[#allocation7 + $0x6c] sm:$0xf]
    %v6832 = vunpack.c.l.b16 %v6824
    %v6833 = vunpack.c.l.b16 %v6825
    %v6834 = vunpack.c.l.b16 %v6826
    %v6835 = vunpack.c.l.b16 %v6827
    %v6836 = vpack.c.b16 %v6833, %v6832
    %v6837 = vpack.c.b16 %v6835, %v6834
    %6840 = vmatprep.subr.bf16.mxu0 0
    %6841 = vmatpush1.bf16.msra.mxu0 %v5720
    %6842 = vmatprep.subr.bf16.mxu0 0
    %6843 = vmatpush1.bf16.msra.mxu0 %v5721
    %6844 = vmatprep.subr.bf16.mxu0 0
    %6845 = vmatpush1.bf16.msra.mxu0 %v5722
    %6846 = vmatprep.subr.bf16.mxu0 0
    %6847 = vmatpush1.bf16.msra.mxu0 %v5723
    %6848 = vmatprep.subr.bf16.mxu0 0
    %6849 = vmatpush1.bf16.msra.mxu0 %v5724
    %6850 = vmatprep.subr.bf16.mxu0 0
    %6851 = vmatpush1.bf16.msra.mxu0 %v5725
    %6852 = vmatprep.subr.bf16.mxu0 0
    %6853 = vmatpush1.bf16.msra.mxu0 %v5726
    %6854 = vmatprep.subr.bf16.mxu0 0
    %6855 = vmatpush1.bf16.msra.mxu0 %v5727
    %6856 = vmatprep.subr.bf16.mxu0 0
    %6857 = vmatpush1.bf16.msra.mxu0 0
    %6858 = vmatprep.subr.bf16.mxu0 0
    %6859 = vmatpush1.bf16.msra.mxu0 0
    %6860 = vmatprep.subr.bf16.mxu0 0
    %6861 = vmatpush1.bf16.msra.mxu0 0
    %6862 = vmatprep.subr.bf16.mxu0 0
    %6863 = vmatpush1.bf16.msra.mxu0 0
    %6864 = vmatprep.subr.bf16.mxu0 0
    %6865 = vmatpush1.bf16.msra.mxu0 0
    %6866 = vmatprep.subr.bf16.mxu0 0
    %6867 = vmatpush1.bf16.msra.mxu0 0
    %6868 = vmatprep.subr.bf16.mxu0 0
    %6869 = vmatpush1.bf16.msra.mxu0 0
    %6870 = vmatprep.subr.bf16.mxu0 0
    %6871 = vmatpush1.bf16.msra.mxu0 0
    %6872 = vmatprep.mubr.bf16.mxu0 0
    %6873 = vmatmul.mubr.bf16.gmra.mrb[0].mxu0 %v6836
    %v6874 = vpop.f32.mrb[0].mxu0
    %v6875 = vadd.f32 0.0, %v6874
    %v6876 = vpop.f32.mrb[0].mxu0
    %v6877 = vpop.f32.mrb[0].mxu0
    %v6878 = vadd.f32 0.0, %v6877
    %v6879 = vpop.f32.mrb[0].mxu0
    %6880 = vmatprep.mubr.bf16.mxu0 0
    %6881 = vmatmul.mubr.bf16.gmra.mrb[0].mxu0 %v6837
    %v6882 = vpop.f32.mrb[0].mxu0
    %v6883 = vadd.f32 0.0, %v6882
    %v6884 = vpop.f32.mrb[0].mxu0
    %v6885 = vpop.f32.mrb[0].mxu0
    %v6886 = vadd.f32 0.0, %v6885
    %v6887 = vpop.f32.mrb[0].mxu0
    %6888 = vdwg.mxu0
    %v6889 = vpack.c.bf16 %v6878, %v6875
    %v6890 = vpack.c.bf16 %v6886, %v6883
    %v6891 = vld [vmem:[#allocation9 + $0x180] sm:$0xf]
    %v6892 = vld [vmem:[#allocation9 + $0x184] sm:$0xf]
    %v6893 = vld [vmem:[#allocation9 + $0x188] sm:$0xf]
    %v6894 = vld [vmem:[#allocation9 + $0x18c] sm:$0xf]
    %v6895 = vld [vmem:[#allocation9 + $0x190] sm:$0xf]
    %v6896 = vld [vmem:[#allocation9 + $0x194] sm:$0xf]
    %v6897 = vld [vmem:[#allocation9 + $0x198] sm:$0xf]
    %v6898 = vld [vmem:[#allocation9 + $0x19c] sm:$0xf]
    %v6899 = vld [vmem:[#allocation9 + $0x1a0] sm:$0xf]
    %v6900 = vld [vmem:[#allocation9 + $0x1a4] sm:$0xf]
    %v6901 = vld [vmem:[#allocation9 + $0x1a8] sm:$0xf]
    %v6902 = vld [vmem:[#allocation9 + $0x1ac] sm:$0xf]
    %v6903 = vld [vmem:[#allocation9 + $0x1b0] sm:$0xf]
    %v6904 = vld [vmem:[#allocation9 + $0x1b4] sm:$0xf]
    %v6905 = vld [vmem:[#allocation9 + $0x1b8] sm:$0xf]
    %v6906 = vld [vmem:[#allocation9 + $0x1bc] sm:$0xf]
    %v6923 = vunpack.c.l.b16 %v6891
    %v6924 = vunpack.c.l.b16 %v6892
    %v6925 = vunpack.c.l.b16 %v6893
    %v6926 = vunpack.c.l.b16 %v6894
    %v6927 = vunpack.c.l.b16 %v6895
    %v6928 = vunpack.c.l.b16 %v6896
    %v6929 = vunpack.c.l.b16 %v6897
    %v6930 = vunpack.c.l.b16 %v6898
    %v6931 = vunpack.c.l.b16 %v6899
    %v6932 = vunpack.c.l.b16 %v6900
    %v6933 = vunpack.c.l.b16 %v6901
    %v6934 = vunpack.c.l.b16 %v6902
    %v6935 = vunpack.c.l.b16 %v6903
    %v6936 = vunpack.c.l.b16 %v6904
    %v6937 = vunpack.c.l.b16 %v6905
    %v6938 = vunpack.c.l.b16 %v6906
    %v6939 = vpack.c.b16 %v6924, %v6923
    %v6940 = vpack.c.b16 %v6926, %v6925
    %v6941 = vpack.c.b16 %v6928, %v6927
    %v6942 = vpack.c.b16 %v6930, %v6929
    %v6943 = vpack.c.b16 %v6932, %v6931
    %v6944 = vpack.c.b16 %v6934, %v6933
    %v6945 = vpack.c.b16 %v6936, %v6935
    %v6946 = vpack.c.b16 %v6938, %v6937
    %6955 = vmatprep.subr.bf16.mxu0 0
    %6956 = vmatpush1.bf16.msra.mxu0 %v6939
    %6957 = vmatprep.subr.bf16.mxu0 0
    %6958 = vmatpush1.bf16.msra.mxu0 %v6940
    %6959 = vmatprep.subr.bf16.mxu0 0
    %6960 = vmatpush1.bf16.msra.mxu0 %v6941
    %6961 = vmatprep.subr.bf16.mxu0 0
    %6962 = vmatpush1.bf16.msra.mxu0 %v6942
    %6963 = vmatprep.subr.bf16.mxu0 0
    %6964 = vmatpush1.bf16.msra.mxu0 %v6943
    %6965 = vmatprep.subr.bf16.mxu0 0
    %6966 = vmatpush1.bf16.msra.mxu0 %v6944
    %6967 = vmatprep.subr.bf16.mxu0 0
    %6968 = vmatpush1.bf16.msra.mxu0 %v6945
    %6969 = vmatprep.subr.bf16.mxu0 0
    %6970 = vmatpush1.bf16.msra.mxu0 %v6946
    %6971 = vmatprep.subr.bf16.mxu0 0
    %6972 = vmatpush1.bf16.msra.mxu0 0
    %6973 = vmatprep.subr.bf16.mxu0 0
    %6974 = vmatpush1.bf16.msra.mxu0 0
    %6975 = vmatprep.subr.bf16.mxu0 0
    %6976 = vmatpush1.bf16.msra.mxu0 0
    %6977 = vmatprep.subr.bf16.mxu0 0
    %6978 = vmatpush1.bf16.msra.mxu0 0
    %6979 = vmatprep.subr.bf16.mxu0 0
    %6980 = vmatpush1.bf16.msra.mxu0 0
    %6981 = vmatprep.subr.bf16.mxu0 0
    %6982 = vmatpush1.bf16.msra.mxu0 0
    %6983 = vmatprep.subr.bf16.mxu0 0
    %6984 = vmatpush1.bf16.msra.mxu0 0
    %6985 = vmatprep.subr.bf16.mxu0 0
    %6986 = vmatpush1.bf16.msra.mxu0 0
    %6987 = vmatprep.mubr.bf16.mxu0 0
    %6988 = vmatmul.mubr.bf16.gmra.mrb[0].mxu0 %v6889
    %v6989 = vpop.f32.mrb[0].mxu0
    %v6990 = vadd.f32 0.0, %v6989
    %v6991 = vpop.f32.mrb[0].mxu0
    %v6992 = vpop.f32.mrb[0].mxu0
    %v6993 = vadd.f32 0.0, %v6992
    %v6994 = vpop.f32.mrb[0].mxu0
    %6995 = vmatprep.mubr.bf16.mxu0 0
    %6996 = vmatmul.mubr.bf16.gmra.mrb[0].mxu0 %v6890
    %v6997 = vpop.f32.mrb[0].mxu0
    %v6998 = vadd.f32 0.0, %v6997
    %v6999 = vpop.f32.mrb[0].mxu0
    %v7000 = vpop.f32.mrb[0].mxu0
    %v7001 = vadd.f32 0.0, %v7000
    %v7002 = vpop.f32.mrb[0].mxu0
    %7003 = vdwg.mxu0
    %v7004 = vadd.f32 %v6820, %v6990
    %v7005 = vadd.f32 %v6821, %v6993
    %v7006 = vadd.f32 %v6822, %v6998
    %v7007 = vadd.f32 %v6823, %v7001
    %v7008 = vld [vmem:[#allocation7 + $0x70] sm:$0xf]
    %v7009 = vld [vmem:[#allocation7 + $0x74] sm:$0xf]
    %v7010 = vld [vmem:[#allocation7 + $0x78] sm:$0xf]
    %v7011 = vld [vmem:[#allocation7 + $0x7c] sm:$0xf]
    %v7016 = vunpack.c.l.b16 %v7008
    %v7017 = vunpack.c.l.b16 %v7009
    %v7018 = vunpack.c.l.b16 %v7010
    %v7019 = vunpack.c.l.b16 %v7011
    %v7020 = vpack.c.b16 %v7017, %v7016
    %v7021 = vpack.c.b16 %v7019, %v7018
    %7024 = vmatprep.subr.bf16.mxu0 0
    %7025 = vmatpush1.bf16.msra.mxu0 %v5720
    %7026 = vmatprep.subr.bf16.mxu0 0
    %7027 = vmatpush1.bf16.msra.mxu0 %v5721
    %7028 = vmatprep.subr.bf16.mxu0 0
    %7029 = vmatpush1.bf16.msra.mxu0 %v5722
    %7030 = vmatprep.subr.bf16.mxu0 0
    %7031 = vmatpush1.bf16.msra.mxu0 %v5723
    %7032 = vmatprep.subr.bf16.mxu0 0
    %7033 = vmatpush1.bf16.msra.mxu0 %v5724
    %7034 = vmatprep.subr.bf16.mxu0 0
    %7035 = vmatpush1.bf16.msra.mxu0 %v5725
    %7036 = vmatprep.subr.bf16.mxu0 0
    %7037 = vmatpush1.bf16.msra.mxu0 %v5726
    %7038 = vmatprep.subr.bf16.mxu0 0
    %7039 = vmatpush1.bf16.msra.mxu0 %v5727
    %7040 = vmatprep.subr.bf16.mxu0 0
    %7041 = vmatpush1.bf16.msra.mxu0 0
    %7042 = vmatprep.subr.bf16.mxu0 0
    %7043 = vmatpush1.bf16.msra.mxu0 0
    %7044 = vmatprep.subr.bf16.mxu0 0
    %7045 = vmatpush1.bf16.msra.mxu0 0
    %7046 = vmatprep.subr.bf16.mxu0 0
    %7047 = vmatpush1.bf16.msra.mxu0 0
    %7048 = vmatprep.subr.bf16.mxu0 0
    %7049 = vmatpush1.bf16.msra.mxu0 0
    %7050 = vmatprep.subr.bf16.mxu0 0
    %7051 = vmatpush1.bf16.msra.mxu0 0
    %7052 = vmatprep.subr.bf16.mxu0 0
    %7053 = vmatpush1.bf16.msra.mxu0 0
    %7054 = vmatprep.subr.bf16.mxu0 0
    %7055 = vmatpush1.bf16.msra.mxu0 0
    %7056 = vmatprep.mubr.bf16.mxu0 0
    %7057 = vmatmul.mubr.bf16.gmra.mrb[0].mxu0 %v7020
    %v7058 = vpop.f32.mrb[0].mxu0
    %v7059 = vadd.f32 0.0, %v7058
    %v7060 = vpop.f32.mrb[0].mxu0
    %v7061 = vpop.f32.mrb[0].mxu0
    %v7062 = vadd.f32 0.0, %v7061
    %v7063 = vpop.f32.mrb[0].mxu0
    %7064 = vmatprep.mubr.bf16.mxu0 0
    %7065 = vmatmul.mubr.bf16.gmra.mrb[0].mxu0 %v7021
    %v7066 = vpop.f32.mrb[0].mxu0
    %v7067 = vadd.f32 0.0, %v7066
    %v7068 = vpop.f32.mrb[0].mxu0
    %v7069 = vpop.f32.mrb[0].mxu0
    %v7070 = vadd.f32 0.0, %v7069
    %v7071 = vpop.f32.mrb[0].mxu0
    %7072 = vdwg.mxu0
    %v7073 = vpack.c.bf16 %v7062, %v7059
    %v7074 = vpack.c.bf16 %v7070, %v7067
    %v7075 = vld [vmem:[#allocation9 + $0x1c0] sm:$0xf]
    %v7076 = vld [vmem:[#allocation9 + $0x1c4] sm:$0xf]
    %v7077 = vld [vmem:[#allocation9 + $0x1c8] sm:$0xf]
    %v7078 = vld [vmem:[#allocation9 + $0x1cc] sm:$0xf]
    %v7079 = vld [vmem:[#allocation9 + $0x1d0] sm:$0xf]
    %v7080 = vld [vmem:[#allocation9 + $0x1d4] sm:$0xf]
    %v7081 = vld [vmem:[#allocation9 + $0x1d8] sm:$0xf]
    %v7082 = vld [vmem:[#allocation9 + $0x1dc] sm:$0xf]
    %v7083 = vld [vmem:[#allocation9 + $0x1e0] sm:$0xf]
    %v7084 = vld [vmem:[#allocation9 + $0x1e4] sm:$0xf]
    %v7085 = vld [vmem:[#allocation9 + $0x1e8] sm:$0xf]
    %v7086 = vld [vmem:[#allocation9 + $0x1ec] sm:$0xf]
    %v7087 = vld [vmem:[#allocation9 + $0x1f0] sm:$0xf]
    %v7088 = vld [vmem:[#allocation9 + $0x1f4] sm:$0xf]
    %v7089 = vld [vmem:[#allocation9 + $0x1f8] sm:$0xf]
    %v7090 = vld [vmem:[#allocation9 + $0x1fc] sm:$0xf]
    %v7107 = vunpack.c.l.b16 %v7075
    %v7108 = vunpack.c.l.b16 %v7076
    %v7109 = vunpack.c.l.b16 %v7077
    %v7110 = vunpack.c.l.b16 %v7078
    %v7111 = vunpack.c.l.b16 %v7079
    %v7112 = vunpack.c.l.b16 %v7080
    %v7113 = vunpack.c.l.b16 %v7081
    %v7114 = vunpack.c.l.b16 %v7082
    %v7115 = vunpack.c.l.b16 %v7083
    %v7116 = vunpack.c.l.b16 %v7084
    %v7117 = vunpack.c.l.b16 %v7085
    %v7118 = vunpack.c.l.b16 %v7086
    %v7119 = vunpack.c.l.b16 %v7087
    %v7120 = vunpack.c.l.b16 %v7088
    %v7121 = vunpack.c.l.b16 %v7089
    %v7122 = vunpack.c.l.b16 %v7090
    %v7123 = vpack.c.b16 %v7108, %v7107
    %v7124 = vpack.c.b16 %v7110, %v7109
    %v7125 = vpack.c.b16 %v7112, %v7111
    %v7126 = vpack.c.b16 %v7114, %v7113
    %v7127 = vpack.c.b16 %v7116, %v7115
    %v7128 = vpack.c.b16 %v7118, %v7117
    %v7129 = vpack.c.b16 %v7120, %v7119
    %v7130 = vpack.c.b16 %v7122, %v7121
    %7139 = vmatprep.subr.bf16.mxu0 0
    %7140 = vmatpush1.bf16.msra.mxu0 %v7123
    %7141 = vmatprep.subr.bf16.mxu0 0
    %7142 = vmatpush1.bf16.msra.mxu0 %v7124
    %7143 = vmatprep.subr.bf16.mxu0 0
    %7144 = vmatpush1.bf16.msra.mxu0 %v7125
    %7145 = vmatprep.subr.bf16.mxu0 0
    %7146 = vmatpush1.bf16.msra.mxu0 %v7126
    %7147 = vmatprep.subr.bf16.mxu0 0
    %7148 = vmatpush1.bf16.msra.mxu0 %v7127
    %7149 = vmatprep.subr.bf16.mxu0 0
    %7150 = vmatpush1.bf16.msra.mxu0 %v7128
    %7151 = vmatprep.subr.bf16.mxu0 0
    %7152 = vmatpush1.bf16.msra.mxu0 %v7129
    %7153 = vmatprep.subr.bf16.mxu0 0
    %7154 = vmatpush1.bf16.msra.mxu0 %v7130
    %7155 = vmatprep.subr.bf16.mxu0 0
    %7156 = vmatpush1.bf16.msra.mxu0 0
    %7157 = vmatprep.subr.bf16.mxu0 0
    %7158 = vmatpush1.bf16.msra.mxu0 0
    %7159 = vmatprep.subr.bf16.mxu0 0
    %7160 = vmatpush1.bf16.msra.mxu0 0
    %7161 = vmatprep.subr.bf16.mxu0 0
    %7162 = vmatpush1.bf16.msra.mxu0 0
    %7163 = vmatprep.subr.bf16.mxu0 0
    %7164 = vmatpush1.bf16.msra.mxu0 0
    %7165 = vmatprep.subr.bf16.mxu0 0
    %7166 = vmatpush1.bf16.msra.mxu0 0
    %7167 = vmatprep.subr.bf16.mxu0 0
    %7168 = vmatpush1.bf16.msra.mxu0 0
    %7169 = vmatprep.subr.bf16.mxu0 0
    %7170 = vmatpush1.bf16.msra.mxu0 0
    %7171 = vmatprep.mubr.bf16.mxu0 0
    %7172 = vmatmul.mubr.bf16.gmra.mrb[0].mxu0 %v7073
    %v7173 = vpop.f32.mrb[0].mxu0
    %v7174 = vadd.f32 0.0, %v7173
    %v7175 = vpop.f32.mrb[0].mxu0
    %v7176 = vpop.f32.mrb[0].mxu0
    %v7177 = vadd.f32 0.0, %v7176
    %v7178 = vpop.f32.mrb[0].mxu0
    %7179 = vmatprep.mubr.bf16.mxu0 0
    %7180 = vmatmul.mubr.bf16.gmra.mrb[0].mxu0 %v7074
    %v7181 = vpop.f32.mrb[0].mxu0
    %v7182 = vadd.f32 0.0, %v7181
    %v7183 = vpop.f32.mrb[0].mxu0
    %v7184 = vpop.f32.mrb[0].mxu0
    %v7185 = vadd.f32 0.0, %v7184
    %v7186 = vpop.f32.mrb[0].mxu0
    %7187 = vdwg.mxu0
    %v7188 = vadd.f32 %v7004, %v7174
    %v7189 = vadd.f32 %v7005, %v7177
    %v7190 = vadd.f32 %v7006, %v7182
    %v7191 = vadd.f32 %v7007, %v7185
    %v7192 = vld [vmem:[#allocation7 + $0x80] sm:$0xf]
    %v7193 = vld [vmem:[#allocation7 + $0x84] sm:$0xf]
    %v7194 = vld [vmem:[#allocation7 + $0x88] sm:$0xf]
    %v7195 = vld [vmem:[#allocation7 + $0x8c] sm:$0xf]
    %v7200 = vunpack.c.l.b16 %v7192
    %v7201 = vunpack.c.l.b16 %v7193
    %v7202 = vunpack.c.l.b16 %v7194
    %v7203 = vunpack.c.l.b16 %v7195
    %v7204 = vpack.c.b16 %v7201, %v7200
    %v7205 = vpack.c.b16 %v7203, %v7202
    %7208 = vmatprep.subr.bf16.mxu0 0
    %7209 = vmatpush1.bf16.msra.mxu0 %v5720
    %7210 = vmatprep.subr.bf16.mxu0 0
    %7211 = vmatpush1.bf16.msra.mxu0 %v5721
    %7212 = vmatprep.subr.bf16.mxu0 0
    %7213 = vmatpush1.bf16.msra.mxu0 %v5722
    %7214 = vmatprep.subr.bf16.mxu0 0
    %7215 = vmatpush1.bf16.msra.mxu0 %v5723
    %7216 = vmatprep.subr.bf16.mxu0 0
    %7217 = vmatpush1.bf16.msra.mxu0 %v5724
    %7218 = vmatprep.subr.bf16.mxu0 0
    %7219 = vmatpush1.bf16.msra.mxu0 %v5725
    %7220 = vmatprep.subr.bf16.mxu0 0
    %7221 = vmatpush1.bf16.msra.mxu0 %v5726
    %7222 = vmatprep.subr.bf16.mxu0 0
    %7223 = vmatpush1.bf16.msra.mxu0 %v5727
    %7224 = vmatprep.subr.bf16.mxu0 0
    %7225 = vmatpush1.bf16.msra.mxu0 0
    %7226 = vmatprep.subr.bf16.mxu0 0
    %7227 = vmatpush1.bf16.msra.mxu0 0
    %7228 = vmatprep.subr.bf16.mxu0 0
    %7229 = vmatpush1.bf16.msra.mxu0 0
    %7230 = vmatprep.subr.bf16.mxu0 0
    %7231 = vmatpush1.bf16.msra.mxu0 0
    %7232 = vmatprep.subr.bf16.mxu0 0
    %7233 = vmatpush1.bf16.msra.mxu0 0
    %7234 = vmatprep.subr.bf16.mxu0 0
    %7235 = vmatpush1.bf16.msra.mxu0 0
    %7236 = vmatprep.subr.bf16.mxu0 0
    %7237 = vmatpush1.bf16.msra.mxu0 0
    %7238 = vmatprep.subr.bf16.mxu0 0
    %7239 = vmatpush1.bf16.msra.mxu0 0
    %7240 = vmatprep.mubr.bf16.mxu0 0
    %7241 = vmatmul.mubr.bf16.gmra.mrb[0].mxu0 %v7204
    %v7242 = vpop.f32.mrb[0].mxu0
    %v7243 = vadd.f32 0.0, %v7242
    %v7244 = vpop.f32.mrb[0].mxu0
    %v7245 = vpop.f32.mrb[0].mxu0
    %v7246 = vadd.f32 0.0, %v7245
    %v7247 = vpop.f32.mrb[0].mxu0
    %7248 = vmatprep.mubr.bf16.mxu0 0
    %7249 = vmatmul.mubr.bf16.gmra.mrb[0].mxu0 %v7205
    %v7250 = vpop.f32.mrb[0].mxu0
    %v7251 = vadd.f32 0.0, %v7250
    %v7252 = vpop.f32.mrb[0].mxu0
    %v7253 = vpop.f32.mrb[0].mxu0
    %v7254 = vadd.f32 0.0, %v7253
    %v7255 = vpop.f32.mrb[0].mxu0
    %7256 = vdwg.mxu0
    %v7257 = vpack.c.bf16 %v7246, %v7243
    %v7258 = vpack.c.bf16 %v7254, %v7251
    %v7259 = vld [vmem:[#allocation9 + $0x200] sm:$0xf]
    %v7260 = vld [vmem:[#allocation9 + $0x204] sm:$0xf]
    %v7261 = vld [vmem:[#allocation9 + $0x208] sm:$0xf]
    %v7262 = vld [vmem:[#allocation9 + $0x20c] sm:$0xf]
    %v7263 = vld [vmem:[#allocation9 + $0x210] sm:$0xf]
    %v7264 = vld [vmem:[#allocation9 + $0x214] sm:$0xf]
    %v7265 = vld [vmem:[#allocation9 + $0x218] sm:$0xf]
    %v7266 = vld [vmem:[#allocation9 + $0x21c] sm:$0xf]
    %v7267 = vld [vmem:[#allocation9 + $0x220] sm:$0xf]
    %v7268 = vld [vmem:[#allocation9 + $0x224] sm:$0xf]
    %v7269 = vld [vmem:[#allocation9 + $0x228] sm:$0xf]
    %v7270 = vld [vmem:[#allocation9 + $0x22c] sm:$0xf]
    %v7271 = vld [vmem:[#allocation9 + $0x230] sm:$0xf]
    %v7272 = vld [vmem:[#allocation9 + $0x234] sm:$0xf]
    %v7273 = vld [vmem:[#allocation9 + $0x238] sm:$0xf]
    %v7274 = vld [vmem:[#allocation9 + $0x23c] sm:$0xf]
    %v7291 = vunpack.c.l.b16 %v7259
    %v7292 = vunpack.c.l.b16 %v7260
    %v7293 = vunpack.c.l.b16 %v7261
    %v7294 = vunpack.c.l.b16 %v7262
    %v7295 = vunpack.c.l.b16 %v7263
    %v7296 = vunpack.c.l.b16 %v7264
    %v7297 = vunpack.c.l.b16 %v7265
    %v7298 = vunpack.c.l.b16 %v7266
    %v7299 = vunpack.c.l.b16 %v7267
    %v7300 = vunpack.c.l.b16 %v7268
    %v7301 = vunpack.c.l.b16 %v7269
    %v7302 = vunpack.c.l.b16 %v7270
    %v7303 = vunpack.c.l.b16 %v7271
    %v7304 = vunpack.c.l.b16 %v7272
    %v7305 = vunpack.c.l.b16 %v7273
    %v7306 = vunpack.c.l.b16 %v7274
    %v7307 = vpack.c.b16 %v7292, %v7291
    %v7308 = vpack.c.b16 %v7294, %v7293
    %v7309 = vpack.c.b16 %v7296, %v7295
    %v7310 = vpack.c.b16 %v7298, %v7297
    %v7311 = vpack.c.b16 %v7300, %v7299
    %v7312 = vpack.c.b16 %v7302, %v7301
    %v7313 = vpack.c.b16 %v7304, %v7303
    %v7314 = vpack.c.b16 %v7306, %v7305
    %7323 = vmatprep.subr.bf16.mxu0 0
    %7324 = vmatpush1.bf16.msra.mxu0 %v7307
    %7325 = vmatprep.subr.bf16.mxu0 0
    %7326 = vmatpush1.bf16.msra.mxu0 %v7308
    %7327 = vmatprep.subr.bf16.mxu0 0
    %7328 = vmatpush1.bf16.msra.mxu0 %v7309
    %7329 = vmatprep.subr.bf16.mxu0 0
    %7330 = vmatpush1.bf16.msra.mxu0 %v7310
    %7331 = vmatprep.subr.bf16.mxu0 0
    %7332 = vmatpush1.bf16.msra.mxu0 %v7311
    %7333 = vmatprep.subr.bf16.mxu0 0
    %7334 = vmatpush1.bf16.msra.mxu0 %v7312
    %7335 = vmatprep.subr.bf16.mxu0 0
    %7336 = vmatpush1.bf16.msra.mxu0 %v7313
    %7337 = vmatprep.subr.bf16.mxu0 0
    %7338 = vmatpush1.bf16.msra.mxu0 %v7314
    %7339 = vmatprep.subr.bf16.mxu0 0
    %7340 = vmatpush1.bf16.msra.mxu0 0
    %7341 = vmatprep.subr.bf16.mxu0 0
    %7342 = vmatpush1.bf16.msra.mxu0 0
    %7343 = vmatprep.subr.bf16.mxu0 0
    %7344 = vmatpush1.bf16.msra.mxu0 0
    %7345 = vmatprep.subr.bf16.mxu0 0
    %7346 = vmatpush1.bf16.msra.mxu0 0
    %7347 = vmatprep.subr.bf16.mxu0 0
    %7348 = vmatpush1.bf16.msra.mxu0 0
    %7349 = vmatprep.subr.bf16.mxu0 0
    %7350 = vmatpush1.bf16.msra.mxu0 0
    %7351 = vmatprep.subr.bf16.mxu0 0
    %7352 = vmatpush1.bf16.msra.mxu0 0
    %7353 = vmatprep.subr.bf16.mxu0 0
    %7354 = vmatpush1.bf16.msra.mxu0 0
    %7355 = vmatprep.mubr.bf16.mxu0 0
    %7356 = vmatmul.mubr.bf16.gmra.mrb[0].mxu0 %v7257
    %v7357 = vpop.f32.mrb[0].mxu0
    %v7358 = vadd.f32 0.0, %v7357
    %v7359 = vpop.f32.mrb[0].mxu0
    %v7360 = vpop.f32.mrb[0].mxu0
    %v7361 = vadd.f32 0.0, %v7360
    %v7362 = vpop.f32.mrb[0].mxu0
    %7363 = vmatprep.mubr.bf16.mxu0 0
    %7364 = vmatmul.mubr.bf16.gmra.mrb[0].mxu0 %v7258
    %v7365 = vpop.f32.mrb[0].mxu0
    %v7366 = vadd.f32 0.0, %v7365
    %v7367 = vpop.f32.mrb[0].mxu0
    %v7368 = vpop.f32.mrb[0].mxu0
    %v7369 = vadd.f32 0.0, %v7368
    %v7370 = vpop.f32.mrb[0].mxu0
    %7371 = vdwg.mxu0
    %v7372 = vadd.f32 %v7188, %v7358
    %v7373 = vadd.f32 %v7189, %v7361
    %v7374 = vadd.f32 %v7190, %v7366
    %v7375 = vadd.f32 %v7191, %v7369
    %v7376 = vld [vmem:[#allocation10] sm:$0x1]
    %v7378 = vlaneseq
    %v7379 = vshrl.u32 %v7378, 7
    %v7380 = vsub.s32 0, %v7379
    %v7381 = vrot.slane %v7376, %v7380
    %v7383 = vadd.f32 %v7372, %v7381
    %v7384 = vadd.f32 %v7373, %v7381
    %v7385 = vadd.f32 %v7374, %v7381
    %v7386 = vadd.f32 %v7375, %v7381
    %v7387 = vmax.f32 %v7383, 0.0
    %v7388 = vmax.f32 %v7384, 0.0
    %v7389 = vmax.f32 %v7385, 0.0
    %v7390 = vmax.f32 %v7386, 0.0
    %v7391 = vpack.c.bf16 %v7388, %v7387
    %v7392 = vpack.c.bf16 %v7390, %v7389
    %v7393 = vld [vmem:[%s7] sm:$0xf]
    %v7394 = vld [vmem:[%s7 + $0x4] sm:$0xf]
    %v7397 = vunpack.c.l.b16 %v7393
    %v7398 = vunpack.c.l.b16 %v7394
    %v7399 = vpack.c.b16 %v7398, %v7397
    %vm7400 = vcmask 261120
    %v7402 = vsel %vm7400, %v7399, 0
    %7404 = vmatprep.subr.bf16.mxu0 0
    %7405 = vmatpush1.bf16.msra.mxu0 %v7391
    %7406 = vmatprep.subr.bf16.mxu0 0
    %7407 = vmatpush1.bf16.msra.mxu0 %v7392
    %7408 = vmatprep.subr.bf16.mxu0 0
    %7409 = vmatpush1.bf16.msra.mxu0 0
    %7410 = vmatprep.subr.bf16.mxu0 0
    %7411 = vmatpush1.bf16.msra.mxu0 0
    %7412 = vmatprep.subr.bf16.mxu0 0
    %7413 = vmatpush1.bf16.msra.mxu0 0
    %7414 = vmatprep.subr.bf16.mxu0 0
    %7415 = vmatpush1.bf16.msra.mxu0 0
    %7416 = vmatprep.subr.bf16.mxu0 0
    %7417 = vmatpush1.bf16.msra.mxu0 0
    %7418 = vmatprep.subr.bf16.mxu0 0
    %7419 = vmatpush1.bf16.msra.mxu0 0
    %7420 = vmatprep.subr.bf16.mxu0 0
    %7421 = vmatpush1.bf16.msra.mxu0 0
    %7422 = vmatprep.subr.bf16.mxu0 0
    %7423 = vmatpush1.bf16.msra.mxu0 0
    %7424 = vmatprep.subr.bf16.mxu0 0
    %7425 = vmatpush1.bf16.msra.mxu0 0
    %7426 = vmatprep.subr.bf16.mxu0 0
    %7427 = vmatpush1.bf16.msra.mxu0 0
    %7428 = vmatprep.subr.bf16.mxu0 0
    %7429 = vmatpush1.bf16.msra.mxu0 0
    %7430 = vmatprep.subr.bf16.mxu0 0
    %7431 = vmatpush1.bf16.msra.mxu0 0
    %7432 = vmatprep.subr.bf16.mxu0 0
    %7433 = vmatpush1.bf16.msra.mxu0 0
    %7434 = vmatprep.subr.bf16.mxu0 0
    %7435 = vmatpush1.bf16.msra.mxu0 0
    %7436 = vmatprep.mubr.bf16.mxu0 0
    %7437 = vmatmul.mubr.bf16.gmra.mrb[0].mxu0 %v7402
    %v7438 = vpop.f32.mrb[0].mxu0
    %v7439 = vadd.f32 0.0, %v7438
    %v7440 = vpop.f32.mrb[0].mxu0
    %v7441 = vpop.f32.mrb[0].mxu0
    %v7442 = vadd.f32 0.0, %v7441
    %v7443 = vpop.f32.mrb[0].mxu0
    %7444 = vdwg.mxu0
    %v7445 = vpack.c.bf16 %v7442, %v7439
    %v7446 = vld [vmem:[#allocation12] sm:$0xf]
    %v7447 = vld [vmem:[#allocation12 + $0x4] sm:$0xf]
    %v7448 = vld [vmem:[#allocation12 + $0x8] sm:$0xf]
    %v7449 = vld [vmem:[#allocation12 + $0xc] sm:$0xf]
    %v7450 = vld [vmem:[#allocation12 + $0x10] sm:$0xf]
    %v7451 = vld [vmem:[#allocation12 + $0x14] sm:$0xf]
    %v7452 = vld [vmem:[#allocation12 + $0x18] sm:$0xf]
    %v7453 = vld [vmem:[#allocation12 + $0x1c] sm:$0xf]
    %v7454 = vld [vmem:[#allocation12 + $0x20] sm:$0xf]
    %v7455 = vld [vmem:[#allocation12 + $0x24] sm:$0xf]
    %v7456 = vld [vmem:[#allocation12 + $0x28] sm:$0xf]
    %v7457 = vld [vmem:[#allocation12 + $0x2c] sm:$0xf]
    %v7458 = vld [vmem:[#allocation12 + $0x30] sm:$0xf]
    %v7459 = vld [vmem:[#allocation12 + $0x34] sm:$0xf]
    %v7460 = vld [vmem:[#allocation12 + $0x38] sm:$0xf]
    %v7461 = vld [vmem:[#allocation12 + $0x3c] sm:$0xf]
    %v7462 = vld [vmem:[%s7 + $0x8] sm:$0xf]
    %v7463 = vld [vmem:[%s7 + $0xc] sm:$0xf]
    %v7466 = vunpack.c.l.b16 %v7462
    %v7467 = vunpack.c.l.b16 %v7463
    %v7468 = vpack.c.b16 %v7467, %v7466
    %v7470 = vsel %vm7400, %v7468, 0
    %7472 = vmatprep.subr.bf16.mxu0 0
    %7473 = vmatpush1.bf16.msra.mxu0 %v7391
    %7474 = vmatprep.subr.bf16.mxu0 0
    %7475 = vmatpush1.bf16.msra.mxu0 %v7392
    %7476 = vmatprep.subr.bf16.mxu0 0
    %7477 = vmatpush1.bf16.msra.mxu0 0
    %7478 = vmatprep.subr.bf16.mxu0 0
    %7479 = vmatpush1.bf16.msra.mxu0 0
    %7480 = vmatprep.subr.bf16.mxu0 0
    %7481 = vmatpush1.bf16.msra.mxu0 0
    %7482 = vmatprep.subr.bf16.mxu0 0
    %7483 = vmatpush1.bf16.msra.mxu0 0
    %7484 = vmatprep.subr.bf16.mxu0 0
    %7485 = vmatpush1.bf16.msra.mxu0 0
    %7486 = vmatprep.subr.bf16.mxu0 0
    %7487 = vmatpush1.bf16.msra.mxu0 0
    %7488 = vmatprep.subr.bf16.mxu0 0
    %7489 = vmatpush1.bf16.msra.mxu0 0
    %7490 = vmatprep.subr.bf16.mxu0 0
    %7491 = vmatpush1.bf16.msra.mxu0 0
    %7492 = vmatprep.subr.bf16.mxu0 0
    %7493 = vmatpush1.bf16.msra.mxu0 0
    %7494 = vmatprep.subr.bf16.mxu0 0
    %7495 = vmatpush1.bf16.msra.mxu0 0
    %7496 = vmatprep.subr.bf16.mxu0 0
    %7497 = vmatpush1.bf16.msra.mxu0 0
    %7498 = vmatprep.subr.bf16.mxu0 0
    %7499 = vmatpush1.bf16.msra.mxu0 0
    %7500 = vmatprep.subr.bf16.mxu0 0
    %7501 = vmatpush1.bf16.msra.mxu0 0
    %7502 = vmatprep.subr.bf16.mxu0 0
    %7503 = vmatpush1.bf16.msra.mxu0 0
    %7504 = vmatprep.mubr.bf16.mxu0 0
    %7505 = vmatmul.mubr.bf16.gmra.mrb[0].mxu0 %v7470
    %v7506 = vpop.f32.mrb[0].mxu0
    %v7507 = vadd.f32 0.0, %v7506
    %v7508 = vpop.f32.mrb[0].mxu0
    %v7509 = vpop.f32.mrb[0].mxu0
    %v7510 = vadd.f32 0.0, %v7509
    %v7511 = vpop.f32.mrb[0].mxu0
    %7512 = vdwg.mxu0
    %v7513 = vpack.c.bf16 %v7510, %v7507
    %v7514 = vld [vmem:[#allocation12 + $0x40] sm:$0xf]
    %v7515 = vld [vmem:[#allocation12 + $0x44] sm:$0xf]
    %v7516 = vld [vmem:[#allocation12 + $0x48] sm:$0xf]
    %v7517 = vld [vmem:[#allocation12 + $0x4c] sm:$0xf]
    %v7518 = vld [vmem:[#allocation12 + $0x50] sm:$0xf]
    %v7519 = vld [vmem:[#allocation12 + $0x54] sm:$0xf]
    %v7520 = vld [vmem:[#allocation12 + $0x58] sm:$0xf]
    %v7521 = vld [vmem:[#allocation12 + $0x5c] sm:$0xf]
    %v7522 = vld [vmem:[#allocation12 + $0x60] sm:$0xf]
    %v7523 = vld [vmem:[#allocation12 + $0x64] sm:$0xf]
    %v7524 = vld [vmem:[#allocation12 + $0x68] sm:$0xf]
    %v7525 = vld [vmem:[#allocation12 + $0x6c] sm:$0xf]
    %v7526 = vld [vmem:[#allocation12 + $0x70] sm:$0xf]
    %v7527 = vld [vmem:[#allocation12 + $0x74] sm:$0xf]
    %v7528 = vld [vmem:[#allocation12 + $0x78] sm:$0xf]
    %v7529 = vld [vmem:[#allocation12 + $0x7c] sm:$0xf]
    %v7546 = vunpack.c.l.b16 %v7514
    %v7547 = vunpack.c.l.b16 %v7515
    %v7548 = vunpack.c.l.b16 %v7516
    %v7549 = vunpack.c.l.b16 %v7517
    %v7550 = vunpack.c.l.b16 %v7518
    %v7551 = vunpack.c.l.b16 %v7519
    %v7552 = vunpack.c.l.b16 %v7520
    %v7553 = vunpack.c.l.b16 %v7521
    %v7554 = vunpack.c.l.b16 %v7522
    %v7555 = vunpack.c.l.b16 %v7523
    %v7556 = vunpack.c.l.b16 %v7524
    %v7557 = vunpack.c.l.b16 %v7525
    %v7558 = vunpack.c.l.b16 %v7526
    %v7559 = vunpack.c.l.b16 %v7527
    %v7560 = vunpack.c.l.b16 %v7528
    %v7561 = vunpack.c.l.b16 %v7529
    %v7562 = vpack.c.b16 %v7547, %v7546
    %v7563 = vpack.c.b16 %v7549, %v7548
    %v7564 = vpack.c.b16 %v7551, %v7550
    %v7565 = vpack.c.b16 %v7553, %v7552
    %v7566 = vpack.c.b16 %v7555, %v7554
    %v7567 = vpack.c.b16 %v7557, %v7556
    %v7568 = vpack.c.b16 %v7559, %v7558
    %v7569 = vpack.c.b16 %v7561, %v7560
    %7578 = vmatprep.subr.bf16.mxu0 0
    %7579 = vmatpush1.bf16.msra.mxu0 %v7562
    %7580 = vmatprep.subr.bf16.mxu0 0
    %7581 = vmatpush1.bf16.msra.mxu0 %v7563
    %7582 = vmatprep.subr.bf16.mxu0 0
    %7583 = vmatpush1.bf16.msra.mxu0 %v7564
    %7584 = vmatprep.subr.bf16.mxu0 0
    %7585 = vmatpush1.bf16.msra.mxu0 %v7565
    %7586 = vmatprep.subr.bf16.mxu0 0
    %7587 = vmatpush1.bf16.msra.mxu0 %v7566
    %7588 = vmatprep.subr.bf16.mxu0 0
    %7589 = vmatpush1.bf16.msra.mxu0 %v7567
    %7590 = vmatprep.subr.bf16.mxu0 0
    %7591 = vmatpush1.bf16.msra.mxu0 %v7568
    %7592 = vmatprep.subr.bf16.mxu0 0
    %7593 = vmatpush1.bf16.msra.mxu0 %v7569
    %7594 = vmatprep.subr.bf16.mxu0 0
    %7595 = vmatpush1.bf16.msra.mxu0 0
    %7596 = vmatprep.subr.bf16.mxu0 0
    %7597 = vmatpush1.bf16.msra.mxu0 0
    %7598 = vmatprep.subr.bf16.mxu0 0
    %7599 = vmatpush1.bf16.msra.mxu0 0
    %7600 = vmatprep.subr.bf16.mxu0 0
    %7601 = vmatpush1.bf16.msra.mxu0 0
    %7602 = vmatprep.subr.bf16.mxu0 0
    %7603 = vmatpush1.bf16.msra.mxu0 0
    %7604 = vmatprep.subr.bf16.mxu0 0
    %7605 = vmatpush1.bf16.msra.mxu0 0
    %7606 = vmatprep.subr.bf16.mxu0 0
    %7607 = vmatpush1.bf16.msra.mxu0 0
    %7608 = vmatprep.subr.bf16.mxu0 0
    %7609 = vmatpush1.bf16.msra.mxu0 0
    %7610 = vmatprep.mubr.bf16.mxu0 0
    %7611 = vmatmul.mubr.bf16.gmra.mrb[0].mxu0 %v7513
    %v7612 = vpop.f32.mrb[0].mxu0
    %v7613 = vadd.f32 0.0, %v7612
    %v7614 = vpop.f32.mrb[0].mxu0
    %v7615 = vpop.f32.mrb[0].mxu0
    %v7616 = vadd.f32 0.0, %v7615
    %v7617 = vpop.f32.mrb[0].mxu0
    %7618 = vdwg.mxu0
    %v7635 = vunpack.c.l.b16 %v7446
    %v7636 = vunpack.c.l.b16 %v7447
    %v7637 = vunpack.c.l.b16 %v7448
    %v7638 = vunpack.c.l.b16 %v7449
    %v7639 = vunpack.c.l.b16 %v7450
    %v7640 = vunpack.c.l.b16 %v7451
    %v7641 = vunpack.c.l.b16 %v7452
    %v7642 = vunpack.c.l.b16 %v7453
    %v7643 = vunpack.c.l.b16 %v7454
    %v7644 = vunpack.c.l.b16 %v7455
    %v7645 = vunpack.c.l.b16 %v7456
    %v7646 = vunpack.c.l.b16 %v7457
    %v7647 = vunpack.c.l.b16 %v7458
    %v7648 = vunpack.c.l.b16 %v7459
    %v7649 = vunpack.c.l.b16 %v7460
    %v7650 = vunpack.c.l.b16 %v7461
    %v7651 = vpack.c.b16 %v7636, %v7635
    %v7652 = vpack.c.b16 %v7638, %v7637
    %v7653 = vpack.c.b16 %v7640, %v7639
    %v7654 = vpack.c.b16 %v7642, %v7641
    %v7655 = vpack.c.b16 %v7644, %v7643
    %v7656 = vpack.c.b16 %v7646, %v7645
    %v7657 = vpack.c.b16 %v7648, %v7647
    %v7658 = vpack.c.b16 %v7650, %v7649
    %7667 = vmatprep.subr.bf16.mxu0 0
    %7668 = vmatpush1.bf16.msra.mxu0 %v7651
    %7669 = vmatprep.subr.bf16.mxu0 0
    %7670 = vmatpush1.bf16.msra.mxu0 %v7652
    %7671 = vmatprep.subr.bf16.mxu0 0
    %7672 = vmatpush1.bf16.msra.mxu0 %v7653
    %7673 = vmatprep.subr.bf16.mxu0 0
    %7674 = vmatpush1.bf16.msra.mxu0 %v7654
    %7675 = vmatprep.subr.bf16.mxu0 0
    %7676 = vmatpush1.bf16.msra.mxu0 %v7655
    %7677 = vmatprep.subr.bf16.mxu0 0
    %7678 = vmatpush1.bf16.msra.mxu0 %v7656
    %7679 = vmatprep.subr.bf16.mxu0 0
    %7680 = vmatpush1.bf16.msra.mxu0 %v7657
    %7681 = vmatprep.subr.bf16.mxu0 0
    %7682 = vmatpush1.bf16.msra.mxu0 %v7658
    %7683 = vmatprep.subr.bf16.mxu0 0
    %7684 = vmatpush1.bf16.msra.mxu0 0
    %7685 = vmatprep.subr.bf16.mxu0 0
    %7686 = vmatpush1.bf16.msra.mxu0 0
    %7687 = vmatprep.subr.bf16.mxu0 0
    %7688 = vmatpush1.bf16.msra.mxu0 0
    %7689 = vmatprep.subr.bf16.mxu0 0
    %7690 = vmatpush1.bf16.msra.mxu0 0
    %7691 = vmatprep.subr.bf16.mxu0 0
    %7692 = vmatpush1.bf16.msra.mxu0 0
    %7693 = vmatprep.subr.bf16.mxu0 0
    %7694 = vmatpush1.bf16.msra.mxu0 0
    %7695 = vmatprep.subr.bf16.mxu0 0
    %7696 = vmatpush1.bf16.msra.mxu0 0
    %7697 = vmatprep.subr.bf16.mxu0 0
    %7698 = vmatpush1.bf16.msra.mxu0 0
    %7699 = vmatprep.mubr.bf16.mxu0 0
    %7700 = vmatmul.mubr.bf16.gmra.mrb[0].mxu0 %v7445
    %v7701 = vpop.f32.mrb[0].mxu0
    %v7702 = vadd.f32 %v7613, %v7701
    %v7703 = vpop.f32.mrb[0].mxu0
    %v7704 = vpop.f32.mrb[0].mxu0
    %v7705 = vadd.f32 %v7616, %v7704
    %v7706 = vpop.f32.mrb[0].mxu0
    %7707 = vdwg.mxu0
    %v7708 = vld [vmem:[%s7 + $0x10] sm:$0xf]
    %v7709 = vld [vmem:[%s7 + $0x14] sm:$0xf]
    %v7712 = vunpack.c.l.b16 %v7708
    %v7713 = vunpack.c.l.b16 %v7709
    %v7714 = vpack.c.b16 %v7713, %v7712
    %v7716 = vsel %vm7400, %v7714, 0
    %7718 = vmatprep.subr.bf16.mxu0 0
    %7719 = vmatpush1.bf16.msra.mxu0 %v7391
    %7720 = vmatprep.subr.bf16.mxu0 0
    %7721 = vmatpush1.bf16.msra.mxu0 %v7392
    %7722 = vmatprep.subr.bf16.mxu0 0
    %7723 = vmatpush1.bf16.msra.mxu0 0
    %7724 = vmatprep.subr.bf16.mxu0 0
    %7725 = vmatpush1.bf16.msra.mxu0 0
    %7726 = vmatprep.subr.bf16.mxu0 0
    %7727 = vmatpush1.bf16.msra.mxu0 0
    %7728 = vmatprep.subr.bf16.mxu0 0
    %7729 = vmatpush1.bf16.msra.mxu0 0
    %7730 = vmatprep.subr.bf16.mxu0 0
    %7731 = vmatpush1.bf16.msra.mxu0 0
    %7732 = vmatprep.subr.bf16.mxu0 0
    %7733 = vmatpush1.bf16.msra.mxu0 0
    %7734 = vmatprep.subr.bf16.mxu0 0
    %7735 = vmatpush1.bf16.msra.mxu0 0
    %7736 = vmatprep.subr.bf16.mxu0 0
    %7737 = vmatpush1.bf16.msra.mxu0 0
    %7738 = vmatprep.subr.bf16.mxu0 0
    %7739 = vmatpush1.bf16.msra.mxu0 0
    %7740 = vmatprep.subr.bf16.mxu0 0
    %7741 = vmatpush1.bf16.msra.mxu0 0
    %7742 = vmatprep.subr.bf16.mxu0 0
    %7743 = vmatpush1.bf16.msra.mxu0 0
    %7744 = vmatprep.subr.bf16.mxu0 0
    %7745 = vmatpush1.bf16.msra.mxu0 0
    %7746 = vmatprep.subr.bf16.mxu0 0
    %7747 = vmatpush1.bf16.msra.mxu0 0
    %7748 = vmatprep.subr.bf16.mxu0 0
    %7749 = vmatpush1.bf16.msra.mxu0 0
    %7750 = vmatprep.mubr.bf16.mxu0 0
    %7751 = vmatmul.mubr.bf16.gmra.mrb[0].mxu0 %v7716
    %v7752 = vpop.f32.mrb[0].mxu0
    %v7753 = vadd.f32 0.0, %v7752
    %v7754 = vpop.f32.mrb[0].mxu0
    %v7755 = vpop.f32.mrb[0].mxu0
    %v7756 = vadd.f32 0.0, %v7755
    %v7757 = vpop.f32.mrb[0].mxu0
    %7758 = vdwg.mxu0
    %v7759 = vpack.c.bf16 %v7756, %v7753
    %v7760 = vld [vmem:[#allocation12 + $0x80] sm:$0xf]
    %v7761 = vld [vmem:[#allocation12 + $0x84] sm:$0xf]
    %v7762 = vld [vmem:[#allocation12 + $0x88] sm:$0xf]
    %v7763 = vld [vmem:[#allocation12 + $0x8c] sm:$0xf]
    %v7764 = vld [vmem:[#allocation12 + $0x90] sm:$0xf]
    %v7765 = vld [vmem:[#allocation12 + $0x94] sm:$0xf]
    %v7766 = vld [vmem:[#allocation12 + $0x98] sm:$0xf]
    %v7767 = vld [vmem:[#allocation12 + $0x9c] sm:$0xf]
    %v7768 = vld [vmem:[#allocation12 + $0xa0] sm:$0xf]
    %v7769 = vld [vmem:[#allocation12 + $0xa4] sm:$0xf]
    %v7770 = vld [vmem:[#allocation12 + $0xa8] sm:$0xf]
    %v7771 = vld [vmem:[#allocation12 + $0xac] sm:$0xf]
    %v7772 = vld [vmem:[#allocation12 + $0xb0] sm:$0xf]
    %v7773 = vld [vmem:[#allocation12 + $0xb4] sm:$0xf]
    %v7774 = vld [vmem:[#allocation12 + $0xb8] sm:$0xf]
    %v7775 = vld [vmem:[#allocation12 + $0xbc] sm:$0xf]
    %v7792 = vunpack.c.l.b16 %v7760
    %v7793 = vunpack.c.l.b16 %v7761
    %v7794 = vunpack.c.l.b16 %v7762
    %v7795 = vunpack.c.l.b16 %v7763
    %v7796 = vunpack.c.l.b16 %v7764
    %v7797 = vunpack.c.l.b16 %v7765
    %v7798 = vunpack.c.l.b16 %v7766
    %v7799 = vunpack.c.l.b16 %v7767
    %v7800 = vunpack.c.l.b16 %v7768
    %v7801 = vunpack.c.l.b16 %v7769
    %v7802 = vunpack.c.l.b16 %v7770
    %v7803 = vunpack.c.l.b16 %v7771
    %v7804 = vunpack.c.l.b16 %v7772
    %v7805 = vunpack.c.l.b16 %v7773
    %v7806 = vunpack.c.l.b16 %v7774
    %v7807 = vunpack.c.l.b16 %v7775
    %v7808 = vpack.c.b16 %v7793, %v7792
    %v7809 = vpack.c.b16 %v7795, %v7794
    %v7810 = vpack.c.b16 %v7797, %v7796
    %v7811 = vpack.c.b16 %v7799, %v7798
    %v7812 = vpack.c.b16 %v7801, %v7800
    %v7813 = vpack.c.b16 %v7803, %v7802
    %v7814 = vpack.c.b16 %v7805, %v7804
    %v7815 = vpack.c.b16 %v7807, %v7806
    %7824 = vmatprep.subr.bf16.mxu0 0
    %7825 = vmatpush1.bf16.msra.mxu0 %v7808
    %7826 = vmatprep.subr.bf16.mxu0 0
    %7827 = vmatpush1.bf16.msra.mxu0 %v7809
    %7828 = vmatprep.subr.bf16.mxu0 0
    %7829 = vmatpush1.bf16.msra.mxu0 %v7810
    %7830 = vmatprep.subr.bf16.mxu0 0
    %7831 = vmatpush1.bf16.msra.mxu0 %v7811
    %7832 = vmatprep.subr.bf16.mxu0 0
    %7833 = vmatpush1.bf16.msra.mxu0 %v7812
    %7834 = vmatprep.subr.bf16.mxu0 0
    %7835 = vmatpush1.bf16.msra.mxu0 %v7813
    %7836 = vmatprep.subr.bf16.mxu0 0
    %7837 = vmatpush1.bf16.msra.mxu0 %v7814
    %7838 = vmatprep.subr.bf16.mxu0 0
    %7839 = vmatpush1.bf16.msra.mxu0 %v7815
    %7840 = vmatprep.subr.bf16.mxu0 0
    %7841 = vmatpush1.bf16.msra.mxu0 0
    %7842 = vmatprep.subr.bf16.mxu0 0
    %7843 = vmatpush1.bf16.msra.mxu0 0
    %7844 = vmatprep.subr.bf16.mxu0 0
    %7845 = vmatpush1.bf16.msra.mxu0 0
    %7846 = vmatprep.subr.bf16.mxu0 0
    %7847 = vmatpush1.bf16.msra.mxu0 0
    %7848 = vmatprep.subr.bf16.mxu0 0
    %7849 = vmatpush1.bf16.msra.mxu0 0
    %7850 = vmatprep.subr.bf16.mxu0 0
    %7851 = vmatpush1.bf16.msra.mxu0 0
    %7852 = vmatprep.subr.bf16.mxu0 0
    %7853 = vmatpush1.bf16.msra.mxu0 0
    %7854 = vmatprep.subr.bf16.mxu0 0
    %7855 = vmatpush1.bf16.msra.mxu0 0
    %7856 = vmatprep.mubr.bf16.mxu0 0
    %7857 = vmatmul.mubr.bf16.gmra.mrb[0].mxu0 %v7759
    %v7858 = vpop.f32.mrb[0].mxu0
    %v7859 = vadd.f32 0.0, %v7858
    %v7860 = vpop.f32.mrb[0].mxu0
    %v7861 = vpop.f32.mrb[0].mxu0
    %v7862 = vadd.f32 0.0, %v7861
    %v7863 = vpop.f32.mrb[0].mxu0
    %7864 = vdwg.mxu0
    %v7865 = vadd.f32 %v7702, %v7859
    %v7866 = vadd.f32 %v7705, %v7862
    %v7867 = vld [vmem:[%s7 + $0x18] sm:$0xf]
    %v7868 = vld [vmem:[%s7 + $0x1c] sm:$0xf]
    %v7871 = vunpack.c.l.b16 %v7867
    %v7872 = vunpack.c.l.b16 %v7868
    %v7873 = vpack.c.b16 %v7872, %v7871
    %v7875 = vsel %vm7400, %v7873, 0
    %7877 = vmatprep.subr.bf16.mxu0 0
    %7878 = vmatpush1.bf16.msra.mxu0 %v7391
    %7879 = vmatprep.subr.bf16.mxu0 0
    %7880 = vmatpush1.bf16.msra.mxu0 %v7392
    %7881 = vmatprep.subr.bf16.mxu0 0
    %7882 = vmatpush1.bf16.msra.mxu0 0
    %7883 = vmatprep.subr.bf16.mxu0 0
    %7884 = vmatpush1.bf16.msra.mxu0 0
    %7885 = vmatprep.subr.bf16.mxu0 0
    %7886 = vmatpush1.bf16.msra.mxu0 0
    %7887 = vmatprep.subr.bf16.mxu0 0
    %7888 = vmatpush1.bf16.msra.mxu0 0
    %7889 = vmatprep.subr.bf16.mxu0 0
    %7890 = vmatpush1.bf16.msra.mxu0 0
    %7891 = vmatprep.subr.bf16.mxu0 0
    %7892 = vmatpush1.bf16.msra.mxu0 0
    %7893 = vmatprep.subr.bf16.mxu0 0
    %7894 = vmatpush1.bf16.msra.mxu0 0
    %7895 = vmatprep.subr.bf16.mxu0 0
    %7896 = vmatpush1.bf16.msra.mxu0 0
    %7897 = vmatprep.subr.bf16.mxu0 0
    %7898 = vmatpush1.bf16.msra.mxu0 0
    %7899 = vmatprep.subr.bf16.mxu0 0
    %7900 = vmatpush1.bf16.msra.mxu0 0
    %7901 = vmatprep.subr.bf16.mxu0 0
    %7902 = vmatpush1.bf16.msra.mxu0 0
    %7903 = vmatprep.subr.bf16.mxu0 0
    %7904 = vmatpush1.bf16.msra.mxu0 0
    %7905 = vmatprep.subr.bf16.mxu0 0
    %7906 = vmatpush1.bf16.msra.mxu0 0
    %7907 = vmatprep.subr.bf16.mxu0 0
    %7908 = vmatpush1.bf16.msra.mxu0 0
    %7909 = vmatprep.mubr.bf16.mxu0 0
    %7910 = vmatmul.mubr.bf16.gmra.mrb[0].mxu0 %v7875
    %v7911 = vpop.f32.mrb[0].mxu0
    %v7912 = vadd.f32 0.0, %v7911
    %v7913 = vpop.f32.mrb[0].mxu0
    %v7914 = vpop.f32.mrb[0].mxu0
    %v7915 = vadd.f32 0.0, %v7914
    %v7916 = vpop.f32.mrb[0].mxu0
    %7917 = vdwg.mxu0
    %v7918 = vpack.c.bf16 %v7915, %v7912
    %v7919 = vld [vmem:[#allocation12 + $0xc0] sm:$0xf]
    %v7920 = vld [vmem:[#allocation12 + $0xc4] sm:$0xf]
    %v7921 = vld [vmem:[#allocation12 + $0xc8] sm:$0xf]
    %v7922 = vld [vmem:[#allocation12 + $0xcc] sm:$0xf]
    %v7923 = vld [vmem:[#allocation12 + $0xd0] sm:$0xf]
    %v7924 = vld [vmem:[#allocation12 + $0xd4] sm:$0xf]
    %v7925 = vld [vmem:[#allocation12 + $0xd8] sm:$0xf]
    %v7926 = vld [vmem:[#allocation12 + $0xdc] sm:$0xf]
    %v7927 = vld [vmem:[#allocation12 + $0xe0] sm:$0xf]
    %v7928 = vld [vmem:[#allocation12 + $0xe4] sm:$0xf]
    %v7929 = vld [vmem:[#allocation12 + $0xe8] sm:$0xf]
    %v7930 = vld [vmem:[#allocation12 + $0xec] sm:$0xf]
    %v7931 = vld [vmem:[#allocation12 + $0xf0] sm:$0xf]
    %v7932 = vld [vmem:[#allocation12 + $0xf4] sm:$0xf]
    %v7933 = vld [vmem:[#allocation12 + $0xf8] sm:$0xf]
    %v7934 = vld [vmem:[#allocation12 + $0xfc] sm:$0xf]
    %v7951 = vunpack.c.l.b16 %v7919
    %v7952 = vunpack.c.l.b16 %v7920
    %v7953 = vunpack.c.l.b16 %v7921
    %v7954 = vunpack.c.l.b16 %v7922
    %v7955 = vunpack.c.l.b16 %v7923
    %v7956 = vunpack.c.l.b16 %v7924
    %v7957 = vunpack.c.l.b16 %v7925
    %v7958 = vunpack.c.l.b16 %v7926
    %v7959 = vunpack.c.l.b16 %v7927
    %v7960 = vunpack.c.l.b16 %v7928
    %v7961 = vunpack.c.l.b16 %v7929
    %v7962 = vunpack.c.l.b16 %v7930
    %v7963 = vunpack.c.l.b16 %v7931
    %v7964 = vunpack.c.l.b16 %v7932
    %v7965 = vunpack.c.l.b16 %v7933
    %v7966 = vunpack.c.l.b16 %v7934
    %v7967 = vpack.c.b16 %v7952, %v7951
    %v7968 = vpack.c.b16 %v7954, %v7953
    %v7969 = vpack.c.b16 %v7956, %v7955
    %v7970 = vpack.c.b16 %v7958, %v7957
    %v7971 = vpack.c.b16 %v7960, %v7959
    %v7972 = vpack.c.b16 %v7962, %v7961
    %v7973 = vpack.c.b16 %v7964, %v7963
    %v7974 = vpack.c.b16 %v7966, %v7965
    %7983 = vmatprep.subr.bf16.mxu0 0
    %7984 = vmatpush1.bf16.msra.mxu0 %v7967
    %7985 = vmatprep.subr.bf16.mxu0 0
    %7986 = vmatpush1.bf16.msra.mxu0 %v7968
    %7987 = vmatprep.subr.bf16.mxu0 0
    %7988 = vmatpush1.bf16.msra.mxu0 %v7969
    %7989 = vmatprep.subr.bf16.mxu0 0
    %7990 = vmatpush1.bf16.msra.mxu0 %v7970
    %7991 = vmatprep.subr.bf16.mxu0 0
    %7992 = vmatpush1.bf16.msra.mxu0 %v7971
    %7993 = vmatprep.subr.bf16.mxu0 0
    %7994 = vmatpush1.bf16.msra.mxu0 %v7972
    %7995 = vmatprep.subr.bf16.mxu0 0
    %7996 = vmatpush1.bf16.msra.mxu0 %v7973
    %7997 = vmatprep.subr.bf16.mxu0 0
    %7998 = vmatpush1.bf16.msra.mxu0 %v7974
    %7999 = vmatprep.subr.bf16.mxu0 0
    %8000 = vmatpush1.bf16.msra.mxu0 0
    %8001 = vmatprep.subr.bf16.mxu0 0
    %8002 = vmatpush1.bf16.msra.mxu0 0
    %8003 = vmatprep.subr.bf16.mxu0 0
    %8004 = vmatpush1.bf16.msra.mxu0 0
    %8005 = vmatprep.subr.bf16.mxu0 0
    %8006 = vmatpush1.bf16.msra.mxu0 0
    %8007 = vmatprep.subr.bf16.mxu0 0
    %8008 = vmatpush1.bf16.msra.mxu0 0
    %8009 = vmatprep.subr.bf16.mxu0 0
    %8010 = vmatpush1.bf16.msra.mxu0 0
    %8011 = vmatprep.subr.bf16.mxu0 0
    %8012 = vmatpush1.bf16.msra.mxu0 0
    %8013 = vmatprep.subr.bf16.mxu0 0
    %8014 = vmatpush1.bf16.msra.mxu0 0
    %8015 = vmatprep.mubr.bf16.mxu0 0
    %8016 = vmatmul.mubr.bf16.gmra.mrb[0].mxu0 %v7918
    %v8017 = vpop.f32.mrb[0].mxu0
    %v8018 = vadd.f32 0.0, %v8017
    %v8019 = vpop.f32.mrb[0].mxu0
    %v8020 = vpop.f32.mrb[0].mxu0
    %v8021 = vadd.f32 0.0, %v8020
    %v8022 = vpop.f32.mrb[0].mxu0
    %8023 = vdwg.mxu0
    %v8024 = vadd.f32 %v7865, %v8018
    %v8025 = vadd.f32 %v7866, %v8021
    %v8026 = vld [vmem:[%s7 + $0x20] sm:$0xf]
    %v8027 = vld [vmem:[%s7 + $0x24] sm:$0xf]
    %v8030 = vunpack.c.l.b16 %v8026
    %v8031 = vunpack.c.l.b16 %v8027
    %v8032 = vpack.c.b16 %v8031, %v8030
    %v8034 = vsel %vm7400, %v8032, 0
    %8036 = vmatprep.subr.bf16.mxu0 0
    %8037 = vmatpush1.bf16.msra.mxu0 %v7391
    %8038 = vmatprep.subr.bf16.mxu0 0
    %8039 = vmatpush1.bf16.msra.mxu0 %v7392
    %8040 = vmatprep.subr.bf16.mxu0 0
    %8041 = vmatpush1.bf16.msra.mxu0 0
    %8042 = vmatprep.subr.bf16.mxu0 0
    %8043 = vmatpush1.bf16.msra.mxu0 0
    %8044 = vmatprep.subr.bf16.mxu0 0
    %8045 = vmatpush1.bf16.msra.mxu0 0
    %8046 = vmatprep.subr.bf16.mxu0 0
    %8047 = vmatpush1.bf16.msra.mxu0 0
    %8048 = vmatprep.subr.bf16.mxu0 0
    %8049 = vmatpush1.bf16.msra.mxu0 0
    %8050 = vmatprep.subr.bf16.mxu0 0
    %8051 = vmatpush1.bf16.msra.mxu0 0
    %8052 = vmatprep.subr.bf16.mxu0 0
    %8053 = vmatpush1.bf16.msra.mxu0 0
    %8054 = vmatprep.subr.bf16.mxu0 0
    %8055 = vmatpush1.bf16.msra.mxu0 0
    %8056 = vmatprep.subr.bf16.mxu0 0
    %8057 = vmatpush1.bf16.msra.mxu0 0
    %8058 = vmatprep.subr.bf16.mxu0 0
    %8059 = vmatpush1.bf16.msra.mxu0 0
    %8060 = vmatprep.subr.bf16.mxu0 0
    %8061 = vmatpush1.bf16.msra.mxu0 0
    %8062 = vmatprep.subr.bf16.mxu0 0
    %8063 = vmatpush1.bf16.msra.mxu0 0
    %8064 = vmatprep.subr.bf16.mxu0 0
    %8065 = vmatpush1.bf16.msra.mxu0 0
    %8066 = vmatprep.subr.bf16.mxu0 0
    %8067 = vmatpush1.bf16.msra.mxu0 0
    %8068 = vmatprep.mubr.bf16.mxu0 0
    %8069 = vmatmul.mubr.bf16.gmra.mrb[0].mxu0 %v8034
    %v8070 = vpop.f32.mrb[0].mxu0
    %v8071 = vadd.f32 0.0, %v8070
    %v8072 = vpop.f32.mrb[0].mxu0
    %v8073 = vpop.f32.mrb[0].mxu0
    %v8074 = vadd.f32 0.0, %v8073
    %v8075 = vpop.f32.mrb[0].mxu0
    %8076 = vdwg.mxu0
    %v8077 = vpack.c.bf16 %v8074, %v8071
    %v8078 = vld [vmem:[#allocation12 + $0x100] sm:$0xf]
    %v8079 = vld [vmem:[#allocation12 + $0x104] sm:$0xf]
    %v8080 = vld [vmem:[#allocation12 + $0x108] sm:$0xf]
    %v8081 = vld [vmem:[#allocation12 + $0x10c] sm:$0xf]
    %v8082 = vld [vmem:[#allocation12 + $0x110] sm:$0xf]
    %v8083 = vld [vmem:[#allocation12 + $0x114] sm:$0xf]
    %v8084 = vld [vmem:[#allocation12 + $0x118] sm:$0xf]
    %v8085 = vld [vmem:[#allocation12 + $0x11c] sm:$0xf]
    %v8086 = vld [vmem:[#allocation12 + $0x120] sm:$0xf]
    %v8087 = vld [vmem:[#allocation12 + $0x124] sm:$0xf]
    %v8088 = vld [vmem:[#allocation12 + $0x128] sm:$0xf]
    %v8089 = vld [vmem:[#allocation12 + $0x12c] sm:$0xf]
    %v8090 = vld [vmem:[#allocation12 + $0x130] sm:$0xf]
    %v8091 = vld [vmem:[#allocation12 + $0x134] sm:$0xf]
    %v8092 = vld [vmem:[#allocation12 + $0x138] sm:$0xf]
    %v8093 = vld [vmem:[#allocation12 + $0x13c] sm:$0xf]
    %v8110 = vunpack.c.l.b16 %v8078
    %v8111 = vunpack.c.l.b16 %v8079
    %v8112 = vunpack.c.l.b16 %v8080
    %v8113 = vunpack.c.l.b16 %v8081
    %v8114 = vunpack.c.l.b16 %v8082
    %v8115 = vunpack.c.l.b16 %v8083
    %v8116 = vunpack.c.l.b16 %v8084
    %v8117 = vunpack.c.l.b16 %v8085
    %v8118 = vunpack.c.l.b16 %v8086
    %v8119 = vunpack.c.l.b16 %v8087
    %v8120 = vunpack.c.l.b16 %v8088
    %v8121 = vunpack.c.l.b16 %v8089
    %v8122 = vunpack.c.l.b16 %v8090
    %v8123 = vunpack.c.l.b16 %v8091
    %v8124 = vunpack.c.l.b16 %v8092
    %v8125 = vunpack.c.l.b16 %v8093
    %v8126 = vpack.c.b16 %v8111, %v8110
    %v8127 = vpack.c.b16 %v8113, %v8112
    %v8128 = vpack.c.b16 %v8115, %v8114
    %v8129 = vpack.c.b16 %v8117, %v8116
    %v8130 = vpack.c.b16 %v8119, %v8118
    %v8131 = vpack.c.b16 %v8121, %v8120
    %v8132 = vpack.c.b16 %v8123, %v8122
    %v8133 = vpack.c.b16 %v8125, %v8124
    %8142 = vmatprep.subr.bf16.mxu0 0
    %8143 = vmatpush1.bf16.msra.mxu0 %v8126
    %8144 = vmatprep.subr.bf16.mxu0 0
    %8145 = vmatpush1.bf16.msra.mxu0 %v8127
    %8146 = vmatprep.subr.bf16.mxu0 0
    %8147 = vmatpush1.bf16.msra.mxu0 %v8128
    %8148 = vmatprep.subr.bf16.mxu0 0
    %8149 = vmatpush1.bf16.msra.mxu0 %v8129
    %8150 = vmatprep.subr.bf16.mxu0 0
    %8151 = vmatpush1.bf16.msra.mxu0 %v8130
    %8152 = vmatprep.subr.bf16.mxu0 0
    %8153 = vmatpush1.bf16.msra.mxu0 %v8131
    %8154 = vmatprep.subr.bf16.mxu0 0
    %8155 = vmatpush1.bf16.msra.mxu0 %v8132
    %8156 = vmatprep.subr.bf16.mxu0 0
    %8157 = vmatpush1.bf16.msra.mxu0 %v8133
    %8158 = vmatprep.subr.bf16.mxu0 0
    %8159 = vmatpush1.bf16.msra.mxu0 0
    %8160 = vmatprep.subr.bf16.mxu0 0
    %8161 = vmatpush1.bf16.msra.mxu0 0
    %8162 = vmatprep.subr.bf16.mxu0 0
    %8163 = vmatpush1.bf16.msra.mxu0 0
    %8164 = vmatprep.subr.bf16.mxu0 0
    %8165 = vmatpush1.bf16.msra.mxu0 0
    %8166 = vmatprep.subr.bf16.mxu0 0
    %8167 = vmatpush1.bf16.msra.mxu0 0
    %8168 = vmatprep.subr.bf16.mxu0 0
    %8169 = vmatpush1.bf16.msra.mxu0 0
    %8170 = vmatprep.subr.bf16.mxu0 0
    %8171 = vmatpush1.bf16.msra.mxu0 0
    %8172 = vmatprep.subr.bf16.mxu0 0
    %8173 = vmatpush1.bf16.msra.mxu0 0
    %8174 = vmatprep.mubr.bf16.mxu0 0
    %8175 = vmatmul.mubr.bf16.gmra.mrb[0].mxu0 %v8077
    %v8176 = vpop.f32.mrb[0].mxu0
    %v8177 = vadd.f32 0.0, %v8176
    %v8178 = vpop.f32.mrb[0].mxu0
    %v8179 = vpop.f32.mrb[0].mxu0
    %v8180 = vadd.f32 0.0, %v8179
    %v8181 = vpop.f32.mrb[0].mxu0
    %8182 = vdwg.mxu0
    %v8183 = vadd.f32 %v8024, %v8177
    %v8184 = vadd.f32 %v8025, %v8180
    %v8185 = vld [vmem:[%s7 + $0x28] sm:$0xf]
    %v8186 = vld [vmem:[%s7 + $0x2c] sm:$0xf]
    %v8189 = vunpack.c.l.b16 %v8185
    %v8190 = vunpack.c.l.b16 %v8186
    %v8191 = vpack.c.b16 %v8190, %v8189
    %v8193 = vsel %vm7400, %v8191, 0
    %8195 = vmatprep.subr.bf16.mxu0 0
    %8196 = vmatpush1.bf16.msra.mxu0 %v7391
    %8197 = vmatprep.subr.bf16.mxu0 0
    %8198 = vmatpush1.bf16.msra.mxu0 %v7392
    %8199 = vmatprep.subr.bf16.mxu0 0
    %8200 = vmatpush1.bf16.msra.mxu0 0
    %8201 = vmatprep.subr.bf16.mxu0 0
    %8202 = vmatpush1.bf16.msra.mxu0 0
    %8203 = vmatprep.subr.bf16.mxu0 0
    %8204 = vmatpush1.bf16.msra.mxu0 0
    %8205 = vmatprep.subr.bf16.mxu0 0
    %8206 = vmatpush1.bf16.msra.mxu0 0
    %8207 = vmatprep.subr.bf16.mxu0 0
    %8208 = vmatpush1.bf16.msra.mxu0 0
    %8209 = vmatprep.subr.bf16.mxu0 0
    %8210 = vmatpush1.bf16.msra.mxu0 0
    %8211 = vmatprep.subr.bf16.mxu0 0
    %8212 = vmatpush1.bf16.msra.mxu0 0
    %8213 = vmatprep.subr.bf16.mxu0 0
    %8214 = vmatpush1.bf16.msra.mxu0 0
    %8215 = vmatprep.subr.bf16.mxu0 0
    %8216 = vmatpush1.bf16.msra.mxu0 0
    %8217 = vmatprep.subr.bf16.mxu0 0
    %8218 = vmatpush1.bf16.msra.mxu0 0
    %8219 = vmatprep.subr.bf16.mxu0 0
    %8220 = vmatpush1.bf16.msra.mxu0 0
    %8221 = vmatprep.subr.bf16.mxu0 0
    %8222 = vmatpush1.bf16.msra.mxu0 0
    %8223 = vmatprep.subr.bf16.mxu0 0
    %8224 = vmatpush1.bf16.msra.mxu0 0
    %8225 = vmatprep.subr.bf16.mxu0 0
    %8226 = vmatpush1.bf16.msra.mxu0 0
    %8227 = vmatprep.mubr.bf16.mxu0 0
    %8228 = vmatmul.mubr.bf16.gmra.mrb[0].mxu0 %v8193
    %v8229 = vpop.f32.mrb[0].mxu0
    %v8230 = vadd.f32 0.0, %v8229
    %v8231 = vpop.f32.mrb[0].mxu0
    %v8232 = vpop.f32.mrb[0].mxu0
    %v8233 = vadd.f32 0.0, %v8232
    %v8234 = vpop.f32.mrb[0].mxu0
    %8235 = vdwg.mxu0
    %v8236 = vpack.c.bf16 %v8233, %v8230
    %v8237 = vld [vmem:[#allocation12 + $0x140] sm:$0xf]
    %v8238 = vld [vmem:[#allocation12 + $0x144] sm:$0xf]
    %v8239 = vld [vmem:[#allocation12 + $0x148] sm:$0xf]
    %v8240 = vld [vmem:[#allocation12 + $0x14c] sm:$0xf]
    %v8241 = vld [vmem:[#allocation12 + $0x150] sm:$0xf]
    %v8242 = vld [vmem:[#allocation12 + $0x154] sm:$0xf]
    %v8243 = vld [vmem:[#allocation12 + $0x158] sm:$0xf]
    %v8244 = vld [vmem:[#allocation12 + $0x15c] sm:$0xf]
    %v8245 = vld [vmem:[#allocation12 + $0x160] sm:$0xf]
    %v8246 = vld [vmem:[#allocation12 + $0x164] sm:$0xf]
    %v8247 = vld [vmem:[#allocation12 + $0x168] sm:$0xf]
    %v8248 = vld [vmem:[#allocation12 + $0x16c] sm:$0xf]
    %v8249 = vld [vmem:[#allocation12 + $0x170] sm:$0xf]
    %v8250 = vld [vmem:[#allocation12 + $0x174] sm:$0xf]
    %v8251 = vld [vmem:[#allocation12 + $0x178] sm:$0xf]
    %v8252 = vld [vmem:[#allocation12 + $0x17c] sm:$0xf]
    %v8269 = vunpack.c.l.b16 %v8237
    %v8270 = vunpack.c.l.b16 %v8238
    %v8271 = vunpack.c.l.b16 %v8239
    %v8272 = vunpack.c.l.b16 %v8240
    %v8273 = vunpack.c.l.b16 %v8241
    %v8274 = vunpack.c.l.b16 %v8242
    %v8275 = vunpack.c.l.b16 %v8243
    %v8276 = vunpack.c.l.b16 %v8244
    %v8277 = vunpack.c.l.b16 %v8245
    %v8278 = vunpack.c.l.b16 %v8246
    %v8279 = vunpack.c.l.b16 %v8247
    %v8280 = vunpack.c.l.b16 %v8248
    %v8281 = vunpack.c.l.b16 %v8249
    %v8282 = vunpack.c.l.b16 %v8250
    %v8283 = vunpack.c.l.b16 %v8251
    %v8284 = vunpack.c.l.b16 %v8252
    %v8285 = vpack.c.b16 %v8270, %v8269
    %v8286 = vpack.c.b16 %v8272, %v8271
    %v8287 = vpack.c.b16 %v8274, %v8273
    %v8288 = vpack.c.b16 %v8276, %v8275
    %v8289 = vpack.c.b16 %v8278, %v8277
    %v8290 = vpack.c.b16 %v8280, %v8279
    %v8291 = vpack.c.b16 %v8282, %v8281
    %v8292 = vpack.c.b16 %v8284, %v8283
    %8301 = vmatprep.subr.bf16.mxu0 0
    %8302 = vmatpush1.bf16.msra.mxu0 %v8285
    %8303 = vmatprep.subr.bf16.mxu0 0
    %8304 = vmatpush1.bf16.msra.mxu0 %v8286
    %8305 = vmatprep.subr.bf16.mxu0 0
    %8306 = vmatpush1.bf16.msra.mxu0 %v8287
    %8307 = vmatprep.subr.bf16.mxu0 0
    %8308 = vmatpush1.bf16.msra.mxu0 %v8288
    %8309 = vmatprep.subr.bf16.mxu0 0
    %8310 = vmatpush1.bf16.msra.mxu0 %v8289
    %8311 = vmatprep.subr.bf16.mxu0 0
    %8312 = vmatpush1.bf16.msra.mxu0 %v8290
    %8313 = vmatprep.subr.bf16.mxu0 0
    %8314 = vmatpush1.bf16.msra.mxu0 %v8291
    %8315 = vmatprep.subr.bf16.mxu0 0
    %8316 = vmatpush1.bf16.msra.mxu0 %v8292
    %8317 = vmatprep.subr.bf16.mxu0 0
    %8318 = vmatpush1.bf16.msra.mxu0 0
    %8319 = vmatprep.subr.bf16.mxu0 0
    %8320 = vmatpush1.bf16.msra.mxu0 0
    %8321 = vmatprep.subr.bf16.mxu0 0
    %8322 = vmatpush1.bf16.msra.mxu0 0
    %8323 = vmatprep.subr.bf16.mxu0 0
    %8324 = vmatpush1.bf16.msra.mxu0 0
    %8325 = vmatprep.subr.bf16.mxu0 0
    %8326 = vmatpush1.bf16.msra.mxu0 0
    %8327 = vmatprep.subr.bf16.mxu0 0
    %8328 = vmatpush1.bf16.msra.mxu0 0
    %8329 = vmatprep.subr.bf16.mxu0 0
    %8330 = vmatpush1.bf16.msra.mxu0 0
    %8331 = vmatprep.subr.bf16.mxu0 0
    %8332 = vmatpush1.bf16.msra.mxu0 0
    %8333 = vmatprep.mubr.bf16.mxu0 0
    %8334 = vmatmul.mubr.bf16.gmra.mrb[0].mxu0 %v8236
    %v8335 = vpop.f32.mrb[0].mxu0
    %v8336 = vadd.f32 0.0, %v8335
    %v8337 = vpop.f32.mrb[0].mxu0
    %v8338 = vpop.f32.mrb[0].mxu0
    %v8339 = vadd.f32 0.0, %v8338
    %v8340 = vpop.f32.mrb[0].mxu0
    %8341 = vdwg.mxu0
    %v8342 = vadd.f32 %v8183, %v8336
    %v8343 = vadd.f32 %v8184, %v8339
    %v8344 = vld [vmem:[%s7 + $0x30] sm:$0xf]
    %v8345 = vld [vmem:[%s7 + $0x34] sm:$0xf]
    %v8348 = vunpack.c.l.b16 %v8344
    %v8349 = vunpack.c.l.b16 %v8345
    %v8350 = vpack.c.b16 %v8349, %v8348
    %v8352 = vsel %vm7400, %v8350, 0
    %8354 = vmatprep.subr.bf16.mxu0 0
    %8355 = vmatpush1.bf16.msra.mxu0 %v7391
    %8356 = vmatprep.subr.bf16.mxu0 0
    %8357 = vmatpush1.bf16.msra.mxu0 %v7392
    %8358 = vmatprep.subr.bf16.mxu0 0
    %8359 = vmatpush1.bf16.msra.mxu0 0
    %8360 = vmatprep.subr.bf16.mxu0 0
    %8361 = vmatpush1.bf16.msra.mxu0 0
    %8362 = vmatprep.subr.bf16.mxu0 0
    %8363 = vmatpush1.bf16.msra.mxu0 0
    %8364 = vmatprep.subr.bf16.mxu0 0
    %8365 = vmatpush1.bf16.msra.mxu0 0
    %8366 = vmatprep.subr.bf16.mxu0 0
    %8367 = vmatpush1.bf16.msra.mxu0 0
    %8368 = vmatprep.subr.bf16.mxu0 0
    %8369 = vmatpush1.bf16.msra.mxu0 0
    %8370 = vmatprep.subr.bf16.mxu0 0
    %8371 = vmatpush1.bf16.msra.mxu0 0
    %8372 = vmatprep.subr.bf16.mxu0 0
    %8373 = vmatpush1.bf16.msra.mxu0 0
    %8374 = vmatprep.subr.bf16.mxu0 0
    %8375 = vmatpush1.bf16.msra.mxu0 0
    %8376 = vmatprep.subr.bf16.mxu0 0
    %8377 = vmatpush1.bf16.msra.mxu0 0
    %8378 = vmatprep.subr.bf16.mxu0 0
    %8379 = vmatpush1.bf16.msra.mxu0 0
    %8380 = vmatprep.subr.bf16.mxu0 0
    %8381 = vmatpush1.bf16.msra.mxu0 0
    %8382 = vmatprep.subr.bf16.mxu0 0
    %8383 = vmatpush1.bf16.msra.mxu0 0
    %8384 = vmatprep.subr.bf16.mxu0 0
    %8385 = vmatpush1.bf16.msra.mxu0 0
    %8386 = vmatprep.mubr.bf16.mxu0 0
    %8387 = vmatmul.mubr.bf16.gmra.mrb[0].mxu0 %v8352
    %v8388 = vpop.f32.mrb[0].mxu0
    %v8389 = vadd.f32 0.0, %v8388
    %v8390 = vpop.f32.mrb[0].mxu0
    %v8391 = vpop.f32.mrb[0].mxu0
    %v8392 = vadd.f32 0.0, %v8391
    %v8393 = vpop.f32.mrb[0].mxu0
    %8394 = vdwg.mxu0
    %v8395 = vpack.c.bf16 %v8392, %v8389
    %v8396 = vld [vmem:[#allocation12 + $0x180] sm:$0xf]
    %v8397 = vld [vmem:[#allocation12 + $0x184] sm:$0xf]
    %v8398 = vld [vmem:[#allocation12 + $0x188] sm:$0xf]
    %v8399 = vld [vmem:[#allocation12 + $0x18c] sm:$0xf]
    %v8400 = vld [vmem:[#allocation12 + $0x190] sm:$0xf]
    %v8401 = vld [vmem:[#allocation12 + $0x194] sm:$0xf]
    %v8402 = vld [vmem:[#allocation12 + $0x198] sm:$0xf]
    %v8403 = vld [vmem:[#allocation12 + $0x19c] sm:$0xf]
    %v8404 = vld [vmem:[#allocation12 + $0x1a0] sm:$0xf]
    %v8405 = vld [vmem:[#allocation12 + $0x1a4] sm:$0xf]
    %v8406 = vld [vmem:[#allocation12 + $0x1a8] sm:$0xf]
    %v8407 = vld [vmem:[#allocation12 + $0x1ac] sm:$0xf]
    %v8408 = vld [vmem:[#allocation12 + $0x1b0] sm:$0xf]
    %v8409 = vld [vmem:[#allocation12 + $0x1b4] sm:$0xf]
    %v8410 = vld [vmem:[#allocation12 + $0x1b8] sm:$0xf]
    %v8411 = vld [vmem:[#allocation12 + $0x1bc] sm:$0xf]
    %v8428 = vunpack.c.l.b16 %v8396
    %v8429 = vunpack.c.l.b16 %v8397
    %v8430 = vunpack.c.l.b16 %v8398
    %v8431 = vunpack.c.l.b16 %v8399
    %v8432 = vunpack.c.l.b16 %v8400
    %v8433 = vunpack.c.l.b16 %v8401
    %v8434 = vunpack.c.l.b16 %v8402
    %v8435 = vunpack.c.l.b16 %v8403
    %v8436 = vunpack.c.l.b16 %v8404
    %v8437 = vunpack.c.l.b16 %v8405
    %v8438 = vunpack.c.l.b16 %v8406
    %v8439 = vunpack.c.l.b16 %v8407
    %v8440 = vunpack.c.l.b16 %v8408
    %v8441 = vunpack.c.l.b16 %v8409
    %v8442 = vunpack.c.l.b16 %v8410
    %v8443 = vunpack.c.l.b16 %v8411
    %v8444 = vpack.c.b16 %v8429, %v8428
    %v8445 = vpack.c.b16 %v8431, %v8430
    %v8446 = vpack.c.b16 %v8433, %v8432
    %v8447 = vpack.c.b16 %v8435, %v8434
    %v8448 = vpack.c.b16 %v8437, %v8436
    %v8449 = vpack.c.b16 %v8439, %v8438
    %v8450 = vpack.c.b16 %v8441, %v8440
    %v8451 = vpack.c.b16 %v8443, %v8442
    %8460 = vmatprep.subr.bf16.mxu0 0
    %8461 = vmatpush1.bf16.msra.mxu0 %v8444
    %8462 = vmatprep.subr.bf16.mxu0 0
    %8463 = vmatpush1.bf16.msra.mxu0 %v8445
    %8464 = vmatprep.subr.bf16.mxu0 0
    %8465 = vmatpush1.bf16.msra.mxu0 %v8446
    %8466 = vmatprep.subr.bf16.mxu0 0
    %8467 = vmatpush1.bf16.msra.mxu0 %v8447
    %8468 = vmatprep.subr.bf16.mxu0 0
    %8469 = vmatpush1.bf16.msra.mxu0 %v8448
    %8470 = vmatprep.subr.bf16.mxu0 0
    %8471 = vmatpush1.bf16.msra.mxu0 %v8449
    %8472 = vmatprep.subr.bf16.mxu0 0
    %8473 = vmatpush1.bf16.msra.mxu0 %v8450
    %8474 = vmatprep.subr.bf16.mxu0 0
    %8475 = vmatpush1.bf16.msra.mxu0 %v8451
    %8476 = vmatprep.subr.bf16.mxu0 0
    %8477 = vmatpush1.bf16.msra.mxu0 0
    %8478 = vmatprep.subr.bf16.mxu0 0
    %8479 = vmatpush1.bf16.msra.mxu0 0
    %8480 = vmatprep.subr.bf16.mxu0 0
    %8481 = vmatpush1.bf16.msra.mxu0 0
    %8482 = vmatprep.subr.bf16.mxu0 0
    %8483 = vmatpush1.bf16.msra.mxu0 0
    %8484 = vmatprep.subr.bf16.mxu0 0
    %8485 = vmatpush1.bf16.msra.mxu0 0
    %8486 = vmatprep.subr.bf16.mxu0 0
    %8487 = vmatpush1.bf16.msra.mxu0 0
    %8488 = vmatprep.subr.bf16.mxu0 0
    %8489 = vmatpush1.bf16.msra.mxu0 0
    %8490 = vmatprep.subr.bf16.mxu0 0
    %8491 = vmatpush1.bf16.msra.mxu0 0
    %8492 = vmatprep.mubr.bf16.mxu0 0
    %8493 = vmatmul.mubr.bf16.gmra.mrb[0].mxu0 %v8395
    %v8494 = vpop.f32.mrb[0].mxu0
    %v8495 = vadd.f32 0.0, %v8494
    %v8496 = vpop.f32.mrb[0].mxu0
    %v8497 = vpop.f32.mrb[0].mxu0
    %v8498 = vadd.f32 0.0, %v8497
    %v8499 = vpop.f32.mrb[0].mxu0
    %8500 = vdwg.mxu0
    %v8501 = vadd.f32 %v8342, %v8495
    %v8502 = vadd.f32 %v8343, %v8498
    %v8503 = vld [vmem:[%s7 + $0x38] sm:$0xf]
    %v8504 = vld [vmem:[%s7 + $0x3c] sm:$0xf]
    %v8507 = vunpack.c.l.b16 %v8503
    %v8508 = vunpack.c.l.b16 %v8504
    %v8509 = vpack.c.b16 %v8508, %v8507
    %v8511 = vsel %vm7400, %v8509, 0
    %8513 = vmatprep.subr.bf16.mxu0 0
    %8514 = vmatpush1.bf16.msra.mxu0 %v7391
    %8515 = vmatprep.subr.bf16.mxu0 0
    %8516 = vmatpush1.bf16.msra.mxu0 %v7392
    %8517 = vmatprep.subr.bf16.mxu0 0
    %8518 = vmatpush1.bf16.msra.mxu0 0
    %8519 = vmatprep.subr.bf16.mxu0 0
    %8520 = vmatpush1.bf16.msra.mxu0 0
    %8521 = vmatprep.subr.bf16.mxu0 0
    %8522 = vmatpush1.bf16.msra.mxu0 0
    %8523 = vmatprep.subr.bf16.mxu0 0
    %8524 = vmatpush1.bf16.msra.mxu0 0
    %8525 = vmatprep.subr.bf16.mxu0 0
    %8526 = vmatpush1.bf16.msra.mxu0 0
    %8527 = vmatprep.subr.bf16.mxu0 0
    %8528 = vmatpush1.bf16.msra.mxu0 0
    %8529 = vmatprep.subr.bf16.mxu0 0
    %8530 = vmatpush1.bf16.msra.mxu0 0
    %8531 = vmatprep.subr.bf16.mxu0 0
    %8532 = vmatpush1.bf16.msra.mxu0 0
    %8533 = vmatprep.subr.bf16.mxu0 0
    %8534 = vmatpush1.bf16.msra.mxu0 0
    %8535 = vmatprep.subr.bf16.mxu0 0
    %8536 = vmatpush1.bf16.msra.mxu0 0
    %8537 = vmatprep.subr.bf16.mxu0 0
    %8538 = vmatpush1.bf16.msra.mxu0 0
    %8539 = vmatprep.subr.bf16.mxu0 0
    %8540 = vmatpush1.bf16.msra.mxu0 0
    %8541 = vmatprep.subr.bf16.mxu0 0
    %8542 = vmatpush1.bf16.msra.mxu0 0
    %8543 = vmatprep.subr.bf16.mxu0 0
    %8544 = vmatpush1.bf16.msra.mxu0 0
    %8545 = vmatprep.mubr.bf16.mxu0 0
    %8546 = vmatmul.mubr.bf16.gmra.mrb[0].mxu0 %v8511
    %v8547 = vpop.f32.mrb[0].mxu0
    %v8548 = vadd.f32 0.0, %v8547
    %v8549 = vpop.f32.mrb[0].mxu0
    %v8550 = vpop.f32.mrb[0].mxu0
    %v8551 = vadd.f32 0.0, %v8550
    %v8552 = vpop.f32.mrb[0].mxu0
    %8553 = vdwg.mxu0
    %v8554 = vpack.c.bf16 %v8551, %v8548
    %v8555 = vld [vmem:[#allocation12 + $0x1c0] sm:$0xf]
    %v8556 = vld [vmem:[#allocation12 + $0x1c4] sm:$0xf]
    %v8557 = vld [vmem:[#allocation12 + $0x1c8] sm:$0xf]
    %v8558 = vld [vmem:[#allocation12 + $0x1cc] sm:$0xf]
    %v8559 = vld [vmem:[#allocation12 + $0x1d0] sm:$0xf]
    %v8560 = vld [vmem:[#allocation12 + $0x1d4] sm:$0xf]
    %v8561 = vld [vmem:[#allocation12 + $0x1d8] sm:$0xf]
    %v8562 = vld [vmem:[#allocation12 + $0x1dc] sm:$0xf]
    %v8563 = vld [vmem:[#allocation12 + $0x1e0] sm:$0xf]
    %v8564 = vld [vmem:[#allocation12 + $0x1e4] sm:$0xf]
    %v8565 = vld [vmem:[#allocation12 + $0x1e8] sm:$0xf]
    %v8566 = vld [vmem:[#allocation12 + $0x1ec] sm:$0xf]
    %v8567 = vld [vmem:[#allocation12 + $0x1f0] sm:$0xf]
    %v8568 = vld [vmem:[#allocation12 + $0x1f4] sm:$0xf]
    %v8569 = vld [vmem:[#allocation12 + $0x1f8] sm:$0xf]
    %v8570 = vld [vmem:[#allocation12 + $0x1fc] sm:$0xf]
    %v8587 = vunpack.c.l.b16 %v8555
    %v8588 = vunpack.c.l.b16 %v8556
    %v8589 = vunpack.c.l.b16 %v8557
    %v8590 = vunpack.c.l.b16 %v8558
    %v8591 = vunpack.c.l.b16 %v8559
    %v8592 = vunpack.c.l.b16 %v8560
    %v8593 = vunpack.c.l.b16 %v8561
    %v8594 = vunpack.c.l.b16 %v8562
    %v8595 = vunpack.c.l.b16 %v8563
    %v8596 = vunpack.c.l.b16 %v8564
    %v8597 = vunpack.c.l.b16 %v8565
    %v8598 = vunpack.c.l.b16 %v8566
    %v8599 = vunpack.c.l.b16 %v8567
    %v8600 = vunpack.c.l.b16 %v8568
    %v8601 = vunpack.c.l.b16 %v8569
    %v8602 = vunpack.c.l.b16 %v8570
    %v8603 = vpack.c.b16 %v8588, %v8587
    %v8604 = vpack.c.b16 %v8590, %v8589
    %v8605 = vpack.c.b16 %v8592, %v8591
    %v8606 = vpack.c.b16 %v8594, %v8593
    %v8607 = vpack.c.b16 %v8596, %v8595
    %v8608 = vpack.c.b16 %v8598, %v8597
    %v8609 = vpack.c.b16 %v8600, %v8599
    %v8610 = vpack.c.b16 %v8602, %v8601
    %8619 = vmatprep.subr.bf16.mxu0 0
    %8620 = vmatpush1.bf16.msra.mxu0 %v8603
    %8621 = vmatprep.subr.bf16.mxu0 0
    %8622 = vmatpush1.bf16.msra.mxu0 %v8604
    %8623 = vmatprep.subr.bf16.mxu0 0
    %8624 = vmatpush1.bf16.msra.mxu0 %v8605
    %8625 = vmatprep.subr.bf16.mxu0 0
    %8626 = vmatpush1.bf16.msra.mxu0 %v8606
    %8627 = vmatprep.subr.bf16.mxu0 0
    %8628 = vmatpush1.bf16.msra.mxu0 %v8607
    %8629 = vmatprep.subr.bf16.mxu0 0
    %8630 = vmatpush1.bf16.msra.mxu0 %v8608
    %8631 = vmatprep.subr.bf16.mxu0 0
    %8632 = vmatpush1.bf16.msra.mxu0 %v8609
    %8633 = vmatprep.subr.bf16.mxu0 0
    %8634 = vmatpush1.bf16.msra.mxu0 %v8610
    %8635 = vmatprep.subr.bf16.mxu0 0
    %8636 = vmatpush1.bf16.msra.mxu0 0
    %8637 = vmatprep.subr.bf16.mxu0 0
    %8638 = vmatpush1.bf16.msra.mxu0 0
    %8639 = vmatprep.subr.bf16.mxu0 0
    %8640 = vmatpush1.bf16.msra.mxu0 0
    %8641 = vmatprep.subr.bf16.mxu0 0
    %8642 = vmatpush1.bf16.msra.mxu0 0
    %8643 = vmatprep.subr.bf16.mxu0 0
    %8644 = vmatpush1.bf16.msra.mxu0 0
    %8645 = vmatprep.subr.bf16.mxu0 0
    %8646 = vmatpush1.bf16.msra.mxu0 0
    %8647 = vmatprep.subr.bf16.mxu0 0
    %8648 = vmatpush1.bf16.msra.mxu0 0
    %8649 = vmatprep.subr.bf16.mxu0 0
    %8650 = vmatpush1.bf16.msra.mxu0 0
    %8651 = vmatprep.mubr.bf16.mxu0 0
    %8652 = vmatmul.mubr.bf16.gmra.mrb[0].mxu0 %v8554
    %v8653 = vpop.f32.mrb[0].mxu0
    %v8654 = vadd.f32 0.0, %v8653
    %v8655 = vpop.f32.mrb[0].mxu0
    %v8656 = vpop.f32.mrb[0].mxu0
    %v8657 = vadd.f32 0.0, %v8656
    %v8658 = vpop.f32.mrb[0].mxu0
    %8659 = vdwg.mxu0
    %v8660 = vadd.f32 %v8501, %v8654
    %v8661 = vadd.f32 %v8502, %v8657
    %v8662 = vld [vmem:[%s7 + $0x40] sm:$0xf]
    %v8663 = vld [vmem:[%s7 + $0x44] sm:$0xf]
    %v8666 = vunpack.c.l.b16 %v8662
    %v8667 = vunpack.c.l.b16 %v8663
    %v8668 = vpack.c.b16 %v8667, %v8666
    %v8670 = vsel %vm7400, %v8668, 0
    %8672 = vmatprep.subr.bf16.mxu0 0
    %8673 = vmatpush1.bf16.msra.mxu0 %v7391
    %8674 = vmatprep.subr.bf16.mxu0 0
    %8675 = vmatpush1.bf16.msra.mxu0 %v7392
    %8676 = vmatprep.subr.bf16.mxu0 0
    %8677 = vmatpush1.bf16.msra.mxu0 0
    %8678 = vmatprep.subr.bf16.mxu0 0
    %8679 = vmatpush1.bf16.msra.mxu0 0
    %8680 = vmatprep.subr.bf16.mxu0 0
    %8681 = vmatpush1.bf16.msra.mxu0 0
    %8682 = vmatprep.subr.bf16.mxu0 0
    %8683 = vmatpush1.bf16.msra.mxu0 0
    %8684 = vmatprep.subr.bf16.mxu0 0
    %8685 = vmatpush1.bf16.msra.mxu0 0
    %8686 = vmatprep.subr.bf16.mxu0 0
    %8687 = vmatpush1.bf16.msra.mxu0 0
    %8688 = vmatprep.subr.bf16.mxu0 0
    %8689 = vmatpush1.bf16.msra.mxu0 0
    %8690 = vmatprep.subr.bf16.mxu0 0
    %8691 = vmatpush1.bf16.msra.mxu0 0
    %8692 = vmatprep.subr.bf16.mxu0 0
    %8693 = vmatpush1.bf16.msra.mxu0 0
    %8694 = vmatprep.subr.bf16.mxu0 0
    %8695 = vmatpush1.bf16.msra.mxu0 0
    %8696 = vmatprep.subr.bf16.mxu0 0
    %8697 = vmatpush1.bf16.msra.mxu0 0
    %8698 = vmatprep.subr.bf16.mxu0 0
    %8699 = vmatpush1.bf16.msra.mxu0 0
    %8700 = vmatprep.subr.bf16.mxu0 0
    %8701 = vmatpush1.bf16.msra.mxu0 0
    %8702 = vmatprep.subr.bf16.mxu0 0
    %8703 = vmatpush1.bf16.msra.mxu0 0
    %8704 = vmatprep.mubr.bf16.mxu0 0
    %8705 = vmatmul.mubr.bf16.gmra.mrb[0].mxu0 %v8670
    %v8706 = vpop.f32.mrb[0].mxu0
    %v8707 = vadd.f32 0.0, %v8706
    %v8708 = vpop.f32.mrb[0].mxu0
    %v8709 = vpop.f32.mrb[0].mxu0
    %v8710 = vadd.f32 0.0, %v8709
    %v8711 = vpop.f32.mrb[0].mxu0
    %8712 = vdwg.mxu0
    %v8713 = vpack.c.bf16 %v8710, %v8707
    %v8714 = vld [vmem:[#allocation12 + $0x200] sm:$0xf]
    %v8715 = vld [vmem:[#allocation12 + $0x204] sm:$0xf]
    %v8716 = vld [vmem:[#allocation12 + $0x208] sm:$0xf]
    %v8717 = vld [vmem:[#allocation12 + $0x20c] sm:$0xf]
    %v8718 = vld [vmem:[#allocation12 + $0x210] sm:$0xf]
    %v8719 = vld [vmem:[#allocation12 + $0x214] sm:$0xf]
    %v8720 = vld [vmem:[#allocation12 + $0x218] sm:$0xf]
    %v8721 = vld [vmem:[#allocation12 + $0x21c] sm:$0xf]
    %v8722 = vld [vmem:[#allocation12 + $0x220] sm:$0xf]
    %v8723 = vld [vmem:[#allocation12 + $0x224] sm:$0xf]
    %v8724 = vld [vmem:[#allocation12 + $0x228] sm:$0xf]
    %v8725 = vld [vmem:[#allocation12 + $0x22c] sm:$0xf]
    %v8726 = vld [vmem:[#allocation12 + $0x230] sm:$0xf]
    %v8727 = vld [vmem:[#allocation12 + $0x234] sm:$0xf]
    %v8728 = vld [vmem:[#allocation12 + $0x238] sm:$0xf]
    %v8729 = vld [vmem:[#allocation12 + $0x23c] sm:$0xf]
    %v8746 = vunpack.c.l.b16 %v8714
    %v8747 = vunpack.c.l.b16 %v8715
    %v8748 = vunpack.c.l.b16 %v8716
    %v8749 = vunpack.c.l.b16 %v8717
    %v8750 = vunpack.c.l.b16 %v8718
    %v8751 = vunpack.c.l.b16 %v8719
    %v8752 = vunpack.c.l.b16 %v8720
    %v8753 = vunpack.c.l.b16 %v8721
    %v8754 = vunpack.c.l.b16 %v8722
    %v8755 = vunpack.c.l.b16 %v8723
    %v8756 = vunpack.c.l.b16 %v8724
    %v8757 = vunpack.c.l.b16 %v8725
    %v8758 = vunpack.c.l.b16 %v8726
    %v8759 = vunpack.c.l.b16 %v8727
    %v8760 = vunpack.c.l.b16 %v8728
    %v8761 = vunpack.c.l.b16 %v8729
    %v8762 = vpack.c.b16 %v8747, %v8746
    %v8763 = vpack.c.b16 %v8749, %v8748
    %v8764 = vpack.c.b16 %v8751, %v8750
    %v8765 = vpack.c.b16 %v8753, %v8752
    %v8766 = vpack.c.b16 %v8755, %v8754
    %v8767 = vpack.c.b16 %v8757, %v8756
    %v8768 = vpack.c.b16 %v8759, %v8758
    %v8769 = vpack.c.b16 %v8761, %v8760
    %8778 = vmatprep.subr.bf16.mxu0 0
    %8779 = vmatpush1.bf16.msra.mxu0 %v8762
    %8780 = vmatprep.subr.bf16.mxu0 0
    %8781 = vmatpush1.bf16.msra.mxu0 %v8763
    %8782 = vmatprep.subr.bf16.mxu0 0
    %8783 = vmatpush1.bf16.msra.mxu0 %v8764
    %8784 = vmatprep.subr.bf16.mxu0 0
    %8785 = vmatpush1.bf16.msra.mxu0 %v8765
    %8786 = vmatprep.subr.bf16.mxu0 0
    %8787 = vmatpush1.bf16.msra.mxu0 %v8766
    %8788 = vmatprep.subr.bf16.mxu0 0
    %8789 = vmatpush1.bf16.msra.mxu0 %v8767
    %8790 = vmatprep.subr.bf16.mxu0 0
    %8791 = vmatpush1.bf16.msra.mxu0 %v8768
    %8792 = vmatprep.subr.bf16.mxu0 0
    %8793 = vmatpush1.bf16.msra.mxu0 %v8769
    %8794 = vmatprep.subr.bf16.mxu0 0
    %8795 = vmatpush1.bf16.msra.mxu0 0
    %8796 = vmatprep.subr.bf16.mxu0 0
    %8797 = vmatpush1.bf16.msra.mxu0 0
    %8798 = vmatprep.subr.bf16.mxu0 0
    %8799 = vmatpush1.bf16.msra.mxu0 0
    %8800 = vmatprep.subr.bf16.mxu0 0
    %8801 = vmatpush1.bf16.msra.mxu0 0
    %8802 = vmatprep.subr.bf16.mxu0 0
    %8803 = vmatpush1.bf16.msra.mxu0 0
    %8804 = vmatprep.subr.bf16.mxu0 0
    %8805 = vmatpush1.bf16.msra.mxu0 0
    %8806 = vmatprep.subr.bf16.mxu0 0
    %8807 = vmatpush1.bf16.msra.mxu0 0
    %8808 = vmatprep.subr.bf16.mxu0 0
    %8809 = vmatpush1.bf16.msra.mxu0 0
    %8810 = vmatprep.mubr.bf16.mxu0 0
    %8811 = vmatmul.mubr.bf16.gmra.mrb[0].mxu0 %v8713
    %v8812 = vpop.f32.mrb[0].mxu0
    %v8813 = vadd.f32 0.0, %v8812
    %v8814 = vpop.f32.mrb[0].mxu0
    %v8815 = vpop.f32.mrb[0].mxu0
    %v8816 = vadd.f32 0.0, %v8815
    %v8817 = vpop.f32.mrb[0].mxu0
    %8818 = vdwg.mxu0
    %v8819 = vadd.f32 %v8660, %v8813
    %v8820 = vadd.f32 %v8661, %v8816
    %v8821 = vld [vmem:[#allocation13] sm:$0x1]
    %v8823 = vlaneseq
    %v8824 = vshrl.u32 %v8823, 7
    %v8825 = vsub.s32 0, %v8824
    %v8826 = vrot.slane %v8821, %v8825
    %v8828 = vadd.f32 %v8819, %v8826
    %v8829 = vadd.f32 %v8820, %v8826
    %v8830 = vmax.f32 %v8828, 0.0
    %v8831 = vmax.f32 %v8829, 0.0
    %v8832 = vpack.c.bf16 %v8831, %v8830
    %v8833 = vld [vmem:[%s10] sm:$0xf]
    %v8834 = vld [vmem:[%s10 + $0x4] sm:$0xf]
    %v8837 = vunpack.c.l.b16 %v8833
    %v8838 = vunpack.c.l.b16 %v8834
    %v8839 = vpack.c.b16 %v8838, %v8837
    %vm8840 = vcmask 130048
    %v8842 = vsel %vm8840, %v8839, 0
    %8844 = vmatprep.subr.bf16.mxu0 0
    %8845 = vmatpush1.bf16.msra.mxu0 %v8832
    %8846 = vmatprep.subr.bf16.mxu0 0
    %8847 = vmatpush1.bf16.msra.mxu0 0
    %8848 = vmatprep.subr.bf16.mxu0 0
    %8849 = vmatpush1.bf16.msra.mxu0 0
    %8850 = vmatprep.subr.bf16.mxu0 0
    %8851 = vmatpush1.bf16.msra.mxu0 0
    %8852 = vmatprep.subr.bf16.mxu0 0
    %8853 = vmatpush1.bf16.msra.mxu0 0
    %8854 = vmatprep.subr.bf16.mxu0 0
    %8855 = vmatpush1.bf16.msra.mxu0 0
    %8856 = vmatprep.subr.bf16.mxu0 0
    %8857 = vmatpush1.bf16.msra.mxu0 0
    %8858 = vmatprep.subr.bf16.mxu0 0
    %8859 = vmatpush1.bf16.msra.mxu0 0
    %8860 = vmatprep.subr.bf16.mxu0 0
    %8861 = vmatpush1.bf16.msra.mxu0 0
    %8862 = vmatprep.subr.bf16.mxu0 0
    %8863 = vmatpush1.bf16.msra.mxu0 0
    %8864 = vmatprep.subr.bf16.mxu0 0
    %8865 = vmatpush1.bf16.msra.mxu0 0
    %8866 = vmatprep.subr.bf16.mxu0 0
    %8867 = vmatpush1.bf16.msra.mxu0 0
    %8868 = vmatprep.subr.bf16.mxu0 0
    %8869 = vmatpush1.bf16.msra.mxu0 0
    %8870 = vmatprep.subr.bf16.mxu0 0
    %8871 = vmatpush1.bf16.msra.mxu0 0
    %8872 = vmatprep.subr.bf16.mxu0 0
    %8873 = vmatpush1.bf16.msra.mxu0 0
    %8874 = vmatprep.subr.bf16.mxu0 0
    %8875 = vmatpush1.bf16.msra.mxu0 0
    %8876 = vmatprep.mubr.bf16.mxu0 0
    %8877 = vmatmul.mubr.bf16.gmra.mrb[0].mxu0 %v8842
    %v8878 = vpop.f32.mrb[0].mxu0
    %v8879 = vadd.f32 0.0, %v8878
    %v8880 = vpop.f32.mrb[0].mxu0
    %v8881 = vpop.f32.mrb[0].mxu0
    %v8882 = vadd.f32 0.0, %v8881
    %v8883 = vpop.f32.mrb[0].mxu0
    %8884 = vdwg.mxu0
    %v8885 = vpack.c.bf16 %v8882, %v8879
    %v8886 = vld [vmem:[#allocation15] sm:$0xf]
    %v8887 = vld [vmem:[#allocation15 + $0x4] sm:$0xf]
    %v8888 = vld [vmem:[#allocation15 + $0x8] sm:$0xf]
    %v8889 = vld [vmem:[#allocation15 + $0xc] sm:$0xf]
    %v8890 = vld [vmem:[#allocation15 + $0x10] sm:$0xf]
    %v8891 = vld [vmem:[#allocation15 + $0x14] sm:$0xf]
    %v8892 = vld [vmem:[#allocation15 + $0x18] sm:$0xf]
    %v8893 = vld [vmem:[#allocation15 + $0x1c] sm:$0xf]
    %v8894 = vld [vmem:[#allocation15 + $0x20] sm:$0xf]
    %v8895 = vld [vmem:[#allocation15 + $0x24] sm:$0xf]
    %v8896 = vld [vmem:[#allocation15 + $0x28] sm:$0xf]
    %v8897 = vld [vmem:[#allocation15 + $0x2c] sm:$0xf]
    %v8898 = vld [vmem:[#allocation15 + $0x30] sm:$0xf]
    %v8899 = vld [vmem:[#allocation15 + $0x34] sm:$0xf]
    %v8900 = vld [vmem:[#allocation15 + $0x38] sm:$0xf]
    %v8901 = vld [vmem:[#allocation15 + $0x3c] sm:$0xf]
    %v8902 = vld [vmem:[%s10 + $0x8] sm:$0xf]
    %v8903 = vld [vmem:[%s10 + $0xc] sm:$0xf]
    %v8906 = vunpack.c.l.b16 %v8902
    %v8907 = vunpack.c.l.b16 %v8903
    %v8908 = vpack.c.b16 %v8907, %v8906
    %v8910 = vsel %vm8840, %v8908, 0
    %8912 = vmatprep.subr.bf16.mxu0 0
    %8913 = vmatpush1.bf16.msra.mxu0 %v8832
    %8914 = vmatprep.subr.bf16.mxu0 0
    %8915 = vmatpush1.bf16.msra.mxu0 0
    %8916 = vmatprep.subr.bf16.mxu0 0
    %8917 = vmatpush1.bf16.msra.mxu0 0
    %8918 = vmatprep.subr.bf16.mxu0 0
    %8919 = vmatpush1.bf16.msra.mxu0 0
    %8920 = vmatprep.subr.bf16.mxu0 0
    %8921 = vmatpush1.bf16.msra.mxu0 0
    %8922 = vmatprep.subr.bf16.mxu0 0
    %8923 = vmatpush1.bf16.msra.mxu0 0
    %8924 = vmatprep.subr.bf16.mxu0 0
    %8925 = vmatpush1.bf16.msra.mxu0 0
    %8926 = vmatprep.subr.bf16.mxu0 0
    %8927 = vmatpush1.bf16.msra.mxu0 0
    %8928 = vmatprep.subr.bf16.mxu0 0
    %8929 = vmatpush1.bf16.msra.mxu0 0
    %8930 = vmatprep.subr.bf16.mxu0 0
    %8931 = vmatpush1.bf16.msra.mxu0 0
    %8932 = vmatprep.subr.bf16.mxu0 0
    %8933 = vmatpush1.bf16.msra.mxu0 0
    %8934 = vmatprep.subr.bf16.mxu0 0
    %8935 = vmatpush1.bf16.msra.mxu0 0
    %8936 = vmatprep.subr.bf16.mxu0 0
    %8937 = vmatpush1.bf16.msra.mxu0 0
    %8938 = vmatprep.subr.bf16.mxu0 0
    %8939 = vmatpush1.bf16.msra.mxu0 0
    %8940 = vmatprep.subr.bf16.mxu0 0
    %8941 = vmatpush1.bf16.msra.mxu0 0
    %8942 = vmatprep.subr.bf16.mxu0 0
    %8943 = vmatpush1.bf16.msra.mxu0 0
    %8944 = vmatprep.mubr.bf16.mxu0 0
    %8945 = vmatmul.mubr.bf16.gmra.mrb[0].mxu0 %v8910
    %v8946 = vpop.f32.mrb[0].mxu0
    %v8947 = vadd.f32 0.0, %v8946
    %v8948 = vpop.f32.mrb[0].mxu0
    %v8949 = vpop.f32.mrb[0].mxu0
    %v8950 = vadd.f32 0.0, %v8949
    %v8951 = vpop.f32.mrb[0].mxu0
    %8952 = vdwg.mxu0
    %v8953 = vpack.c.bf16 %v8950, %v8947
    %v8954 = vld [vmem:[#allocation15 + $0x40] sm:$0xf]
    %v8955 = vld [vmem:[#allocation15 + $0x44] sm:$0xf]
    %v8956 = vld [vmem:[#allocation15 + $0x48] sm:$0xf]
    %v8957 = vld [vmem:[#allocation15 + $0x4c] sm:$0xf]
    %v8958 = vld [vmem:[#allocation15 + $0x50] sm:$0xf]
    %v8959 = vld [vmem:[#allocation15 + $0x54] sm:$0xf]
    %v8960 = vld [vmem:[#allocation15 + $0x58] sm:$0xf]
    %v8961 = vld [vmem:[#allocation15 + $0x5c] sm:$0xf]
    %v8962 = vld [vmem:[#allocation15 + $0x60] sm:$0xf]
    %v8963 = vld [vmem:[#allocation15 + $0x64] sm:$0xf]
    %v8964 = vld [vmem:[#allocation15 + $0x68] sm:$0xf]
    %v8965 = vld [vmem:[#allocation15 + $0x6c] sm:$0xf]
    %v8966 = vld [vmem:[#allocation15 + $0x70] sm:$0xf]
    %v8967 = vld [vmem:[#allocation15 + $0x74] sm:$0xf]
    %v8968 = vld [vmem:[#allocation15 + $0x78] sm:$0xf]
    %v8969 = vld [vmem:[#allocation15 + $0x7c] sm:$0xf]
    %v8986 = vunpack.c.l.b16 %v8954
    %v8987 = vunpack.c.l.b16 %v8955
    %v8988 = vunpack.c.l.b16 %v8956
    %v8989 = vunpack.c.l.b16 %v8957
    %v8990 = vunpack.c.l.b16 %v8958
    %v8991 = vunpack.c.l.b16 %v8959
    %v8992 = vunpack.c.l.b16 %v8960
    %v8993 = vunpack.c.l.b16 %v8961
    %v8994 = vunpack.c.l.b16 %v8962
    %v8995 = vunpack.c.l.b16 %v8963
    %v8996 = vunpack.c.l.b16 %v8964
    %v8997 = vunpack.c.l.b16 %v8965
    %v8998 = vunpack.c.l.b16 %v8966
    %v8999 = vunpack.c.l.b16 %v8967
    %v9000 = vunpack.c.l.b16 %v8968
    %v9001 = vunpack.c.l.b16 %v8969
    %v9002 = vpack.c.b16 %v8987, %v8986
    %v9003 = vpack.c.b16 %v8989, %v8988
    %v9004 = vpack.c.b16 %v8991, %v8990
    %v9005 = vpack.c.b16 %v8993, %v8992
    %v9006 = vpack.c.b16 %v8995, %v8994
    %v9007 = vpack.c.b16 %v8997, %v8996
    %v9008 = vpack.c.b16 %v8999, %v8998
    %v9009 = vpack.c.b16 %v9001, %v9000
    %9018 = vmatprep.subr.bf16.mxu0 0
    %9019 = vmatpush1.bf16.msra.mxu0 %v9002
    %9020 = vmatprep.subr.bf16.mxu0 0
    %9021 = vmatpush1.bf16.msra.mxu0 %v9003
    %9022 = vmatprep.subr.bf16.mxu0 0
    %9023 = vmatpush1.bf16.msra.mxu0 %v9004
    %9024 = vmatprep.subr.bf16.mxu0 0
    %9025 = vmatpush1.bf16.msra.mxu0 %v9005
    %9026 = vmatprep.subr.bf16.mxu0 0
    %9027 = vmatpush1.bf16.msra.mxu0 %v9006
    %9028 = vmatprep.subr.bf16.mxu0 0
    %9029 = vmatpush1.bf16.msra.mxu0 %v9007
    %9030 = vmatprep.subr.bf16.mxu0 0
    %9031 = vmatpush1.bf16.msra.mxu0 %v9008
    %9032 = vmatprep.subr.bf16.mxu0 0
    %9033 = vmatpush1.bf16.msra.mxu0 %v9009
    %9034 = vmatprep.subr.bf16.mxu0 0
    %9035 = vmatpush1.bf16.msra.mxu0 0
    %9036 = vmatprep.subr.bf16.mxu0 0
    %9037 = vmatpush1.bf16.msra.mxu0 0
    %9038 = vmatprep.subr.bf16.mxu0 0
    %9039 = vmatpush1.bf16.msra.mxu0 0
    %9040 = vmatprep.subr.bf16.mxu0 0
    %9041 = vmatpush1.bf16.msra.mxu0 0
    %9042 = vmatprep.subr.bf16.mxu0 0
    %9043 = vmatpush1.bf16.msra.mxu0 0
    %9044 = vmatprep.subr.bf16.mxu0 0
    %9045 = vmatpush1.bf16.msra.mxu0 0
    %9046 = vmatprep.subr.bf16.mxu0 0
    %9047 = vmatpush1.bf16.msra.mxu0 0
    %9048 = vmatprep.subr.bf16.mxu0 0
    %9049 = vmatpush1.bf16.msra.mxu0 0
    %9050 = vmatprep.mubr.bf16.mxu0 0
    %9051 = vmatmul.mubr.bf16.gmra.mrb[0].mxu0 %v8953
    %v9052 = vpop.f32.mrb[0].mxu0
    %v9053 = vadd.f32 0.0, %v9052
    %v9054 = vpop.f32.mrb[0].mxu0
    %v9055 = vpop.f32.mrb[0].mxu0
    %v9056 = vadd.f32 0.0, %v9055
    %v9057 = vpop.f32.mrb[0].mxu0
    %9058 = vdwg.mxu0
    %v9075 = vunpack.c.l.b16 %v8886
    %v9076 = vunpack.c.l.b16 %v8887
    %v9077 = vunpack.c.l.b16 %v8888
    %v9078 = vunpack.c.l.b16 %v8889
    %v9079 = vunpack.c.l.b16 %v8890
    %v9080 = vunpack.c.l.b16 %v8891
    %v9081 = vunpack.c.l.b16 %v8892
    %v9082 = vunpack.c.l.b16 %v8893
    %v9083 = vunpack.c.l.b16 %v8894
    %v9084 = vunpack.c.l.b16 %v8895
    %v9085 = vunpack.c.l.b16 %v8896
    %v9086 = vunpack.c.l.b16 %v8897
    %v9087 = vunpack.c.l.b16 %v8898
    %v9088 = vunpack.c.l.b16 %v8899
    %v9089 = vunpack.c.l.b16 %v8900
    %v9090 = vunpack.c.l.b16 %v8901
    %v9091 = vpack.c.b16 %v9076, %v9075
    %v9092 = vpack.c.b16 %v9078, %v9077
    %v9093 = vpack.c.b16 %v9080, %v9079
    %v9094 = vpack.c.b16 %v9082, %v9081
    %v9095 = vpack.c.b16 %v9084, %v9083
    %v9096 = vpack.c.b16 %v9086, %v9085
    %v9097 = vpack.c.b16 %v9088, %v9087
    %v9098 = vpack.c.b16 %v9090, %v9089
    %9107 = vmatprep.subr.bf16.mxu0 0
    %9108 = vmatpush1.bf16.msra.mxu0 %v9091
    %9109 = vmatprep.subr.bf16.mxu0 0
    %9110 = vmatpush1.bf16.msra.mxu0 %v9092
    %9111 = vmatprep.subr.bf16.mxu0 0
    %9112 = vmatpush1.bf16.msra.mxu0 %v9093
    %9113 = vmatprep.subr.bf16.mxu0 0
    %9114 = vmatpush1.bf16.msra.mxu0 %v9094
    %9115 = vmatprep.subr.bf16.mxu0 0
    %9116 = vmatpush1.bf16.msra.mxu0 %v9095
    %9117 = vmatprep.subr.bf16.mxu0 0
    %9118 = vmatpush1.bf16.msra.mxu0 %v9096
    %9119 = vmatprep.subr.bf16.mxu0 0
    %9120 = vmatpush1.bf16.msra.mxu0 %v9097
    %9121 = vmatprep.subr.bf16.mxu0 0
    %9122 = vmatpush1.bf16.msra.mxu0 %v9098
    %9123 = vmatprep.subr.bf16.mxu0 0
    %9124 = vmatpush1.bf16.msra.mxu0 0
    %9125 = vmatprep.subr.bf16.mxu0 0
    %9126 = vmatpush1.bf16.msra.mxu0 0
    %9127 = vmatprep.subr.bf16.mxu0 0
    %9128 = vmatpush1.bf16.msra.mxu0 0
    %9129 = vmatprep.subr.bf16.mxu0 0
    %9130 = vmatpush1.bf16.msra.mxu0 0
    %9131 = vmatprep.subr.bf16.mxu0 0
    %9132 = vmatpush1.bf16.msra.mxu0 0
    %9133 = vmatprep.subr.bf16.mxu0 0
    %9134 = vmatpush1.bf16.msra.mxu0 0
    %9135 = vmatprep.subr.bf16.mxu0 0
    %9136 = vmatpush1.bf16.msra.mxu0 0
    %9137 = vmatprep.subr.bf16.mxu0 0
    %9138 = vmatpush1.bf16.msra.mxu0 0
    %9139 = vmatprep.mubr.bf16.mxu0 0
    %9140 = vmatmul.mubr.bf16.gmra.mrb[0].mxu0 %v8885
    %v9141 = vpop.f32.mrb[0].mxu0
    %v9142 = vadd.f32 %v9053, %v9141
    %v9143 = vpop.f32.mrb[0].mxu0
    %v9144 = vpop.f32.mrb[0].mxu0
    %v9145 = vadd.f32 %v9056, %v9144
    %v9146 = vpop.f32.mrb[0].mxu0
    %9147 = vdwg.mxu0
    %v9148 = vld [vmem:[%s10 + $0x10] sm:$0xf]
    %v9149 = vld [vmem:[%s10 + $0x14] sm:$0xf]
    %v9152 = vunpack.c.l.b16 %v9148
    %v9153 = vunpack.c.l.b16 %v9149
    %v9154 = vpack.c.b16 %v9153, %v9152
    %v9156 = vsel %vm8840, %v9154, 0
    %9158 = vmatprep.subr.bf16.mxu0 0
    %9159 = vmatpush1.bf16.msra.mxu0 %v8832
    %9160 = vmatprep.subr.bf16.mxu0 0
    %9161 = vmatpush1.bf16.msra.mxu0 0
    %9162 = vmatprep.subr.bf16.mxu0 0
    %9163 = vmatpush1.bf16.msra.mxu0 0
    %9164 = vmatprep.subr.bf16.mxu0 0
    %9165 = vmatpush1.bf16.msra.mxu0 0
    %9166 = vmatprep.subr.bf16.mxu0 0
    %9167 = vmatpush1.bf16.msra.mxu0 0
    %9168 = vmatprep.subr.bf16.mxu0 0
    %9169 = vmatpush1.bf16.msra.mxu0 0
    %9170 = vmatprep.subr.bf16.mxu0 0
    %9171 = vmatpush1.bf16.msra.mxu0 0
    %9172 = vmatprep.subr.bf16.mxu0 0
    %9173 = vmatpush1.bf16.msra.mxu0 0
    %9174 = vmatprep.subr.bf16.mxu0 0
    %9175 = vmatpush1.bf16.msra.mxu0 0
    %9176 = vmatprep.subr.bf16.mxu0 0
    %9177 = vmatpush1.bf16.msra.mxu0 0
    %9178 = vmatprep.subr.bf16.mxu0 0
    %9179 = vmatpush1.bf16.msra.mxu0 0
    %9180 = vmatprep.subr.bf16.mxu0 0
    %9181 = vmatpush1.bf16.msra.mxu0 0
    %9182 = vmatprep.subr.bf16.mxu0 0
    %9183 = vmatpush1.bf16.msra.mxu0 0
    %9184 = vmatprep.subr.bf16.mxu0 0
    %9185 = vmatpush1.bf16.msra.mxu0 0
    %9186 = vmatprep.subr.bf16.mxu0 0
    %9187 = vmatpush1.bf16.msra.mxu0 0
    %9188 = vmatprep.subr.bf16.mxu0 0
    %9189 = vmatpush1.bf16.msra.mxu0 0
    %9190 = vmatprep.mubr.bf16.mxu0 0
    %9191 = vmatmul.mubr.bf16.gmra.mrb[0].mxu0 %v9156
    %v9192 = vpop.f32.mrb[0].mxu0
    %v9193 = vadd.f32 0.0, %v9192
    %v9194 = vpop.f32.mrb[0].mxu0
    %v9195 = vpop.f32.mrb[0].mxu0
    %v9196 = vadd.f32 0.0, %v9195
    %v9197 = vpop.f32.mrb[0].mxu0
    %9198 = vdwg.mxu0
    %v9199 = vpack.c.bf16 %v9196, %v9193
    %v9200 = vld [vmem:[#allocation15 + $0x80] sm:$0xf]
    %v9201 = vld [vmem:[#allocation15 + $0x84] sm:$0xf]
    %v9202 = vld [vmem:[#allocation15 + $0x88] sm:$0xf]
    %v9203 = vld [vmem:[#allocation15 + $0x8c] sm:$0xf]
    %v9204 = vld [vmem:[#allocation15 + $0x90] sm:$0xf]
    %v9205 = vld [vmem:[#allocation15 + $0x94] sm:$0xf]
    %v9206 = vld [vmem:[#allocation15 + $0x98] sm:$0xf]
    %v9207 = vld [vmem:[#allocation15 + $0x9c] sm:$0xf]
    %v9208 = vld [vmem:[#allocation15 + $0xa0] sm:$0xf]
    %v9209 = vld [vmem:[#allocation15 + $0xa4] sm:$0xf]
    %v9210 = vld [vmem:[#allocation15 + $0xa8] sm:$0xf]
    %v9211 = vld [vmem:[#allocation15 + $0xac] sm:$0xf]
    %v9212 = vld [vmem:[#allocation15 + $0xb0] sm:$0xf]
    %v9213 = vld [vmem:[#allocation15 + $0xb4] sm:$0xf]
    %v9214 = vld [vmem:[#allocation15 + $0xb8] sm:$0xf]
    %v9215 = vld [vmem:[#allocation15 + $0xbc] sm:$0xf]
    %v9232 = vunpack.c.l.b16 %v9200
    %v9233 = vunpack.c.l.b16 %v9201
    %v9234 = vunpack.c.l.b16 %v9202
    %v9235 = vunpack.c.l.b16 %v9203
    %v9236 = vunpack.c.l.b16 %v9204
    %v9237 = vunpack.c.l.b16 %v9205
    %v9238 = vunpack.c.l.b16 %v9206
    %v9239 = vunpack.c.l.b16 %v9207
    %v9240 = vunpack.c.l.b16 %v9208
    %v9241 = vunpack.c.l.b16 %v9209
    %v9242 = vunpack.c.l.b16 %v9210
    %v9243 = vunpack.c.l.b16 %v9211
    %v9244 = vunpack.c.l.b16 %v9212
    %v9245 = vunpack.c.l.b16 %v9213
    %v9246 = vunpack.c.l.b16 %v9214
    %v9247 = vunpack.c.l.b16 %v9215
    %v9248 = vpack.c.b16 %v9233, %v9232
    %v9249 = vpack.c.b16 %v9235, %v9234
    %v9250 = vpack.c.b16 %v9237, %v9236
    %v9251 = vpack.c.b16 %v9239, %v9238
    %v9252 = vpack.c.b16 %v9241, %v9240
    %v9253 = vpack.c.b16 %v9243, %v9242
    %v9254 = vpack.c.b16 %v9245, %v9244
    %v9255 = vpack.c.b16 %v9247, %v9246
    %9264 = vmatprep.subr.bf16.mxu0 0
    %9265 = vmatpush1.bf16.msra.mxu0 %v9248
    %9266 = vmatprep.subr.bf16.mxu0 0
    %9267 = vmatpush1.bf16.msra.mxu0 %v9249
    %9268 = vmatprep.subr.bf16.mxu0 0
    %9269 = vmatpush1.bf16.msra.mxu0 %v9250
    %9270 = vmatprep.subr.bf16.mxu0 0
    %9271 = vmatpush1.bf16.msra.mxu0 %v9251
    %9272 = vmatprep.subr.bf16.mxu0 0
    %9273 = vmatpush1.bf16.msra.mxu0 %v9252
    %9274 = vmatprep.subr.bf16.mxu0 0
    %9275 = vmatpush1.bf16.msra.mxu0 %v9253
    %9276 = vmatprep.subr.bf16.mxu0 0
    %9277 = vmatpush1.bf16.msra.mxu0 %v9254
    %9278 = vmatprep.subr.bf16.mxu0 0
    %9279 = vmatpush1.bf16.msra.mxu0 %v9255
    %9280 = vmatprep.subr.bf16.mxu0 0
    %9281 = vmatpush1.bf16.msra.mxu0 0
    %9282 = vmatprep.subr.bf16.mxu0 0
    %9283 = vmatpush1.bf16.msra.mxu0 0
    %9284 = vmatprep.subr.bf16.mxu0 0
    %9285 = vmatpush1.bf16.msra.mxu0 0
    %9286 = vmatprep.subr.bf16.mxu0 0
    %9287 = vmatpush1.bf16.msra.mxu0 0
    %9288 = vmatprep.subr.bf16.mxu0 0
    %9289 = vmatpush1.bf16.msra.mxu0 0
    %9290 = vmatprep.subr.bf16.mxu0 0
    %9291 = vmatpush1.bf16.msra.mxu0 0
    %9292 = vmatprep.subr.bf16.mxu0 0
    %9293 = vmatpush1.bf16.msra.mxu0 0
    %9294 = vmatprep.subr.bf16.mxu0 0
    %9295 = vmatpush1.bf16.msra.mxu0 0
    %9296 = vmatprep.mubr.bf16.mxu0 0
    %9297 = vmatmul.mubr.bf16.gmra.mrb[0].mxu0 %v9199
    %v9298 = vpop.f32.mrb[0].mxu0
    %v9299 = vadd.f32 0.0, %v9298
    %v9300 = vpop.f32.mrb[0].mxu0
    %v9301 = vpop.f32.mrb[0].mxu0
    %v9302 = vadd.f32 0.0, %v9301
    %v9303 = vpop.f32.mrb[0].mxu0
    %9304 = vdwg.mxu0
    %v9305 = vadd.f32 %v9142, %v9299
    %v9306 = vadd.f32 %v9145, %v9302
    %v9307 = vld [vmem:[%s10 + $0x18] sm:$0xf]
    %v9308 = vld [vmem:[%s10 + $0x1c] sm:$0xf]
    %v9311 = vunpack.c.l.b16 %v9307
    %v9312 = vunpack.c.l.b16 %v9308
    %v9313 = vpack.c.b16 %v9312, %v9311
    %v9315 = vsel %vm8840, %v9313, 0
    %9317 = vmatprep.subr.bf16.mxu0 0
    %9318 = vmatpush1.bf16.msra.mxu0 %v8832
    %9319 = vmatprep.subr.bf16.mxu0 0
    %9320 = vmatpush1.bf16.msra.mxu0 0
    %9321 = vmatprep.subr.bf16.mxu0 0
    %9322 = vmatpush1.bf16.msra.mxu0 0
    %9323 = vmatprep.subr.bf16.mxu0 0
    %9324 = vmatpush1.bf16.msra.mxu0 0
    %9325 = vmatprep.subr.bf16.mxu0 0
    %9326 = vmatpush1.bf16.msra.mxu0 0
    %9327 = vmatprep.subr.bf16.mxu0 0
    %9328 = vmatpush1.bf16.msra.mxu0 0
    %9329 = vmatprep.subr.bf16.mxu0 0
    %9330 = vmatpush1.bf16.msra.mxu0 0
    %9331 = vmatprep.subr.bf16.mxu0 0
    %9332 = vmatpush1.bf16.msra.mxu0 0
    %9333 = vmatprep.subr.bf16.mxu0 0
    %9334 = vmatpush1.bf16.msra.mxu0 0
    %9335 = vmatprep.subr.bf16.mxu0 0
    %9336 = vmatpush1.bf16.msra.mxu0 0
    %9337 = vmatprep.subr.bf16.mxu0 0
    %9338 = vmatpush1.bf16.msra.mxu0 0
    %9339 = vmatprep.subr.bf16.mxu0 0
    %9340 = vmatpush1.bf16.msra.mxu0 0
    %9341 = vmatprep.subr.bf16.mxu0 0
    %9342 = vmatpush1.bf16.msra.mxu0 0
    %9343 = vmatprep.subr.bf16.mxu0 0
    %9344 = vmatpush1.bf16.msra.mxu0 0
    %9345 = vmatprep.subr.bf16.mxu0 0
    %9346 = vmatpush1.bf16.msra.mxu0 0
    %9347 = vmatprep.subr.bf16.mxu0 0
    %9348 = vmatpush1.bf16.msra.mxu0 0
    %9349 = vmatprep.mubr.bf16.mxu0 0
    %9350 = vmatmul.mubr.bf16.gmra.mrb[0].mxu0 %v9315
    %v9351 = vpop.f32.mrb[0].mxu0
    %v9352 = vadd.f32 0.0, %v9351
    %v9353 = vpop.f32.mrb[0].mxu0
    %v9354 = vpop.f32.mrb[0].mxu0
    %v9355 = vadd.f32 0.0, %v9354
    %v9356 = vpop.f32.mrb[0].mxu0
    %9357 = vdwg.mxu0
    %v9358 = vpack.c.bf16 %v9355, %v9352
    %v9359 = vld [vmem:[#allocation15 + $0xc0] sm:$0xf]
    %v9360 = vld [vmem:[#allocation15 + $0xc4] sm:$0xf]
    %v9361 = vld [vmem:[#allocation15 + $0xc8] sm:$0xf]
    %v9362 = vld [vmem:[#allocation15 + $0xcc] sm:$0xf]
    %v9363 = vld [vmem:[#allocation15 + $0xd0] sm:$0xf]
    %v9364 = vld [vmem:[#allocation15 + $0xd4] sm:$0xf]
    %v9365 = vld [vmem:[#allocation15 + $0xd8] sm:$0xf]
    %v9366 = vld [vmem:[#allocation15 + $0xdc] sm:$0xf]
    %v9367 = vld [vmem:[#allocation15 + $0xe0] sm:$0xf]
    %v9368 = vld [vmem:[#allocation15 + $0xe4] sm:$0xf]
    %v9369 = vld [vmem:[#allocation15 + $0xe8] sm:$0xf]
    %v9370 = vld [vmem:[#allocation15 + $0xec] sm:$0xf]
    %v9371 = vld [vmem:[#allocation15 + $0xf0] sm:$0xf]
    %v9372 = vld [vmem:[#allocation15 + $0xf4] sm:$0xf]
    %v9373 = vld [vmem:[#allocation15 + $0xf8] sm:$0xf]
    %v9374 = vld [vmem:[#allocation15 + $0xfc] sm:$0xf]
    %v9391 = vunpack.c.l.b16 %v9359
    %v9392 = vunpack.c.l.b16 %v9360
    %v9393 = vunpack.c.l.b16 %v9361
    %v9394 = vunpack.c.l.b16 %v9362
    %v9395 = vunpack.c.l.b16 %v9363
    %v9396 = vunpack.c.l.b16 %v9364
    %v9397 = vunpack.c.l.b16 %v9365
    %v9398 = vunpack.c.l.b16 %v9366
    %v9399 = vunpack.c.l.b16 %v9367
    %v9400 = vunpack.c.l.b16 %v9368
    %v9401 = vunpack.c.l.b16 %v9369
    %v9402 = vunpack.c.l.b16 %v9370
    %v9403 = vunpack.c.l.b16 %v9371
    %v9404 = vunpack.c.l.b16 %v9372
    %v9405 = vunpack.c.l.b16 %v9373
    %v9406 = vunpack.c.l.b16 %v9374
    %v9407 = vpack.c.b16 %v9392, %v9391
    %v9408 = vpack.c.b16 %v9394, %v9393
    %v9409 = vpack.c.b16 %v9396, %v9395
    %v9410 = vpack.c.b16 %v9398, %v9397
    %v9411 = vpack.c.b16 %v9400, %v9399
    %v9412 = vpack.c.b16 %v9402, %v9401
    %v9413 = vpack.c.b16 %v9404, %v9403
    %v9414 = vpack.c.b16 %v9406, %v9405
    %9423 = vmatprep.subr.bf16.mxu0 0
    %9424 = vmatpush1.bf16.msra.mxu0 %v9407
    %9425 = vmatprep.subr.bf16.mxu0 0
    %9426 = vmatpush1.bf16.msra.mxu0 %v9408
    %9427 = vmatprep.subr.bf16.mxu0 0
    %9428 = vmatpush1.bf16.msra.mxu0 %v9409
    %9429 = vmatprep.subr.bf16.mxu0 0
    %9430 = vmatpush1.bf16.msra.mxu0 %v9410
    %9431 = vmatprep.subr.bf16.mxu0 0
    %9432 = vmatpush1.bf16.msra.mxu0 %v9411
    %9433 = vmatprep.subr.bf16.mxu0 0
    %9434 = vmatpush1.bf16.msra.mxu0 %v9412
    %9435 = vmatprep.subr.bf16.mxu0 0
    %9436 = vmatpush1.bf16.msra.mxu0 %v9413
    %9437 = vmatprep.subr.bf16.mxu0 0
    %9438 = vmatpush1.bf16.msra.mxu0 %v9414
    %9439 = vmatprep.subr.bf16.mxu0 0
    %9440 = vmatpush1.bf16.msra.mxu0 0
    %9441 = vmatprep.subr.bf16.mxu0 0
    %9442 = vmatpush1.bf16.msra.mxu0 0
    %9443 = vmatprep.subr.bf16.mxu0 0
    %9444 = vmatpush1.bf16.msra.mxu0 0
    %9445 = vmatprep.subr.bf16.mxu0 0
    %9446 = vmatpush1.bf16.msra.mxu0 0
    %9447 = vmatprep.subr.bf16.mxu0 0
    %9448 = vmatpush1.bf16.msra.mxu0 0
    %9449 = vmatprep.subr.bf16.mxu0 0
    %9450 = vmatpush1.bf16.msra.mxu0 0
    %9451 = vmatprep.subr.bf16.mxu0 0
    %9452 = vmatpush1.bf16.msra.mxu0 0
    %9453 = vmatprep.subr.bf16.mxu0 0
    %9454 = vmatpush1.bf16.msra.mxu0 0
    %9455 = vmatprep.mubr.bf16.mxu0 0
    %9456 = vmatmul.mubr.bf16.gmra.mrb[0].mxu0 %v9358
    %v9457 = vpop.f32.mrb[0].mxu0
    %v9458 = vadd.f32 0.0, %v9457
    %v9459 = vpop.f32.mrb[0].mxu0
    %v9460 = vpop.f32.mrb[0].mxu0
    %v9461 = vadd.f32 0.0, %v9460
    %v9462 = vpop.f32.mrb[0].mxu0
    %9463 = vdwg.mxu0
    %v9464 = vadd.f32 %v9305, %v9458
    %v9465 = vadd.f32 %v9306, %v9461
    %v9466 = vld [vmem:[%s10 + $0x20] sm:$0xf]
    %v9467 = vld [vmem:[%s10 + $0x24] sm:$0xf]
    %v9470 = vunpack.c.l.b16 %v9466
    %v9471 = vunpack.c.l.b16 %v9467
    %v9472 = vpack.c.b16 %v9471, %v9470
    %v9474 = vsel %vm8840, %v9472, 0
    %9476 = vmatprep.subr.bf16.mxu0 0
    %9477 = vmatpush1.bf16.msra.mxu0 %v8832
    %9478 = vmatprep.subr.bf16.mxu0 0
    %9479 = vmatpush1.bf16.msra.mxu0 0
    %9480 = vmatprep.subr.bf16.mxu0 0
    %9481 = vmatpush1.bf16.msra.mxu0 0
    %9482 = vmatprep.subr.bf16.mxu0 0
    %9483 = vmatpush1.bf16.msra.mxu0 0
    %9484 = vmatprep.subr.bf16.mxu0 0
    %9485 = vmatpush1.bf16.msra.mxu0 0
    %9486 = vmatprep.subr.bf16.mxu0 0
    %9487 = vmatpush1.bf16.msra.mxu0 0
    %9488 = vmatprep.subr.bf16.mxu0 0
    %9489 = vmatpush1.bf16.msra.mxu0 0
    %9490 = vmatprep.subr.bf16.mxu0 0
    %9491 = vmatpush1.bf16.msra.mxu0 0
    %9492 = vmatprep.subr.bf16.mxu0 0
    %9493 = vmatpush1.bf16.msra.mxu0 0
    %9494 = vmatprep.subr.bf16.mxu0 0
    %9495 = vmatpush1.bf16.msra.mxu0 0
    %9496 = vmatprep.subr.bf16.mxu0 0
    %9497 = vmatpush1.bf16.msra.mxu0 0
    %9498 = vmatprep.subr.bf16.mxu0 0
    %9499 = vmatpush1.bf16.msra.mxu0 0
    %9500 = vmatprep.subr.bf16.mxu0 0
    %9501 = vmatpush1.bf16.msra.mxu0 0
    %9502 = vmatprep.subr.bf16.mxu0 0
    %9503 = vmatpush1.bf16.msra.mxu0 0
    %9504 = vmatprep.subr.bf16.mxu0 0
    %9505 = vmatpush1.bf16.msra.mxu0 0
    %9506 = vmatprep.subr.bf16.mxu0 0
    %9507 = vmatpush1.bf16.msra.mxu0 0
    %9508 = vmatprep.mubr.bf16.mxu0 0
    %9509 = vmatmul.mubr.bf16.gmra.mrb[0].mxu0 %v9474
    %v9510 = vpop.f32.mrb[0].mxu0
    %v9511 = vadd.f32 0.0, %v9510
    %v9512 = vpop.f32.mrb[0].mxu0
    %v9513 = vpop.f32.mrb[0].mxu0
    %v9514 = vadd.f32 0.0, %v9513
    %v9515 = vpop.f32.mrb[0].mxu0
    %9516 = vdwg.mxu0
    %v9517 = vpack.c.bf16 %v9514, %v9511
    %v9518 = vld [vmem:[#allocation15 + $0x100] sm:$0xf]
    %v9519 = vld [vmem:[#allocation15 + $0x104] sm:$0xf]
    %v9520 = vld [vmem:[#allocation15 + $0x108] sm:$0xf]
    %v9521 = vld [vmem:[#allocation15 + $0x10c] sm:$0xf]
    %v9522 = vld [vmem:[#allocation15 + $0x110] sm:$0xf]
    %v9523 = vld [vmem:[#allocation15 + $0x114] sm:$0xf]
    %v9524 = vld [vmem:[#allocation15 + $0x118] sm:$0xf]
    %v9525 = vld [vmem:[#allocation15 + $0x11c] sm:$0xf]
    %v9526 = vld [vmem:[#allocation15 + $0x120] sm:$0xf]
    %v9527 = vld [vmem:[#allocation15 + $0x124] sm:$0xf]
    %v9528 = vld [vmem:[#allocation15 + $0x128] sm:$0xf]
    %v9529 = vld [vmem:[#allocation15 + $0x12c] sm:$0xf]
    %v9530 = vld [vmem:[#allocation15 + $0x130] sm:$0xf]
    %v9531 = vld [vmem:[#allocation15 + $0x134] sm:$0xf]
    %v9532 = vld [vmem:[#allocation15 + $0x138] sm:$0xf]
    %v9533 = vld [vmem:[#allocation15 + $0x13c] sm:$0xf]
    %v9550 = vunpack.c.l.b16 %v9518
    %v9551 = vunpack.c.l.b16 %v9519
    %v9552 = vunpack.c.l.b16 %v9520
    %v9553 = vunpack.c.l.b16 %v9521
    %v9554 = vunpack.c.l.b16 %v9522
    %v9555 = vunpack.c.l.b16 %v9523
    %v9556 = vunpack.c.l.b16 %v9524
    %v9557 = vunpack.c.l.b16 %v9525
    %v9558 = vunpack.c.l.b16 %v9526
    %v9559 = vunpack.c.l.b16 %v9527
    %v9560 = vunpack.c.l.b16 %v9528
    %v9561 = vunpack.c.l.b16 %v9529
    %v9562 = vunpack.c.l.b16 %v9530
    %v9563 = vunpack.c.l.b16 %v9531
    %v9564 = vunpack.c.l.b16 %v9532
    %v9565 = vunpack.c.l.b16 %v9533
    %v9566 = vpack.c.b16 %v9551, %v9550
    %v9567 = vpack.c.b16 %v9553, %v9552
    %v9568 = vpack.c.b16 %v9555, %v9554
    %v9569 = vpack.c.b16 %v9557, %v9556
    %v9570 = vpack.c.b16 %v9559, %v9558
    %v9571 = vpack.c.b16 %v9561, %v9560
    %v9572 = vpack.c.b16 %v9563, %v9562
    %v9573 = vpack.c.b16 %v9565, %v9564
    %9582 = vmatprep.subr.bf16.mxu0 0
    %9583 = vmatpush1.bf16.msra.mxu0 %v9566
    %9584 = vmatprep.subr.bf16.mxu0 0
    %9585 = vmatpush1.bf16.msra.mxu0 %v9567
    %9586 = vmatprep.subr.bf16.mxu0 0
    %9587 = vmatpush1.bf16.msra.mxu0 %v9568
    %9588 = vmatprep.subr.bf16.mxu0 0
    %9589 = vmatpush1.bf16.msra.mxu0 %v9569
    %9590 = vmatprep.subr.bf16.mxu0 0
    %9591 = vmatpush1.bf16.msra.mxu0 %v9570
    %9592 = vmatprep.subr.bf16.mxu0 0
    %9593 = vmatpush1.bf16.msra.mxu0 %v9571
    %9594 = vmatprep.subr.bf16.mxu0 0
    %9595 = vmatpush1.bf16.msra.mxu0 %v9572
    %9596 = vmatprep.subr.bf16.mxu0 0
    %9597 = vmatpush1.bf16.msra.mxu0 %v9573
    %9598 = vmatprep.subr.bf16.mxu0 0
    %9599 = vmatpush1.bf16.msra.mxu0 0
    %9600 = vmatprep.subr.bf16.mxu0 0
    %9601 = vmatpush1.bf16.msra.mxu0 0
    %9602 = vmatprep.subr.bf16.mxu0 0
    %9603 = vmatpush1.bf16.msra.mxu0 0
    %9604 = vmatprep.subr.bf16.mxu0 0
    %9605 = vmatpush1.bf16.msra.mxu0 0
    %9606 = vmatprep.subr.bf16.mxu0 0
    %9607 = vmatpush1.bf16.msra.mxu0 0
    %9608 = vmatprep.subr.bf16.mxu0 0
    %9609 = vmatpush1.bf16.msra.mxu0 0
    %9610 = vmatprep.subr.bf16.mxu0 0
    %9611 = vmatpush1.bf16.msra.mxu0 0
    %9612 = vmatprep.subr.bf16.mxu0 0
    %9613 = vmatpush1.bf16.msra.mxu0 0
    %9614 = vmatprep.mubr.bf16.mxu0 0
    %9615 = vmatmul.mubr.bf16.gmra.mrb[0].mxu0 %v9517
    %v9616 = vpop.f32.mrb[0].mxu0
    %v9617 = vadd.f32 0.0, %v9616
    %v9618 = vpop.f32.mrb[0].mxu0
    %v9619 = vpop.f32.mrb[0].mxu0
    %v9620 = vadd.f32 0.0, %v9619
    %v9621 = vpop.f32.mrb[0].mxu0
    %9622 = vdwg.mxu0
    %v9623 = vadd.f32 %v9464, %v9617
    %v9624 = vadd.f32 %v9465, %v9620
    %v9625 = vld [vmem:[%s10 + $0x28] sm:$0xf]
    %v9626 = vld [vmem:[%s10 + $0x2c] sm:$0xf]
    %v9629 = vunpack.c.l.b16 %v9625
    %v9630 = vunpack.c.l.b16 %v9626
    %v9631 = vpack.c.b16 %v9630, %v9629
    %v9633 = vsel %vm8840, %v9631, 0
    %9635 = vmatprep.subr.bf16.mxu0 0
    %9636 = vmatpush1.bf16.msra.mxu0 %v8832
    %9637 = vmatprep.subr.bf16.mxu0 0
    %9638 = vmatpush1.bf16.msra.mxu0 0
    %9639 = vmatprep.subr.bf16.mxu0 0
    %9640 = vmatpush1.bf16.msra.mxu0 0
    %9641 = vmatprep.subr.bf16.mxu0 0
    %9642 = vmatpush1.bf16.msra.mxu0 0
    %9643 = vmatprep.subr.bf16.mxu0 0
    %9644 = vmatpush1.bf16.msra.mxu0 0
    %9645 = vmatprep.subr.bf16.mxu0 0
    %9646 = vmatpush1.bf16.msra.mxu0 0
    %9647 = vmatprep.subr.bf16.mxu0 0
    %9648 = vmatpush1.bf16.msra.mxu0 0
    %9649 = vmatprep.subr.bf16.mxu0 0
    %9650 = vmatpush1.bf16.msra.mxu0 0
    %9651 = vmatprep.subr.bf16.mxu0 0
    %9652 = vmatpush1.bf16.msra.mxu0 0
    %9653 = vmatprep.subr.bf16.mxu0 0
    %9654 = vmatpush1.bf16.msra.mxu0 0
    %9655 = vmatprep.subr.bf16.mxu0 0
    %9656 = vmatpush1.bf16.msra.mxu0 0
    %9657 = vmatprep.subr.bf16.mxu0 0
    %9658 = vmatpush1.bf16.msra.mxu0 0
    %9659 = vmatprep.subr.bf16.mxu0 0
    %9660 = vmatpush1.bf16.msra.mxu0 0
    %9661 = vmatprep.subr.bf16.mxu0 0
    %9662 = vmatpush1.bf16.msra.mxu0 0
    %9663 = vmatprep.subr.bf16.mxu0 0
    %9664 = vmatpush1.bf16.msra.mxu0 0
    %9665 = vmatprep.subr.bf16.mxu0 0
    %9666 = vmatpush1.bf16.msra.mxu0 0
    %9667 = vmatprep.mubr.bf16.mxu0 0
    %9668 = vmatmul.mubr.bf16.gmra.mrb[0].mxu0 %v9633
    %v9669 = vpop.f32.mrb[0].mxu0
    %v9670 = vadd.f32 0.0, %v9669
    %v9671 = vpop.f32.mrb[0].mxu0
    %v9672 = vpop.f32.mrb[0].mxu0
    %v9673 = vadd.f32 0.0, %v9672
    %v9674 = vpop.f32.mrb[0].mxu0
    %9675 = vdwg.mxu0
    %v9676 = vpack.c.bf16 %v9673, %v9670
    %v9677 = vld [vmem:[#allocation15 + $0x140] sm:$0xf]
    %v9678 = vld [vmem:[#allocation15 + $0x144] sm:$0xf]
    %v9679 = vld [vmem:[#allocation15 + $0x148] sm:$0xf]
    %v9680 = vld [vmem:[#allocation15 + $0x14c] sm:$0xf]
    %v9681 = vld [vmem:[#allocation15 + $0x150] sm:$0xf]
    %v9682 = vld [vmem:[#allocation15 + $0x154] sm:$0xf]
    %v9683 = vld [vmem:[#allocation15 + $0x158] sm:$0xf]
    %v9684 = vld [vmem:[#allocation15 + $0x15c] sm:$0xf]
    %v9685 = vld [vmem:[#allocation15 + $0x160] sm:$0xf]
    %v9686 = vld [vmem:[#allocation15 + $0x164] sm:$0xf]
    %v9687 = vld [vmem:[#allocation15 + $0x168] sm:$0xf]
    %v9688 = vld [vmem:[#allocation15 + $0x16c] sm:$0xf]
    %v9689 = vld [vmem:[#allocation15 + $0x170] sm:$0xf]
    %v9690 = vld [vmem:[#allocation15 + $0x174] sm:$0xf]
    %v9691 = vld [vmem:[#allocation15 + $0x178] sm:$0xf]
    %v9692 = vld [vmem:[#allocation15 + $0x17c] sm:$0xf]
    %v9709 = vunpack.c.l.b16 %v9677
    %v9710 = vunpack.c.l.b16 %v9678
    %v9711 = vunpack.c.l.b16 %v9679
    %v9712 = vunpack.c.l.b16 %v9680
    %v9713 = vunpack.c.l.b16 %v9681
    %v9714 = vunpack.c.l.b16 %v9682
    %v9715 = vunpack.c.l.b16 %v9683
    %v9716 = vunpack.c.l.b16 %v9684
    %v9717 = vunpack.c.l.b16 %v9685
    %v9718 = vunpack.c.l.b16 %v9686
    %v9719 = vunpack.c.l.b16 %v9687
    %v9720 = vunpack.c.l.b16 %v9688
    %v9721 = vunpack.c.l.b16 %v9689
    %v9722 = vunpack.c.l.b16 %v9690
    %v9723 = vunpack.c.l.b16 %v9691
    %v9724 = vunpack.c.l.b16 %v9692
    %v9725 = vpack.c.b16 %v9710, %v9709
    %v9726 = vpack.c.b16 %v9712, %v9711
    %v9727 = vpack.c.b16 %v9714, %v9713
    %v9728 = vpack.c.b16 %v9716, %v9715
    %v9729 = vpack.c.b16 %v9718, %v9717
    %v9730 = vpack.c.b16 %v9720, %v9719
    %v9731 = vpack.c.b16 %v9722, %v9721
    %v9732 = vpack.c.b16 %v9724, %v9723
    %9741 = vmatprep.subr.bf16.mxu0 0
    %9742 = vmatpush1.bf16.msra.mxu0 %v9725
    %9743 = vmatprep.subr.bf16.mxu0 0
    %9744 = vmatpush1.bf16.msra.mxu0 %v9726
    %9745 = vmatprep.subr.bf16.mxu0 0
    %9746 = vmatpush1.bf16.msra.mxu0 %v9727
    %9747 = vmatprep.subr.bf16.mxu0 0
    %9748 = vmatpush1.bf16.msra.mxu0 %v9728
    %9749 = vmatprep.subr.bf16.mxu0 0
    %9750 = vmatpush1.bf16.msra.mxu0 %v9729
    %9751 = vmatprep.subr.bf16.mxu0 0
    %9752 = vmatpush1.bf16.msra.mxu0 %v9730
    %9753 = vmatprep.subr.bf16.mxu0 0
    %9754 = vmatpush1.bf16.msra.mxu0 %v9731
    %9755 = vmatprep.subr.bf16.mxu0 0
    %9756 = vmatpush1.bf16.msra.mxu0 %v9732
    %9757 = vmatprep.subr.bf16.mxu0 0
    %9758 = vmatpush1.bf16.msra.mxu0 0
    %9759 = vmatprep.subr.bf16.mxu0 0
    %9760 = vmatpush1.bf16.msra.mxu0 0
    %9761 = vmatprep.subr.bf16.mxu0 0
    %9762 = vmatpush1.bf16.msra.mxu0 0
    %9763 = vmatprep.subr.bf16.mxu0 0
    %9764 = vmatpush1.bf16.msra.mxu0 0
    %9765 = vmatprep.subr.bf16.mxu0 0
    %9766 = vmatpush1.bf16.msra.mxu0 0
    %9767 = vmatprep.subr.bf16.mxu0 0
    %9768 = vmatpush1.bf16.msra.mxu0 0
    %9769 = vmatprep.subr.bf16.mxu0 0
    %9770 = vmatpush1.bf16.msra.mxu0 0
    %9771 = vmatprep.subr.bf16.mxu0 0
    %9772 = vmatpush1.bf16.msra.mxu0 0
    %9773 = vmatprep.mubr.bf16.mxu0 0
    %9774 = vmatmul.mubr.bf16.gmra.mrb[0].mxu0 %v9676
    %v9775 = vpop.f32.mrb[0].mxu0
    %v9776 = vadd.f32 0.0, %v9775
    %v9777 = vpop.f32.mrb[0].mxu0
    %v9778 = vpop.f32.mrb[0].mxu0
    %v9779 = vadd.f32 0.0, %v9778
    %v9780 = vpop.f32.mrb[0].mxu0
    %9781 = vdwg.mxu0
    %v9782 = vadd.f32 %v9623, %v9776
    %v9783 = vadd.f32 %v9624, %v9779
    %v9784 = vld [vmem:[%s10 + $0x30] sm:$0xf]
    %v9785 = vld [vmem:[%s10 + $0x34] sm:$0xf]
    %v9788 = vunpack.c.l.b16 %v9784
    %v9789 = vunpack.c.l.b16 %v9785
    %v9790 = vpack.c.b16 %v9789, %v9788
    %v9792 = vsel %vm8840, %v9790, 0
    %9794 = vmatprep.subr.bf16.mxu0 0
    %9795 = vmatpush1.bf16.msra.mxu0 %v8832
    %9796 = vmatprep.subr.bf16.mxu0 0
    %9797 = vmatpush1.bf16.msra.mxu0 0
    %9798 = vmatprep.subr.bf16.mxu0 0
    %9799 = vmatpush1.bf16.msra.mxu0 0
    %9800 = vmatprep.subr.bf16.mxu0 0
    %9801 = vmatpush1.bf16.msra.mxu0 0
    %9802 = vmatprep.subr.bf16.mxu0 0
    %9803 = vmatpush1.bf16.msra.mxu0 0
    %9804 = vmatprep.subr.bf16.mxu0 0
    %9805 = vmatpush1.bf16.msra.mxu0 0
    %9806 = vmatprep.subr.bf16.mxu0 0
    %9807 = vmatpush1.bf16.msra.mxu0 0
    %9808 = vmatprep.subr.bf16.mxu0 0
    %9809 = vmatpush1.bf16.msra.mxu0 0
    %9810 = vmatprep.subr.bf16.mxu0 0
    %9811 = vmatpush1.bf16.msra.mxu0 0
    %9812 = vmatprep.subr.bf16.mxu0 0
    %9813 = vmatpush1.bf16.msra.mxu0 0
    %9814 = vmatprep.subr.bf16.mxu0 0
    %9815 = vmatpush1.bf16.msra.mxu0 0
    %9816 = vmatprep.subr.bf16.mxu0 0
    %9817 = vmatpush1.bf16.msra.mxu0 0
    %9818 = vmatprep.subr.bf16.mxu0 0
    %9819 = vmatpush1.bf16.msra.mxu0 0
    %9820 = vmatprep.subr.bf16.mxu0 0
    %9821 = vmatpush1.bf16.msra.mxu0 0
    %9822 = vmatprep.subr.bf16.mxu0 0
    %9823 = vmatpush1.bf16.msra.mxu0 0
    %9824 = vmatprep.subr.bf16.mxu0 0
    %9825 = vmatpush1.bf16.msra.mxu0 0
    %9826 = vmatprep.mubr.bf16.mxu0 0
    %9827 = vmatmul.mubr.bf16.gmra.mrb[0].mxu0 %v9792
    %v9828 = vpop.f32.mrb[0].mxu0
    %v9829 = vadd.f32 0.0, %v9828
    %v9830 = vpop.f32.mrb[0].mxu0
    %v9831 = vpop.f32.mrb[0].mxu0
    %v9832 = vadd.f32 0.0, %v9831
    %v9833 = vpop.f32.mrb[0].mxu0
    %9834 = vdwg.mxu0
    %v9835 = vpack.c.bf16 %v9832, %v9829
    %v9836 = vld [vmem:[#allocation15 + $0x180] sm:$0xf]
    %v9837 = vld [vmem:[#allocation15 + $0x184] sm:$0xf]
    %v9838 = vld [vmem:[#allocation15 + $0x188] sm:$0xf]
    %v9839 = vld [vmem:[#allocation15 + $0x18c] sm:$0xf]
    %v9840 = vld [vmem:[#allocation15 + $0x190] sm:$0xf]
    %v9841 = vld [vmem:[#allocation15 + $0x194] sm:$0xf]
    %v9842 = vld [vmem:[#allocation15 + $0x198] sm:$0xf]
    %v9843 = vld [vmem:[#allocation15 + $0x19c] sm:$0xf]
    %v9844 = vld [vmem:[#allocation15 + $0x1a0] sm:$0xf]
    %v9845 = vld [vmem:[#allocation15 + $0x1a4] sm:$0xf]
    %v9846 = vld [vmem:[#allocation15 + $0x1a8] sm:$0xf]
    %v9847 = vld [vmem:[#allocation15 + $0x1ac] sm:$0xf]
    %v9848 = vld [vmem:[#allocation15 + $0x1b0] sm:$0xf]
    %v9849 = vld [vmem:[#allocation15 + $0x1b4] sm:$0xf]
    %v9850 = vld [vmem:[#allocation15 + $0x1b8] sm:$0xf]
    %v9851 = vld [vmem:[#allocation15 + $0x1bc] sm:$0xf]
    %v9868 = vunpack.c.l.b16 %v9836
    %v9869 = vunpack.c.l.b16 %v9837
    %v9870 = vunpack.c.l.b16 %v9838
    %v9871 = vunpack.c.l.b16 %v9839
    %v9872 = vunpack.c.l.b16 %v9840
    %v9873 = vunpack.c.l.b16 %v9841
    %v9874 = vunpack.c.l.b16 %v9842
    %v9875 = vunpack.c.l.b16 %v9843
    %v9876 = vunpack.c.l.b16 %v9844
    %v9877 = vunpack.c.l.b16 %v9845
    %v9878 = vunpack.c.l.b16 %v9846
    %v9879 = vunpack.c.l.b16 %v9847
    %v9880 = vunpack.c.l.b16 %v9848
    %v9881 = vunpack.c.l.b16 %v9849
    %v9882 = vunpack.c.l.b16 %v9850
    %v9883 = vunpack.c.l.b16 %v9851
    %v9884 = vpack.c.b16 %v9869, %v9868
    %v9885 = vpack.c.b16 %v9871, %v9870
    %v9886 = vpack.c.b16 %v9873, %v9872
    %v9887 = vpack.c.b16 %v9875, %v9874
    %v9888 = vpack.c.b16 %v9877, %v9876
    %v9889 = vpack.c.b16 %v9879, %v9878
    %v9890 = vpack.c.b16 %v9881, %v9880
    %v9891 = vpack.c.b16 %v9883, %v9882
    %9900 = vmatprep.subr.bf16.mxu0 0
    %9901 = vmatpush1.bf16.msra.mxu0 %v9884
    %9902 = vmatprep.subr.bf16.mxu0 0
    %9903 = vmatpush1.bf16.msra.mxu0 %v9885
    %9904 = vmatprep.subr.bf16.mxu0 0
    %9905 = vmatpush1.bf16.msra.mxu0 %v9886
    %9906 = vmatprep.subr.bf16.mxu0 0
    %9907 = vmatpush1.bf16.msra.mxu0 %v9887
    %9908 = vmatprep.subr.bf16.mxu0 0
    %9909 = vmatpush1.bf16.msra.mxu0 %v9888
    %9910 = vmatprep.subr.bf16.mxu0 0
    %9911 = vmatpush1.bf16.msra.mxu0 %v9889
    %9912 = vmatprep.subr.bf16.mxu0 0
    %9913 = vmatpush1.bf16.msra.mxu0 %v9890
    %9914 = vmatprep.subr.bf16.mxu0 0
    %9915 = vmatpush1.bf16.msra.mxu0 %v9891
    %9916 = vmatprep.subr.bf16.mxu0 0
    %9917 = vmatpush1.bf16.msra.mxu0 0
    %9918 = vmatprep.subr.bf16.mxu0 0
    %9919 = vmatpush1.bf16.msra.mxu0 0
    %9920 = vmatprep.subr.bf16.mxu0 0
    %9921 = vmatpush1.bf16.msra.mxu0 0
    %9922 = vmatprep.subr.bf16.mxu0 0
    %9923 = vmatpush1.bf16.msra.mxu0 0
    %9924 = vmatprep.subr.bf16.mxu0 0
    %9925 = vmatpush1.bf16.msra.mxu0 0
    %9926 = vmatprep.subr.bf16.mxu0 0
    %9927 = vmatpush1.bf16.msra.mxu0 0
    %9928 = vmatprep.subr.bf16.mxu0 0
    %9929 = vmatpush1.bf16.msra.mxu0 0
    %9930 = vmatprep.subr.bf16.mxu0 0
    %9931 = vmatpush1.bf16.msra.mxu0 0
    %9932 = vmatprep.mubr.bf16.mxu0 0
    %9933 = vmatmul.mubr.bf16.gmra.mrb[0].mxu0 %v9835
    %v9934 = vpop.f32.mrb[0].mxu0
    %v9935 = vadd.f32 0.0, %v9934
    %v9936 = vpop.f32.mrb[0].mxu0
    %v9937 = vpop.f32.mrb[0].mxu0
    %v9938 = vadd.f32 0.0, %v9937
    %v9939 = vpop.f32.mrb[0].mxu0
    %9940 = vdwg.mxu0
    %v9941 = vadd.f32 %v9782, %v9935
    %v9942 = vadd.f32 %v9783, %v9938
    %v9943 = vld [vmem:[%s10 + $0x38] sm:$0xf]
    %v9944 = vld [vmem:[%s10 + $0x3c] sm:$0xf]
    %v9947 = vunpack.c.l.b16 %v9943
    %v9948 = vunpack.c.l.b16 %v9944
    %v9949 = vpack.c.b16 %v9948, %v9947
    %v9951 = vsel %vm8840, %v9949, 0
    %9953 = vmatprep.subr.bf16.mxu0 0
    %9954 = vmatpush1.bf16.msra.mxu0 %v8832
    %9955 = vmatprep.subr.bf16.mxu0 0
    %9956 = vmatpush1.bf16.msra.mxu0 0
    %9957 = vmatprep.subr.bf16.mxu0 0
    %9958 = vmatpush1.bf16.msra.mxu0 0
    %9959 = vmatprep.subr.bf16.mxu0 0
    %9960 = vmatpush1.bf16.msra.mxu0 0
    %9961 = vmatprep.subr.bf16.mxu0 0
    %9962 = vmatpush1.bf16.msra.mxu0 0
    %9963 = vmatprep.subr.bf16.mxu0 0
    %9964 = vmatpush1.bf16.msra.mxu0 0
    %9965 = vmatprep.subr.bf16.mxu0 0
    %9966 = vmatpush1.bf16.msra.mxu0 0
    %9967 = vmatprep.subr.bf16.mxu0 0
    %9968 = vmatpush1.bf16.msra.mxu0 0
    %9969 = vmatprep.subr.bf16.mxu0 0
    %9970 = vmatpush1.bf16.msra.mxu0 0
    %9971 = vmatprep.subr.bf16.mxu0 0
    %9972 = vmatpush1.bf16.msra.mxu0 0
    %9973 = vmatprep.subr.bf16.mxu0 0
    %9974 = vmatpush1.bf16.msra.mxu0 0
    %9975 = vmatprep.subr.bf16.mxu0 0
    %9976 = vmatpush1.bf16.msra.mxu0 0
    %9977 = vmatprep.subr.bf16.mxu0 0
    %9978 = vmatpush1.bf16.msra.mxu0 0
    %9979 = vmatprep.subr.bf16.mxu0 0
    %9980 = vmatpush1.bf16.msra.mxu0 0
    %9981 = vmatprep.subr.bf16.mxu0 0
    %9982 = vmatpush1.bf16.msra.mxu0 0
    %9983 = vmatprep.subr.bf16.mxu0 0
    %9984 = vmatpush1.bf16.msra.mxu0 0
    %9985 = vmatprep.mubr.bf16.mxu0 0
    %9986 = vmatmul.mubr.bf16.gmra.mrb[0].mxu0 %v9951
    %v9987 = vpop.f32.mrb[0].mxu0
    %v9988 = vadd.f32 0.0, %v9987
    %v9989 = vpop.f32.mrb[0].mxu0
    %v9990 = vpop.f32.mrb[0].mxu0
    %v9991 = vadd.f32 0.0, %v9990
    %v9992 = vpop.f32.mrb[0].mxu0
    %9993 = vdwg.mxu0
    %v9994 = vpack.c.bf16 %v9991, %v9988
    %v9995 = vld [vmem:[#allocation15 + $0x1c0] sm:$0xf]
    %v9996 = vld [vmem:[#allocation15 + $0x1c4] sm:$0xf]
    %v9997 = vld [vmem:[#allocation15 + $0x1c8] sm:$0xf]
    %v9998 = vld [vmem:[#allocation15 + $0x1cc] sm:$0xf]
    %v9999 = vld [vmem:[#allocation15 + $0x1d0] sm:$0xf]
    %v10000 = vld [vmem:[#allocation15 + $0x1d4] sm:$0xf]
    %v10001 = vld [vmem:[#allocation15 + $0x1d8] sm:$0xf]
    %v10002 = vld [vmem:[#allocation15 + $0x1dc] sm:$0xf]
    %v10003 = vld [vmem:[#allocation15 + $0x1e0] sm:$0xf]
    %v10004 = vld [vmem:[#allocation15 + $0x1e4] sm:$0xf]
    %v10005 = vld [vmem:[#allocation15 + $0x1e8] sm:$0xf]
    %v10006 = vld [vmem:[#allocation15 + $0x1ec] sm:$0xf]
    %v10007 = vld [vmem:[#allocation15 + $0x1f0] sm:$0xf]
    %v10008 = vld [vmem:[#allocation15 + $0x1f4] sm:$0xf]
    %v10009 = vld [vmem:[#allocation15 + $0x1f8] sm:$0xf]
    %v10010 = vld [vmem:[#allocation15 + $0x1fc] sm:$0xf]
    %v10027 = vunpack.c.l.b16 %v9995
    %v10028 = vunpack.c.l.b16 %v9996
    %v10029 = vunpack.c.l.b16 %v9997
    %v10030 = vunpack.c.l.b16 %v9998
    %v10031 = vunpack.c.l.b16 %v9999
    %v10032 = vunpack.c.l.b16 %v10000
    %v10033 = vunpack.c.l.b16 %v10001
    %v10034 = vunpack.c.l.b16 %v10002
    %v10035 = vunpack.c.l.b16 %v10003
    %v10036 = vunpack.c.l.b16 %v10004
    %v10037 = vunpack.c.l.b16 %v10005
    %v10038 = vunpack.c.l.b16 %v10006
    %v10039 = vunpack.c.l.b16 %v10007
    %v10040 = vunpack.c.l.b16 %v10008
    %v10041 = vunpack.c.l.b16 %v10009
    %v10042 = vunpack.c.l.b16 %v10010
    %v10043 = vpack.c.b16 %v10028, %v10027
    %v10044 = vpack.c.b16 %v10030, %v10029
    %v10045 = vpack.c.b16 %v10032, %v10031
    %v10046 = vpack.c.b16 %v10034, %v10033
    %v10047 = vpack.c.b16 %v10036, %v10035
    %v10048 = vpack.c.b16 %v10038, %v10037
    %v10049 = vpack.c.b16 %v10040, %v10039
    %v10050 = vpack.c.b16 %v10042, %v10041
    %10059 = vmatprep.subr.bf16.mxu0 0
    %10060 = vmatpush1.bf16.msra.mxu0 %v10043
    %10061 = vmatprep.subr.bf16.mxu0 0
    %10062 = vmatpush1.bf16.msra.mxu0 %v10044
    %10063 = vmatprep.subr.bf16.mxu0 0
    %10064 = vmatpush1.bf16.msra.mxu0 %v10045
    %10065 = vmatprep.subr.bf16.mxu0 0
    %10066 = vmatpush1.bf16.msra.mxu0 %v10046
    %10067 = vmatprep.subr.bf16.mxu0 0
    %10068 = vmatpush1.bf16.msra.mxu0 %v10047
    %10069 = vmatprep.subr.bf16.mxu0 0
    %10070 = vmatpush1.bf16.msra.mxu0 %v10048
    %10071 = vmatprep.subr.bf16.mxu0 0
    %10072 = vmatpush1.bf16.msra.mxu0 %v10049
    %10073 = vmatprep.subr.bf16.mxu0 0
    %10074 = vmatpush1.bf16.msra.mxu0 %v10050
    %10075 = vmatprep.subr.bf16.mxu0 0
    %10076 = vmatpush1.bf16.msra.mxu0 0
    %10077 = vmatprep.subr.bf16.mxu0 0
    %10078 = vmatpush1.bf16.msra.mxu0 0
    %10079 = vmatprep.subr.bf16.mxu0 0
    %10080 = vmatpush1.bf16.msra.mxu0 0
    %10081 = vmatprep.subr.bf16.mxu0 0
    %10082 = vmatpush1.bf16.msra.mxu0 0
    %10083 = vmatprep.subr.bf16.mxu0 0
    %10084 = vmatpush1.bf16.msra.mxu0 0
    %10085 = vmatprep.subr.bf16.mxu0 0
    %10086 = vmatpush1.bf16.msra.mxu0 0
    %10087 = vmatprep.subr.bf16.mxu0 0
    %10088 = vmatpush1.bf16.msra.mxu0 0
    %10089 = vmatprep.subr.bf16.mxu0 0
    %10090 = vmatpush1.bf16.msra.mxu0 0
    %10091 = vmatprep.mubr.bf16.mxu0 0
    %10092 = vmatmul.mubr.bf16.gmra.mrb[0].mxu0 %v9994
    %v10093 = vpop.f32.mrb[0].mxu0
    %v10094 = vadd.f32 0.0, %v10093
    %v10095 = vpop.f32.mrb[0].mxu0
    %v10096 = vpop.f32.mrb[0].mxu0
    %v10097 = vadd.f32 0.0, %v10096
    %v10098 = vpop.f32.mrb[0].mxu0
    %10099 = vdwg.mxu0
    %v10100 = vadd.f32 %v9941, %v10094
    %v10101 = vadd.f32 %v9942, %v10097
    %v10102 = vld [vmem:[%s10 + $0x40] sm:$0xf]
    %v10103 = vld [vmem:[%s10 + $0x44] sm:$0xf]
    %v10106 = vunpack.c.l.b16 %v10102
    %v10107 = vunpack.c.l.b16 %v10103
    %v10108 = vpack.c.b16 %v10107, %v10106
    %v10110 = vsel %vm8840, %v10108, 0
    %10112 = vmatprep.subr.bf16.mxu0 0
    %10113 = vmatpush1.bf16.msra.mxu0 %v8832
    %10114 = vmatprep.subr.bf16.mxu0 0
    %10115 = vmatpush1.bf16.msra.mxu0 0
    %10116 = vmatprep.subr.bf16.mxu0 0
    %10117 = vmatpush1.bf16.msra.mxu0 0
    %10118 = vmatprep.subr.bf16.mxu0 0
    %10119 = vmatpush1.bf16.msra.mxu0 0
    %10120 = vmatprep.subr.bf16.mxu0 0
    %10121 = vmatpush1.bf16.msra.mxu0 0
    %10122 = vmatprep.subr.bf16.mxu0 0
    %10123 = vmatpush1.bf16.msra.mxu0 0
    %10124 = vmatprep.subr.bf16.mxu0 0
    %10125 = vmatpush1.bf16.msra.mxu0 0
    %10126 = vmatprep.subr.bf16.mxu0 0
    %10127 = vmatpush1.bf16.msra.mxu0 0
    %10128 = vmatprep.subr.bf16.mxu0 0
    %10129 = vmatpush1.bf16.msra.mxu0 0
    %10130 = vmatprep.subr.bf16.mxu0 0
    %10131 = vmatpush1.bf16.msra.mxu0 0
    %10132 = vmatprep.subr.bf16.mxu0 0
    %10133 = vmatpush1.bf16.msra.mxu0 0
    %10134 = vmatprep.subr.bf16.mxu0 0
    %10135 = vmatpush1.bf16.msra.mxu0 0
    %10136 = vmatprep.subr.bf16.mxu0 0
    %10137 = vmatpush1.bf16.msra.mxu0 0
    %10138 = vmatprep.subr.bf16.mxu0 0
    %10139 = vmatpush1.bf16.msra.mxu0 0
    %10140 = vmatprep.subr.bf16.mxu0 0
    %10141 = vmatpush1.bf16.msra.mxu0 0
    %10142 = vmatprep.subr.bf16.mxu0 0
    %10143 = vmatpush1.bf16.msra.mxu0 0
    %10144 = vmatprep.mubr.bf16.mxu0 0
    %10145 = vmatmul.mubr.bf16.gmra.mrb[0].mxu0 %v10110
    %v10146 = vpop.f32.mrb[0].mxu0
    %v10147 = vadd.f32 0.0, %v10146
    %v10148 = vpop.f32.mrb[0].mxu0
    %v10149 = vpop.f32.mrb[0].mxu0
    %v10150 = vadd.f32 0.0, %v10149
    %v10151 = vpop.f32.mrb[0].mxu0
    %10152 = vdwg.mxu0
    %v10153 = vpack.c.bf16 %v10150, %v10147
    %v10154 = vld [vmem:[#allocation15 + $0x200] sm:$0xf]
    %v10155 = vld [vmem:[#allocation15 + $0x204] sm:$0xf]
    %v10156 = vld [vmem:[#allocation15 + $0x208] sm:$0xf]
    %v10157 = vld [vmem:[#allocation15 + $0x20c] sm:$0xf]
    %v10158 = vld [vmem:[#allocation15 + $0x210] sm:$0xf]
    %v10159 = vld [vmem:[#allocation15 + $0x214] sm:$0xf]
    %v10160 = vld [vmem:[#allocation15 + $0x218] sm:$0xf]
    %v10161 = vld [vmem:[#allocation15 + $0x21c] sm:$0xf]
    %v10162 = vld [vmem:[#allocation15 + $0x220] sm:$0xf]
    %v10163 = vld [vmem:[#allocation15 + $0x224] sm:$0xf]
    %v10164 = vld [vmem:[#allocation15 + $0x228] sm:$0xf]
    %v10165 = vld [vmem:[#allocation15 + $0x22c] sm:$0xf]
    %v10166 = vld [vmem:[#allocation15 + $0x230] sm:$0xf]
    %v10167 = vld [vmem:[#allocation15 + $0x234] sm:$0xf]
    %v10168 = vld [vmem:[#allocation15 + $0x238] sm:$0xf]
    %v10169 = vld [vmem:[#allocation15 + $0x23c] sm:$0xf]
    %v10186 = vunpack.c.l.b16 %v10154
    %v10187 = vunpack.c.l.b16 %v10155
    %v10188 = vunpack.c.l.b16 %v10156
    %v10189 = vunpack.c.l.b16 %v10157
    %v10190 = vunpack.c.l.b16 %v10158
    %v10191 = vunpack.c.l.b16 %v10159
    %v10192 = vunpack.c.l.b16 %v10160
    %v10193 = vunpack.c.l.b16 %v10161
    %v10194 = vunpack.c.l.b16 %v10162
    %v10195 = vunpack.c.l.b16 %v10163
    %v10196 = vunpack.c.l.b16 %v10164
    %v10197 = vunpack.c.l.b16 %v10165
    %v10198 = vunpack.c.l.b16 %v10166
    %v10199 = vunpack.c.l.b16 %v10167
    %v10200 = vunpack.c.l.b16 %v10168
    %v10201 = vunpack.c.l.b16 %v10169
    %v10202 = vpack.c.b16 %v10187, %v10186
    %v10203 = vpack.c.b16 %v10189, %v10188
    %v10204 = vpack.c.b16 %v10191, %v10190
    %v10205 = vpack.c.b16 %v10193, %v10192
    %v10206 = vpack.c.b16 %v10195, %v10194
    %v10207 = vpack.c.b16 %v10197, %v10196
    %v10208 = vpack.c.b16 %v10199, %v10198
    %v10209 = vpack.c.b16 %v10201, %v10200
    %10218 = vmatprep.subr.bf16.mxu0 0
    %10219 = vmatpush1.bf16.msra.mxu0 %v10202
    %10220 = vmatprep.subr.bf16.mxu0 0
    %10221 = vmatpush1.bf16.msra.mxu0 %v10203
    %10222 = vmatprep.subr.bf16.mxu0 0
    %10223 = vmatpush1.bf16.msra.mxu0 %v10204
    %10224 = vmatprep.subr.bf16.mxu0 0
    %10225 = vmatpush1.bf16.msra.mxu0 %v10205
    %10226 = vmatprep.subr.bf16.mxu0 0
    %10227 = vmatpush1.bf16.msra.mxu0 %v10206
    %10228 = vmatprep.subr.bf16.mxu0 0
    %10229 = vmatpush1.bf16.msra.mxu0 %v10207
    %10230 = vmatprep.subr.bf16.mxu0 0
    %10231 = vmatpush1.bf16.msra.mxu0 %v10208
    %10232 = vmatprep.subr.bf16.mxu0 0
    %10233 = vmatpush1.bf16.msra.mxu0 %v10209
    %10234 = vmatprep.subr.bf16.mxu0 0
    %10235 = vmatpush1.bf16.msra.mxu0 0
    %10236 = vmatprep.subr.bf16.mxu0 0
    %10237 = vmatpush1.bf16.msra.mxu0 0
    %10238 = vmatprep.subr.bf16.mxu0 0
    %10239 = vmatpush1.bf16.msra.mxu0 0
    %10240 = vmatprep.subr.bf16.mxu0 0
    %10241 = vmatpush1.bf16.msra.mxu0 0
    %10242 = vmatprep.subr.bf16.mxu0 0
    %10243 = vmatpush1.bf16.msra.mxu0 0
    %10244 = vmatprep.subr.bf16.mxu0 0
    %10245 = vmatpush1.bf16.msra.mxu0 0
    %10246 = vmatprep.subr.bf16.mxu0 0
    %10247 = vmatpush1.bf16.msra.mxu0 0
    %10248 = vmatprep.subr.bf16.mxu0 0
    %10249 = vmatpush1.bf16.msra.mxu0 0
    %10250 = vmatprep.mubr.bf16.mxu0 0
    %10251 = vmatmul.mubr.bf16.gmra.mrb[0].mxu0 %v10153
    %v10252 = vpop.f32.mrb[0].mxu0
    %v10253 = vadd.f32 0.0, %v10252
    %v10254 = vpop.f32.mrb[0].mxu0
    %v10255 = vpop.f32.mrb[0].mxu0
    %v10256 = vadd.f32 0.0, %v10255
    %v10257 = vpop.f32.mrb[0].mxu0
    %10258 = vdwg.mxu0
    %v10259 = vadd.f32 %v10100, %v10253
    %v10260 = vadd.f32 %v10101, %v10256
    %v10261 = vld [vmem:[#allocation16] sm:$0x1]
    %v10263 = vlaneseq
    %v10264 = vshrl.u32 %v10263, 7
    %v10265 = vsub.s32 0, %v10264
    %v10266 = vrot.slane %v10261, %v10265
    %v10268 = vadd.f32 %v10259, %v10266
    %v10269 = vadd.f32 %v10260, %v10266
    %v10270 = vmax.f32 %v10268, 0.0
    %v10271 = vmax.f32 %v10269, 0.0
    %v10272 = vpack.c.bf16 %v10271, %v10270
    %v10273 = vld [vmem:[#allocation18] sm:$0xf]
    %v10274 = vld [vmem:[#allocation18 + $0x4] sm:$0xf]
    %v10275 = vld [vmem:[#allocation18 + $0x8] sm:$0xf]
    %v10276 = vld [vmem:[#allocation18 + $0xc] sm:$0xf]
    %v10277 = vld [vmem:[#allocation18 + $0x10] sm:$0xf]
    %v10278 = vld [vmem:[#allocation18 + $0x14] sm:$0xf]
    %v10279 = vld [vmem:[#allocation18 + $0x18] sm:$0xf]
    %v10280 = vld [vmem:[#allocation18 + $0x1c] sm:$0xf]
    %v10281 = vld [vmem:[#allocation18 + $0x20] sm:$0xf]
    %v10282 = vld [vmem:[#allocation18 + $0x24] sm:$0xf]
    %v10283 = vld [vmem:[#allocation18 + $0x28] sm:$0xf]
    %v10284 = vld [vmem:[#allocation18 + $0x2c] sm:$0xf]
    %v10285 = vld [vmem:[#allocation18 + $0x30] sm:$0xf]
    %v10286 = vld [vmem:[#allocation18 + $0x34] sm:$0xf]
    %v10287 = vld [vmem:[#allocation18 + $0x38] sm:$0xf]
    %v10288 = vld [vmem:[#allocation18 + $0x3c] sm:$0xf]
    %v10289 = vld [vmem:[#allocation19] sm:$0x1]
    %v10291 = vlaneseq
    %v10292 = vshrl.u32 %v10291, 7
    %v10293 = vsub.s32 0, %v10292
    %v10294 = vrot.slane %v10289, %v10293
    %v10312 = vunpack.c.l.b16 %v10273
    %v10313 = vunpack.c.l.b16 %v10274
    %v10314 = vunpack.c.l.b16 %v10275
    %v10315 = vunpack.c.l.b16 %v10276
    %v10316 = vunpack.c.l.b16 %v10277
    %v10317 = vunpack.c.l.b16 %v10278
    %v10318 = vunpack.c.l.b16 %v10279
    %v10319 = vunpack.c.l.b16 %v10280
    %v10320 = vunpack.c.l.b16 %v10281
    %v10321 = vunpack.c.l.b16 %v10282
    %v10322 = vunpack.c.l.b16 %v10283
    %v10323 = vunpack.c.l.b16 %v10284
    %v10324 = vunpack.c.l.b16 %v10285
    %v10325 = vunpack.c.l.b16 %v10286
    %v10326 = vunpack.c.l.b16 %v10287
    %v10327 = vunpack.c.l.b16 %v10288
    %v10328 = vpack.c.b16 %v10313, %v10312
    %v10329 = vpack.c.b16 %v10315, %v10314
    %v10330 = vpack.c.b16 %v10317, %v10316
    %v10331 = vpack.c.b16 %v10319, %v10318
    %v10332 = vpack.c.b16 %v10321, %v10320
    %v10333 = vpack.c.b16 %v10323, %v10322
    %v10334 = vpack.c.b16 %v10325, %v10324
    %v10335 = vpack.c.b16 %v10327, %v10326
    %10344 = vmatprep.subr.bf16.mxu0 0
    %10345 = vmatpush1.bf16.msra.mxu0 %v10328
    %10346 = vmatprep.subr.bf16.mxu0 0
    %10347 = vmatpush1.bf16.msra.mxu0 %v10329
    %10348 = vmatprep.subr.bf16.mxu0 0
    %10349 = vmatpush1.bf16.msra.mxu0 %v10330
    %10350 = vmatprep.subr.bf16.mxu0 0
    %10351 = vmatpush1.bf16.msra.mxu0 %v10331
    %10352 = vmatprep.subr.bf16.mxu0 0
    %10353 = vmatpush1.bf16.msra.mxu0 %v10332
    %10354 = vmatprep.subr.bf16.mxu0 0
    %10355 = vmatpush1.bf16.msra.mxu0 %v10333
    %10356 = vmatprep.subr.bf16.mxu0 0
    %10357 = vmatpush1.bf16.msra.mxu0 %v10334
    %10358 = vmatprep.subr.bf16.mxu0 0
    %10359 = vmatpush1.bf16.msra.mxu0 %v10335
    %10360 = vmatprep.subr.bf16.mxu0 0
    %10361 = vmatpush1.bf16.msra.mxu0 0
    %10362 = vmatprep.subr.bf16.mxu0 0
    %10363 = vmatpush1.bf16.msra.mxu0 0
    %10364 = vmatprep.subr.bf16.mxu0 0
    %10365 = vmatpush1.bf16.msra.mxu0 0
    %10366 = vmatprep.subr.bf16.mxu0 0
    %10367 = vmatpush1.bf16.msra.mxu0 0
    %10368 = vmatprep.subr.bf16.mxu0 0
    %10369 = vmatpush1.bf16.msra.mxu0 0
    %10370 = vmatprep.subr.bf16.mxu0 0
    %10371 = vmatpush1.bf16.msra.mxu0 0
    %10372 = vmatprep.subr.bf16.mxu0 0
    %10373 = vmatpush1.bf16.msra.mxu0 0
    %10374 = vmatprep.subr.bf16.mxu0 0
    %10375 = vmatpush1.bf16.msra.mxu0 0
    %10376 = vmatprep.mubr.bf16.mxu0 0
    %10377 = vmatmul.mubr.bf16.gmra.mrb[0].mxu0 %v10272
    %v10378 = vpop.f32.mrb[0].mxu0
    %v10379 = vadd.f32 %v10294, %v10378
    %v10380 = vpop.f32.mrb[0].mxu0
    %v10381 = vpop.f32.mrb[0].mxu0
    %v10382 = vadd.f32 %v10294, %v10381
    %v10383 = vpop.f32.mrb[0].mxu0
    %10384 = vdwg.mxu0
    %10385 = vst [vmem:[%s23] sm:$0xff] %v10379
    %10386 = vst [vmem:[%s23 + $0x8] sm:$0xff] %v10382
    %v10387 = vld [vmem:[%s15] sm:$0xf]
    %v10388 = vld [vmem:[%s15 + $0x4] sm:$0xf]
    %v10391 = vunpack.c.l.b16 %v10387
    %v10392 = vunpack.c.l.b16 %v10388
    %v10393 = vpack.c.b16 %v10392, %v10391
    %v10395 = vsel %vm8840, %v10393, 0
    %10397 = vmatprep.subr.bf16.mxu0 0
    %10398 = vmatpush1.bf16.msra.mxu0 %v8832
    %10399 = vmatprep.subr.bf16.mxu0 0
    %10400 = vmatpush1.bf16.msra.mxu0 0
    %10401 = vmatprep.subr.bf16.mxu0 0
    %10402 = vmatpush1.bf16.msra.mxu0 0
    %10403 = vmatprep.subr.bf16.mxu0 0
    %10404 = vmatpush1.bf16.msra.mxu0 0
    %10405 = vmatprep.subr.bf16.mxu0 0
    %10406 = vmatpush1.bf16.msra.mxu0 0
    %10407 = vmatprep.subr.bf16.mxu0 0
    %10408 = vmatpush1.bf16.msra.mxu0 0
    %10409 = vmatprep.subr.bf16.mxu0 0
    %10410 = vmatpush1.bf16.msra.mxu0 0
    %10411 = vmatprep.subr.bf16.mxu0 0
    %10412 = vmatpush1.bf16.msra.mxu0 0
    %10413 = vmatprep.subr.bf16.mxu0 0
    %10414 = vmatpush1.bf16.msra.mxu0 0
    %10415 = vmatprep.subr.bf16.mxu0 0
    %10416 = vmatpush1.bf16.msra.mxu0 0
    %10417 = vmatprep.subr.bf16.mxu0 0
    %10418 = vmatpush1.bf16.msra.mxu0 0
    %10419 = vmatprep.subr.bf16.mxu0 0
    %10420 = vmatpush1.bf16.msra.mxu0 0
    %10421 = vmatprep.subr.bf16.mxu0 0
    %10422 = vmatpush1.bf16.msra.mxu0 0
    %10423 = vmatprep.subr.bf16.mxu0 0
    %10424 = vmatpush1.bf16.msra.mxu0 0
    %10425 = vmatprep.subr.bf16.mxu0 0
    %10426 = vmatpush1.bf16.msra.mxu0 0
    %10427 = vmatprep.subr.bf16.mxu0 0
    %10428 = vmatpush1.bf16.msra.mxu0 0
    %10429 = vmatprep.mubr.bf16.mxu0 0
    %10430 = vmatmul.mubr.bf16.gmra.mrb[0].mxu0 %v10395
    %v10431 = vpop.f32.mrb[0].mxu0
    %v10432 = vadd.f32 0.0, %v10431
    %v10433 = vpop.f32.mrb[0].mxu0
    %v10434 = vpop.f32.mrb[0].mxu0
    %v10435 = vadd.f32 0.0, %v10434
    %v10436 = vpop.f32.mrb[0].mxu0
    %10437 = vdwg.mxu0
    %v10438 = vpack.c.bf16 %v10435, %v10432
    %v10439 = vld [vmem:[#allocation21] sm:$0xff]
    %v10440 = vld [vmem:[#allocation21 + $0x8] sm:$0xff]
    %v10441 = vld [vmem:[#allocation21 + $0x10] sm:$0xff]
    %v10442 = vld [vmem:[#allocation21 + $0x18] sm:$0xff]
    %v10443 = vld [vmem:[#allocation21 + $0x20] sm:$0xff]
    %v10444 = vld [vmem:[#allocation21 + $0x28] sm:$0xff]
    %v10445 = vld [vmem:[#allocation21 + $0x30] sm:$0xff]
    %v10446 = vld [vmem:[#allocation21 + $0x38] sm:$0xff]
    %v10447 = vld [vmem:[#allocation21 + $0x40] sm:$0xff]
    %v10448 = vld [vmem:[#allocation21 + $0x48] sm:$0xff]
    %v10449 = vld [vmem:[#allocation21 + $0x50] sm:$0xff]
    %v10450 = vld [vmem:[#allocation21 + $0x58] sm:$0xff]
    %v10451 = vld [vmem:[#allocation21 + $0x60] sm:$0xff]
    %v10452 = vld [vmem:[#allocation21 + $0x68] sm:$0xff]
    %v10453 = vld [vmem:[#allocation21 + $0x70] sm:$0xff]
    %v10454 = vld [vmem:[#allocation21 + $0x78] sm:$0xff]
    %v10455 = vld [vmem:[%s15 + $0x8] sm:$0xf]
    %v10456 = vld [vmem:[%s15 + $0xc] sm:$0xf]
    %v10459 = vunpack.c.l.b16 %v10455
    %v10460 = vunpack.c.l.b16 %v10456
    %v10461 = vpack.c.b16 %v10460, %v10459
    %v10463 = vsel %vm8840, %v10461, 0
    %10465 = vmatprep.subr.bf16.mxu0 0
    %10466 = vmatpush1.bf16.msra.mxu0 %v8832
    %10467 = vmatprep.subr.bf16.mxu0 0
    %10468 = vmatpush1.bf16.msra.mxu0 0
    %10469 = vmatprep.subr.bf16.mxu0 0
    %10470 = vmatpush1.bf16.msra.mxu0 0
    %10471 = vmatprep.subr.bf16.mxu0 0
    %10472 = vmatpush1.bf16.msra.mxu0 0
    %10473 = vmatprep.subr.bf16.mxu0 0
    %10474 = vmatpush1.bf16.msra.mxu0 0
    %10475 = vmatprep.subr.bf16.mxu0 0
    %10476 = vmatpush1.bf16.msra.mxu0 0
    %10477 = vmatprep.subr.bf16.mxu0 0
    %10478 = vmatpush1.bf16.msra.mxu0 0
    %10479 = vmatprep.subr.bf16.mxu0 0
    %10480 = vmatpush1.bf16.msra.mxu0 0
    %10481 = vmatprep.subr.bf16.mxu0 0
    %10482 = vmatpush1.bf16.msra.mxu0 0
    %10483 = vmatprep.subr.bf16.mxu0 0
    %10484 = vmatpush1.bf16.msra.mxu0 0
    %10485 = vmatprep.subr.bf16.mxu0 0
    %10486 = vmatpush1.bf16.msra.mxu0 0
    %10487 = vmatprep.subr.bf16.mxu0 0
    %10488 = vmatpush1.bf16.msra.mxu0 0
    %10489 = vmatprep.subr.bf16.mxu0 0
    %10490 = vmatpush1.bf16.msra.mxu0 0
    %10491 = vmatprep.subr.bf16.mxu0 0
    %10492 = vmatpush1.bf16.msra.mxu0 0
    %10493 = vmatprep.subr.bf16.mxu0 0
    %10494 = vmatpush1.bf16.msra.mxu0 0
    %10495 = vmatprep.subr.bf16.mxu0 0
    %10496 = vmatpush1.bf16.msra.mxu0 0
    %10497 = vmatprep.mubr.bf16.mxu0 0
    %10498 = vmatmul.mubr.bf16.gmra.mrb[0].mxu0 %v10463
    %v10499 = vpop.f32.mrb[0].mxu0
    %v10500 = vadd.f32 0.0, %v10499
    %v10501 = vpop.f32.mrb[0].mxu0
    %v10502 = vpop.f32.mrb[0].mxu0
    %v10503 = vadd.f32 0.0, %v10502
    %v10504 = vpop.f32.mrb[0].mxu0
    %10505 = vdwg.mxu0
    %v10506 = vpack.c.bf16 %v10503, %v10500
    %v10507 = vld [vmem:[#allocation21 + $0x80] sm:$0xff]
    %v10508 = vld [vmem:[#allocation21 + $0x88] sm:$0xff]
    %v10509 = vld [vmem:[#allocation21 + $0x90] sm:$0xff]
    %v10510 = vld [vmem:[#allocation21 + $0x98] sm:$0xff]
    %v10511 = vld [vmem:[#allocation21 + $0xa0] sm:$0xff]
    %v10512 = vld [vmem:[#allocation21 + $0xa8] sm:$0xff]
    %v10513 = vld [vmem:[#allocation21 + $0xb0] sm:$0xff]
    %v10514 = vld [vmem:[#allocation21 + $0xb8] sm:$0xff]
    %v10515 = vld [vmem:[#allocation21 + $0xc0] sm:$0xff]
    %v10516 = vld [vmem:[#allocation21 + $0xc8] sm:$0xff]
    %v10517 = vld [vmem:[#allocation21 + $0xd0] sm:$0xff]
    %v10518 = vld [vmem:[#allocation21 + $0xd8] sm:$0xff]
    %v10519 = vld [vmem:[#allocation21 + $0xe0] sm:$0xff]
    %v10520 = vld [vmem:[#allocation21 + $0xe8] sm:$0xff]
    %v10521 = vld [vmem:[#allocation21 + $0xf0] sm:$0xff]
    %v10522 = vld [vmem:[#allocation21 + $0xf8] sm:$0xff]
    %v10539 = vunpack.c.l.b16 %v10507
    %v10540 = vunpack.c.h.b16 %v10507
    %v10541 = vunpack.c.l.b16 %v10508
    %v10542 = vunpack.c.h.b16 %v10508
    %v10543 = vunpack.c.l.b16 %v10509
    %v10544 = vunpack.c.h.b16 %v10509
    %v10545 = vunpack.c.l.b16 %v10510
    %v10546 = vunpack.c.h.b16 %v10510
    %v10547 = vunpack.c.l.b16 %v10511
    %v10548 = vunpack.c.h.b16 %v10511
    %v10549 = vunpack.c.l.b16 %v10512
    %v10550 = vunpack.c.h.b16 %v10512
    %v10551 = vunpack.c.l.b16 %v10513
    %v10552 = vunpack.c.h.b16 %v10513
    %v10553 = vunpack.c.l.b16 %v10514
    %v10554 = vunpack.c.h.b16 %v10514
    %v10555 = vunpack.c.l.b16 %v10515
    %v10556 = vunpack.c.h.b16 %v10515
    %v10557 = vunpack.c.l.b16 %v10516
    %v10558 = vunpack.c.h.b16 %v10516
    %v10559 = vunpack.c.l.b16 %v10517
    %v10560 = vunpack.c.h.b16 %v10517
    %v10561 = vunpack.c.l.b16 %v10518
    %v10562 = vunpack.c.h.b16 %v10518
    %v10563 = vunpack.c.l.b16 %v10519
    %v10564 = vunpack.c.h.b16 %v10519
    %v10565 = vunpack.c.l.b16 %v10520
    %v10566 = vunpack.c.h.b16 %v10520
    %v10567 = vunpack.c.l.b16 %v10521
    %v10568 = vunpack.c.h.b16 %v10521
    %v10569 = vunpack.c.l.b16 %v10522
    %v10570 = vunpack.c.h.b16 %v10522
    %v10571 = vpack.c.b16 %v10541, %v10539
    %v10572 = vpack.c.b16 %v10542, %v10540
    %v10573 = vpack.c.b16 %v10545, %v10543
    %v10574 = vpack.c.b16 %v10546, %v10544
    %v10575 = vpack.c.b16 %v10549, %v10547
    %v10576 = vpack.c.b16 %v10550, %v10548
    %v10577 = vpack.c.b16 %v10553, %v10551
    %v10578 = vpack.c.b16 %v10554, %v10552
    %v10579 = vpack.c.b16 %v10557, %v10555
    %v10580 = vpack.c.b16 %v10558, %v10556
    %v10581 = vpack.c.b16 %v10561, %v10559
    %v10582 = vpack.c.b16 %v10562, %v10560
    %v10583 = vpack.c.b16 %v10565, %v10563
    %v10584 = vpack.c.b16 %v10566, %v10564
    %v10585 = vpack.c.b16 %v10569, %v10567
    %v10586 = vpack.c.b16 %v10570, %v10568
    %10603 = vmatprep.subr.bf16.mxu0 %v10572
    %10604 = vmatpush1.bf16.msra.mxu0 %v10571
    %10605 = vmatprep.subr.bf16.mxu0 %v10574
    %10606 = vmatpush1.bf16.msra.mxu0 %v10573
    %10607 = vmatprep.subr.bf16.mxu0 %v10576
    %10608 = vmatpush1.bf16.msra.mxu0 %v10575
    %10609 = vmatprep.subr.bf16.mxu0 %v10578
    %10610 = vmatpush1.bf16.msra.mxu0 %v10577
    %10611 = vmatprep.subr.bf16.mxu0 %v10580
    %10612 = vmatpush1.bf16.msra.mxu0 %v10579
    %10613 = vmatprep.subr.bf16.mxu0 %v10582
    %10614 = vmatpush1.bf16.msra.mxu0 %v10581
    %10615 = vmatprep.subr.bf16.mxu0 %v10584
    %10616 = vmatpush1.bf16.msra.mxu0 %v10583
    %10617 = vmatprep.subr.bf16.mxu0 %v10586
    %10618 = vmatpush1.bf16.msra.mxu0 %v10585
    %10619 = vmatprep.subr.bf16.mxu0 0
    %10620 = vmatpush1.bf16.msra.mxu0 0
    %10621 = vmatprep.subr.bf16.mxu0 0
    %10622 = vmatpush1.bf16.msra.mxu0 0
    %10623 = vmatprep.subr.bf16.mxu0 0
    %10624 = vmatpush1.bf16.msra.mxu0 0
    %10625 = vmatprep.subr.bf16.mxu0 0
    %10626 = vmatpush1.bf16.msra.mxu0 0
    %10627 = vmatprep.subr.bf16.mxu0 0
    %10628 = vmatpush1.bf16.msra.mxu0 0
    %10629 = vmatprep.subr.bf16.mxu0 0
    %10630 = vmatpush1.bf16.msra.mxu0 0
    %10631 = vmatprep.subr.bf16.mxu0 0
    %10632 = vmatpush1.bf16.msra.mxu0 0
    %10633 = vmatprep.subr.bf16.mxu0 0
    %10634 = vmatpush1.bf16.msra.mxu0 0
    %10635 = vmatprep.mubr.bf16.mxu0 0
    %10636 = vmatmul.mubr.bf16.gmra.mrb[0].mxu0 %v10506
    %v10637 = vpop.f32.mrb[0].mxu0
    %v10638 = vadd.f32 0.0, %v10637
    %v10639 = vpop.f32.mrb[0].mxu0
    %v10640 = vadd.f32 0.0, %v10639
    %v10641 = vpop.f32.mrb[0].mxu0
    %v10642 = vadd.f32 0.0, %v10641
    %v10643 = vpop.f32.mrb[0].mxu0
    %v10644 = vadd.f32 0.0, %v10643
    %10645 = vdwg.mxu0
    %v10662 = vunpack.c.l.b16 %v10439
    %v10663 = vunpack.c.h.b16 %v10439
    %v10664 = vunpack.c.l.b16 %v10440
    %v10665 = vunpack.c.h.b16 %v10440
    %v10666 = vunpack.c.l.b16 %v10441
    %v10667 = vunpack.c.h.b16 %v10441
    %v10668 = vunpack.c.l.b16 %v10442
    %v10669 = vunpack.c.h.b16 %v10442
    %v10670 = vunpack.c.l.b16 %v10443
    %v10671 = vunpack.c.h.b16 %v10443
    %v10672 = vunpack.c.l.b16 %v10444
    %v10673 = vunpack.c.h.b16 %v10444
    %v10674 = vunpack.c.l.b16 %v10445
    %v10675 = vunpack.c.h.b16 %v10445
    %v10676 = vunpack.c.l.b16 %v10446
    %v10677 = vunpack.c.h.b16 %v10446
    %v10678 = vunpack.c.l.b16 %v10447
    %v10679 = vunpack.c.h.b16 %v10447
    %v10680 = vunpack.c.l.b16 %v10448
    %v10681 = vunpack.c.h.b16 %v10448
    %v10682 = vunpack.c.l.b16 %v10449
    %v10683 = vunpack.c.h.b16 %v10449
    %v10684 = vunpack.c.l.b16 %v10450
    %v10685 = vunpack.c.h.b16 %v10450
    %v10686 = vunpack.c.l.b16 %v10451
    %v10687 = vunpack.c.h.b16 %v10451
    %v10688 = vunpack.c.l.b16 %v10452
    %v10689 = vunpack.c.h.b16 %v10452
    %v10690 = vunpack.c.l.b16 %v10453
    %v10691 = vunpack.c.h.b16 %v10453
    %v10692 = vunpack.c.l.b16 %v10454
    %v10693 = vunpack.c.h.b16 %v10454
    %v10694 = vpack.c.b16 %v10664, %v10662
    %v10695 = vpack.c.b16 %v10665, %v10663
    %v10696 = vpack.c.b16 %v10668, %v10666
    %v10697 = vpack.c.b16 %v10669, %v10667
    %v10698 = vpack.c.b16 %v10672, %v10670
    %v10699 = vpack.c.b16 %v10673, %v10671
    %v10700 = vpack.c.b16 %v10676, %v10674
    %v10701 = vpack.c.b16 %v10677, %v10675
    %v10702 = vpack.c.b16 %v10680, %v10678
    %v10703 = vpack.c.b16 %v10681, %v10679
    %v10704 = vpack.c.b16 %v10684, %v10682
    %v10705 = vpack.c.b16 %v10685, %v10683
    %v10706 = vpack.c.b16 %v10688, %v10686
    %v10707 = vpack.c.b16 %v10689, %v10687
    %v10708 = vpack.c.b16 %v10692, %v10690
    %v10709 = vpack.c.b16 %v10693, %v10691
    %10726 = vmatprep.subr.bf16.mxu0 %v10695
    %10727 = vmatpush1.bf16.msra.mxu0 %v10694
    %10728 = vmatprep.subr.bf16.mxu0 %v10697
    %10729 = vmatpush1.bf16.msra.mxu0 %v10696
    %10730 = vmatprep.subr.bf16.mxu0 %v10699
    %10731 = vmatpush1.bf16.msra.mxu0 %v10698
    %10732 = vmatprep.subr.bf16.mxu0 %v10701
    %10733 = vmatpush1.bf16.msra.mxu0 %v10700
    %10734 = vmatprep.subr.bf16.mxu0 %v10703
    %10735 = vmatpush1.bf16.msra.mxu0 %v10702
    %10736 = vmatprep.subr.bf16.mxu0 %v10705
    %10737 = vmatpush1.bf16.msra.mxu0 %v10704
    %10738 = vmatprep.subr.bf16.mxu0 %v10707
    %10739 = vmatpush1.bf16.msra.mxu0 %v10706
    %10740 = vmatprep.subr.bf16.mxu0 %v10709
    %10741 = vmatpush1.bf16.msra.mxu0 %v10708
    %10742 = vmatprep.subr.bf16.mxu0 0
    %10743 = vmatpush1.bf16.msra.mxu0 0
    %10744 = vmatprep.subr.bf16.mxu0 0
    %10745 = vmatpush1.bf16.msra.mxu0 0
    %10746 = vmatprep.subr.bf16.mxu0 0
    %10747 = vmatpush1.bf16.msra.mxu0 0
    %10748 = vmatprep.subr.bf16.mxu0 0
    %10749 = vmatpush1.bf16.msra.mxu0 0
    %10750 = vmatprep.subr.bf16.mxu0 0
    %10751 = vmatpush1.bf16.msra.mxu0 0
    %10752 = vmatprep.subr.bf16.mxu0 0
    %10753 = vmatpush1.bf16.msra.mxu0 0
    %10754 = vmatprep.subr.bf16.mxu0 0
    %10755 = vmatpush1.bf16.msra.mxu0 0
    %10756 = vmatprep.subr.bf16.mxu0 0
    %10757 = vmatpush1.bf16.msra.mxu0 0
    %10758 = vmatprep.mubr.bf16.mxu0 0
    %10759 = vmatmul.mubr.bf16.gmra.mrb[0].mxu0 %v10438
    %v10760 = vpop.f32.mrb[0].mxu0
    %v10761 = vadd.f32 %v10638, %v10760
    %v10762 = vpop.f32.mrb[0].mxu0
    %v10763 = vadd.f32 %v10640, %v10762
    %v10764 = vpop.f32.mrb[0].mxu0
    %v10765 = vadd.f32 %v10642, %v10764
    %v10766 = vpop.f32.mrb[0].mxu0
    %v10767 = vadd.f32 %v10644, %v10766
    %10768 = vdwg.mxu0
    %v10769 = vld [vmem:[%s15 + $0x10] sm:$0xf]
    %v10770 = vld [vmem:[%s15 + $0x14] sm:$0xf]
    %v10773 = vunpack.c.l.b16 %v10769
    %v10774 = vunpack.c.l.b16 %v10770
    %v10775 = vpack.c.b16 %v10774, %v10773
    %v10777 = vsel %vm8840, %v10775, 0
    %10779 = vmatprep.subr.bf16.mxu0 0
    %10780 = vmatpush1.bf16.msra.mxu0 %v8832
    %10781 = vmatprep.subr.bf16.mxu0 0
    %10782 = vmatpush1.bf16.msra.mxu0 0
    %10783 = vmatprep.subr.bf16.mxu0 0
    %10784 = vmatpush1.bf16.msra.mxu0 0
    %10785 = vmatprep.subr.bf16.mxu0 0
    %10786 = vmatpush1.bf16.msra.mxu0 0
    %10787 = vmatprep.subr.bf16.mxu0 0
    %10788 = vmatpush1.bf16.msra.mxu0 0
    %10789 = vmatprep.subr.bf16.mxu0 0
    %10790 = vmatpush1.bf16.msra.mxu0 0
    %10791 = vmatprep.subr.bf16.mxu0 0
    %10792 = vmatpush1.bf16.msra.mxu0 0
    %10793 = vmatprep.subr.bf16.mxu0 0
    %10794 = vmatpush1.bf16.msra.mxu0 0
    %10795 = vmatprep.subr.bf16.mxu0 0
    %10796 = vmatpush1.bf16.msra.mxu0 0
    %10797 = vmatprep.subr.bf16.mxu0 0
    %10798 = vmatpush1.bf16.msra.mxu0 0
    %10799 = vmatprep.subr.bf16.mxu0 0
    %10800 = vmatpush1.bf16.msra.mxu0 0
    %10801 = vmatprep.subr.bf16.mxu0 0
    %10802 = vmatpush1.bf16.msra.mxu0 0
    %10803 = vmatprep.subr.bf16.mxu0 0
    %10804 = vmatpush1.bf16.msra.mxu0 0
    %10805 = vmatprep.subr.bf16.mxu0 0
    %10806 = vmatpush1.bf16.msra.mxu0 0
    %10807 = vmatprep.subr.bf16.mxu0 0
    %10808 = vmatpush1.bf16.msra.mxu0 0
    %10809 = vmatprep.subr.bf16.mxu0 0
    %10810 = vmatpush1.bf16.msra.mxu0 0
    %10811 = vmatprep.mubr.bf16.mxu0 0
    %10812 = vmatmul.mubr.bf16.gmra.mrb[0].mxu0 %v10777
    %v10813 = vpop.f32.mrb[0].mxu0
    %v10814 = vadd.f32 0.0, %v10813
    %v10815 = vpop.f32.mrb[0].mxu0
    %v10816 = vpop.f32.mrb[0].mxu0
    %v10817 = vadd.f32 0.0, %v10816
    %v10818 = vpop.f32.mrb[0].mxu0
    %10819 = vdwg.mxu0
    %v10820 = vpack.c.bf16 %v10817, %v10814
    %v10821 = vld [vmem:[#allocation21 + $0x100] sm:$0xff]
    %v10822 = vld [vmem:[#allocation21 + $0x108] sm:$0xff]
    %v10823 = vld [vmem:[#allocation21 + $0x110] sm:$0xff]
    %v10824 = vld [vmem:[#allocation21 + $0x118] sm:$0xff]
    %v10825 = vld [vmem:[#allocation21 + $0x120] sm:$0xff]
    %v10826 = vld [vmem:[#allocation21 + $0x128] sm:$0xff]
    %v10827 = vld [vmem:[#allocation21 + $0x130] sm:$0xff]
    %v10828 = vld [vmem:[#allocation21 + $0x138] sm:$0xff]
    %v10829 = vld [vmem:[#allocation21 + $0x140] sm:$0xff]
    %v10830 = vld [vmem:[#allocation21 + $0x148] sm:$0xff]
    %v10831 = vld [vmem:[#allocation21 + $0x150] sm:$0xff]
    %v10832 = vld [vmem:[#allocation21 + $0x158] sm:$0xff]
    %v10833 = vld [vmem:[#allocation21 + $0x160] sm:$0xff]
    %v10834 = vld [vmem:[#allocation21 + $0x168] sm:$0xff]
    %v10835 = vld [vmem:[#allocation21 + $0x170] sm:$0xff]
    %v10836 = vld [vmem:[#allocation21 + $0x178] sm:$0xff]
    %v10853 = vunpack.c.l.b16 %v10821
    %v10854 = vunpack.c.h.b16 %v10821
    %v10855 = vunpack.c.l.b16 %v10822
    %v10856 = vunpack.c.h.b16 %v10822
    %v10857 = vunpack.c.l.b16 %v10823
    %v10858 = vunpack.c.h.b16 %v10823
    %v10859 = vunpack.c.l.b16 %v10824
    %v10860 = vunpack.c.h.b16 %v10824
    %v10861 = vunpack.c.l.b16 %v10825
    %v10862 = vunpack.c.h.b16 %v10825
    %v10863 = vunpack.c.l.b16 %v10826
    %v10864 = vunpack.c.h.b16 %v10826
    %v10865 = vunpack.c.l.b16 %v10827
    %v10866 = vunpack.c.h.b16 %v10827
    %v10867 = vunpack.c.l.b16 %v10828
    %v10868 = vunpack.c.h.b16 %v10828
    %v10869 = vunpack.c.l.b16 %v10829
    %v10870 = vunpack.c.h.b16 %v10829
    %v10871 = vunpack.c.l.b16 %v10830
    %v10872 = vunpack.c.h.b16 %v10830
    %v10873 = vunpack.c.l.b16 %v10831
    %v10874 = vunpack.c.h.b16 %v10831
    %v10875 = vunpack.c.l.b16 %v10832
    %v10876 = vunpack.c.h.b16 %v10832
    %v10877 = vunpack.c.l.b16 %v10833
    %v10878 = vunpack.c.h.b16 %v10833
    %v10879 = vunpack.c.l.b16 %v10834
    %v10880 = vunpack.c.h.b16 %v10834
    %v10881 = vunpack.c.l.b16 %v10835
    %v10882 = vunpack.c.h.b16 %v10835
    %v10883 = vunpack.c.l.b16 %v10836
    %v10884 = vunpack.c.h.b16 %v10836
    %v10885 = vpack.c.b16 %v10855, %v10853
    %v10886 = vpack.c.b16 %v10856, %v10854
    %v10887 = vpack.c.b16 %v10859, %v10857
    %v10888 = vpack.c.b16 %v10860, %v10858
    %v10889 = vpack.c.b16 %v10863, %v10861
    %v10890 = vpack.c.b16 %v10864, %v10862
    %v10891 = vpack.c.b16 %v10867, %v10865
    %v10892 = vpack.c.b16 %v10868, %v10866
    %v10893 = vpack.c.b16 %v10871, %v10869
    %v10894 = vpack.c.b16 %v10872, %v10870
    %v10895 = vpack.c.b16 %v10875, %v10873
    %v10896 = vpack.c.b16 %v10876, %v10874
    %v10897 = vpack.c.b16 %v10879, %v10877
    %v10898 = vpack.c.b16 %v10880, %v10878
    %v10899 = vpack.c.b16 %v10883, %v10881
    %v10900 = vpack.c.b16 %v10884, %v10882
    %10917 = vmatprep.subr.bf16.mxu0 %v10886
    %10918 = vmatpush1.bf16.msra.mxu0 %v10885
    %10919 = vmatprep.subr.bf16.mxu0 %v10888
    %10920 = vmatpush1.bf16.msra.mxu0 %v10887
    %10921 = vmatprep.subr.bf16.mxu0 %v10890
    %10922 = vmatpush1.bf16.msra.mxu0 %v10889
    %10923 = vmatprep.subr.bf16.mxu0 %v10892
    %10924 = vmatpush1.bf16.msra.mxu0 %v10891
    %10925 = vmatprep.subr.bf16.mxu0 %v10894
    %10926 = vmatpush1.bf16.msra.mxu0 %v10893
    %10927 = vmatprep.subr.bf16.mxu0 %v10896
    %10928 = vmatpush1.bf16.msra.mxu0 %v10895
    %10929 = vmatprep.subr.bf16.mxu0 %v10898
    %10930 = vmatpush1.bf16.msra.mxu0 %v10897
    %10931 = vmatprep.subr.bf16.mxu0 %v10900
    %10932 = vmatpush1.bf16.msra.mxu0 %v10899
    %10933 = vmatprep.subr.bf16.mxu0 0
    %10934 = vmatpush1.bf16.msra.mxu0 0
    %10935 = vmatprep.subr.bf16.mxu0 0
    %10936 = vmatpush1.bf16.msra.mxu0 0
    %10937 = vmatprep.subr.bf16.mxu0 0
    %10938 = vmatpush1.bf16.msra.mxu0 0
    %10939 = vmatprep.subr.bf16.mxu0 0
    %10940 = vmatpush1.bf16.msra.mxu0 0
    %10941 = vmatprep.subr.bf16.mxu0 0
    %10942 = vmatpush1.bf16.msra.mxu0 0
    %10943 = vmatprep.subr.bf16.mxu0 0
    %10944 = vmatpush1.bf16.msra.mxu0 0
    %10945 = vmatprep.subr.bf16.mxu0 0
    %10946 = vmatpush1.bf16.msra.mxu0 0
    %10947 = vmatprep.subr.bf16.mxu0 0
    %10948 = vmatpush1.bf16.msra.mxu0 0
    %10949 = vmatprep.mubr.bf16.mxu0 0
    %10950 = vmatmul.mubr.bf16.gmra.mrb[0].mxu0 %v10820
    %v10951 = vpop.f32.mrb[0].mxu0
    %v10952 = vadd.f32 0.0, %v10951
    %v10953 = vpop.f32.mrb[0].mxu0
    %v10954 = vadd.f32 0.0, %v10953
    %v10955 = vpop.f32.mrb[0].mxu0
    %v10956 = vadd.f32 0.0, %v10955
    %v10957 = vpop.f32.mrb[0].mxu0
    %v10958 = vadd.f32 0.0, %v10957
    %10959 = vdwg.mxu0
    %v10960 = vadd.f32 %v10761, %v10952
    %v10961 = vadd.f32 %v10763, %v10954
    %v10962 = vadd.f32 %v10765, %v10956
    %v10963 = vadd.f32 %v10767, %v10958
    %v10964 = vld [vmem:[%s15 + $0x18] sm:$0xf]
    %v10965 = vld [vmem:[%s15 + $0x1c] sm:$0xf]
    %v10968 = vunpack.c.l.b16 %v10964
    %v10969 = vunpack.c.l.b16 %v10965
    %v10970 = vpack.c.b16 %v10969, %v10968
    %v10972 = vsel %vm8840, %v10970, 0
    %10974 = vmatprep.subr.bf16.mxu0 0
    %10975 = vmatpush1.bf16.msra.mxu0 %v8832
    %10976 = vmatprep.subr.bf16.mxu0 0
    %10977 = vmatpush1.bf16.msra.mxu0 0
    %10978 = vmatprep.subr.bf16.mxu0 0
    %10979 = vmatpush1.bf16.msra.mxu0 0
    %10980 = vmatprep.subr.bf16.mxu0 0
    %10981 = vmatpush1.bf16.msra.mxu0 0
    %10982 = vmatprep.subr.bf16.mxu0 0
    %10983 = vmatpush1.bf16.msra.mxu0 0
    %10984 = vmatprep.subr.bf16.mxu0 0
    %10985 = vmatpush1.bf16.msra.mxu0 0
    %10986 = vmatprep.subr.bf16.mxu0 0
    %10987 = vmatpush1.bf16.msra.mxu0 0
    %10988 = vmatprep.subr.bf16.mxu0 0
    %10989 = vmatpush1.bf16.msra.mxu0 0
    %10990 = vmatprep.subr.bf16.mxu0 0
    %10991 = vmatpush1.bf16.msra.mxu0 0
    %10992 = vmatprep.subr.bf16.mxu0 0
    %10993 = vmatpush1.bf16.msra.mxu0 0
    %10994 = vmatprep.subr.bf16.mxu0 0
    %10995 = vmatpush1.bf16.msra.mxu0 0
    %10996 = vmatprep.subr.bf16.mxu0 0
    %10997 = vmatpush1.bf16.msra.mxu0 0
    %10998 = vmatprep.subr.bf16.mxu0 0
    %10999 = vmatpush1.bf16.msra.mxu0 0
    %11000 = vmatprep.subr.bf16.mxu0 0
    %11001 = vmatpush1.bf16.msra.mxu0 0
    %11002 = vmatprep.subr.bf16.mxu0 0
    %11003 = vmatpush1.bf16.msra.mxu0 0
    %11004 = vmatprep.subr.bf16.mxu0 0
    %11005 = vmatpush1.bf16.msra.mxu0 0
    %11006 = vmatprep.mubr.bf16.mxu0 0
    %11007 = vmatmul.mubr.bf16.gmra.mrb[0].mxu0 %v10972
    %v11008 = vpop.f32.mrb[0].mxu0
    %v11009 = vadd.f32 0.0, %v11008
    %v11010 = vpop.f32.mrb[0].mxu0
    %v11011 = vpop.f32.mrb[0].mxu0
    %v11012 = vadd.f32 0.0, %v11011
    %v11013 = vpop.f32.mrb[0].mxu0
    %11014 = vdwg.mxu0
    %v11015 = vpack.c.bf16 %v11012, %v11009
    %v11016 = vld [vmem:[#allocation21 + $0x180] sm:$0xff]
    %v11017 = vld [vmem:[#allocation21 + $0x188] sm:$0xff]
    %v11018 = vld [vmem:[#allocation21 + $0x190] sm:$0xff]
    %v11019 = vld [vmem:[#allocation21 + $0x198] sm:$0xff]
    %v11020 = vld [vmem:[#allocation21 + $0x1a0] sm:$0xff]
    %v11021 = vld [vmem:[#allocation21 + $0x1a8] sm:$0xff]
    %v11022 = vld [vmem:[#allocation21 + $0x1b0] sm:$0xff]
    %v11023 = vld [vmem:[#allocation21 + $0x1b8] sm:$0xff]
    %v11024 = vld [vmem:[#allocation21 + $0x1c0] sm:$0xff]
    %v11025 = vld [vmem:[#allocation21 + $0x1c8] sm:$0xff]
    %v11026 = vld [vmem:[#allocation21 + $0x1d0] sm:$0xff]
    %v11027 = vld [vmem:[#allocation21 + $0x1d8] sm:$0xff]
    %v11028 = vld [vmem:[#allocation21 + $0x1e0] sm:$0xff]
    %v11029 = vld [vmem:[#allocation21 + $0x1e8] sm:$0xff]
    %v11030 = vld [vmem:[#allocation21 + $0x1f0] sm:$0xff]
    %v11031 = vld [vmem:[#allocation21 + $0x1f8] sm:$0xff]
    %v11048 = vunpack.c.l.b16 %v11016
    %v11049 = vunpack.c.h.b16 %v11016
    %v11050 = vunpack.c.l.b16 %v11017
    %v11051 = vunpack.c.h.b16 %v11017
    %v11052 = vunpack.c.l.b16 %v11018
    %v11053 = vunpack.c.h.b16 %v11018
    %v11054 = vunpack.c.l.b16 %v11019
    %v11055 = vunpack.c.h.b16 %v11019
    %v11056 = vunpack.c.l.b16 %v11020
    %v11057 = vunpack.c.h.b16 %v11020
    %v11058 = vunpack.c.l.b16 %v11021
    %v11059 = vunpack.c.h.b16 %v11021
    %v11060 = vunpack.c.l.b16 %v11022
    %v11061 = vunpack.c.h.b16 %v11022
    %v11062 = vunpack.c.l.b16 %v11023
    %v11063 = vunpack.c.h.b16 %v11023
    %v11064 = vunpack.c.l.b16 %v11024
    %v11065 = vunpack.c.h.b16 %v11024
    %v11066 = vunpack.c.l.b16 %v11025
    %v11067 = vunpack.c.h.b16 %v11025
    %v11068 = vunpack.c.l.b16 %v11026
    %v11069 = vunpack.c.h.b16 %v11026
    %v11070 = vunpack.c.l.b16 %v11027
    %v11071 = vunpack.c.h.b16 %v11027
    %v11072 = vunpack.c.l.b16 %v11028
    %v11073 = vunpack.c.h.b16 %v11028
    %v11074 = vunpack.c.l.b16 %v11029
    %v11075 = vunpack.c.h.b16 %v11029
    %v11076 = vunpack.c.l.b16 %v11030
    %v11077 = vunpack.c.h.b16 %v11030
    %v11078 = vunpack.c.l.b16 %v11031
    %v11079 = vunpack.c.h.b16 %v11031
    %v11080 = vpack.c.b16 %v11050, %v11048
    %v11081 = vpack.c.b16 %v11051, %v11049
    %v11082 = vpack.c.b16 %v11054, %v11052
    %v11083 = vpack.c.b16 %v11055, %v11053
    %v11084 = vpack.c.b16 %v11058, %v11056
    %v11085 = vpack.c.b16 %v11059, %v11057
    %v11086 = vpack.c.b16 %v11062, %v11060
    %v11087 = vpack.c.b16 %v11063, %v11061
    %v11088 = vpack.c.b16 %v11066, %v11064
    %v11089 = vpack.c.b16 %v11067, %v11065
    %v11090 = vpack.c.b16 %v11070, %v11068
    %v11091 = vpack.c.b16 %v11071, %v11069
    %v11092 = vpack.c.b16 %v11074, %v11072
    %v11093 = vpack.c.b16 %v11075, %v11073
    %v11094 = vpack.c.b16 %v11078, %v11076
    %v11095 = vpack.c.b16 %v11079, %v11077
    %11112 = vmatprep.subr.bf16.mxu0 %v11081
    %11113 = vmatpush1.bf16.msra.mxu0 %v11080
    %11114 = vmatprep.subr.bf16.mxu0 %v11083
    %11115 = vmatpush1.bf16.msra.mxu0 %v11082
    %11116 = vmatprep.subr.bf16.mxu0 %v11085
    %11117 = vmatpush1.bf16.msra.mxu0 %v11084
    %11118 = vmatprep.subr.bf16.mxu0 %v11087
    %11119 = vmatpush1.bf16.msra.mxu0 %v11086
    %11120 = vmatprep.subr.bf16.mxu0 %v11089
    %11121 = vmatpush1.bf16.msra.mxu0 %v11088
    %11122 = vmatprep.subr.bf16.mxu0 %v11091
    %11123 = vmatpush1.bf16.msra.mxu0 %v11090
    %11124 = vmatprep.subr.bf16.mxu0 %v11093
    %11125 = vmatpush1.bf16.msra.mxu0 %v11092
    %11126 = vmatprep.subr.bf16.mxu0 %v11095
    %11127 = vmatpush1.bf16.msra.mxu0 %v11094
    %11128 = vmatprep.subr.bf16.mxu0 0
    %11129 = vmatpush1.bf16.msra.mxu0 0
    %11130 = vmatprep.subr.bf16.mxu0 0
    %11131 = vmatpush1.bf16.msra.mxu0 0
    %11132 = vmatprep.subr.bf16.mxu0 0
    %11133 = vmatpush1.bf16.msra.mxu0 0
    %11134 = vmatprep.subr.bf16.mxu0 0
    %11135 = vmatpush1.bf16.msra.mxu0 0
    %11136 = vmatprep.subr.bf16.mxu0 0
    %11137 = vmatpush1.bf16.msra.mxu0 0
    %11138 = vmatprep.subr.bf16.mxu0 0
    %11139 = vmatpush1.bf16.msra.mxu0 0
    %11140 = vmatprep.subr.bf16.mxu0 0
    %11141 = vmatpush1.bf16.msra.mxu0 0
    %11142 = vmatprep.subr.bf16.mxu0 0
    %11143 = vmatpush1.bf16.msra.mxu0 0
    %11144 = vmatprep.mubr.bf16.mxu0 0
    %11145 = vmatmul.mubr.bf16.gmra.mrb[0].mxu0 %v11015
    %v11146 = vpop.f32.mrb[0].mxu0
    %v11147 = vadd.f32 0.0, %v11146
    %v11148 = vpop.f32.mrb[0].mxu0
    %v11149 = vadd.f32 0.0, %v11148
    %v11150 = vpop.f32.mrb[0].mxu0
    %v11151 = vadd.f32 0.0, %v11150
    %v11152 = vpop.f32.mrb[0].mxu0
    %v11153 = vadd.f32 0.0, %v11152
    %11154 = vdwg.mxu0
    %v11155 = vadd.f32 %v10960, %v11147
    %v11156 = vadd.f32 %v10961, %v11149
    %v11157 = vadd.f32 %v10962, %v11151
    %v11158 = vadd.f32 %v10963, %v11153
    %v11159 = vld [vmem:[#allocation22] sm:$0x3]
    %v11161 = vlaneseq
    %v11162 = vshrl.u32 %v11161, 7
    %v11163 = vsub.s32 0, %v11162
    %v11164 = vrot.slane %v11159, %v11163
    %v11165 = vlaneseq
    %v11166 = vshrl.u32 %v11165, 7
    %v11167 = vsub.s32 1, %v11166
    %v11168 = vrot.slane %v11159, %v11167
    %v11171 = vadd.f32 %v11155, %v11164
    %v11172 = vadd.f32 %v11156, %v11168
    %v11173 = vadd.f32 %v11157, %v11164
    %v11174 = vadd.f32 %v11158, %v11168
    %v11175 = vmax.f32 %v11171, 0.0
    %v11176 = vmax.f32 %v11172, 0.0
    %v11177 = vmax.f32 %v11173, 0.0
    %v11178 = vmax.f32 %v11174, 0.0
    %v11179 = vpack.c.bf16 %v11177, %v11175
    %v11180 = vpack.c.bf16 %v11178, %v11176
    %v11181 = vld [vmem:[#allocation24] sm:$0xf]
    %v11182 = vld [vmem:[#allocation24 + $0x4] sm:$0xf]
    %v11185 = vunpack.c.l.b16 %v11181
    %v11186 = vunpack.c.l.b16 %v11182
    %v11187 = vpack.c.b16 %v11186, %v11185
    %v11189 = vsel %vm8840, %v11187, 0
    %11191 = vmatprep.subr.bf16.mxu0 %v11180
    %11192 = vmatpush1.bf16.msra.mxu0 %v11179
    %11193 = vmatprep.subr.bf16.mxu0 0
    %11194 = vmatpush1.bf16.msra.mxu0 0
    %11195 = vmatprep.subr.bf16.mxu0 0
    %11196 = vmatpush1.bf16.msra.mxu0 0
    %11197 = vmatprep.subr.bf16.mxu0 0
    %11198 = vmatpush1.bf16.msra.mxu0 0
    %11199 = vmatprep.subr.bf16.mxu0 0
    %11200 = vmatpush1.bf16.msra.mxu0 0
    %11201 = vmatprep.subr.bf16.mxu0 0
    %11202 = vmatpush1.bf16.msra.mxu0 0
    %11203 = vmatprep.subr.bf16.mxu0 0
    %11204 = vmatpush1.bf16.msra.mxu0 0
    %11205 = vmatprep.subr.bf16.mxu0 0
    %11206 = vmatpush1.bf16.msra.mxu0 0
    %11207 = vmatprep.subr.bf16.mxu0 0
    %11208 = vmatpush1.bf16.msra.mxu0 0
    %11209 = vmatprep.subr.bf16.mxu0 0
    %11210 = vmatpush1.bf16.msra.mxu0 0
    %11211 = vmatprep.subr.bf16.mxu0 0
    %11212 = vmatpush1.bf16.msra.mxu0 0
    %11213 = vmatprep.subr.bf16.mxu0 0
    %11214 = vmatpush1.bf16.msra.mxu0 0
    %11215 = vmatprep.subr.bf16.mxu0 0
    %11216 = vmatpush1.bf16.msra.mxu0 0
    %11217 = vmatprep.subr.bf16.mxu0 0
    %11218 = vmatpush1.bf16.msra.mxu0 0
    %11219 = vmatprep.subr.bf16.mxu0 0
    %11220 = vmatpush1.bf16.msra.mxu0 0
    %11221 = vmatprep.subr.bf16.mxu0 0
    %11222 = vmatpush1.bf16.msra.mxu0 0
    %11223 = vmatprep.mubr.bf16.mxu0 0
    %11224 = vmatmul.mubr.bf16.gmra.mrb[0].mxu0 %v11189
    %v11225 = vpop.f32.mrb[0].mxu0
    %v11226 = vadd.f32 0.0, %v11225
    %v11227 = vpop.f32.mrb[0].mxu0
    %v11228 = vadd.f32 0.0, %v11227
    %v11229 = vpop.f32.mrb[0].mxu0
    %v11230 = vadd.f32 0.0, %v11229
    %v11231 = vpop.f32.mrb[0].mxu0
    %v11232 = vadd.f32 0.0, %v11231
    %11233 = vdwg.mxu0
    %v11234 = vpack.c.bf16 %v11230, %v11226
    %v11235 = vpack.c.bf16 %v11232, %v11228
    %v11236 = vld [vmem:[#allocation25] sm:$0xff]
    %v11237 = vld [vmem:[#allocation25 + $0x8] sm:$0xff]
    %v11238 = vld [vmem:[#allocation25 + $0x10] sm:$0xff]
    %v11239 = vld [vmem:[#allocation25 + $0x18] sm:$0xff]
    %v11240 = vld [vmem:[#allocation25 + $0x20] sm:$0xff]
    %v11241 = vld [vmem:[#allocation25 + $0x28] sm:$0xff]
    %v11242 = vld [vmem:[#allocation25 + $0x30] sm:$0xff]
    %v11243 = vld [vmem:[#allocation25 + $0x38] sm:$0xff]
    %v11244 = vld [vmem:[#allocation25 + $0x40] sm:$0xff]
    %v11245 = vld [vmem:[#allocation25 + $0x48] sm:$0xff]
    %v11246 = vld [vmem:[#allocation25 + $0x50] sm:$0xff]
    %v11247 = vld [vmem:[#allocation25 + $0x58] sm:$0xff]
    %v11248 = vld [vmem:[#allocation25 + $0x60] sm:$0xff]
    %v11249 = vld [vmem:[#allocation25 + $0x68] sm:$0xff]
    %v11250 = vld [vmem:[#allocation25 + $0x70] sm:$0xff]
    %v11251 = vld [vmem:[#allocation25 + $0x78] sm:$0xff]
    %v11252 = vld [vmem:[#allocation25 + $0x80] sm:$0xff]
    %v11253 = vld [vmem:[#allocation25 + $0x88] sm:$0xff]
    %v11254 = vld [vmem:[#allocation25 + $0x90] sm:$0xff]
    %v11255 = vld [vmem:[#allocation25 + $0x98] sm:$0xff]
    %v11256 = vld [vmem:[#allocation25 + $0xa0] sm:$0xff]
    %v11257 = vld [vmem:[#allocation25 + $0xa8] sm:$0xff]
    %v11258 = vld [vmem:[#allocation25 + $0xb0] sm:$0xff]
    %v11259 = vld [vmem:[#allocation25 + $0xb8] sm:$0xff]
    %v11260 = vld [vmem:[#allocation25 + $0xc0] sm:$0xff]
    %v11261 = vld [vmem:[#allocation25 + $0xc8] sm:$0xff]
    %v11262 = vld [vmem:[#allocation25 + $0xd0] sm:$0xff]
    %v11263 = vld [vmem:[#allocation25 + $0xd8] sm:$0xff]
    %v11264 = vld [vmem:[#allocation25 + $0xe0] sm:$0xff]
    %v11265 = vld [vmem:[#allocation25 + $0xe8] sm:$0xff]
    %v11266 = vld [vmem:[#allocation25 + $0xf0] sm:$0xff]
    %v11267 = vld [vmem:[#allocation25 + $0xf8] sm:$0xff]
    %v11268 = vld [vmem:[#allocation27] sm:$0x3]
    %v11270 = vlaneseq
    %v11271 = vshrl.u32 %v11270, 7
    %v11272 = vsub.s32 0, %v11271
    %v11273 = vrot.slane %v11268, %v11272
    %v11274 = vlaneseq
    %v11275 = vshrl.u32 %v11274, 7
    %v11276 = vsub.s32 1, %v11275
    %v11277 = vrot.slane %v11268, %v11276
    %v11312 = vunpack.c.l.b16 %v11236
    %v11313 = vunpack.c.h.b16 %v11236
    %v11314 = vunpack.c.l.b16 %v11237
    %v11315 = vunpack.c.h.b16 %v11237
    %v11316 = vunpack.c.l.b16 %v11238
    %v11317 = vunpack.c.h.b16 %v11238
    %v11318 = vunpack.c.l.b16 %v11239
    %v11319 = vunpack.c.h.b16 %v11239
    %v11320 = vunpack.c.l.b16 %v11240
    %v11321 = vunpack.c.h.b16 %v11240
    %v11322 = vunpack.c.l.b16 %v11241
    %v11323 = vunpack.c.h.b16 %v11241
    %v11324 = vunpack.c.l.b16 %v11242
    %v11325 = vunpack.c.h.b16 %v11242
    %v11326 = vunpack.c.l.b16 %v11243
    %v11327 = vunpack.c.h.b16 %v11243
    %v11328 = vunpack.c.l.b16 %v11244
    %v11329 = vunpack.c.h.b16 %v11244
    %v11330 = vunpack.c.l.b16 %v11245
    %v11331 = vunpack.c.h.b16 %v11245
    %v11332 = vunpack.c.l.b16 %v11246
    %v11333 = vunpack.c.h.b16 %v11246
    %v11334 = vunpack.c.l.b16 %v11247
    %v11335 = vunpack.c.h.b16 %v11247
    %v11336 = vunpack.c.l.b16 %v11248
    %v11337 = vunpack.c.h.b16 %v11248
    %v11338 = vunpack.c.l.b16 %v11249
    %v11339 = vunpack.c.h.b16 %v11249
    %v11340 = vunpack.c.l.b16 %v11250
    %v11341 = vunpack.c.h.b16 %v11250
    %v11342 = vunpack.c.l.b16 %v11251
    %v11343 = vunpack.c.h.b16 %v11251
    %v11344 = vunpack.c.l.b16 %v11252
    %v11345 = vunpack.c.h.b16 %v11252
    %v11346 = vunpack.c.l.b16 %v11253
    %v11347 = vunpack.c.h.b16 %v11253
    %v11348 = vunpack.c.l.b16 %v11254
    %v11349 = vunpack.c.h.b16 %v11254
    %v11350 = vunpack.c.l.b16 %v11255
    %v11351 = vunpack.c.h.b16 %v11255
    %v11352 = vunpack.c.l.b16 %v11256
    %v11353 = vunpack.c.h.b16 %v11256
    %v11354 = vunpack.c.l.b16 %v11257
    %v11355 = vunpack.c.h.b16 %v11257
    %v11356 = vunpack.c.l.b16 %v11258
    %v11357 = vunpack.c.h.b16 %v11258
    %v11358 = vunpack.c.l.b16 %v11259
    %v11359 = vunpack.c.h.b16 %v11259
    %v11360 = vunpack.c.l.b16 %v11260
    %v11361 = vunpack.c.h.b16 %v11260
    %v11362 = vunpack.c.l.b16 %v11261
    %v11363 = vunpack.c.h.b16 %v11261
    %v11364 = vunpack.c.l.b16 %v11262
    %v11365 = vunpack.c.h.b16 %v11262
    %v11366 = vunpack.c.l.b16 %v11263
    %v11367 = vunpack.c.h.b16 %v11263
    %v11368 = vunpack.c.l.b16 %v11264
    %v11369 = vunpack.c.h.b16 %v11264
    %v11370 = vunpack.c.l.b16 %v11265
    %v11371 = vunpack.c.h.b16 %v11265
    %v11372 = vunpack.c.l.b16 %v11266
    %v11373 = vunpack.c.h.b16 %v11266
    %v11374 = vunpack.c.l.b16 %v11267
    %v11375 = vunpack.c.h.b16 %v11267
    %v11376 = vpack.c.b16 %v11314, %v11312
    %v11377 = vpack.c.b16 %v11315, %v11313
    %v11378 = vpack.c.b16 %v11318, %v11316
    %v11379 = vpack.c.b16 %v11319, %v11317
    %v11380 = vpack.c.b16 %v11322, %v11320
    %v11381 = vpack.c.b16 %v11323, %v11321
    %v11382 = vpack.c.b16 %v11326, %v11324
    %v11383 = vpack.c.b16 %v11327, %v11325
    %v11384 = vpack.c.b16 %v11330, %v11328
    %v11385 = vpack.c.b16 %v11331, %v11329
    %v11386 = vpack.c.b16 %v11334, %v11332
    %v11387 = vpack.c.b16 %v11335, %v11333
    %v11388 = vpack.c.b16 %v11338, %v11336
    %v11389 = vpack.c.b16 %v11339, %v11337
    %v11390 = vpack.c.b16 %v11342, %v11340
    %v11391 = vpack.c.b16 %v11343, %v11341
    %v11392 = vpack.c.b16 %v11346, %v11344
    %v11393 = vpack.c.b16 %v11347, %v11345
    %v11394 = vpack.c.b16 %v11350, %v11348
    %v11395 = vpack.c.b16 %v11351, %v11349
    %v11396 = vpack.c.b16 %v11354, %v11352
    %v11397 = vpack.c.b16 %v11355, %v11353
    %v11398 = vpack.c.b16 %v11358, %v11356
    %v11399 = vpack.c.b16 %v11359, %v11357
    %v11400 = vpack.c.b16 %v11362, %v11360
    %v11401 = vpack.c.b16 %v11363, %v11361
    %v11402 = vpack.c.b16 %v11366, %v11364
    %v11403 = vpack.c.b16 %v11367, %v11365
    %v11404 = vpack.c.b16 %v11370, %v11368
    %v11405 = vpack.c.b16 %v11371, %v11369
    %v11406 = vpack.c.b16 %v11374, %v11372
    %v11407 = vpack.c.b16 %v11375, %v11373
    %11440 = vmatprep.subr.bf16.mxu0 %v11377
    %11441 = vmatpush1.bf16.msra.mxu0 %v11376
    %11442 = vmatprep.subr.bf16.mxu0 %v11379
    %11443 = vmatpush1.bf16.msra.mxu0 %v11378
    %11444 = vmatprep.subr.bf16.mxu0 %v11381
    %11445 = vmatpush1.bf16.msra.mxu0 %v11380
    %11446 = vmatprep.subr.bf16.mxu0 %v11383
    %11447 = vmatpush1.bf16.msra.mxu0 %v11382
    %11448 = vmatprep.subr.bf16.mxu0 %v11385
    %11449 = vmatpush1.bf16.msra.mxu0 %v11384
    %11450 = vmatprep.subr.bf16.mxu0 %v11387
    %11451 = vmatpush1.bf16.msra.mxu0 %v11386
    %11452 = vmatprep.subr.bf16.mxu0 %v11389
    %11453 = vmatpush1.bf16.msra.mxu0 %v11388
    %11454 = vmatprep.subr.bf16.mxu0 %v11391
    %11455 = vmatpush1.bf16.msra.mxu0 %v11390
    %11456 = vmatprep.subr.bf16.mxu0 %v11393
    %11457 = vmatpush1.bf16.msra.mxu0 %v11392
    %11458 = vmatprep.subr.bf16.mxu0 %v11395
    %11459 = vmatpush1.bf16.msra.mxu0 %v11394
    %11460 = vmatprep.subr.bf16.mxu0 %v11397
    %11461 = vmatpush1.bf16.msra.mxu0 %v11396
    %11462 = vmatprep.subr.bf16.mxu0 %v11399
    %11463 = vmatpush1.bf16.msra.mxu0 %v11398
    %11464 = vmatprep.subr.bf16.mxu0 %v11401
    %11465 = vmatpush1.bf16.msra.mxu0 %v11400
    %11466 = vmatprep.subr.bf16.mxu0 %v11403
    %11467 = vmatpush1.bf16.msra.mxu0 %v11402
    %11468 = vmatprep.subr.bf16.mxu0 %v11405
    %11469 = vmatpush1.bf16.msra.mxu0 %v11404
    %11470 = vmatprep.subr.bf16.mxu0 %v11407
    %11471 = vmatpush1.bf16.msra.mxu0 %v11406
    %11472 = vmatprep.mubr.bf16.mxu0 %v11235
    %11473 = vmatmul.mubr.bf16.gmra.mrb[0].mxu0 %v11234
    %v11474 = vpop.f32.mrb[0].mxu0
    %v11475 = vadd.f32 %v11273, %v11474
    %v11476 = vpop.f32.mrb[0].mxu0
    %v11477 = vadd.f32 %v11277, %v11476
    %v11478 = vpop.f32.mrb[0].mxu0
    %v11479 = vadd.f32 %v11273, %v11478
    %v11480 = vpop.f32.mrb[0].mxu0
    %v11481 = vadd.f32 %v11277, %v11480
    %11482 = vdwg.mxu0
    %v11483 = vmax.f32 %v11475, 0.0
    %v11484 = vmax.f32 %v11477, 0.0
    %v11485 = vmax.f32 %v11479, 0.0
    %v11486 = vmax.f32 %v11481, 0.0
    %v11487 = vpack.c.bf16 %v11485, %v11483
    %v11488 = vpack.c.bf16 %v11486, %v11484
    %v11489 = vld [vmem:[#allocation28] sm:$0xf]
    %v11490 = vld [vmem:[#allocation28 + $0x4] sm:$0xf]
    %v11491 = vld [vmem:[#allocation28 + $0x8] sm:$0xf]
    %v11492 = vld [vmem:[#allocation28 + $0xc] sm:$0xf]
    %v11493 = vld [vmem:[#allocation28 + $0x10] sm:$0xf]
    %v11494 = vld [vmem:[#allocation28 + $0x14] sm:$0xf]
    %v11495 = vld [vmem:[#allocation28 + $0x18] sm:$0xf]
    %v11496 = vld [vmem:[#allocation28 + $0x1c] sm:$0xf]
    %v11497 = vld [vmem:[#allocation28 + $0x20] sm:$0xf]
    %v11498 = vld [vmem:[#allocation28 + $0x24] sm:$0xf]
    %v11499 = vld [vmem:[#allocation28 + $0x28] sm:$0xf]
    %v11500 = vld [vmem:[#allocation28 + $0x2c] sm:$0xf]
    %v11501 = vld [vmem:[#allocation28 + $0x30] sm:$0xf]
    %v11502 = vld [vmem:[#allocation28 + $0x34] sm:$0xf]
    %v11503 = vld [vmem:[#allocation28 + $0x38] sm:$0xf]
    %v11504 = vld [vmem:[#allocation28 + $0x3c] sm:$0xf]
    %v11505 = vld [vmem:[#allocation28 + $0x40] sm:$0xf]
    %v11506 = vld [vmem:[#allocation28 + $0x44] sm:$0xf]
    %v11507 = vld [vmem:[#allocation28 + $0x48] sm:$0xf]
    %v11508 = vld [vmem:[#allocation28 + $0x4c] sm:$0xf]
    %v11509 = vld [vmem:[#allocation28 + $0x50] sm:$0xf]
    %v11510 = vld [vmem:[#allocation28 + $0x54] sm:$0xf]
    %v11511 = vld [vmem:[#allocation28 + $0x58] sm:$0xf]
    %v11512 = vld [vmem:[#allocation28 + $0x5c] sm:$0xf]
    %v11513 = vld [vmem:[#allocation28 + $0x60] sm:$0xf]
    %v11514 = vld [vmem:[#allocation28 + $0x64] sm:$0xf]
    %v11515 = vld [vmem:[#allocation28 + $0x68] sm:$0xf]
    %v11516 = vld [vmem:[#allocation28 + $0x6c] sm:$0xf]
    %v11517 = vld [vmem:[#allocation28 + $0x70] sm:$0xf]
    %v11518 = vld [vmem:[#allocation28 + $0x74] sm:$0xf]
    %v11519 = vld [vmem:[#allocation28 + $0x78] sm:$0xf]
    %v11520 = vld [vmem:[#allocation28 + $0x7c] sm:$0xf]
    %v11521 = vld [vmem:[#allocation30] sm:$0x1]
    %v11523 = vlaneseq
    %v11524 = vshrl.u32 %v11523, 7
    %v11525 = vsub.s32 0, %v11524
    %v11526 = vrot.slane %v11521, %v11525
    %v11560 = vunpack.c.l.b16 %v11489
    %v11561 = vunpack.c.l.b16 %v11490
    %v11562 = vunpack.c.l.b16 %v11491
    %v11563 = vunpack.c.l.b16 %v11492
    %v11564 = vunpack.c.l.b16 %v11493
    %v11565 = vunpack.c.l.b16 %v11494
    %v11566 = vunpack.c.l.b16 %v11495
    %v11567 = vunpack.c.l.b16 %v11496
    %v11568 = vunpack.c.l.b16 %v11497
    %v11569 = vunpack.c.l.b16 %v11498
    %v11570 = vunpack.c.l.b16 %v11499
    %v11571 = vunpack.c.l.b16 %v11500
    %v11572 = vunpack.c.l.b16 %v11501
    %v11573 = vunpack.c.l.b16 %v11502
    %v11574 = vunpack.c.l.b16 %v11503
    %v11575 = vunpack.c.l.b16 %v11504
    %v11576 = vunpack.c.l.b16 %v11505
    %v11577 = vunpack.c.l.b16 %v11506
    %v11578 = vunpack.c.l.b16 %v11507
    %v11579 = vunpack.c.l.b16 %v11508
    %v11580 = vunpack.c.l.b16 %v11509
    %v11581 = vunpack.c.l.b16 %v11510
    %v11582 = vunpack.c.l.b16 %v11511
    %v11583 = vunpack.c.l.b16 %v11512
    %v11584 = vunpack.c.l.b16 %v11513
    %v11585 = vunpack.c.l.b16 %v11514
    %v11586 = vunpack.c.l.b16 %v11515
    %v11587 = vunpack.c.l.b16 %v11516
    %v11588 = vunpack.c.l.b16 %v11517
    %v11589 = vunpack.c.l.b16 %v11518
    %v11590 = vunpack.c.l.b16 %v11519
    %v11591 = vunpack.c.l.b16 %v11520
    %v11592 = vpack.c.b16 %v11561, %v11560
    %v11593 = vpack.c.b16 %v11563, %v11562
    %v11594 = vpack.c.b16 %v11565, %v11564
    %v11595 = vpack.c.b16 %v11567, %v11566
    %v11596 = vpack.c.b16 %v11569, %v11568
    %v11597 = vpack.c.b16 %v11571, %v11570
    %v11598 = vpack.c.b16 %v11573, %v11572
    %v11599 = vpack.c.b16 %v11575, %v11574
    %v11600 = vpack.c.b16 %v11577, %v11576
    %v11601 = vpack.c.b16 %v11579, %v11578
    %v11602 = vpack.c.b16 %v11581, %v11580
    %v11603 = vpack.c.b16 %v11583, %v11582
    %v11604 = vpack.c.b16 %v11585, %v11584
    %v11605 = vpack.c.b16 %v11587, %v11586
    %v11606 = vpack.c.b16 %v11589, %v11588
    %v11607 = vpack.c.b16 %v11591, %v11590
    %11624 = vmatprep.subr.bf16.mxu0 0
    %11625 = vmatpush1.bf16.msra.mxu0 %v11592
    %11626 = vmatprep.subr.bf16.mxu0 0
    %11627 = vmatpush1.bf16.msra.mxu0 %v11593
    %11628 = vmatprep.subr.bf16.mxu0 0
    %11629 = vmatpush1.bf16.msra.mxu0 %v11594
    %11630 = vmatprep.subr.bf16.mxu0 0
    %11631 = vmatpush1.bf16.msra.mxu0 %v11595
    %11632 = vmatprep.subr.bf16.mxu0 0
    %11633 = vmatpush1.bf16.msra.mxu0 %v11596
    %11634 = vmatprep.subr.bf16.mxu0 0
    %11635 = vmatpush1.bf16.msra.mxu0 %v11597
    %11636 = vmatprep.subr.bf16.mxu0 0
    %11637 = vmatpush1.bf16.msra.mxu0 %v11598
    %11638 = vmatprep.subr.bf16.mxu0 0
    %11639 = vmatpush1.bf16.msra.mxu0 %v11599
    %11640 = vmatprep.subr.bf16.mxu0 0
    %11641 = vmatpush1.bf16.msra.mxu0 %v11600
    %11642 = vmatprep.subr.bf16.mxu0 0
    %11643 = vmatpush1.bf16.msra.mxu0 %v11601
    %11644 = vmatprep.subr.bf16.mxu0 0
    %11645 = vmatpush1.bf16.msra.mxu0 %v11602
    %11646 = vmatprep.subr.bf16.mxu0 0
    %11647 = vmatpush1.bf16.msra.mxu0 %v11603
    %11648 = vmatprep.subr.bf16.mxu0 0
    %11649 = vmatpush1.bf16.msra.mxu0 %v11604
    %11650 = vmatprep.subr.bf16.mxu0 0
    %11651 = vmatpush1.bf16.msra.mxu0 %v11605
    %11652 = vmatprep.subr.bf16.mxu0 0
    %11653 = vmatpush1.bf16.msra.mxu0 %v11606
    %11654 = vmatprep.subr.bf16.mxu0 0
    %11655 = vmatpush1.bf16.msra.mxu0 %v11607
    %11656 = vmatprep.mubr.bf16.mxu0 %v11488
    %11657 = vmatmul.mubr.bf16.gmra.mrb[0].mxu0 %v11487
    %v11658 = vpop.f32.mrb[0].mxu0
    %v11659 = vadd.f32 %v11526, %v11658
    %v11660 = vpop.f32.mrb[0].mxu0
    %v11661 = vpop.f32.mrb[0].mxu0
    %v11662 = vadd.f32 %v11526, %v11661
    %v11663 = vpop.f32.mrb[0].mxu0
    %11664 = vdwg.mxu0
    %11665 = vst [vmem:[%s24] sm:$0xff] %v11659
    %11666 = vst [vmem:[%s24 + $0x8] sm:$0xff] %v11662
    // Predicated region
    $region170: #{fwd.1} parent=1 // pred_check
      _
    $region171: #{fwd.1} parent=1 // pred_check_branch
      %11668 = sbr.rel (0) target = $region173
    $region172: #{fwd.1} parent=1 // pred_region
      _
    $region173: #{fwd.1} parent=1 // pred_fallthru
      _
    // Predicated region
    $region174: #{fwd.1} parent=1 // pred_check
      _
    $region175: #{fwd.1} parent=1 // pred_check_branch
      %11670 = sbr.rel (0) target = $region177
    $region176: #{fwd.1} parent=1 // pred_region
      _
    $region177: #{fwd.1} parent=1 // pred_fallthru
      _
    // Predicated region
    $region178: #{fwd.1} parent=1 // pred_check
      _
    $region179: #{fwd.1} parent=1 // pred_check_branch
      %11672 = sbr.rel (0) target = $region181
    $region180: #{fwd.1} parent=1 // pred_region
      _
    $region181: #{fwd.1} parent=1 // pred_fallthru
      _
    // Predicated region
    $region182: #{fwd.1} parent=1 // pred_check
      _
    $region183: #{fwd.1} parent=1 // pred_check_branch
      %11674 = sbr.rel (0) target = $region185
    $region184: #{fwd.1} parent=1 // pred_region
      _
    $region185: #{fwd.1} parent=1 // pred_fallthru
      _
    %11675 = vsyncpa [#allocation3], 1
    %11676 = vsyncpa [#allocation5], 1
    %11677 = vsyncpa [#allocation8], 1
    %11678 = vsyncpa [#allocation11], 1
    %11679 = vsyncpa [#allocation14], 1
    %11680 = vsyncpa [#allocation17], 1
    %11681 = vsyncpa [#allocation20], 1
    %11682 = vsyncpa [#allocation23], 1
    %11683 = vsyncpa [#allocation26], 1
    %11684 = vsyncpa [#allocation29], 1

</llo_original>
